<compile_context>
chip_gen: v6e
topology: v6e:2x2x1
jax: 0.10.0
libtpu: 0.0.40
codegen_flags: <defaults>
</compile_context>

<pallas_src>
import functools

import jax
import jax.numpy as jnp
from jax import lax
from jax.experimental import pallas as pl
from jax.experimental.pallas import tpu as pltpu

_BN_EPS = 1e-5
_TN = 128  # output-channel tile (lane-aligned); this grid axis is "parallel"


def _round_up(x, m):
    return (x + m - 1) // m * m


# ---------------------------------------------------------------------------
# Pallas kernel: 3x3 conv (9 shifted-window matmuls) + train-mode BN
#                (+ fused 1x1-conv+BN shortcut | identity residual) (+ ReLU)
# ---------------------------------------------------------------------------
def _make_block_kernel(*, taps, m_rows, inv_m, relu, has_sc_conv, has_identity_res):
    """taps: 9 static (quadrant, row-offset) pairs; m_rows: static row count."""

    def kernel(*refs):
        it = iter(refs)
        x_ref = next(it)       # (ss, m_full, Cin)  bf16, resident quadrant-flat input
        w_ref = next(it)       # (9, Cin, tn)       bf16 conv weights per tap
        mask_ref = next(it)    # (m_rows, 1)        f32, 1.0 on valid output rows
        gamma_ref = next(it)   # (1, tn) f32
        beta_ref = next(it)    # (1, tn) f32
        if has_sc_conv:
            xs_ref = next(it)  # (m_rows, Cin_sc)   bf16 strided shortcut input
            ws_ref = next(it)  # (Cin_sc, tn)       bf16 1x1 shortcut weights
            gs_ref = next(it)  # (1, tn) f32
            bs_ref = next(it)  # (1, tn) f32
        if has_identity_res:
            r_ref = next(it)   # (m_rows, tn)       bf16 identity residual
        o_ref = next(it)       # (m_rows, tn)

        # 3x3 conv as 9 shifted contiguous-window matmuls, f32 MXU accumulation.
        q0, d0 = taps[0]
        acc = jnp.dot(x_ref[q0, pl.ds(d0, m_rows), :], w_ref[0],
                      preferred_element_type=jnp.float32)
        for t in range(1, 9):
            q, d = taps[t]
            acc = acc + jnp.dot(x_ref[q, pl.ds(d, m_rows), :], w_ref[t],
                                preferred_element_type=jnp.float32)

        mask = mask_ref[...]  # (m_rows, 1)

        def bn_scale_shift(a, gamma, beta):
            # Masked single-pass stats (halo/junk rows excluded), then one FMA.
            am = a * mask
            s1 = jnp.sum(am, axis=0, keepdims=True)          # (1, tn)
            s2 = jnp.sum(am * a, axis=0, keepdims=True)      # (1, tn)
            mean = s1 * inv_m
            var = jnp.maximum(s2 * inv_m - mean * mean, 0.0)
            scale = gamma * lax.rsqrt(var + _BN_EPS)
            shift = beta - mean * scale
            return scale, shift

        scale, shift = bn_scale_shift(acc, gamma_ref[...], beta_ref[...])
        y = acc * scale + shift

        if has_sc_conv:
            acc_s = jnp.dot(xs_ref[...], ws_ref[...],
                            preferred_element_type=jnp.float32)
            scale_s, shift_s = bn_scale_shift(acc_s, gs_ref[...], bs_ref[...])
            y = y + (acc_s * scale_s + shift_s)
        if has_identity_res:
            y = y + r_ref[...].astype(jnp.float32)
        if relu:
            y = jnp.maximum(y, 0.0)
        o_ref[...] = y.astype(o_ref.dtype)

    return kernel


def _conv_block_pallas(xq, wq, mask, gamma, beta, *, taps, m_rows, m_valid,
                       relu, out_dtype, sc=None, res=None):
    ss, m_full, cin = xq.shape
    cout = wq.shape[2]
    tn = _TN
    assert cout % tn == 0

    kernel = _make_block_kernel(
        taps=taps, m_rows=m_rows, inv_m=1.0 / float(m_valid), relu=relu,
        has_sc_conv=sc is not None, has_identity_res=res is not None)

    in_specs = [
        pl.BlockSpec((ss, m_full, cin), lambda j: (0, 0, 0)),  # resident input
        pl.BlockSpec((9, cin, tn), lambda j: (0, 0, j)),       # weights slab
        pl.BlockSpec((m_rows, 1), lambda j: (0, 0)),           # valid-row mask
        pl.BlockSpec((1, tn), lambda j: (0, j)),               # gamma
        pl.BlockSpec((1, tn), lambda j: (0, j)),               # beta
    ]
    args = [xq, wq, mask, gamma, beta]
    if sc is not None:
        xs2d, ws2d, gs, bs = sc
        cin_sc = xs2d.shape[1]
        in_specs += [
            pl.BlockSpec((m_rows, cin_sc), lambda j: (0, 0)),  # shortcut input
            pl.BlockSpec((cin_sc, tn), lambda j: (0, j)),      # 1x1 weights
            pl.BlockSpec((1, tn), lambda j: (0, j)),           # sc gamma
            pl.BlockSpec((1, tn), lambda j: (0, j)),           # sc beta
        ]
        args += [xs2d, ws2d, gs, bs]
    if res is not None:
        in_specs.append(pl.BlockSpec((m_rows, tn), lambda j: (0, j)))
        args.append(res)

    return pl.pallas_call(
        kernel,
        out_shape=jax.ShapeDtypeStruct((m_rows, cout), out_dtype),
        grid_spec=pltpu.PrefetchScalarGridSpec(
            num_scalar_prefetch=0,
            grid=(cout // tn,),                   # channel split only (BN-safe)
            in_specs=in_specs,
            out_specs=pl.BlockSpec((m_rows, tn), lambda j: (0, j)),
        ),
        compiler_params=pltpu.CompilerParams(
            dimension_semantics=("parallel",),    # megacore on v7x when grid > 1
        ),
    )(*args)


# ---------------------------------------------------------------------------
# Wrapper: quadrant-flat layout prep (thin bf16 XLA glue, no im2col blowup)
# ---------------------------------------------------------------------------
def conv3x3_bn_block(x, w, gamma, beta, *, stride, relu, out_dtype,
                     sc=None, res=None):
    """Fused 3x3 conv (pad=1, bias=False) + training-mode BN (+ shortcut) (+ReLU).

    x: (N,H,W,Cin) bf16 NHWC.  w: (Cout,Cin,3,3) PyTorch layout.
    sc:  (x_src, w_1x1, gamma, beta, sc_stride)  -> fused 1x1-conv+BN shortcut.
    res: (N,OH,OW,Cout) identity residual, added before the final ReLU.
    Returns (N, OH, OW, Cout) in out_dtype.
    """
    N, H, W, Cin = x.shape
    Cout = w.shape[0]
    s = stride
    OH = (H - 1) // s + 1
    OW = (W - 1) // s + 1
    m_valid = N * OH * OW
    Cp = _round_up(Cout, _TN)

    # Pad spatially (padding=1), split into stride-parity quadrants, flatten
    # to rows: each 3x3 tap is then a contiguous row window of one quadrant.
    xp = jnp.pad(x, ((0, 0), (1, 1), (1, 1), (0, 0)))
    Hp, Wp = H + 2, W + 2
    Hq, Wq = -(-Hp // s), -(-Wp // s)
    if s > 1:
        xp = jnp.pad(xp, ((0, 0), (0, Hq * s - Hp), (0, Wq * s - Wp), (0, 0)))
        xq = xp.reshape(N, Hq, s, Wq, s, Cin).transpose(2, 4, 0, 1, 3, 5)
        xq = xq.reshape(s * s, N * Hq * Wq, Cin)
    else:
        xq = xp.reshape(1, N * Hp * Wp, Cin)
    m_full = N * Hq * Wq

    # Tap table: (quadrant, row offset) per (kh, kw); max offset bounds m_rows.
    taps = [((kh % s) * s + (kw % s), (kh // s) * Wq + (kw // s))
            for kh in range(3) for kw in range(3)]
    m_rows = m_full - max(d for _, d in taps)

    # Weights (Cout,Cin,3,3) -> (9, Cin, Cp) bf16; BN params -> (1, Cp) f32.
    wq = jnp.transpose(w, (2, 3, 1, 0)).reshape(9, Cin, Cout)
    wq = jnp.pad(wq, ((0, 0), (0, 0), (0, Cp - Cout))).astype(jnp.bfloat16)
    g = jnp.pad(gamma.astype(jnp.float32), (0, Cp - Cout),
                constant_values=1.0).reshape(1, Cp)
    b = jnp.pad(beta.astype(jnp.float32), (0, Cp - Cout)).reshape(1, Cp)

    # Valid-row mask: 1.0 where the flat row maps to a real (n, oh, ow).
    mask = (jnp.arange(Hq) < OH)[:, None] & (jnp.arange(Wq) < OW)[None, :]
    mask = jnp.broadcast_to(mask[None], (N, Hq, Wq)).astype(jnp.float32)
    mask = mask.reshape(m_full, 1)[:m_rows]

    sc_args = None
    if sc is not None:
        xsrc, wsc, gsc, bsc, s_sc = sc
        xs = xsrc[:, ::s_sc, ::s_sc, :][:, :OH, :OW, :]
        xs = jnp.pad(xs, ((0, 0), (0, Hq - OH), (0, Wq - OW), (0, 0)))
        xs2d = xs.reshape(m_full, xs.shape[-1])[:m_rows].astype(jnp.bfloat16)
        ws2d = jnp.transpose(wsc.reshape(Cout, -1), (1, 0))
        ws2d = jnp.pad(ws2d, ((0, 0), (0, Cp - Cout))).astype(jnp.bfloat16)
        gs = jnp.pad(gsc.astype(jnp.float32), (0, Cp - Cout),
                     constant_values=1.0).reshape(1, Cp)
        bs = jnp.pad(bsc.astype(jnp.float32), (0, Cp - Cout)).reshape(1, Cp)
        sc_args = (xs2d, ws2d, gs, bs)

    res_arg = None
    if res is not None:
        r = jnp.pad(res, ((0, 0), (0, Hq - OH), (0, Wq - OW), (0, Cp - Cout)))
        res_arg = r.reshape(m_full, Cp)[:m_rows].astype(jnp.bfloat16)

    out = _conv_block_pallas(xq, wq, mask, g, b, taps=taps, m_rows=m_rows,
                             m_valid=m_valid, relu=relu, out_dtype=out_dtype,
                             sc=sc_args, res=res_arg)
    # Back to NHWC: re-pad to the quadrant grid, crop the valid window.
    out = jnp.pad(out, ((0, m_full - m_rows), (0, 0)))
    out = out.reshape(N, Hq, Wq, Cp)[:, :OH, :OW, :Cout]
    return out


# ---------------------------------------------------------------------------
# BasicBlock: parameters + forward
# ---------------------------------------------------------------------------
def init_params(key, in_planes, planes, stride):
    keys = iter(jax.random.split(key, 16))

    def conv_w(cout, cin, k):
        return 0.05 * jax.random.normal(next(keys), (cout, cin, k, k), jnp.float32)

    def bn_p(c):
        gamma = 1.0 + 0.1 * jax.random.normal(next(keys), (c,), jnp.float32)
        beta = 0.1 * jax.random.normal(next(keys), (c,), jnp.float32)
        return gamma, beta

    p = {
        "conv1": conv_w(planes, in_planes, 3),
        "bn1": bn_p(planes),
        "conv2": conv_w(planes, planes, 3),
        "bn2": bn_p(planes),
    }
    if stride != 1 or in_planes != planes:
        p["sc_conv"] = conv_w(planes, in_planes, 1)
        p["sc_bn"] = bn_p(planes)
    return p


@functools.partial(jax.jit, static_argnames=("stride",))
def basic_block_forward(x_nchw, params, *, stride):
    # Cast to bf16 *before* the layout transpose so all XLA-side glue moves
    # half the bytes; conv accumulation / BN epilogue stay f32 in-kernel.
    x = jnp.transpose(x_nchw.astype(jnp.bfloat16), (0, 2, 3, 1))  # NCHW -> NHWC

    # conv1 + bn1 + relu  (bf16 intermediate straight out of the kernel).
    out1 = conv3x3_bn_block(x, params["conv1"], *params["bn1"],
                            stride=stride, relu=True, out_dtype=jnp.bfloat16)

    # conv2 + bn2 + shortcut + relu, fused in one Pallas kernel.
    if "sc_conv" in params:
        sc = (x, params["sc_conv"], *params["sc_bn"], stride)
        out2 = conv3x3_bn_block(out1, params["conv2"], *params["bn2"],
                                stride=1, relu=True, out_dtype=jnp.float32,
                                sc=sc)
    else:
        out2 = conv3x3_bn_block(out1, params["conv2"], *params["bn2"],
                                stride=1, relu=True, out_dtype=jnp.float32,
                                res=x)
    return jnp.transpose(out2, (0, 3, 1, 2))  # NHWC -> NCHW (PyTorch layout)


if __name__ == "__main__":
    key = jax.random.PRNGKey(0)
    kx, kp = jax.random.split(key)
    # BasicBlock(in_planes=128, planes=256, stride=2) on a 16x16 map, batch 2.
    N, in_planes, planes, stride, H, W = 2, 128, 256, 2, 16, 16
    x = jax.random.normal(kx, (N, in_planes, H, W), jnp.float32)  # NCHW like PyTorch
    params = init_params(kp, in_planes, planes, stride)

    out = basic_block_forward(x, params, stride=stride)
    out = jax.block_until_ready(out)
    assert out.shape == (N, planes, H // stride, W // stride)
    assert out.dtype == jnp.float32
    print("KERNEL_OK")
</pallas_src>

<mosaic_0001>
module attributes {stable_mosaic.version = 11 : i64} {
  func.func @kernel(%arg0: i32, %arg1: memref<4x162x128xbf16, #tpu.memory_space<vmem>>, %arg2: memref<9x128x128xbf16, #tpu.memory_space<vmem>>, %arg3: memref<152x1xf32, #tpu.memory_space<vmem>>, %arg4: memref<1x128xf32, #tpu.memory_space<vmem>>, %arg5: memref<1x128xf32, #tpu.memory_space<vmem>>, %arg6: memref<152x128xbf16, #tpu.memory_space<vmem>>) attributes {dimension_semantics = [#tpu.dimension_semantics<parallel>], iteration_bounds = array<i64: 2>, scalar_prefetch = 0 : i64, scratch_operands = 0 : i64, tpu.core_type = #tpu.core_type<tc>, window_params = [{pipeline_mode = #tpu.pipeline_mode<synchronous>, transform_indices = @transform_0, window_bounds = array<i64: 4, 162, 128>}, {transform_indices = @transform_1, window_bounds = array<i64: 9, 128, 128>}, {pipeline_mode = #tpu.pipeline_mode<synchronous>, transform_indices = @transform_2, window_bounds = array<i64: 152, 1>}, {transform_indices = @transform_3, window_bounds = array<i64: 1, 128>}, {transform_indices = @transform_4, window_bounds = array<i64: 1, 128>}, {transform_indices = @transform_5, window_bounds = array<i64: 152, 128>}]} {
    %c0 = arith.constant 0 : index
    %c0_0 = arith.constant 0 : index
    %c0_1 = arith.constant 0 : index
    %0 = vector.load %arg1[%c0, %c0_0, %c0_1] : memref<4x162x128xbf16, #tpu.memory_space<vmem>>, vector<1x152x128xbf16>
    %1 = vector.shape_cast %0 : vector<1x152x128xbf16> to vector<152x128xbf16>
    %c0_2 = arith.constant 0 : index
    %c0_3 = arith.constant 0 : index
    %c0_4 = arith.constant 0 : index
    %2 = vector.load %arg2[%c0_2, %c0_3, %c0_4] : memref<9x128x128xbf16, #tpu.memory_space<vmem>>, vector<1x128x128xbf16>
    %3 = vector.shape_cast %2 : vector<1x128x128xbf16> to vector<128x128xbf16>
    %cst = arith.constant dense<0.000000e+00> : vector<152x128xf32>
    %4 = tpu.matmul %1, %3, %cst {dimension_numbers = #tpu.dot_dimension_numbers<[1], [0], [0], [1], [0, 0, 1, 1], [], []>} : vector<152x128xbf16>, vector<128x128xbf16>, vector<152x128xf32> -> vector<152x128xf32>
    %c1 = arith.constant 1 : index
    %c0_5 = arith.constant 0 : index
    %c0_6 = arith.constant 0 : index
    %5 = vector.load %arg1[%c1, %c0_5, %c0_6] : memref<4x162x128xbf16, #tpu.memory_space<vmem>>, vector<1x152x128xbf16>
    %6 = vector.shape_cast %5 : vector<1x152x128xbf16> to vector<152x128xbf16>
    %c1_7 = arith.constant 1 : index
    %c0_8 = arith.constant 0 : index
    %c0_9 = arith.constant 0 : index
    %7 = vector.load %arg2[%c1_7, %c0_8, %c0_9] : memref<9x128x128xbf16, #tpu.memory_space<vmem>>, vector<1x128x128xbf16>
    %8 = vector.shape_cast %7 : vector<1x128x128xbf16> to vector<128x128xbf16>
    %cst_10 = arith.constant dense<0.000000e+00> : vector<152x128xf32>
    %9 = tpu.matmul %6, %8, %cst_10 {dimension_numbers = #tpu.dot_dimension_numbers<[1], [0], [0], [1], [0, 0, 1, 1], [], []>} : vector<152x128xbf16>, vector<128x128xbf16>, vector<152x128xf32> -> vector<152x128xf32>
    %10 = arith.addf %4, %9 : vector<152x128xf32>
    %c0_11 = arith.constant 0 : index
    %c1_12 = arith.constant 1 : index
    %c0_13 = arith.constant 0 : index
    %11 = vector.load %arg1[%c0_11, %c1_12, %c0_13] : memref<4x162x128xbf16, #tpu.memory_space<vmem>>, vector<1x152x128xbf16>
    %12 = vector.shape_cast %11 : vector<1x152x128xbf16> to vector<152x128xbf16>
    %c2 = arith.constant 2 : index
    %c0_14 = arith.constant 0 : index
    %c0_15 = arith.constant 0 : index
    %13 = vector.load %arg2[%c2, %c0_14, %c0_15] : memref<9x128x128xbf16, #tpu.memory_space<vmem>>, vector<1x128x128xbf16>
    %14 = vector.shape_cast %13 : vector<1x128x128xbf16> to vector<128x128xbf16>
    %cst_16 = arith.constant dense<0.000000e+00> : vector<152x128xf32>
    %15 = tpu.matmul %12, %14, %cst_16 {dimension_numbers = #tpu.dot_dimension_numbers<[1], [0], [0], [1], [0, 0, 1, 1], [], []>} : vector<152x128xbf16>, vector<128x128xbf16>, vector<152x128xf32> -> vector<152x128xf32>
    %16 = arith.addf %10, %15 : vector<152x128xf32>
    %c2_17 = arith.constant 2 : index
    %c0_18 = arith.constant 0 : index
    %c0_19 = arith.constant 0 : index
    %17 = vector.load %arg1[%c2_17, %c0_18, %c0_19] : memref<4x162x128xbf16, #tpu.memory_space<vmem>>, vector<1x152x128xbf16>
    %18 = vector.shape_cast %17 : vector<1x152x128xbf16> to vector<152x128xbf16>
    %c3 = arith.constant 3 : index
    %c0_20 = arith.constant 0 : index
    %c0_21 = arith.constant 0 : index
    %19 = vector.load %arg2[%c3, %c0_20, %c0_21] : memref<9x128x128xbf16, #tpu.memory_space<vmem>>, vector<1x128x128xbf16>
    %20 = vector.shape_cast %19 : vector<1x128x128xbf16> to vector<128x128xbf16>
    %cst_22 = arith.constant dense<0.000000e+00> : vector<152x128xf32>
    %21 = tpu.matmul %18, %20, %cst_22 {dimension_numbers = #tpu.dot_dimension_numbers<[1], [0], [0], [1], [0, 0, 1, 1], [], []>} : vector<152x128xbf16>, vector<128x128xbf16>, vector<152x128xf32> -> vector<152x128xf32>
    %22 = arith.addf %16, %21 : vector<152x128xf32>
    %c3_23 = arith.constant 3 : index
    %c0_24 = arith.constant 0 : index
    %c0_25 = arith.constant 0 : index
    %23 = vector.load %arg1[%c3_23, %c0_24, %c0_25] : memref<4x162x128xbf16, #tpu.memory_space<vmem>>, vector<1x152x128xbf16>
    %24 = vector.shape_cast %23 : vector<1x152x128xbf16> to vector<152x128xbf16>
    %c4 = arith.constant 4 : index
    %c0_26 = arith.constant 0 : index
    %c0_27 = arith.constant 0 : index
    %25 = vector.load %arg2[%c4, %c0_26, %c0_27] : memref<9x128x128xbf16, #tpu.memory_space<vmem>>, vector<1x128x128xbf16>
    %26 = vector.shape_cast %25 : vector<1x128x128xbf16> to vector<128x128xbf16>
    %cst_28 = arith.constant dense<0.000000e+00> : vector<152x128xf32>
    %27 = tpu.matmul %24, %26, %cst_28 {dimension_numbers = #tpu.dot_dimension_numbers<[1], [0], [0], [1], [0, 0, 1, 1], [], []>} : vector<152x128xbf16>, vector<128x128xbf16>, vector<152x128xf32> -> vector<152x128xf32>
    %28 = arith.addf %22, %27 : vector<152x128xf32>
    %c2_29 = arith.constant 2 : index
    %c1_30 = arith.constant 1 : index
    %c0_31 = arith.constant 0 : index
    %29 = vector.load %arg1[%c2_29, %c1_30, %c0_31] : memref<4x162x128xbf16, #tpu.memory_space<vmem>>, vector<1x152x128xbf16>
    %30 = vector.shape_cast %29 : vector<1x152x128xbf16> to vector<152x128xbf16>
    %c5 = arith.constant 5 : index
    %c0_32 = arith.constant 0 : index
    %c0_33 = arith.constant 0 : index
    %31 = vector.load %arg2[%c5, %c0_32, %c0_33] : memref<9x128x128xbf16, #tpu.memory_space<vmem>>, vector<1x128x128xbf16>
    %32 = vector.shape_cast %31 : vector<1x128x128xbf16> to vector<128x128xbf16>
    %cst_34 = arith.constant dense<0.000000e+00> : vector<152x128xf32>
    %33 = tpu.matmul %30, %32, %cst_34 {dimension_numbers = #tpu.dot_dimension_numbers<[1], [0], [0], [1], [0, 0, 1, 1], [], []>} : vector<152x128xbf16>, vector<128x128xbf16>, vector<152x128xf32> -> vector<152x128xf32>
    %34 = arith.addf %28, %33 : vector<152x128xf32>
    %c0_35 = arith.constant 0 : index
    %c9 = arith.constant 9 : index
    %c0_36 = arith.constant 0 : index
    %35 = vector.load %arg1[%c0_35, %c9, %c0_36] : memref<4x162x128xbf16, #tpu.memory_space<vmem>>, vector<1x152x128xbf16>
    %36 = vector.shape_cast %35 : vector<1x152x128xbf16> to vector<152x128xbf16>
    %c6 = arith.constant 6 : index
    %c0_37 = arith.constant 0 : index
    %c0_38 = arith.constant 0 : index
    %37 = vector.load %arg2[%c6, %c0_37, %c0_38] : memref<9x128x128xbf16, #tpu.memory_space<vmem>>, vector<1x128x128xbf16>
    %38 = vector.shape_cast %37 : vector<1x128x128xbf16> to vector<128x128xbf16>
    %cst_39 = arith.constant dense<0.000000e+00> : vector<152x128xf32>
    %39 = tpu.matmul %36, %38, %cst_39 {dimension_numbers = #tpu.dot_dimension_numbers<[1], [0], [0], [1], [0, 0, 1, 1], [], []>} : vector<152x128xbf16>, vector<128x128xbf16>, vector<152x128xf32> -> vector<152x128xf32>
    %40 = arith.addf %34, %39 : vector<152x128xf32>
    %c1_40 = arith.constant 1 : index
    %c9_41 = arith.constant 9 : index
    %c0_42 = arith.constant 0 : index
    %41 = vector.load %arg1[%c1_40, %c9_41, %c0_42] : memref<4x162x128xbf16, #tpu.memory_space<vmem>>, vector<1x152x128xbf16>
    %42 = vector.shape_cast %41 : vector<1x152x128xbf16> to vector<152x128xbf16>
    %c7 = arith.constant 7 : index
    %c0_43 = arith.constant 0 : index
    %c0_44 = arith.constant 0 : index
    %43 = vector.load %arg2[%c7, %c0_43, %c0_44] : memref<9x128x128xbf16, #tpu.memory_space<vmem>>, vector<1x128x128xbf16>
    %44 = vector.shape_cast %43 : vector<1x128x128xbf16> to vector<128x128xbf16>
    %cst_45 = arith.constant dense<0.000000e+00> : vector<152x128xf32>
    %45 = tpu.matmul %42, %44, %cst_45 {dimension_numbers = #tpu.dot_dimension_numbers<[1], [0], [0], [1], [0, 0, 1, 1], [], []>} : vector<152x128xbf16>, vector<128x128xbf16>, vector<152x128xf32> -> vector<152x128xf32>
    %46 = arith.addf %40, %45 : vector<152x128xf32>
    %c0_46 = arith.constant 0 : index
    %c10 = arith.constant 10 : index
    %c0_47 = arith.constant 0 : index
    %47 = vector.load %arg1[%c0_46, %c10, %c0_47] : memref<4x162x128xbf16, #tpu.memory_space<vmem>>, vector<1x152x128xbf16>
    %48 = vector.shape_cast %47 : vector<1x152x128xbf16> to vector<152x128xbf16>
    %c8 = arith.constant 8 : index
    %c0_48 = arith.constant 0 : index
    %c0_49 = arith.constant 0 : index
    %49 = vector.load %arg2[%c8, %c0_48, %c0_49] : memref<9x128x128xbf16, #tpu.memory_space<vmem>>, vector<1x128x128xbf16>
    %50 = vector.shape_cast %49 : vector<1x128x128xbf16> to vector<128x128xbf16>
    %cst_50 = arith.constant dense<0.000000e+00> : vector<152x128xf32>
    %51 = tpu.matmul %48, %50, %cst_50 {dimension_numbers = #tpu.dot_dimension_numbers<[1], [0], [0], [1], [0, 0, 1, 1], [], []>} : vector<152x128xbf16>, vector<128x128xbf16>, vector<152x128xf32> -> vector<152x128xf32>
    %52 = arith.addf %46, %51 : vector<152x128xf32>
    %c0_51 = arith.constant 0 : index
    %c0_52 = arith.constant 0 : index
    %53 = vector.load %arg3[%c0_51, %c0_52] : memref<152x1xf32, #tpu.memory_space<vmem>>, vector<152x1xf32>
    %c0_53 = arith.constant 0 : index
    %c0_54 = arith.constant 0 : index
    %54 = vector.load %arg4[%c0_53, %c0_54] : memref<1x128xf32, #tpu.memory_space<vmem>>, vector<1x128xf32>
    %c0_55 = arith.constant 0 : index
    %c0_56 = arith.constant 0 : index
    %55 = vector.load %arg5[%c0_55, %c0_56] : memref<1x128xf32, #tpu.memory_space<vmem>>, vector<1x128xf32>
    %56 = vector.broadcast %53 : vector<152x1xf32> to vector<152x128xf32>
    %57 = arith.mulf %52, %56 : vector<152x128xf32>
    %cst_57 = arith.constant dense<0.000000e+00> : vector<128xf32>
    %58 = vector.multi_reduction <add>, %57, %cst_57 [0] : vector<152x128xf32> to vector<128xf32>
    %59 = vector.shape_cast %58 : vector<128xf32> to vector<1x128xf32>
    %60 = arith.mulf %57, %52 : vector<152x128xf32>
    %cst_58 = arith.constant dense<0.000000e+00> : vector<128xf32>
    %61 = vector.multi_reduction <add>, %60, %cst_58 [0] : vector<152x128xf32> to vector<128xf32>
    %62 = vector.shape_cast %61 : vector<128xf32> to vector<1x128xf32>
    %cst_59 = arith.constant 7.812500e-03 : f32
    %63 = vector.broadcast %cst_59 : f32 to vector<1x128xf32>
    %64 = arith.mulf %59, %63 : vector<1x128xf32>
    %cst_60 = arith.constant 7.812500e-03 : f32
    %65 = vector.broadcast %cst_60 : f32 to vector<1x128xf32>
    %66 = arith.mulf %62, %65 : vector<1x128xf32>
    %67 = arith.mulf %64, %64 : vector<1x128xf32>
    %68 = arith.subf %66, %67 : vector<1x128xf32>
    %cst_61 = arith.constant 0.000000e+00 : f32
    %69 = vector.broadcast %cst_61 : f32 to vector<1x128xf32>
    %70 = arith.maximumf %68, %69 : vector<1x128xf32>
    %cst_62 = arith.constant 9.99999974E-6 : f32
    %71 = vector.broadcast %cst_62 : f32 to vector<1x128xf32>
    %72 = arith.addf %70, %71 : vector<1x128xf32>
    %73 = math.rsqrt %72 : vector<1x128xf32>
    %74 = arith.mulf %54, %73 : vector<1x128xf32>
    %75 = arith.mulf %64, %74 : vector<1x128xf32>
    %76 = arith.subf %55, %75 : vector<1x128xf32>
    %77 = vector.broadcast %74 : vector<1x128xf32> to vector<152x128xf32>
    %78 = arith.mulf %52, %77 : vector<152x128xf32>
    %79 = vector.broadcast %76 : vector<1x128xf32> to vector<152x128xf32>
    %80 = arith.addf %78, %79 : vector<152x128xf32>
    %cst_63 = arith.constant 0.000000e+00 : f32
    %81 = vector.broadcast %cst_63 : f32 to vector<152x128xf32>
    %82 = arith.maximumf %80, %81 : vector<152x128xf32>
    %83 = arith.truncf %82 : vector<152x128xf32> to vector<152x128xbf16>
    %c0_64 = arith.constant 0 : index
    %c0_65 = arith.constant 0 : index
    %84 = vector.load %arg6[%c0_64, %c0_65] : memref<152x128xbf16, #tpu.memory_space<vmem>>, vector<152x128xbf16>
    tpu.vector_store %arg6[%c0_64, %c0_65], %83 {strides = array<i32>} : memref<152x128xbf16, #tpu.memory_space<vmem>>, vector<152x128xbf16>,
    return
  }
  func.func @transform_0(%arg0: i32) -> (i32, i32, i32) {
    %c0_i32 = arith.constant 0 : i32
    %c0_i32_0 = arith.constant 0 : i32
    %c0_i32_1 = arith.constant 0 : i32
    %c0_i32_2 = arith.constant 0 : i32
    return %c0_i32, %c0_i32_0, %c0_i32_1 : i32, i32, i32
  }
  func.func @transform_1(%arg0: i32) -> (i32, i32, i32) {
    %c0_i32 = arith.constant 0 : i32
    %c0_i32_0 = arith.constant 0 : i32
    %c0_i32_1 = arith.constant 0 : i32
    return %c0_i32, %c0_i32_0, %arg0 : i32, i32, i32
  }
  func.func @transform_2(%arg0: i32) -> (i32, i32) {
    %c0_i32 = arith.constant 0 : i32
    %c0_i32_0 = arith.constant 0 : i32
    %c0_i32_1 = arith.constant 0 : i32
    return %c0_i32, %c0_i32_0 : i32, i32
  }
  func.func @transform_3(%arg0: i32) -> (i32, i32) {
    %c0_i32 = arith.constant 0 : i32
    %c0_i32_0 = arith.constant 0 : i32
    return %c0_i32, %arg0 : i32, i32
  }
  func.func @transform_4(%arg0: i32) -> (i32, i32) {
    %c0_i32 = arith.constant 0 : i32
    %c0_i32_0 = arith.constant 0 : i32
    return %c0_i32, %arg0 : i32, i32
  }
  func.func @transform_5(%arg0: i32) -> (i32, i32) {
    %c0_i32 = arith.constant 0 : i32
    %c0_i32_0 = arith.constant 0 : i32
    return %c0_i32, %arg0 : i32, i32
  }
}

module attributes {stable_mosaic.version = 11 : i64} {
  func.func @kernel(%arg0: i32, %arg1: memref<1x200x256xbf16, #tpu.memory_space<vmem>>, %arg2: memref<9x256x128xbf16, #tpu.memory_space<vmem>>, %arg3: memref<178x1xf32, #tpu.memory_space<vmem>>, %arg4: memref<1x128xf32, #tpu.memory_space<vmem>>, %arg5: memref<1x128xf32, #tpu.memory_space<vmem>>, %arg6: memref<178x128xbf16, #tpu.memory_space<vmem>>, %arg7: memref<128x128xbf16, #tpu.memory_space<vmem>>, %arg8: memref<1x128xf32, #tpu.memory_space<vmem>>, %arg9: memref<1x128xf32, #tpu.memory_space<vmem>>, %arg10: memref<178x128xf32, #tpu.memory_space<vmem>>) attributes {dimension_semantics = [#tpu.dimension_semantics<parallel>], iteration_bounds = array<i64: 2>, scalar_prefetch = 0 : i64, scratch_operands = 0 : i64, tpu.core_type = #tpu.core_type<tc>, window_params = [{pipeline_mode = #tpu.pipeline_mode<synchronous>, transform_indices = @transform_0, window_bounds = array<i64: 1, 200, 256>}, {transform_indices = @transform_1, window_bounds = array<i64: 9, 256, 128>}, {pipeline_mode = #tpu.pipeline_mode<synchronous>, transform_indices = @transform_2, window_bounds = array<i64: 178, 1>}, {transform_indices = @transform_3, window_bounds = array<i64: 1, 128>}, {transform_indices = @transform_4, window_bounds = array<i64: 1, 128>}, {pipeline_mode = #tpu.pipeline_mode<synchronous>, transform_indices = @transform_5, window_bounds = array<i64: 178, 128>}, {transform_indices = @transform_6, window_bounds = array<i64: 128, 128>}, {transform_indices = @transform_7, window_bounds = array<i64: 1, 128>}, {transform_indices = @transform_8, window_bounds = array<i64: 1, 128>}, {transform_indices = @transform_9, window_bounds = array<i64: 178, 128>}]} {
    %c0 = arith.constant 0 : index
    %c0_0 = arith.constant 0 : index
    %c0_1 = arith.constant 0 : index
    %0 = vector.load %arg1[%c0, %c0_0, %c0_1] : memref<1x200x256xbf16, #tpu.memory_space<vmem>>, vector<1x178x256xbf16>
    %1 = vector.shape_cast %0 : vector<1x178x256xbf16> to vector<178x256xbf16>
    %c0_2 = arith.constant 0 : index
    %c0_3 = arith.constant 0 : index
    %c0_4 = arith.constant 0 : index
    %2 = vector.load %arg2[%c0_2, %c0_3, %c0_4] : memref<9x256x128xbf16, #tpu.memory_space<vmem>>, vector<1x256x128xbf16>
    %3 = vector.shape_cast %2 : vector<1x256x128xbf16> to vector<256x128xbf16>
    %cst = arith.constant dense<0.000000e+00> : vector<178x128xf32>
    %4 = tpu.matmul %1, %3, %cst {dimension_numbers = #tpu.dot_dimension_numbers<[1], [0], [0], [1], [0, 0, 1, 1], [], []>} : vector<178x256xbf16>, vector<256x128xbf16>, vector<178x128xf32> -> vector<178x128xf32>
    %c0_5 = arith.constant 0 : index
    %c1 = arith.constant 1 : index
    %c0_6 = arith.constant 0 : index
    %5 = vector.load %arg1[%c0_5, %c1, %c0_6] : memref<1x200x256xbf16, #tpu.memory_space<vmem>>, vector<1x178x256xbf16>
    %6 = vector.shape_cast %5 : vector<1x178x256xbf16> to vector<178x256xbf16>
    %c1_7 = arith.constant 1 : index
    %c0_8 = arith.constant 0 : index
    %c0_9 = arith.constant 0 : index
    %7 = vector.load %arg2[%c1_7, %c0_8, %c0_9] : memref<9x256x128xbf16, #tpu.memory_space<vmem>>, vector<1x256x128xbf16>
    %8 = vector.shape_cast %7 : vector<1x256x128xbf16> to vector<256x128xbf16>
    %cst_10 = arith.constant dense<0.000000e+00> : vector<178x128xf32>
    %9 = tpu.matmul %6, %8, %cst_10 {dimension_numbers = #tpu.dot_dimension_numbers<[1], [0], [0], [1], [0, 0, 1, 1], [], []>} : vector<178x256xbf16>, vector<256x128xbf16>, vector<178x128xf32> -> vector<178x128xf32>
    %10 = arith.addf %4, %9 : vector<178x128xf32>
    %c0_11 = arith.constant 0 : index
    %c2 = arith.constant 2 : index
    %c0_12 = arith.constant 0 : index
    %11 = vector.load %arg1[%c0_11, %c2, %c0_12] : memref<1x200x256xbf16, #tpu.memory_space<vmem>>, vector<1x178x256xbf16>
    %12 = vector.shape_cast %11 : vector<1x178x256xbf16> to vector<178x256xbf16>
    %c2_13 = arith.constant 2 : index
    %c0_14 = arith.constant 0 : index
    %c0_15 = arith.constant 0 : index
    %13 = vector.load %arg2[%c2_13, %c0_14, %c0_15] : memref<9x256x128xbf16, #tpu.memory_space<vmem>>, vector<1x256x128xbf16>
    %14 = vector.shape_cast %13 : vector<1x256x128xbf16> to vector<256x128xbf16>
    %cst_16 = arith.constant dense<0.000000e+00> : vector<178x128xf32>
    %15 = tpu.matmul %12, %14, %cst_16 {dimension_numbers = #tpu.dot_dimension_numbers<[1], [0], [0], [1], [0, 0, 1, 1], [], []>} : vector<178x256xbf16>, vector<256x128xbf16>, vector<178x128xf32> -> vector<178x128xf32>
    %16 = arith.addf %10, %15 : vector<178x128xf32>
    %c0_17 = arith.constant 0 : index
    %c10 = arith.constant 10 : index
    %c0_18 = arith.constant 0 : index
    %17 = vector.load %arg1[%c0_17, %c10, %c0_18] : memref<1x200x256xbf16, #tpu.memory_space<vmem>>, vector<1x178x256xbf16>
    %18 = vector.shape_cast %17 : vector<1x178x256xbf16> to vector<178x256xbf16>
    %c3 = arith.constant 3 : index
    %c0_19 = arith.constant 0 : index
    %c0_20 = arith.constant 0 : index
    %19 = vector.load %arg2[%c3, %c0_19, %c0_20] : memref<9x256x128xbf16, #tpu.memory_space<vmem>>, vector<1x256x128xbf16>
    %20 = vector.shape_cast %19 : vector<1x256x128xbf16> to vector<256x128xbf16>
    %cst_21 = arith.constant dense<0.000000e+00> : vector<178x128xf32>
    %21 = tpu.matmul %18, %20, %cst_21 {dimension_numbers = #tpu.dot_dimension_numbers<[1], [0], [0], [1], [0, 0, 1, 1], [], []>} : vector<178x256xbf16>, vector<256x128xbf16>, vector<178x128xf32> -> vector<178x128xf32>
    %22 = arith.addf %16, %21 : vector<178x128xf32>
    %c0_22 = arith.constant 0 : index
    %c11 = arith.constant 11 : index
    %c0_23 = arith.constant 0 : index
    %23 = vector.load %arg1[%c0_22, %c11, %c0_23] : memref<1x200x256xbf16, #tpu.memory_space<vmem>>, vector<1x178x256xbf16>
    %24 = vector.shape_cast %23 : vector<1x178x256xbf16> to vector<178x256xbf16>
    %c4 = arith.constant 4 : index
    %c0_24 = arith.constant 0 : index
    %c0_25 = arith.constant 0 : index
    %25 = vector.load %arg2[%c4, %c0_24, %c0_25] : memref<9x256x128xbf16, #tpu.memory_space<vmem>>, vector<1x256x128xbf16>
    %26 = vector.shape_cast %25 : vector<1x256x128xbf16> to vector<256x128xbf16>
    %cst_26 = arith.constant dense<0.000000e+00> : vector<178x128xf32>
    %27 = tpu.matmul %24, %26, %cst_26 {dimension_numbers = #tpu.dot_dimension_numbers<[1], [0], [0], [1], [0, 0, 1, 1], [], []>} : vector<178x256xbf16>, vector<256x128xbf16>, vector<178x128xf32> -> vector<178x128xf32>
    %28 = arith.addf %22, %27 : vector<178x128xf32>
    %c0_27 = arith.constant 0 : index
    %c12 = arith.constant 12 : index
    %c0_28 = arith.constant 0 : index
    %29 = vector.load %arg1[%c0_27, %c12, %c0_28] : memref<1x200x256xbf16, #tpu.memory_space<vmem>>, vector<1x178x256xbf16>
    %30 = vector.shape_cast %29 : vector<1x178x256xbf16> to vector<178x256xbf16>
    %c5 = arith.constant 5 : index
    %c0_29 = arith.constant 0 : index
    %c0_30 = arith.constant 0 : index
    %31 = vector.load %arg2[%c5, %c0_29, %c0_30] : memref<9x256x128xbf16, #tpu.memory_space<vmem>>, vector<1x256x128xbf16>
    %32 = vector.shape_cast %31 : vector<1x256x128xbf16> to vector<256x128xbf16>
    %cst_31 = arith.constant dense<0.000000e+00> : vector<178x128xf32>
    %33 = tpu.matmul %30, %32, %cst_31 {dimension_numbers = #tpu.dot_dimension_numbers<[1], [0], [0], [1], [0, 0, 1, 1], [], []>} : vector<178x256xbf16>, vector<256x128xbf16>, vector<178x128xf32> -> vector<178x128xf32>
    %34 = arith.addf %28, %33 : vector<178x128xf32>
    %c0_32 = arith.constant 0 : index
    %c20 = arith.constant 20 : index
    %c0_33 = arith.constant 0 : index
    %35 = vector.load %arg1[%c0_32, %c20, %c0_33] : memref<1x200x256xbf16, #tpu.memory_space<vmem>>, vector<1x178x256xbf16>
    %36 = vector.shape_cast %35 : vector<1x178x256xbf16> to vector<178x256xbf16>
    %c6 = arith.constant 6 : index
    %c0_34 = arith.constant 0 : index
    %c0_35 = arith.constant 0 : index
    %37 = vector.load %arg2[%c6, %c0_34, %c0_35] : memref<9x256x128xbf16, #tpu.memory_space<vmem>>, vector<1x256x128xbf16>
    %38 = vector.shape_cast %37 : vector<1x256x128xbf16> to vector<256x128xbf16>
    %cst_36 = arith.constant dense<0.000000e+00> : vector<178x128xf32>
    %39 = tpu.matmul %36, %38, %cst_36 {dimension_numbers = #tpu.dot_dimension_numbers<[1], [0], [0], [1], [0, 0, 1, 1], [], []>} : vector<178x256xbf16>, vector<256x128xbf16>, vector<178x128xf32> -> vector<178x128xf32>
    %40 = arith.addf %34, %39 : vector<178x128xf32>
    %c0_37 = arith.constant 0 : index
    %c21 = arith.constant 21 : index
    %c0_38 = arith.constant 0 : index
    %41 = vector.load %arg1[%c0_37, %c21, %c0_38] : memref<1x200x256xbf16, #tpu.memory_space<vmem>>, vector<1x178x256xbf16>
    %42 = vector.shape_cast %41 : vector<1x178x256xbf16> to vector<178x256xbf16>
    %c7 = arith.constant 7 : index
    %c0_39 = arith.constant 0 : index
    %c0_40 = arith.constant 0 : index
    %43 = vector.load %arg2[%c7, %c0_39, %c0_40] : memref<9x256x128xbf16, #tpu.memory_space<vmem>>, vector<1x256x128xbf16>
    %44 = vector.shape_cast %43 : vector<1x256x128xbf16> to vector<256x128xbf16>
    %cst_41 = arith.constant dense<0.000000e+00> : vector<178x128xf32>
    %45 = tpu.matmul %42, %44, %cst_41 {dimension_numbers = #tpu.dot_dimension_numbers<[1], [0], [0], [1], [0, 0, 1, 1], [], []>} : vector<178x256xbf16>, vector<256x128xbf16>, vector<178x128xf32> -> vector<178x128xf32>
    %46 = arith.addf %40, %45 : vector<178x128xf32>
    %c0_42 = arith.constant 0 : index
    %c22 = arith.constant 22 : index
    %c0_43 = arith.constant 0 : index
    %47 = vector.load %arg1[%c0_42, %c22, %c0_43] : memref<1x200x256xbf16, #tpu.memory_space<vmem>>, vector<1x178x256xbf16>
    %48 = vector.shape_cast %47 : vector<1x178x256xbf16> to vector<178x256xbf16>
    %c8 = arith.constant 8 : index
    %c0_44 = arith.constant 0 : index
    %c0_45 = arith.constant 0 : index
    %49 = vector.load %arg2[%c8, %c0_44, %c0_45] : memref<9x256x128xbf16, #tpu.memory_space<vmem>>, vector<1x256x128xbf16>
    %50 = vector.shape_cast %49 : vector<1x256x128xbf16> to vector<256x128xbf16>
    %cst_46 = arith.constant dense<0.000000e+00> : vector<178x128xf32>
    %51 = tpu.matmul %48, %50, %cst_46 {dimension_numbers = #tpu.dot_dimension_numbers<[1], [0], [0], [1], [0, 0, 1, 1], [], []>} : vector<178x256xbf16>, vector<256x128xbf16>, vector<178x128xf32> -> vector<178x128xf32>
    %52 = arith.addf %46, %51 : vector<178x128xf32>
    %c0_47 = arith.constant 0 : index
    %c0_48 = arith.constant 0 : index
    %53 = vector.load %arg3[%c0_47, %c0_48] : memref<178x1xf32, #tpu.memory_space<vmem>>, vector<178x1xf32>
    %c0_49 = arith.constant 0 : index
    %c0_50 = arith.constant 0 : index
    %54 = vector.load %arg4[%c0_49, %c0_50] : memref<1x128xf32, #tpu.memory_space<vmem>>, vector<1x128xf32>
    %c0_51 = arith.constant 0 : index
    %c0_52 = arith.constant 0 : index
    %55 = vector.load %arg5[%c0_51, %c0_52] : memref<1x128xf32, #tpu.memory_space<vmem>>, vector<1x128xf32>
    %56 = vector.broadcast %53 : vector<178x1xf32> to vector<178x128xf32>
    %57 = arith.mulf %52, %56 : vector<178x128xf32>
    %cst_53 = arith.constant dense<0.000000e+00> : vector<128xf32>
    %58 = vector.multi_reduction <add>, %57, %cst_53 [0] : vector<178x128xf32> to vector<128xf32>
    %59 = vector.shape_cast %58 : vector<128xf32> to vector<1x128xf32>
    %60 = arith.mulf %57, %52 : vector<178x128xf32>
    %cst_54 = arith.constant dense<0.000000e+00> : vector<128xf32>
    %61 = vector.multi_reduction <add>, %60, %cst_54 [0] : vector<178x128xf32> to vector<128xf32>
    %62 = vector.shape_cast %61 : vector<128xf32> to vector<1x128xf32>
    %cst_55 = arith.constant 7.812500e-03 : f32
    %63 = vector.broadcast %cst_55 : f32 to vector<1x128xf32>
    %64 = arith.mulf %59, %63 : vector<1x128xf32>
    %cst_56 = arith.constant 7.812500e-03 : f32
    %65 = vector.broadcast %cst_56 : f32 to vector<1x128xf32>
    %66 = arith.mulf %62, %65 : vector<1x128xf32>
    %67 = arith.mulf %64, %64 : vector<1x128xf32>
    %68 = arith.subf %66, %67 : vector<1x128xf32>
    %cst_57 = arith.constant 0.000000e+00 : f32
    %69 = vector.broadcast %cst_57 : f32 to vector<1x128xf32>
    %70 = arith.maximumf %68, %69 : vector<1x128xf32>
    %cst_58 = arith.constant 9.99999974E-6 : f32
    %71 = vector.broadcast %cst_58 : f32 to vector<1x128xf32>
    %72 = arith.addf %70, %71 : vector<1x128xf32>
    %73 = math.rsqrt %72 : vector<1x128xf32>
    %74 = arith.mulf %54, %73 : vector<1x128xf32>
    %75 = arith.mulf %64, %74 : vector<1x128xf32>
    %76 = arith.subf %55, %75 : vector<1x128xf32>
    %77 = vector.broadcast %74 : vector<1x128xf32> to vector<178x128xf32>
    %78 = arith.mulf %52, %77 : vector<178x128xf32>
    %79 = vector.broadcast %76 : vector<1x128xf32> to vector<178x128xf32>
    %80 = arith.addf %78, %79 : vector<178x128xf32>
    %c0_59 = arith.constant 0 : index
    %c0_60 = arith.constant 0 : index
    %81 = vector.load %arg6[%c0_59, %c0_60] : memref<178x128xbf16, #tpu.memory_space<vmem>>, vector<178x128xbf16>
    %c0_61 = arith.constant 0 : index
    %c0_62 = arith.constant 0 : index
    %82 = vector.load %arg7[%c0_61, %c0_62] : memref<128x128xbf16, #tpu.memory_space<vmem>>, vector<128x128xbf16>
    %cst_63 = arith.constant dense<0.000000e+00> : vector<178x128xf32>
    %83 = tpu.matmul %81, %82, %cst_63 {dimension_numbers = #tpu.dot_dimension_numbers<[1], [0], [0], [1], [0, 0, 1, 1], [], []>} : vector<178x128xbf16>, vector<128x128xbf16>, vector<178x128xf32> -> vector<178x128xf32>
    %c0_64 = arith.constant 0 : index
    %c0_65 = arith.constant 0 : index
    %84 = vector.load %arg8[%c0_64, %c0_65] : memref<1x128xf32, #tpu.memory_space<vmem>>, vector<1x128xf32>
    %c0_66 = arith.constant 0 : index
    %c0_67 = arith.constant 0 : index
    %85 = vector.load %arg9[%c0_66, %c0_67] : memref<1x128xf32, #tpu.memory_space<vmem>>, vector<1x128xf32>
    %86 = vector.broadcast %53 : vector<178x1xf32> to vector<178x128xf32>
    %87 = arith.mulf %83, %86 : vector<178x128xf32>
    %cst_68 = arith.constant dense<0.000000e+00> : vector<128xf32>
    %88 = vector.multi_reduction <add>, %87, %cst_68 [0] : vector<178x128xf32> to vector<128xf32>
    %89 = vector.shape_cast %88 : vector<128xf32> to vector<1x128xf32>
    %90 = arith.mulf %87, %83 : vector<178x128xf32>
    %cst_69 = arith.constant dense<0.000000e+00> : vector<128xf32>
    %91 = vector.multi_reduction <add>, %90, %cst_69 [0] : vector<178x128xf32> to vector<128xf32>
    %92 = vector.shape_cast %91 : vector<128xf32> to vector<1x128xf32>
    %cst_70 = arith.constant 7.812500e-03 : f32
    %93 = vector.broadcast %cst_70 : f32 to vector<1x128xf32>
    %94 = arith.mulf %89, %93 : vector<1x128xf32>
    %cst_71 = arith.constant 7.812500e-03 : f32
    %95 = vector.broadcast %cst_71 : f32 to vector<1x128xf32>
    %96 = arith.mulf %92, %95 : vector<1x128xf32>
    %97 = arith.mulf %94, %94 : vector<1x128xf32>
    %98 = arith.subf %96, %97 : vector<1x128xf32>
    %cst_72 = arith.constant 0.000000e+00 : f32
    %99 = vector.broadcast %cst_72 : f32 to vector<1x128xf32>
    %100 = arith.maximumf %98, %99 : vector<1x128xf32>
    %cst_73 = arith.constant 9.99999974E-6 : f32
    %101 = vector.broadcast %cst_73 : f32 to vector<1x128xf32>
    %102 = arith.addf %100, %101 : vector<1x128xf32>
    %103 = math.rsqrt %102 : vector<1x128xf32>
    %104 = arith.mulf %84, %103 : vector<1x128xf32>
    %105 = arith.mulf %94, %104 : vector<1x128xf32>
    %106 = arith.subf %85, %105 : vector<1x128xf32>
    %107 = vector.broadcast %104 : vector<1x128xf32> to vector<178x128xf32>
    %108 = arith.mulf %83, %107 : vector<178x128xf32>
    %109 = vector.broadcast %106 : vector<1x128xf32> to vector<178x128xf32>
    %110 = arith.addf %108, %109 : vector<178x128xf32>
    %111 = arith.addf %80, %110 : vector<178x128xf32>
    %cst_74 = arith.constant 0.000000e+00 : f32
    %112 = vector.broadcast %cst_74 : f32 to vector<178x128xf32>
    %113 = arith.maximumf %111, %112 : vector<178x128xf32>
    %c0_75 = arith.constant 0 : index
    %c0_76 = arith.constant 0 : index
    %114 = vector.load %arg10[%c0_75, %c0_76] : memref<178x128xf32, #tpu.memory_space<vmem>>, vector<178x128xf32>
    tpu.vector_store %arg10[%c0_75, %c0_76], %113 {strides = array<i32>} : memref<178x128xf32, #tpu.memory_space<vmem>>, vector<178x128xf32>,
    return
  }
  func.func @transform_0(%arg0: i32) -> (i32, i32, i32) {
    %c0_i32 = arith.constant 0 : i32
    %c0_i32_0 = arith.constant 0 : i32
    %c0_i32_1 = arith.constant 0 : i32
    %c0_i32_2 = arith.constant 0 : i32
    return %c0_i32, %c0_i32_0, %c0_i32_1 : i32, i32, i32
  }
  func.func @transform_1(%arg0: i32) -> (i32, i32, i32) {
    %c0_i32 = arith.constant 0 : i32
    %c0_i32_0 = arith.constant 0 : i32
    %c0_i32_1 = arith.constant 0 : i32
    return %c0_i32, %c0_i32_0, %arg0 : i32, i32, i32
  }
  func.func @transform_2(%arg0: i32) -> (i32, i32) {
    %c0_i32 = arith.constant 0 : i32
    %c0_i32_0 = arith.constant 0 : i32
    %c0_i32_1 = arith.constant 0 : i32
    return %c0_i32, %c0_i32_0 : i32, i32
  }
  func.func @transform_3(%arg0: i32) -> (i32, i32) {
    %c0_i32 = arith.constant 0 : i32
    %c0_i32_0 = arith.constant 0 : i32
    return %c0_i32, %arg0 : i32, i32
  }
  func.func @transform_4(%arg0: i32) -> (i32, i32) {
    %c0_i32 = arith.constant 0 : i32
    %c0_i32_0 = arith.constant 0 : i32
    return %c0_i32, %arg0 : i32, i32
  }
  func.func @transform_5(%arg0: i32) -> (i32, i32) {
    %c0_i32 = arith.constant 0 : i32
    %c0_i32_0 = arith.constant 0 : i32
    %c0_i32_1 = arith.constant 0 : i32
    return %c0_i32, %c0_i32_0 : i32, i32
  }
  func.func @transform_6(%arg0: i32) -> (i32, i32) {
    %c0_i32 = arith.constant 0 : i32
    %c0_i32_0 = arith.constant 0 : i32
    return %c0_i32, %arg0 : i32, i32
  }
  func.func @transform_7(%arg0: i32) -> (i32, i32) {
    %c0_i32 = arith.constant 0 : i32
    %c0_i32_0 = arith.constant 0 : i32
    return %c0_i32, %arg0 : i32, i32
  }
  func.func @transform_8(%arg0: i32) -> (i32, i32) {
    %c0_i32 = arith.constant 0 : i32
    %c0_i32_0 = arith.constant 0 : i32
    return %c0_i32, %arg0 : i32, i32
  }
  func.func @transform_9(%arg0: i32) -> (i32, i32) {
    %c0_i32 = arith.constant 0 : i32
    %c0_i32_0 = arith.constant 0 : i32
    return %c0_i32, %arg0 : i32, i32
  }
}

</mosaic_0001>

<llo_original>
// kernel: basic_block_forward.2
$region0: #{basic_block_forward.2}
  #allocation0 [shape = 'u32[]', space=smem, size = 0x4, offset = 0x4, fixed_abs, tag = 'smem constant byte address 0x4 - core index']
  #allocation1 [shape = 'u32[144,128]{1,0:T(1,128)}', space=vmem, size = 0x12000, scoped, tag = 'internal scratch']
  %s0 = inlined_call_operand.vmem [shape: bf16[4,162,128], index: 0, kind: input, shape index: {}]
  %s1 = inlined_call_operand.vmem [shape: bf16[9,128,256], index: 1, kind: input, shape index: {}]
  %s2 = inlined_call_operand.vmem [shape: f32[152,1], index: 2, kind: input, shape index: {}]
  %s3 = inlined_call_operand.vmem [shape: f32[1,256], index: 3, kind: input, shape index: {}]
  %s4 = inlined_call_operand.vmem [shape: f32[1,256], index: 4, kind: input, shape index: {}]
  %s5 = inlined_call_operand.vmem [shape: bf16[152,256], index: 5, kind: output, shape index: {}]
  %s6 = sld [smem:[#allocation0]]
  $region131: #{basic_block_forward.2} parent=0
    _
  %s8 = ssub.s32 1, %s6
  %s9 = scalar_select 0, %s8, %s6
  $region1: #{basic_block_forward.2} parent=0
    #allocation2 [shape = 'u8[589824]{0}', space=vmem, size = 0x90000, scoped, tag = 'input window, operand 1']
    #allocation3 [shape = 'u8[77824]{0}', space=vmem, size = 0x13000, scoped, tag = 'output window, operand 0']
    loop: start=0, step=1, limit=4
    $region2: #{basic_block_forward.2} parent=1 // loop_pre_header
      _
    $region3: #{basic_block_forward.2} parent=1 // loop_header
      %s11 = sphi 0, %s15
      %p12 = scmp.ge.s32.totalorder %s11, 4
      %s19 = sphi 0, %s19
      %s21 = sphi 0, %s19
      %s22 = sphi 0, %s21
      %s36 = sphi 0, %s22
      %s42 = sphi 0, %s44
      %s45 = sphi 0, %s42
      %s46 = sphi 0, %s45
      %s62 = sphi 0, %s46
      %s66 = sphi 0, %s66
      %s68 = sphi 0, %s66
      %s69 = sphi 0, %s68
      %s83 = sphi 0, %s69
      %s89 = sphi 0, %s91
      %s92 = sphi 0, %s89
      %s93 = sphi 0, %s92
      %s109 = sphi 0, %s93
      %s115 = sphi 0, %s117
      %s118 = sphi 0, %s115
      %s119 = sphi 0, %s118
      %s135 = sphi 0, %s119
      %s141 = sphi 0, %s143
      %s144 = sphi 0, %s141
      %s145 = sphi 0, %s144
      %s161 = sphi 0, %s145
    $region4: #{basic_block_forward.2} parent=1 // loop_header_branch
      %14 = sbr.rel (%p12) target = $region8
    $region5: #{basic_block_forward.2} parent=1 // loop_body
      %s16 = ssub.s32 %s11, 1
      %s17 = ssub.s32 %s11, 2
      %s18 = sadd.s32 %s11, 1
      %s20 = sadd.s32 %s19, 1
      %p23 = scmp.eq.s32.totalorder %s11, 1
      %p24 = scmp.ne.s32.totalorder %s19, %s21
      %p25 = scmp.eq.s32.totalorder %s11, 0
      %p26 = por %p24, %p25
      %p27 = scmp.ne.s32.totalorder %s19, %s21
      %p28 = scmp.eq.s32.totalorder %s16, 1
      %p29 = por %p27, %p28
      %p30 = scmp.ne.s32.totalorder %s21, %s22
      %p31 = scmp.eq.s32.totalorder %s16, 0
      %p32 = por %p30, %p31
      %p33 = scmp.ne.s32.totalorder %s21, %s22
      %p34 = scmp.eq.s32.totalorder %s17, 1
      %p35 = por %p33, %p34
      %p37 = scmp.ne.s32.totalorder %s22, %s36
      %p38 = scmp.eq.s32.totalorder %s17, 0
      %p39 = por %p37, %p38
      %s40 = ssub.s32 %s11, %s18
      %p41 = scmp.eq.s32.totalorder %s40, 0
      %s43 = sadd.s32 %s42, 1
      %s44 = scalar_select %p41, %s42, %s43
      %p47 = pneg %p41
      %p48 = scmp.eq.s32.totalorder %s11, 1
      %p49 = por %p47, %p48
      %p50 = scmp.ne.s32.totalorder %s42, %s45
      %p51 = scmp.eq.s32.totalorder %s11, 0
      %p52 = por %p50, %p51
      %p53 = scmp.ne.s32.totalorder %s42, %s45
      %p54 = scmp.eq.s32.totalorder %s16, 1
      %p55 = por %p53, %p54
      %p56 = scmp.ne.s32.totalorder %s45, %s46
      %p57 = scmp.eq.s32.totalorder %s16, 0
      %p58 = por %p56, %p57
      %p59 = scmp.ne.s32.totalorder %s45, %s46
      %p60 = scmp.eq.s32.totalorder %s17, 1
      %p61 = por %p59, %p60
      %p63 = scmp.ne.s32.totalorder %s46, %s62
      %p64 = scmp.eq.s32.totalorder %s17, 0
      %p65 = por %p63, %p64
      %s67 = sadd.s32 %s66, 1
      %p70 = scmp.eq.s32.totalorder %s11, 1
      %p71 = scmp.ne.s32.totalorder %s66, %s68
      %p72 = scmp.eq.s32.totalorder %s11, 0
      %p73 = por %p71, %p72
      %p74 = scmp.ne.s32.totalorder %s66, %s68
      %p75 = scmp.eq.s32.totalorder %s16, 1
      %p76 = por %p74, %p75
      %p77 = scmp.ne.s32.totalorder %s68, %s69
      %p78 = scmp.eq.s32.totalorder %s16, 0
      %p79 = por %p77, %p78
      %p80 = scmp.ne.s32.totalorder %s68, %s69
      %p81 = scmp.eq.s32.totalorder %s17, 1
      %p82 = por %p80, %p81
      %p84 = scmp.ne.s32.totalorder %s69, %s83
      %p85 = scmp.eq.s32.totalorder %s17, 0
      %p86 = por %p84, %p85
      %s87 = ssub.s32 %s11, %s18
      %p88 = scmp.eq.s32.totalorder %s87, 0
      %s90 = sadd.s32 %s89, 1
      %s91 = scalar_select %p88, %s89, %s90
      %p94 = pneg %p88
      %p95 = scmp.eq.s32.totalorder %s11, 1
      %p96 = por %p94, %p95
      %p97 = scmp.ne.s32.totalorder %s89, %s92
      %p98 = scmp.eq.s32.totalorder %s11, 0
      %p99 = por %p97, %p98
      %p100 = scmp.ne.s32.totalorder %s89, %s92
      %p101 = scmp.eq.s32.totalorder %s16, 1
      %p102 = por %p100, %p101
      %p103 = scmp.ne.s32.totalorder %s92, %s93
      %p104 = scmp.eq.s32.totalorder %s16, 0
      %p105 = por %p103, %p104
      %p106 = scmp.ne.s32.totalorder %s92, %s93
      %p107 = scmp.eq.s32.totalorder %s17, 1
      %p108 = por %p106, %p107
      %p110 = scmp.ne.s32.totalorder %s93, %s109
      %p111 = scmp.eq.s32.totalorder %s17, 0
      %p112 = por %p110, %p111
      %s113 = ssub.s32 %s11, %s18
      %p114 = scmp.eq.s32.totalorder %s113, 0
      %s116 = sadd.s32 %s115, 1
      %s117 = scalar_select %p114, %s115, %s116
      %p120 = pneg %p114
      %p121 = scmp.eq.s32.totalorder %s11, 1
      %p122 = por %p120, %p121
      %p123 = scmp.ne.s32.totalorder %s115, %s118
      %p124 = scmp.eq.s32.totalorder %s11, 0
      %p125 = por %p123, %p124
      %p126 = scmp.ne.s32.totalorder %s115, %s118
      %p127 = scmp.eq.s32.totalorder %s16, 1
      %p128 = por %p126, %p127
      %p129 = scmp.ne.s32.totalorder %s118, %s119
      %p130 = scmp.eq.s32.totalorder %s16, 0
      %p131 = por %p129, %p130
      %p132 = scmp.ne.s32.totalorder %s118, %s119
      %p133 = scmp.eq.s32.totalorder %s17, 1
      %p134 = por %p132, %p133
      %p136 = scmp.ne.s32.totalorder %s119, %s135
      %p137 = scmp.eq.s32.totalorder %s17, 0
      %p138 = por %p136, %p137
      %s139 = ssub.s32 %s11, %s18
      %p140 = scmp.eq.s32.totalorder %s139, 0
      %s142 = sadd.s32 %s141, 1
      %s143 = scalar_select %p140, %s141, %s142
      %p146 = pneg %p140
      %p147 = scmp.eq.s32.totalorder %s11, 1
      %p148 = por %p146, %p147
      %p149 = scmp.ne.s32.totalorder %s141, %s144
      %p150 = scmp.eq.s32.totalorder %s11, 0
      %p151 = por %p149, %p150
      %p152 = scmp.ne.s32.totalorder %s141, %s144
      %p153 = scmp.eq.s32.totalorder %s16, 1
      %p154 = por %p152, %p153
      %p155 = scmp.ne.s32.totalorder %s144, %s145
      %p156 = scmp.eq.s32.totalorder %s16, 0
      %p157 = por %p155, %p156
      %p158 = scmp.ne.s32.totalorder %s144, %s145
      %p159 = scmp.eq.s32.totalorder %s17, 1
      %p160 = por %p158, %p159
      %p162 = scmp.ne.s32.totalorder %s145, %s161
      %p163 = scmp.eq.s32.totalorder %s17, 0
      %p164 = por %p162, %p163
      %p165 = scmp.le.s32.totalorder 1, %s11
      %p166 = scmp.lt.s32.totalorder %s11, 3
      %p167 = pnand %p165, %p166
      %p168 = pneg %p167
      // Predicated region
      $region9: #{basic_block_forward.2} parent=5 // pred_check
        _
      $region10: #{basic_block_forward.2} parent=5 // pred_check_branch
        %170 = sbr.rel (%p167) target = $region12
      $region11: #{basic_block_forward.2} parent=5 // pred_region
        %s171 = ssub.s32 %s11, 1
        // Predicated region
        $region13: #{basic_block_forward.2} parent=11 // pred_check
          %p172 = pneg %p32
        $region14: #{basic_block_forward.2} parent=11 // pred_check_branch
          %174 = sbr.rel (%p172) target = $region16
        $region15: #{basic_block_forward.2} parent=11 // pred_region
          _
        $region16: #{basic_block_forward.2} parent=11 // pred_fallthru
          _
        // Predicated region
        $region17: #{basic_block_forward.2} parent=11 // pred_check
          %p175 = pneg %p79
        $region18: #{basic_block_forward.2} parent=11 // pred_check_branch
          %177 = sbr.rel (%p175) target = $region20
        $region19: #{basic_block_forward.2} parent=11 // pred_region
          _
        $region20: #{basic_block_forward.2} parent=11 // pred_fallthru
          _
      $region12: #{basic_block_forward.2} parent=5 // pred_fallthru
        _
      %p178 = scmp.lt.s32.totalorder %s11, 2
      // Predicated region
      $region21: #{basic_block_forward.2} parent=5 // pred_check
        %p179 = pneg %p178
      $region22: #{basic_block_forward.2} parent=5 // pred_check_branch
        %181 = sbr.rel (%p179) target = $region24
      $region23: #{basic_block_forward.2} parent=5 // pred_region
        // Predicated region
        $region25: #{basic_block_forward.2} parent=23 // pred_check
          %p182 = pneg %p52
        $region26: #{basic_block_forward.2} parent=23 // pred_check_branch
          %184 = sbr.rel (%p182) target = $region28
        $region27: #{basic_block_forward.2} parent=23 // pred_region
          %s185 = sand.u32 %s42, 1
          %s186 = sand.u32 %s42, 1
          %s187 = smul.addr %s186, 576
          %s188 = scalar_lea.vmem [#allocation2], %s187
          %s189 = smul.addr %s11, 4
          %s190 = scalar_lea.vmem %s1, %s189
          // Predicated region
          $region29: #{basic_block_forward.2} parent=27 // pred_check
            _
          $region30: #{basic_block_forward.2} parent=27 // pred_check_branch
            %192 = sbr.rel (0) target = $region32
          $region31: #{basic_block_forward.2} parent=27 // pred_region
            // Predicated region
            $region33: #{basic_block_forward.2} parent=31 // pred_check
              _
            $region34: #{basic_block_forward.2} parent=31 // pred_check_branch
              %194 = sbr.rel target = $region36
            $region35: #{basic_block_forward.2} parent=31 // pred_region
              // Predicated region
              $region48: #{basic_block_forward.2} parent=35 // pred_check
                _
              $region49: #{basic_block_forward.2} parent=35 // pred_check_branch
                %496 = sbr.rel (0) target = $region51
              $region50: #{basic_block_forward.2} parent=35 // pred_region
                loop: start=0, step=1, limit=1
                $region52: #{basic_block_forward.2} parent=50 // loop_pre_header
                  _
                $region53: #{basic_block_forward.2} parent=50 // loop_header
                  %s498 = sphi 0, %s502
                  %p499 = scmp.ge.s32.totalorder %s498, 1
                  %s503 = sphi %s190, %s190
                  %s504 = sphi %s188, %s188
                $region54: #{basic_block_forward.2} parent=50 // loop_header_branch
                  %501 = sbr.rel (%p499) target = $region58
                $region55: #{basic_block_forward.2} parent=50 // loop_body
                  _
                $region56: #{basic_block_forward.2} parent=50 // loop_footer
                  %s502 = sadd.s32 1, %s498
                $region57: #{basic_block_forward.2} parent=50 // loop_footer_branch
                  %497 = sbr.rel target = $region53
                $region58: #{basic_block_forward.2} parent=50 // loop_exit
                  _
                %s506 = ssub.s32 16, 1
                loop: start=0, step=1, limit=1
                $region59: #{basic_block_forward.2} parent=50 // loop_pre_header
                  _
                $region60: #{basic_block_forward.2} parent=50 // loop_header
                  %s508 = sphi 0, %s512
                  %p509 = scmp.ge.s32.totalorder %s508, 1
                  %s513 = sphi %s190, %s190
                  %s514 = sphi %s188, %s188
                $region61: #{basic_block_forward.2} parent=50 // loop_header_branch
                  %511 = sbr.rel (%p509) target = $region65
                $region62: #{basic_block_forward.2} parent=50 // loop_body
                  %v515 = vld [vmem:[%s513] sm:%s506]
                  %516 = vst [vmem:[%s514] sm:%s506] %v515
                  %v517 = vld [vmem:[%s513 + $0x8] sm:%s506]
                  %518 = vst [vmem:[%s514 + $0x4] sm:%s506] %v517
                  %v519 = vld [vmem:[%s513 + $0x10] sm:%s506]
                  %520 = vst [vmem:[%s514 + $0x8] sm:%s506] %v519
                  %v521 = vld [vmem:[%s513 + $0x18] sm:%s506]
                  %522 = vst [vmem:[%s514 + $0xc] sm:%s506] %v521
                  %v523 = vld [vmem:[%s513 + $0x20] sm:%s506]
                  %524 = vst [vmem:[%s514 + $0x10] sm:%s506] %v523
                  %v525 = vld [vmem:[%s513 + $0x28] sm:%s506]
                  %526 = vst [vmem:[%s514 + $0x14] sm:%s506] %v525
                  %v527 = vld [vmem:[%s513 + $0x30] sm:%s506]
                  %528 = vst [vmem:[%s514 + $0x18] sm:%s506] %v527
                  %v529 = vld [vmem:[%s513 + $0x38] sm:%s506]
                  %530 = vst [vmem:[%s514 + $0x1c] sm:%s506] %v529
                  %v531 = vld [vmem:[%s513 + $0x40] sm:%s506]
                  %532 = vst [vmem:[%s514 + $0x20] sm:%s506] %v531
                  %v533 = vld [vmem:[%s513 + $0x48] sm:%s506]
                  %534 = vst [vmem:[%s514 + $0x24] sm:%s506] %v533
                  %v535 = vld [vmem:[%s513 + $0x50] sm:%s506]
                  %536 = vst [vmem:[%s514 + $0x28] sm:%s506] %v535
                  %v537 = vld [vmem:[%s513 + $0x58] sm:%s506]
                  %538 = vst [vmem:[%s514 + $0x2c] sm:%s506] %v537
                  %v539 = vld [vmem:[%s513 + $0x60] sm:%s506]
                  %540 = vst [vmem:[%s514 + $0x30] sm:%s506] %v539
                  %v541 = vld [vmem:[%s513 + $0x68] sm:%s506]
                  %542 = vst [vmem:[%s514 + $0x34] sm:%s506] %v541
                  %v543 = vld [vmem:[%s513 + $0x70] sm:%s506]
                  %544 = vst [vmem:[%s514 + $0x38] sm:%s506] %v543
                  %v545 = vld [vmem:[%s513 + $0x78] sm:%s506]
                  %546 = vst [vmem:[%s514 + $0x3c] sm:%s506] %v545
                  %v547 = vld [vmem:[%s513 + $0x80] sm:%s506]
                  %548 = vst [vmem:[%s514 + $0x40] sm:%s506] %v547
                  %v549 = vld [vmem:[%s513 + $0x88] sm:%s506]
                  %550 = vst [vmem:[%s514 + $0x44] sm:%s506] %v549
                  %v551 = vld [vmem:[%s513 + $0x90] sm:%s506]
                  %552 = vst [vmem:[%s514 + $0x48] sm:%s506] %v551
                  %v553 = vld [vmem:[%s513 + $0x98] sm:%s506]
                  %554 = vst [vmem:[%s514 + $0x4c] sm:%s506] %v553
                  %v555 = vld [vmem:[%s513 + $0xa0] sm:%s506]
                  %556 = vst [vmem:[%s514 + $0x50] sm:%s506] %v555
                  %v557 = vld [vmem:[%s513 + $0xa8] sm:%s506]
                  %558 = vst [vmem:[%s514 + $0x54] sm:%s506] %v557
                  %v559 = vld [vmem:[%s513 + $0xb0] sm:%s506]
                  %560 = vst [vmem:[%s514 + $0x58] sm:%s506] %v559
                  %v561 = vld [vmem:[%s513 + $0xb8] sm:%s506]
                  %562 = vst [vmem:[%s514 + $0x5c] sm:%s506] %v561
                  %v563 = vld [vmem:[%s513 + $0xc0] sm:%s506]
                  %564 = vst [vmem:[%s514 + $0x60] sm:%s506] %v563
                  %v565 = vld [vmem:[%s513 + $0xc8] sm:%s506]
                  %566 = vst [vmem:[%s514 + $0x64] sm:%s506] %v565
                  %v567 = vld [vmem:[%s513 + $0xd0] sm:%s506]
                  %568 = vst [vmem:[%s514 + $0x68] sm:%s506] %v567
                  %v569 = vld [vmem:[%s513 + $0xd8] sm:%s506]
                  %570 = vst [vmem:[%s514 + $0x6c] sm:%s506] %v569
                  %v571 = vld [vmem:[%s513 + $0xe0] sm:%s506]
                  %572 = vst [vmem:[%s514 + $0x70] sm:%s506] %v571
                  %v573 = vld [vmem:[%s513 + $0xe8] sm:%s506]
                  %574 = vst [vmem:[%s514 + $0x74] sm:%s506] %v573
                  %v575 = vld [vmem:[%s513 + $0xf0] sm:%s506]
                  %576 = vst [vmem:[%s514 + $0x78] sm:%s506] %v575
                  %v577 = vld [vmem:[%s513 + $0xf8] sm:%s506]
                  %578 = vst [vmem:[%s514 + $0x7c] sm:%s506] %v577
                  %v579 = vld [vmem:[%s513 + $0x100] sm:%s506]
                  %580 = vst [vmem:[%s514 + $0x80] sm:%s506] %v579
                  %v581 = vld [vmem:[%s513 + $0x108] sm:%s506]
                  %582 = vst [vmem:[%s514 + $0x84] sm:%s506] %v581
                  %v583 = vld [vmem:[%s513 + $0x110] sm:%s506]
                  %584 = vst [vmem:[%s514 + $0x88] sm:%s506] %v583
                  %v585 = vld [vmem:[%s513 + $0x118] sm:%s506]
                  %586 = vst [vmem:[%s514 + $0x8c] sm:%s506] %v585
                  %v587 = vld [vmem:[%s513 + $0x120] sm:%s506]
                  %588 = vst [vmem:[%s514 + $0x90] sm:%s506] %v587
                  %v589 = vld [vmem:[%s513 + $0x128] sm:%s506]
                  %590 = vst [vmem:[%s514 + $0x94] sm:%s506] %v589
                  %v591 = vld [vmem:[%s513 + $0x130] sm:%s506]
                  %592 = vst [vmem:[%s514 + $0x98] sm:%s506] %v591
                  %v593 = vld [vmem:[%s513 + $0x138] sm:%s506]
                  %594 = vst [vmem:[%s514 + $0x9c] sm:%s506] %v593
                  %v595 = vld [vmem:[%s513 + $0x140] sm:%s506]
                  %596 = vst [vmem:[%s514 + $0xa0] sm:%s506] %v595
                  %v597 = vld [vmem:[%s513 + $0x148] sm:%s506]
                  %598 = vst [vmem:[%s514 + $0xa4] sm:%s506] %v597
                  %v599 = vld [vmem:[%s513 + $0x150] sm:%s506]
                  %600 = vst [vmem:[%s514 + $0xa8] sm:%s506] %v599
                  %v601 = vld [vmem:[%s513 + $0x158] sm:%s506]
                  %602 = vst [vmem:[%s514 + $0xac] sm:%s506] %v601
                  %v603 = vld [vmem:[%s513 + $0x160] sm:%s506]
                  %604 = vst [vmem:[%s514 + $0xb0] sm:%s506] %v603
                  %v605 = vld [vmem:[%s513 + $0x168] sm:%s506]
                  %606 = vst [vmem:[%s514 + $0xb4] sm:%s506] %v605
                  %v607 = vld [vmem:[%s513 + $0x170] sm:%s506]
                  %608 = vst [vmem:[%s514 + $0xb8] sm:%s506] %v607
                  %v609 = vld [vmem:[%s513 + $0x178] sm:%s506]
                  %610 = vst [vmem:[%s514 + $0xbc] sm:%s506] %v609
                  %v611 = vld [vmem:[%s513 + $0x180] sm:%s506]
                  %612 = vst [vmem:[%s514 + $0xc0] sm:%s506] %v611
                  %v613 = vld [vmem:[%s513 + $0x188] sm:%s506]
                  %614 = vst [vmem:[%s514 + $0xc4] sm:%s506] %v613
                  %v615 = vld [vmem:[%s513 + $0x190] sm:%s506]
                  %616 = vst [vmem:[%s514 + $0xc8] sm:%s506] %v615
                  %v617 = vld [vmem:[%s513 + $0x198] sm:%s506]
                  %618 = vst [vmem:[%s514 + $0xcc] sm:%s506] %v617
                  %v619 = vld [vmem:[%s513 + $0x1a0] sm:%s506]
                  %620 = vst [vmem:[%s514 + $0xd0] sm:%s506] %v619
                  %v621 = vld [vmem:[%s513 + $0x1a8] sm:%s506]
                  %622 = vst [vmem:[%s514 + $0xd4] sm:%s506] %v621
                  %v623 = vld [vmem:[%s513 + $0x1b0] sm:%s506]
                  %624 = vst [vmem:[%s514 + $0xd8] sm:%s506] %v623
                  %v625 = vld [vmem:[%s513 + $0x1b8] sm:%s506]
                  %626 = vst [vmem:[%s514 + $0xdc] sm:%s506] %v625
                  %v627 = vld [vmem:[%s513 + $0x1c0] sm:%s506]
                  %628 = vst [vmem:[%s514 + $0xe0] sm:%s506] %v627
                  %v629 = vld [vmem:[%s513 + $0x1c8] sm:%s506]
                  %630 = vst [vmem:[%s514 + $0xe4] sm:%s506] %v629
                  %v631 = vld [vmem:[%s513 + $0x1d0] sm:%s506]
                  %632 = vst [vmem:[%s514 + $0xe8] sm:%s506] %v631
                  %v633 = vld [vmem:[%s513 + $0x1d8] sm:%s506]
                  %634 = vst [vmem:[%s514 + $0xec] sm:%s506] %v633
                  %v635 = vld [vmem:[%s513 + $0x1e0] sm:%s506]
                  %636 = vst [vmem:[%s514 + $0xf0] sm:%s506] %v635
                  %v637 = vld [vmem:[%s513 + $0x1e8] sm:%s506]
                  %638 = vst [vmem:[%s514 + $0xf4] sm:%s506] %v637
                  %v639 = vld [vmem:[%s513 + $0x1f0] sm:%s506]
                  %640 = vst [vmem:[%s514 + $0xf8] sm:%s506] %v639
                  %v641 = vld [vmem:[%s513 + $0x1f8] sm:%s506]
                  %642 = vst [vmem:[%s514 + $0xfc] sm:%s506] %v641
                  %v643 = vld [vmem:[%s513 + $0x200] sm:%s506]
                  %644 = vst [vmem:[%s514 + $0x100] sm:%s506] %v643
                  %v645 = vld [vmem:[%s513 + $0x208] sm:%s506]
                  %646 = vst [vmem:[%s514 + $0x104] sm:%s506] %v645
                  %v647 = vld [vmem:[%s513 + $0x210] sm:%s506]
                  %648 = vst [vmem:[%s514 + $0x108] sm:%s506] %v647
                  %v649 = vld [vmem:[%s513 + $0x218] sm:%s506]
                  %650 = vst [vmem:[%s514 + $0x10c] sm:%s506] %v649
                  %v651 = vld [vmem:[%s513 + $0x220] sm:%s506]
                  %652 = vst [vmem:[%s514 + $0x110] sm:%s506] %v651
                  %v653 = vld [vmem:[%s513 + $0x228] sm:%s506]
                  %654 = vst [vmem:[%s514 + $0x114] sm:%s506] %v653
                  %v655 = vld [vmem:[%s513 + $0x230] sm:%s506]
                  %656 = vst [vmem:[%s514 + $0x118] sm:%s506] %v655
                  %v657 = vld [vmem:[%s513 + $0x238] sm:%s506]
                  %658 = vst [vmem:[%s514 + $0x11c] sm:%s506] %v657
                  %v659 = vld [vmem:[%s513 + $0x240] sm:%s506]
                  %660 = vst [vmem:[%s514 + $0x120] sm:%s506] %v659
                  %v661 = vld [vmem:[%s513 + $0x248] sm:%s506]
                  %662 = vst [vmem:[%s514 + $0x124] sm:%s506] %v661
                  %v663 = vld [vmem:[%s513 + $0x250] sm:%s506]
                  %664 = vst [vmem:[%s514 + $0x128] sm:%s506] %v663
                  %v665 = vld [vmem:[%s513 + $0x258] sm:%s506]
                  %666 = vst [vmem:[%s514 + $0x12c] sm:%s506] %v665
                  %v667 = vld [vmem:[%s513 + $0x260] sm:%s506]
                  %668 = vst [vmem:[%s514 + $0x130] sm:%s506] %v667
                  %v669 = vld [vmem:[%s513 + $0x268] sm:%s506]
                  %670 = vst [vmem:[%s514 + $0x134] sm:%s506] %v669
                  %v671 = vld [vmem:[%s513 + $0x270] sm:%s506]
                  %672 = vst [vmem:[%s514 + $0x138] sm:%s506] %v671
                  %v673 = vld [vmem:[%s513 + $0x278] sm:%s506]
                  %674 = vst [vmem:[%s514 + $0x13c] sm:%s506] %v673
                  %v675 = vld [vmem:[%s513 + $0x280] sm:%s506]
                  %676 = vst [vmem:[%s514 + $0x140] sm:%s506] %v675
                  %v677 = vld [vmem:[%s513 + $0x288] sm:%s506]
                  %678 = vst [vmem:[%s514 + $0x144] sm:%s506] %v677
                  %v679 = vld [vmem:[%s513 + $0x290] sm:%s506]
                  %680 = vst [vmem:[%s514 + $0x148] sm:%s506] %v679
                  %v681 = vld [vmem:[%s513 + $0x298] sm:%s506]
                  %682 = vst [vmem:[%s514 + $0x14c] sm:%s506] %v681
                  %v683 = vld [vmem:[%s513 + $0x2a0] sm:%s506]
                  %684 = vst [vmem:[%s514 + $0x150] sm:%s506] %v683
                  %v685 = vld [vmem:[%s513 + $0x2a8] sm:%s506]
                  %686 = vst [vmem:[%s514 + $0x154] sm:%s506] %v685
                  %v687 = vld [vmem:[%s513 + $0x2b0] sm:%s506]
                  %688 = vst [vmem:[%s514 + $0x158] sm:%s506] %v687
                  %v689 = vld [vmem:[%s513 + $0x2b8] sm:%s506]
                  %690 = vst [vmem:[%s514 + $0x15c] sm:%s506] %v689
                  %v691 = vld [vmem:[%s513 + $0x2c0] sm:%s506]
                  %692 = vst [vmem:[%s514 + $0x160] sm:%s506] %v691
                  %v693 = vld [vmem:[%s513 + $0x2c8] sm:%s506]
                  %694 = vst [vmem:[%s514 + $0x164] sm:%s506] %v693
                  %v695 = vld [vmem:[%s513 + $0x2d0] sm:%s506]
                  %696 = vst [vmem:[%s514 + $0x168] sm:%s506] %v695
                  %v697 = vld [vmem:[%s513 + $0x2d8] sm:%s506]
                  %698 = vst [vmem:[%s514 + $0x16c] sm:%s506] %v697
                  %v699 = vld [vmem:[%s513 + $0x2e0] sm:%s506]
                  %700 = vst [vmem:[%s514 + $0x170] sm:%s506] %v699
                  %v701 = vld [vmem:[%s513 + $0x2e8] sm:%s506]
                  %702 = vst [vmem:[%s514 + $0x174] sm:%s506] %v701
                  %v703 = vld [vmem:[%s513 + $0x2f0] sm:%s506]
                  %704 = vst [vmem:[%s514 + $0x178] sm:%s506] %v703
                  %v705 = vld [vmem:[%s513 + $0x2f8] sm:%s506]
                  %706 = vst [vmem:[%s514 + $0x17c] sm:%s506] %v705
                  %v707 = vld [vmem:[%s513 + $0x300] sm:%s506]
                  %708 = vst [vmem:[%s514 + $0x180] sm:%s506] %v707
                  %v709 = vld [vmem:[%s513 + $0x308] sm:%s506]
                  %710 = vst [vmem:[%s514 + $0x184] sm:%s506] %v709
                  %v711 = vld [vmem:[%s513 + $0x310] sm:%s506]
                  %712 = vst [vmem:[%s514 + $0x188] sm:%s506] %v711
                  %v713 = vld [vmem:[%s513 + $0x318] sm:%s506]
                  %714 = vst [vmem:[%s514 + $0x18c] sm:%s506] %v713
                  %v715 = vld [vmem:[%s513 + $0x320] sm:%s506]
                  %716 = vst [vmem:[%s514 + $0x190] sm:%s506] %v715
                  %v717 = vld [vmem:[%s513 + $0x328] sm:%s506]
                  %718 = vst [vmem:[%s514 + $0x194] sm:%s506] %v717
                  %v719 = vld [vmem:[%s513 + $0x330] sm:%s506]
                  %720 = vst [vmem:[%s514 + $0x198] sm:%s506] %v719
                  %v721 = vld [vmem:[%s513 + $0x338] sm:%s506]
                  %722 = vst [vmem:[%s514 + $0x19c] sm:%s506] %v721
                  %v723 = vld [vmem:[%s513 + $0x340] sm:%s506]
                  %724 = vst [vmem:[%s514 + $0x1a0] sm:%s506] %v723
                  %v725 = vld [vmem:[%s513 + $0x348] sm:%s506]
                  %726 = vst [vmem:[%s514 + $0x1a4] sm:%s506] %v725
                  %v727 = vld [vmem:[%s513 + $0x350] sm:%s506]
                  %728 = vst [vmem:[%s514 + $0x1a8] sm:%s506] %v727
                  %v729 = vld [vmem:[%s513 + $0x358] sm:%s506]
                  %730 = vst [vmem:[%s514 + $0x1ac] sm:%s506] %v729
                  %v731 = vld [vmem:[%s513 + $0x360] sm:%s506]
                  %732 = vst [vmem:[%s514 + $0x1b0] sm:%s506] %v731
                  %v733 = vld [vmem:[%s513 + $0x368] sm:%s506]
                  %734 = vst [vmem:[%s514 + $0x1b4] sm:%s506] %v733
                  %v735 = vld [vmem:[%s513 + $0x370] sm:%s506]
                  %736 = vst [vmem:[%s514 + $0x1b8] sm:%s506] %v735
                  %v737 = vld [vmem:[%s513 + $0x378] sm:%s506]
                  %738 = vst [vmem:[%s514 + $0x1bc] sm:%s506] %v737
                  %v739 = vld [vmem:[%s513 + $0x380] sm:%s506]
                  %740 = vst [vmem:[%s514 + $0x1c0] sm:%s506] %v739
                  %v741 = vld [vmem:[%s513 + $0x388] sm:%s506]
                  %742 = vst [vmem:[%s514 + $0x1c4] sm:%s506] %v741
                  %v743 = vld [vmem:[%s513 + $0x390] sm:%s506]
                  %744 = vst [vmem:[%s514 + $0x1c8] sm:%s506] %v743
                  %v745 = vld [vmem:[%s513 + $0x398] sm:%s506]
                  %746 = vst [vmem:[%s514 + $0x1cc] sm:%s506] %v745
                  %v747 = vld [vmem:[%s513 + $0x3a0] sm:%s506]
                  %748 = vst [vmem:[%s514 + $0x1d0] sm:%s506] %v747
                  %v749 = vld [vmem:[%s513 + $0x3a8] sm:%s506]
                  %750 = vst [vmem:[%s514 + $0x1d4] sm:%s506] %v749
                  %v751 = vld [vmem:[%s513 + $0x3b0] sm:%s506]
                  %752 = vst [vmem:[%s514 + $0x1d8] sm:%s506] %v751
                  %v753 = vld [vmem:[%s513 + $0x3b8] sm:%s506]
                  %754 = vst [vmem:[%s514 + $0x1dc] sm:%s506] %v753
                  %v755 = vld [vmem:[%s513 + $0x3c0] sm:%s506]
                  %756 = vst [vmem:[%s514 + $0x1e0] sm:%s506] %v755
                  %v757 = vld [vmem:[%s513 + $0x3c8] sm:%s506]
                  %758 = vst [vmem:[%s514 + $0x1e4] sm:%s506] %v757
                  %v759 = vld [vmem:[%s513 + $0x3d0] sm:%s506]
                  %760 = vst [vmem:[%s514 + $0x1e8] sm:%s506] %v759
                  %v761 = vld [vmem:[%s513 + $0x3d8] sm:%s506]
                  %762 = vst [vmem:[%s514 + $0x1ec] sm:%s506] %v761
                  %v763 = vld [vmem:[%s513 + $0x3e0] sm:%s506]
                  %764 = vst [vmem:[%s514 + $0x1f0] sm:%s506] %v763
                  %v765 = vld [vmem:[%s513 + $0x3e8] sm:%s506]
                  %766 = vst [vmem:[%s514 + $0x1f4] sm:%s506] %v765
                  %v767 = vld [vmem:[%s513 + $0x3f0] sm:%s506]
                  %768 = vst [vmem:[%s514 + $0x1f8] sm:%s506] %v767
                  %v769 = vld [vmem:[%s513 + $0x3f8] sm:%s506]
                  %770 = vst [vmem:[%s514 + $0x1fc] sm:%s506] %v769
                  %v771 = vld [vmem:[%s513 + $0x400] sm:%s506]
                  %772 = vst [vmem:[%s514 + $0x200] sm:%s506] %v771
                  %v773 = vld [vmem:[%s513 + $0x408] sm:%s506]
                  %774 = vst [vmem:[%s514 + $0x204] sm:%s506] %v773
                  %v775 = vld [vmem:[%s513 + $0x410] sm:%s506]
                  %776 = vst [vmem:[%s514 + $0x208] sm:%s506] %v775
                  %v777 = vld [vmem:[%s513 + $0x418] sm:%s506]
                  %778 = vst [vmem:[%s514 + $0x20c] sm:%s506] %v777
                  %v779 = vld [vmem:[%s513 + $0x420] sm:%s506]
                  %780 = vst [vmem:[%s514 + $0x210] sm:%s506] %v779
                  %v781 = vld [vmem:[%s513 + $0x428] sm:%s506]
                  %782 = vst [vmem:[%s514 + $0x214] sm:%s506] %v781
                  %v783 = vld [vmem:[%s513 + $0x430] sm:%s506]
                  %784 = vst [vmem:[%s514 + $0x218] sm:%s506] %v783
                  %v785 = vld [vmem:[%s513 + $0x438] sm:%s506]
                  %786 = vst [vmem:[%s514 + $0x21c] sm:%s506] %v785
                  %v787 = vld [vmem:[%s513 + $0x440] sm:%s506]
                  %788 = vst [vmem:[%s514 + $0x220] sm:%s506] %v787
                  %v789 = vld [vmem:[%s513 + $0x448] sm:%s506]
                  %790 = vst [vmem:[%s514 + $0x224] sm:%s506] %v789
                  %v791 = vld [vmem:[%s513 + $0x450] sm:%s506]
                  %792 = vst [vmem:[%s514 + $0x228] sm:%s506] %v791
                  %v793 = vld [vmem:[%s513 + $0x458] sm:%s506]
                  %794 = vst [vmem:[%s514 + $0x22c] sm:%s506] %v793
                  %v795 = vld [vmem:[%s513 + $0x460] sm:%s506]
                  %796 = vst [vmem:[%s514 + $0x230] sm:%s506] %v795
                  %v797 = vld [vmem:[%s513 + $0x468] sm:%s506]
                  %798 = vst [vmem:[%s514 + $0x234] sm:%s506] %v797
                  %v799 = vld [vmem:[%s513 + $0x470] sm:%s506]
                  %800 = vst [vmem:[%s514 + $0x238] sm:%s506] %v799
                  %v801 = vld [vmem:[%s513 + $0x478] sm:%s506]
                  %802 = vst [vmem:[%s514 + $0x23c] sm:%s506] %v801
                $region63: #{basic_block_forward.2} parent=50 // loop_footer
                  %s512 = sadd.s32 1, %s508
                $region64: #{basic_block_forward.2} parent=50 // loop_footer_branch
                  %507 = sbr.rel target = $region60
                $region65: #{basic_block_forward.2} parent=50 // loop_exit
                  _
              $region51: #{basic_block_forward.2} parent=35 // pred_fallthru
                _
            $region36: #{basic_block_forward.2} parent=31 // pred_fallthru
              _
            // Predicated region
            $region37: #{basic_block_forward.2} parent=31 // pred_check
              _
            $region38: #{basic_block_forward.2} parent=31 // pred_check_branch
              %196 = sbr.rel (0) target = $region40
            $region39: #{basic_block_forward.2} parent=31 // pred_region
              %s198 = ssub.s32 16, 1
              loop: start=0, step=1, limit=1
              $region41: #{basic_block_forward.2} parent=39 // loop_pre_header
                _
              $region42: #{basic_block_forward.2} parent=39 // loop_header
                %s200 = sphi 0, %s204
                %p201 = scmp.ge.s32.totalorder %s200, 1
                %s205 = sphi %s190, %s190
                %s206 = sphi %s188, %s188
              $region43: #{basic_block_forward.2} parent=39 // loop_header_branch
                %203 = sbr.rel (%p201) target = $region47
              $region44: #{basic_block_forward.2} parent=39 // loop_body
                %v207 = vld [vmem:[%s205] sm:%s198]
                %208 = vst [vmem:[%s206] sm:%s198] %v207
                %v209 = vld [vmem:[%s205 + $0x8] sm:%s198]
                %210 = vst [vmem:[%s206 + $0x4] sm:%s198] %v209
                %v211 = vld [vmem:[%s205 + $0x10] sm:%s198]
                %212 = vst [vmem:[%s206 + $0x8] sm:%s198] %v211
                %v213 = vld [vmem:[%s205 + $0x18] sm:%s198]
                %214 = vst [vmem:[%s206 + $0xc] sm:%s198] %v213
                %v215 = vld [vmem:[%s205 + $0x20] sm:%s198]
                %216 = vst [vmem:[%s206 + $0x10] sm:%s198] %v215
                %v217 = vld [vmem:[%s205 + $0x28] sm:%s198]
                %218 = vst [vmem:[%s206 + $0x14] sm:%s198] %v217
                %v219 = vld [vmem:[%s205 + $0x30] sm:%s198]
                %220 = vst [vmem:[%s206 + $0x18] sm:%s198] %v219
                %v221 = vld [vmem:[%s205 + $0x38] sm:%s198]
                %222 = vst [vmem:[%s206 + $0x1c] sm:%s198] %v221
                %v223 = vld [vmem:[%s205 + $0x40] sm:%s198]
                %224 = vst [vmem:[%s206 + $0x20] sm:%s198] %v223
                %v225 = vld [vmem:[%s205 + $0x48] sm:%s198]
                %226 = vst [vmem:[%s206 + $0x24] sm:%s198] %v225
                %v227 = vld [vmem:[%s205 + $0x50] sm:%s198]
                %228 = vst [vmem:[%s206 + $0x28] sm:%s198] %v227
                %v229 = vld [vmem:[%s205 + $0x58] sm:%s198]
                %230 = vst [vmem:[%s206 + $0x2c] sm:%s198] %v229
                %v231 = vld [vmem:[%s205 + $0x60] sm:%s198]
                %232 = vst [vmem:[%s206 + $0x30] sm:%s198] %v231
                %v233 = vld [vmem:[%s205 + $0x68] sm:%s198]
                %234 = vst [vmem:[%s206 + $0x34] sm:%s198] %v233
                %v235 = vld [vmem:[%s205 + $0x70] sm:%s198]
                %236 = vst [vmem:[%s206 + $0x38] sm:%s198] %v235
                %v237 = vld [vmem:[%s205 + $0x78] sm:%s198]
                %238 = vst [vmem:[%s206 + $0x3c] sm:%s198] %v237
                %v239 = vld [vmem:[%s205 + $0x80] sm:%s198]
                %240 = vst [vmem:[%s206 + $0x40] sm:%s198] %v239
                %v241 = vld [vmem:[%s205 + $0x88] sm:%s198]
                %242 = vst [vmem:[%s206 + $0x44] sm:%s198] %v241
                %v243 = vld [vmem:[%s205 + $0x90] sm:%s198]
                %244 = vst [vmem:[%s206 + $0x48] sm:%s198] %v243
                %v245 = vld [vmem:[%s205 + $0x98] sm:%s198]
                %246 = vst [vmem:[%s206 + $0x4c] sm:%s198] %v245
                %v247 = vld [vmem:[%s205 + $0xa0] sm:%s198]
                %248 = vst [vmem:[%s206 + $0x50] sm:%s198] %v247
                %v249 = vld [vmem:[%s205 + $0xa8] sm:%s198]
                %250 = vst [vmem:[%s206 + $0x54] sm:%s198] %v249
                %v251 = vld [vmem:[%s205 + $0xb0] sm:%s198]
                %252 = vst [vmem:[%s206 + $0x58] sm:%s198] %v251
                %v253 = vld [vmem:[%s205 + $0xb8] sm:%s198]
                %254 = vst [vmem:[%s206 + $0x5c] sm:%s198] %v253
                %v255 = vld [vmem:[%s205 + $0xc0] sm:%s198]
                %256 = vst [vmem:[%s206 + $0x60] sm:%s198] %v255
                %v257 = vld [vmem:[%s205 + $0xc8] sm:%s198]
                %258 = vst [vmem:[%s206 + $0x64] sm:%s198] %v257
                %v259 = vld [vmem:[%s205 + $0xd0] sm:%s198]
                %260 = vst [vmem:[%s206 + $0x68] sm:%s198] %v259
                %v261 = vld [vmem:[%s205 + $0xd8] sm:%s198]
                %262 = vst [vmem:[%s206 + $0x6c] sm:%s198] %v261
                %v263 = vld [vmem:[%s205 + $0xe0] sm:%s198]
                %264 = vst [vmem:[%s206 + $0x70] sm:%s198] %v263
                %v265 = vld [vmem:[%s205 + $0xe8] sm:%s198]
                %266 = vst [vmem:[%s206 + $0x74] sm:%s198] %v265
                %v267 = vld [vmem:[%s205 + $0xf0] sm:%s198]
                %268 = vst [vmem:[%s206 + $0x78] sm:%s198] %v267
                %v269 = vld [vmem:[%s205 + $0xf8] sm:%s198]
                %270 = vst [vmem:[%s206 + $0x7c] sm:%s198] %v269
                %v271 = vld [vmem:[%s205 + $0x100] sm:%s198]
                %272 = vst [vmem:[%s206 + $0x80] sm:%s198] %v271
                %v273 = vld [vmem:[%s205 + $0x108] sm:%s198]
                %274 = vst [vmem:[%s206 + $0x84] sm:%s198] %v273
                %v275 = vld [vmem:[%s205 + $0x110] sm:%s198]
                %276 = vst [vmem:[%s206 + $0x88] sm:%s198] %v275
                %v277 = vld [vmem:[%s205 + $0x118] sm:%s198]
                %278 = vst [vmem:[%s206 + $0x8c] sm:%s198] %v277
                %v279 = vld [vmem:[%s205 + $0x120] sm:%s198]
                %280 = vst [vmem:[%s206 + $0x90] sm:%s198] %v279
                %v281 = vld [vmem:[%s205 + $0x128] sm:%s198]
                %282 = vst [vmem:[%s206 + $0x94] sm:%s198] %v281
                %v283 = vld [vmem:[%s205 + $0x130] sm:%s198]
                %284 = vst [vmem:[%s206 + $0x98] sm:%s198] %v283
                %v285 = vld [vmem:[%s205 + $0x138] sm:%s198]
                %286 = vst [vmem:[%s206 + $0x9c] sm:%s198] %v285
                %v287 = vld [vmem:[%s205 + $0x140] sm:%s198]
                %288 = vst [vmem:[%s206 + $0xa0] sm:%s198] %v287
                %v289 = vld [vmem:[%s205 + $0x148] sm:%s198]
                %290 = vst [vmem:[%s206 + $0xa4] sm:%s198] %v289
                %v291 = vld [vmem:[%s205 + $0x150] sm:%s198]
                %292 = vst [vmem:[%s206 + $0xa8] sm:%s198] %v291
                %v293 = vld [vmem:[%s205 + $0x158] sm:%s198]
                %294 = vst [vmem:[%s206 + $0xac] sm:%s198] %v293
                %v295 = vld [vmem:[%s205 + $0x160] sm:%s198]
                %296 = vst [vmem:[%s206 + $0xb0] sm:%s198] %v295
                %v297 = vld [vmem:[%s205 + $0x168] sm:%s198]
                %298 = vst [vmem:[%s206 + $0xb4] sm:%s198] %v297
                %v299 = vld [vmem:[%s205 + $0x170] sm:%s198]
                %300 = vst [vmem:[%s206 + $0xb8] sm:%s198] %v299
                %v301 = vld [vmem:[%s205 + $0x178] sm:%s198]
                %302 = vst [vmem:[%s206 + $0xbc] sm:%s198] %v301
                %v303 = vld [vmem:[%s205 + $0x180] sm:%s198]
                %304 = vst [vmem:[%s206 + $0xc0] sm:%s198] %v303
                %v305 = vld [vmem:[%s205 + $0x188] sm:%s198]
                %306 = vst [vmem:[%s206 + $0xc4] sm:%s198] %v305
                %v307 = vld [vmem:[%s205 + $0x190] sm:%s198]
                %308 = vst [vmem:[%s206 + $0xc8] sm:%s198] %v307
                %v309 = vld [vmem:[%s205 + $0x198] sm:%s198]
                %310 = vst [vmem:[%s206 + $0xcc] sm:%s198] %v309
                %v311 = vld [vmem:[%s205 + $0x1a0] sm:%s198]
                %312 = vst [vmem:[%s206 + $0xd0] sm:%s198] %v311
                %v313 = vld [vmem:[%s205 + $0x1a8] sm:%s198]
                %314 = vst [vmem:[%s206 + $0xd4] sm:%s198] %v313
                %v315 = vld [vmem:[%s205 + $0x1b0] sm:%s198]
                %316 = vst [vmem:[%s206 + $0xd8] sm:%s198] %v315
                %v317 = vld [vmem:[%s205 + $0x1b8] sm:%s198]
                %318 = vst [vmem:[%s206 + $0xdc] sm:%s198] %v317
                %v319 = vld [vmem:[%s205 + $0x1c0] sm:%s198]
                %320 = vst [vmem:[%s206 + $0xe0] sm:%s198] %v319
                %v321 = vld [vmem:[%s205 + $0x1c8] sm:%s198]
                %322 = vst [vmem:[%s206 + $0xe4] sm:%s198] %v321
                %v323 = vld [vmem:[%s205 + $0x1d0] sm:%s198]
                %324 = vst [vmem:[%s206 + $0xe8] sm:%s198] %v323
                %v325 = vld [vmem:[%s205 + $0x1d8] sm:%s198]
                %326 = vst [vmem:[%s206 + $0xec] sm:%s198] %v325
                %v327 = vld [vmem:[%s205 + $0x1e0] sm:%s198]
                %328 = vst [vmem:[%s206 + $0xf0] sm:%s198] %v327
                %v329 = vld [vmem:[%s205 + $0x1e8] sm:%s198]
                %330 = vst [vmem:[%s206 + $0xf4] sm:%s198] %v329
                %v331 = vld [vmem:[%s205 + $0x1f0] sm:%s198]
                %332 = vst [vmem:[%s206 + $0xf8] sm:%s198] %v331
                %v333 = vld [vmem:[%s205 + $0x1f8] sm:%s198]
                %334 = vst [vmem:[%s206 + $0xfc] sm:%s198] %v333
                %v335 = vld [vmem:[%s205 + $0x200] sm:%s198]
                %336 = vst [vmem:[%s206 + $0x100] sm:%s198] %v335
                %v337 = vld [vmem:[%s205 + $0x208] sm:%s198]
                %338 = vst [vmem:[%s206 + $0x104] sm:%s198] %v337
                %v339 = vld [vmem:[%s205 + $0x210] sm:%s198]
                %340 = vst [vmem:[%s206 + $0x108] sm:%s198] %v339
                %v341 = vld [vmem:[%s205 + $0x218] sm:%s198]
                %342 = vst [vmem:[%s206 + $0x10c] sm:%s198] %v341
                %v343 = vld [vmem:[%s205 + $0x220] sm:%s198]
                %344 = vst [vmem:[%s206 + $0x110] sm:%s198] %v343
                %v345 = vld [vmem:[%s205 + $0x228] sm:%s198]
                %346 = vst [vmem:[%s206 + $0x114] sm:%s198] %v345
                %v347 = vld [vmem:[%s205 + $0x230] sm:%s198]
                %348 = vst [vmem:[%s206 + $0x118] sm:%s198] %v347
                %v349 = vld [vmem:[%s205 + $0x238] sm:%s198]
                %350 = vst [vmem:[%s206 + $0x11c] sm:%s198] %v349
                %v351 = vld [vmem:[%s205 + $0x240] sm:%s198]
                %352 = vst [vmem:[%s206 + $0x120] sm:%s198] %v351
                %v353 = vld [vmem:[%s205 + $0x248] sm:%s198]
                %354 = vst [vmem:[%s206 + $0x124] sm:%s198] %v353
                %v355 = vld [vmem:[%s205 + $0x250] sm:%s198]
                %356 = vst [vmem:[%s206 + $0x128] sm:%s198] %v355
                %v357 = vld [vmem:[%s205 + $0x258] sm:%s198]
                %358 = vst [vmem:[%s206 + $0x12c] sm:%s198] %v357
                %v359 = vld [vmem:[%s205 + $0x260] sm:%s198]
                %360 = vst [vmem:[%s206 + $0x130] sm:%s198] %v359
                %v361 = vld [vmem:[%s205 + $0x268] sm:%s198]
                %362 = vst [vmem:[%s206 + $0x134] sm:%s198] %v361
                %v363 = vld [vmem:[%s205 + $0x270] sm:%s198]
                %364 = vst [vmem:[%s206 + $0x138] sm:%s198] %v363
                %v365 = vld [vmem:[%s205 + $0x278] sm:%s198]
                %366 = vst [vmem:[%s206 + $0x13c] sm:%s198] %v365
                %v367 = vld [vmem:[%s205 + $0x280] sm:%s198]
                %368 = vst [vmem:[%s206 + $0x140] sm:%s198] %v367
                %v369 = vld [vmem:[%s205 + $0x288] sm:%s198]
                %370 = vst [vmem:[%s206 + $0x144] sm:%s198] %v369
                %v371 = vld [vmem:[%s205 + $0x290] sm:%s198]
                %372 = vst [vmem:[%s206 + $0x148] sm:%s198] %v371
                %v373 = vld [vmem:[%s205 + $0x298] sm:%s198]
                %374 = vst [vmem:[%s206 + $0x14c] sm:%s198] %v373
                %v375 = vld [vmem:[%s205 + $0x2a0] sm:%s198]
                %376 = vst [vmem:[%s206 + $0x150] sm:%s198] %v375
                %v377 = vld [vmem:[%s205 + $0x2a8] sm:%s198]
                %378 = vst [vmem:[%s206 + $0x154] sm:%s198] %v377
                %v379 = vld [vmem:[%s205 + $0x2b0] sm:%s198]
                %380 = vst [vmem:[%s206 + $0x158] sm:%s198] %v379
                %v381 = vld [vmem:[%s205 + $0x2b8] sm:%s198]
                %382 = vst [vmem:[%s206 + $0x15c] sm:%s198] %v381
                %v383 = vld [vmem:[%s205 + $0x2c0] sm:%s198]
                %384 = vst [vmem:[%s206 + $0x160] sm:%s198] %v383
                %v385 = vld [vmem:[%s205 + $0x2c8] sm:%s198]
                %386 = vst [vmem:[%s206 + $0x164] sm:%s198] %v385
                %v387 = vld [vmem:[%s205 + $0x2d0] sm:%s198]
                %388 = vst [vmem:[%s206 + $0x168] sm:%s198] %v387
                %v389 = vld [vmem:[%s205 + $0x2d8] sm:%s198]
                %390 = vst [vmem:[%s206 + $0x16c] sm:%s198] %v389
                %v391 = vld [vmem:[%s205 + $0x2e0] sm:%s198]
                %392 = vst [vmem:[%s206 + $0x170] sm:%s198] %v391
                %v393 = vld [vmem:[%s205 + $0x2e8] sm:%s198]
                %394 = vst [vmem:[%s206 + $0x174] sm:%s198] %v393
                %v395 = vld [vmem:[%s205 + $0x2f0] sm:%s198]
                %396 = vst [vmem:[%s206 + $0x178] sm:%s198] %v395
                %v397 = vld [vmem:[%s205 + $0x2f8] sm:%s198]
                %398 = vst [vmem:[%s206 + $0x17c] sm:%s198] %v397
                %v399 = vld [vmem:[%s205 + $0x300] sm:%s198]
                %400 = vst [vmem:[%s206 + $0x180] sm:%s198] %v399
                %v401 = vld [vmem:[%s205 + $0x308] sm:%s198]
                %402 = vst [vmem:[%s206 + $0x184] sm:%s198] %v401
                %v403 = vld [vmem:[%s205 + $0x310] sm:%s198]
                %404 = vst [vmem:[%s206 + $0x188] sm:%s198] %v403
                %v405 = vld [vmem:[%s205 + $0x318] sm:%s198]
                %406 = vst [vmem:[%s206 + $0x18c] sm:%s198] %v405
                %v407 = vld [vmem:[%s205 + $0x320] sm:%s198]
                %408 = vst [vmem:[%s206 + $0x190] sm:%s198] %v407
                %v409 = vld [vmem:[%s205 + $0x328] sm:%s198]
                %410 = vst [vmem:[%s206 + $0x194] sm:%s198] %v409
                %v411 = vld [vmem:[%s205 + $0x330] sm:%s198]
                %412 = vst [vmem:[%s206 + $0x198] sm:%s198] %v411
                %v413 = vld [vmem:[%s205 + $0x338] sm:%s198]
                %414 = vst [vmem:[%s206 + $0x19c] sm:%s198] %v413
                %v415 = vld [vmem:[%s205 + $0x340] sm:%s198]
                %416 = vst [vmem:[%s206 + $0x1a0] sm:%s198] %v415
                %v417 = vld [vmem:[%s205 + $0x348] sm:%s198]
                %418 = vst [vmem:[%s206 + $0x1a4] sm:%s198] %v417
                %v419 = vld [vmem:[%s205 + $0x350] sm:%s198]
                %420 = vst [vmem:[%s206 + $0x1a8] sm:%s198] %v419
                %v421 = vld [vmem:[%s205 + $0x358] sm:%s198]
                %422 = vst [vmem:[%s206 + $0x1ac] sm:%s198] %v421
                %v423 = vld [vmem:[%s205 + $0x360] sm:%s198]
                %424 = vst [vmem:[%s206 + $0x1b0] sm:%s198] %v423
                %v425 = vld [vmem:[%s205 + $0x368] sm:%s198]
                %426 = vst [vmem:[%s206 + $0x1b4] sm:%s198] %v425
                %v427 = vld [vmem:[%s205 + $0x370] sm:%s198]
                %428 = vst [vmem:[%s206 + $0x1b8] sm:%s198] %v427
                %v429 = vld [vmem:[%s205 + $0x378] sm:%s198]
                %430 = vst [vmem:[%s206 + $0x1bc] sm:%s198] %v429
                %v431 = vld [vmem:[%s205 + $0x380] sm:%s198]
                %432 = vst [vmem:[%s206 + $0x1c0] sm:%s198] %v431
                %v433 = vld [vmem:[%s205 + $0x388] sm:%s198]
                %434 = vst [vmem:[%s206 + $0x1c4] sm:%s198] %v433
                %v435 = vld [vmem:[%s205 + $0x390] sm:%s198]
                %436 = vst [vmem:[%s206 + $0x1c8] sm:%s198] %v435
                %v437 = vld [vmem:[%s205 + $0x398] sm:%s198]
                %438 = vst [vmem:[%s206 + $0x1cc] sm:%s198] %v437
                %v439 = vld [vmem:[%s205 + $0x3a0] sm:%s198]
                %440 = vst [vmem:[%s206 + $0x1d0] sm:%s198] %v439
                %v441 = vld [vmem:[%s205 + $0x3a8] sm:%s198]
                %442 = vst [vmem:[%s206 + $0x1d4] sm:%s198] %v441
                %v443 = vld [vmem:[%s205 + $0x3b0] sm:%s198]
                %444 = vst [vmem:[%s206 + $0x1d8] sm:%s198] %v443
                %v445 = vld [vmem:[%s205 + $0x3b8] sm:%s198]
                %446 = vst [vmem:[%s206 + $0x1dc] sm:%s198] %v445
                %v447 = vld [vmem:[%s205 + $0x3c0] sm:%s198]
                %448 = vst [vmem:[%s206 + $0x1e0] sm:%s198] %v447
                %v449 = vld [vmem:[%s205 + $0x3c8] sm:%s198]
                %450 = vst [vmem:[%s206 + $0x1e4] sm:%s198] %v449
                %v451 = vld [vmem:[%s205 + $0x3d0] sm:%s198]
                %452 = vst [vmem:[%s206 + $0x1e8] sm:%s198] %v451
                %v453 = vld [vmem:[%s205 + $0x3d8] sm:%s198]
                %454 = vst [vmem:[%s206 + $0x1ec] sm:%s198] %v453
                %v455 = vld [vmem:[%s205 + $0x3e0] sm:%s198]
                %456 = vst [vmem:[%s206 + $0x1f0] sm:%s198] %v455
                %v457 = vld [vmem:[%s205 + $0x3e8] sm:%s198]
                %458 = vst [vmem:[%s206 + $0x1f4] sm:%s198] %v457
                %v459 = vld [vmem:[%s205 + $0x3f0] sm:%s198]
                %460 = vst [vmem:[%s206 + $0x1f8] sm:%s198] %v459
                %v461 = vld [vmem:[%s205 + $0x3f8] sm:%s198]
                %462 = vst [vmem:[%s206 + $0x1fc] sm:%s198] %v461
                %v463 = vld [vmem:[%s205 + $0x400] sm:%s198]
                %464 = vst [vmem:[%s206 + $0x200] sm:%s198] %v463
                %v465 = vld [vmem:[%s205 + $0x408] sm:%s198]
                %466 = vst [vmem:[%s206 + $0x204] sm:%s198] %v465
                %v467 = vld [vmem:[%s205 + $0x410] sm:%s198]
                %468 = vst [vmem:[%s206 + $0x208] sm:%s198] %v467
                %v469 = vld [vmem:[%s205 + $0x418] sm:%s198]
                %470 = vst [vmem:[%s206 + $0x20c] sm:%s198] %v469
                %v471 = vld [vmem:[%s205 + $0x420] sm:%s198]
                %472 = vst [vmem:[%s206 + $0x210] sm:%s198] %v471
                %v473 = vld [vmem:[%s205 + $0x428] sm:%s198]
                %474 = vst [vmem:[%s206 + $0x214] sm:%s198] %v473
                %v475 = vld [vmem:[%s205 + $0x430] sm:%s198]
                %476 = vst [vmem:[%s206 + $0x218] sm:%s198] %v475
                %v477 = vld [vmem:[%s205 + $0x438] sm:%s198]
                %478 = vst [vmem:[%s206 + $0x21c] sm:%s198] %v477
                %v479 = vld [vmem:[%s205 + $0x440] sm:%s198]
                %480 = vst [vmem:[%s206 + $0x220] sm:%s198] %v479
                %v481 = vld [vmem:[%s205 + $0x448] sm:%s198]
                %482 = vst [vmem:[%s206 + $0x224] sm:%s198] %v481
                %v483 = vld [vmem:[%s205 + $0x450] sm:%s198]
                %484 = vst [vmem:[%s206 + $0x228] sm:%s198] %v483
                %v485 = vld [vmem:[%s205 + $0x458] sm:%s198]
                %486 = vst [vmem:[%s206 + $0x22c] sm:%s198] %v485
                %v487 = vld [vmem:[%s205 + $0x460] sm:%s198]
                %488 = vst [vmem:[%s206 + $0x230] sm:%s198] %v487
                %v489 = vld [vmem:[%s205 + $0x468] sm:%s198]
                %490 = vst [vmem:[%s206 + $0x234] sm:%s198] %v489
                %v491 = vld [vmem:[%s205 + $0x470] sm:%s198]
                %492 = vst [vmem:[%s206 + $0x238] sm:%s198] %v491
                %v493 = vld [vmem:[%s205 + $0x478] sm:%s198]
                %494 = vst [vmem:[%s206 + $0x23c] sm:%s198] %v493
              $region45: #{basic_block_forward.2} parent=39 // loop_footer
                %s204 = sadd.s32 1, %s200
              $region46: #{basic_block_forward.2} parent=39 // loop_footer_branch
                %199 = sbr.rel target = $region42
              $region47: #{basic_block_forward.2} parent=39 // loop_exit
                _
            $region40: #{basic_block_forward.2} parent=31 // pred_fallthru
              _
          $region32: #{basic_block_forward.2} parent=27 // pred_fallthru
            _
          %803 = vnop
        $region28: #{basic_block_forward.2} parent=23 // pred_fallthru
          _
        // Predicated region
        $region66: #{basic_block_forward.2} parent=23 // pred_check
          %p804 = pneg %p99
        $region67: #{basic_block_forward.2} parent=23 // pred_check_branch
          %806 = sbr.rel (%p804) target = $region69
        $region68: #{basic_block_forward.2} parent=23 // pred_region
          %p807 = scmp.lt.s32.totalorder %s11, 1
          %s808 = scalar_select %p807, %s11, 1
          %s809 = scalar_lea.vmem %s3, %s808
        $region69: #{basic_block_forward.2} parent=23 // pred_fallthru
          _
        // Predicated region
        $region70: #{basic_block_forward.2} parent=23 // pred_check
          %p810 = pneg %p125
        $region71: #{basic_block_forward.2} parent=23 // pred_check_branch
          %812 = sbr.rel (%p810) target = $region73
        $region72: #{basic_block_forward.2} parent=23 // pred_region
          %p813 = scmp.lt.s32.totalorder %s11, 1
          %s814 = scalar_select %p813, %s11, 1
          %s815 = scalar_lea.vmem %s4, %s814
        $region73: #{basic_block_forward.2} parent=23 // pred_fallthru
          _
      $region24: #{basic_block_forward.2} parent=5 // pred_fallthru
        _
      %p816 = scmp.le.s32.totalorder 1, %s11
      %p817 = scmp.lt.s32.totalorder %s11, 3
      %p818 = pnand %p816, %p817
      %p819 = pneg %p818
      // Predicated region
      $region74: #{basic_block_forward.2} parent=5 // pred_check
        _
      $region75: #{basic_block_forward.2} parent=5 // pred_check_branch
        %821 = sbr.rel (%p818) target = $region77
      $region76: #{basic_block_forward.2} parent=5 // pred_region
        %s822 = ssub.s32 %s11, 1
        %s823 = sand.u32 %s45, 1
        %s824 = sand.u32 %s45, 1
        %s825 = smul.addr %s824, 576
        %s826 = scalar_lea.vmem [#allocation2], %s825
        // Predicated region
        $region78: #{basic_block_forward.2} parent=76 // pred_check
          %p827 = pneg %p58
        $region79: #{basic_block_forward.2} parent=76 // pred_check_branch
          %829 = sbr.rel (%p827) target = $region81
        $region80: #{basic_block_forward.2} parent=76 // pred_region
          _
        $region81: #{basic_block_forward.2} parent=76 // pred_fallthru
          _
        %p830 = pneg %p32
        %p831 = pneg %p29
        %s832 = sand.u32 %s45, 1
        %s833 = sand.u32 %s45, 1
        %s834 = smul.addr %s833, 576
        %s835 = scalar_lea.vmem [#allocation2], %s834
        %p836 = pneg %p58
        %p837 = pneg %p55
        %p838 = pneg %p79
        %p839 = pneg %p76
        %p840 = scmp.lt.s32.totalorder %s16, 1
        %s841 = scalar_select %p840, %s16, 1
        %s842 = scalar_lea.vmem %s3, %s841
        %p843 = pneg %p105
        %p844 = pneg %p102
        %p845 = scmp.lt.s32.totalorder %s16, 1
        %s846 = scalar_select %p845, %s16, 1
        %s847 = scalar_lea.vmem %s4, %s846
        %p848 = pneg %p131
        %p849 = pneg %p128
        %p850 = pneg %p157
        %p851 = pneg %p154
        %s852 = sand.u32 %s144, 1
        %s853 = sand.u32 %s144, 1
        %s854 = smul.addr %s853, 76
        %s855 = scalar_lea.vmem [#allocation3], %s854
        %p856 = scmp.lt.s32.totalorder %s16, 1
        %s857 = scalar_select %p856, %s16, 1
        %s858 = scalar_lea.vmem %s3, %s857
        %p859 = scmp.lt.s32.totalorder %s16, 1
        %s860 = scalar_select %p859, %s16, 1
        %s861 = scalar_lea.vmem %s4, %s860
        %v863 = vld [vmem:[%s0] sm:$0xf]
        %v864 = vld [vmem:[%s0 + $0x4] sm:$0xf]
        %v865 = vld [vmem:[%s0 + $0x8] sm:$0xf]
        %v866 = vld [vmem:[%s0 + $0xc] sm:$0xf]
        %v867 = vld [vmem:[%s0 + $0x10] sm:$0xf]
        %v868 = vld [vmem:[%s0 + $0x14] sm:$0xf]
        %v869 = vld [vmem:[%s0 + $0x18] sm:$0xf]
        %v870 = vld [vmem:[%s0 + $0x1c] sm:$0xf]
        %v871 = vld [vmem:[%s0 + $0x20] sm:$0xf]
        %v872 = vld [vmem:[%s0 + $0x24] sm:$0xf]
        %v873 = vld [vmem:[%s0 + $0x28] sm:$0xf]
        %v874 = vld [vmem:[%s0 + $0x2c] sm:$0xf]
        %v875 = vld [vmem:[%s0 + $0x30] sm:$0xf]
        %v876 = vld [vmem:[%s0 + $0x34] sm:$0xf]
        %v877 = vld [vmem:[%s0 + $0x38] sm:$0xf]
        %v878 = vld [vmem:[%s0 + $0x3c] sm:$0xf]
        %v879 = vld [vmem:[%s0 + $0x40] sm:$0xf]
        %v880 = vld [vmem:[%s0 + $0x44] sm:$0xf]
        %v881 = vld [vmem:[%s0 + $0x48] sm:$0xf]
        %v882 = vld [vmem:[%s826] sm:$0xf]
        %v883 = vld [vmem:[%s826 + $0x4] sm:$0xf]
        %v884 = vld [vmem:[%s826 + $0x8] sm:$0xf]
        %v885 = vld [vmem:[%s826 + $0xc] sm:$0xf]
        %v886 = vld [vmem:[%s826 + $0x10] sm:$0xf]
        %v887 = vld [vmem:[%s826 + $0x14] sm:$0xf]
        %v888 = vld [vmem:[%s826 + $0x18] sm:$0xf]
        %v889 = vld [vmem:[%s826 + $0x1c] sm:$0xf]
        %v890 = vld [vmem:[%s826 + $0x20] sm:$0xf]
        %v891 = vld [vmem:[%s826 + $0x24] sm:$0xf]
        %v892 = vld [vmem:[%s826 + $0x28] sm:$0xf]
        %v893 = vld [vmem:[%s826 + $0x2c] sm:$0xf]
        %v894 = vld [vmem:[%s826 + $0x30] sm:$0xf]
        %v895 = vld [vmem:[%s826 + $0x34] sm:$0xf]
        %v896 = vld [vmem:[%s826 + $0x38] sm:$0xf]
        %v897 = vld [vmem:[%s826 + $0x3c] sm:$0xf]
        %s898 = scalar_lea.vmem %s0, 84
        %v899 = vld [vmem:[%s898] sm:$0xf]
        %v900 = vld [vmem:[%s898 + $0x4] sm:$0xf]
        %v901 = vld [vmem:[%s898 + $0x8] sm:$0xf]
        %v902 = vld [vmem:[%s898 + $0xc] sm:$0xf]
        %v903 = vld [vmem:[%s898 + $0x10] sm:$0xf]
        %v904 = vld [vmem:[%s898 + $0x14] sm:$0xf]
        %v905 = vld [vmem:[%s898 + $0x18] sm:$0xf]
        %v906 = vld [vmem:[%s898 + $0x1c] sm:$0xf]
        %v907 = vld [vmem:[%s898 + $0x20] sm:$0xf]
        %v908 = vld [vmem:[%s898 + $0x24] sm:$0xf]
        %v909 = vld [vmem:[%s898 + $0x28] sm:$0xf]
        %v910 = vld [vmem:[%s898 + $0x2c] sm:$0xf]
        %v911 = vld [vmem:[%s898 + $0x30] sm:$0xf]
        %v912 = vld [vmem:[%s898 + $0x34] sm:$0xf]
        %v913 = vld [vmem:[%s898 + $0x38] sm:$0xf]
        %v914 = vld [vmem:[%s898 + $0x3c] sm:$0xf]
        %v915 = vld [vmem:[%s898 + $0x40] sm:$0xf]
        %v916 = vld [vmem:[%s898 + $0x44] sm:$0xf]
        %v917 = vld [vmem:[%s898 + $0x48] sm:$0xf]
        %s918 = scalar_lea.vmem %s826, 64 [#allocation2]
        %v919 = vld [vmem:[%s918] sm:$0xf]
        %v920 = vld [vmem:[%s918 + $0x4] sm:$0xf]
        %v921 = vld [vmem:[%s918 + $0x8] sm:$0xf]
        %v922 = vld [vmem:[%s918 + $0xc] sm:$0xf]
        %v923 = vld [vmem:[%s918 + $0x10] sm:$0xf]
        %v924 = vld [vmem:[%s918 + $0x14] sm:$0xf]
        %v925 = vld [vmem:[%s918 + $0x18] sm:$0xf]
        %v926 = vld [vmem:[%s918 + $0x1c] sm:$0xf]
        %v927 = vld [vmem:[%s918 + $0x20] sm:$0xf]
        %v928 = vld [vmem:[%s918 + $0x24] sm:$0xf]
        %v929 = vld [vmem:[%s918 + $0x28] sm:$0xf]
        %v930 = vld [vmem:[%s918 + $0x2c] sm:$0xf]
        %v931 = vld [vmem:[%s918 + $0x30] sm:$0xf]
        %v932 = vld [vmem:[%s918 + $0x34] sm:$0xf]
        %v933 = vld [vmem:[%s918 + $0x38] sm:$0xf]
        %v934 = vld [vmem:[%s918 + $0x3c] sm:$0xf]
        %v954 = vunpack.c.l.b16 %v899
        %v955 = vunpack.c.l.b16 %v900
        %v956 = vunpack.c.l.b16 %v901
        %v957 = vunpack.c.l.b16 %v902
        %v958 = vunpack.c.l.b16 %v903
        %v959 = vunpack.c.l.b16 %v904
        %v960 = vunpack.c.l.b16 %v905
        %v961 = vunpack.c.l.b16 %v906
        %v962 = vunpack.c.l.b16 %v907
        %v963 = vunpack.c.l.b16 %v908
        %v964 = vunpack.c.l.b16 %v909
        %v965 = vunpack.c.l.b16 %v910
        %v966 = vunpack.c.l.b16 %v911
        %v967 = vunpack.c.l.b16 %v912
        %v968 = vunpack.c.l.b16 %v913
        %v969 = vunpack.c.l.b16 %v914
        %v970 = vunpack.c.l.b16 %v915
        %v971 = vunpack.c.l.b16 %v916
        %v972 = vunpack.c.l.b16 %v917
        %v973 = vpack.c.b16 %v955, %v954
        %v974 = vpack.c.b16 %v957, %v956
        %v975 = vpack.c.b16 %v959, %v958
        %v976 = vpack.c.b16 %v961, %v960
        %v977 = vpack.c.b16 %v963, %v962
        %v978 = vpack.c.b16 %v965, %v964
        %v979 = vpack.c.b16 %v967, %v966
        %v980 = vpack.c.b16 %v969, %v968
        %v981 = vpack.c.b16 %v971, %v970
        %v982 = vpack.c.b16 %v972, %v972
        %v1009 = vunpack.c.l.b16 %v919
        %v1010 = vunpack.c.l.b16 %v920
        %v1011 = vunpack.c.l.b16 %v921
        %v1012 = vunpack.c.l.b16 %v922
        %v1013 = vunpack.c.l.b16 %v923
        %v1014 = vunpack.c.l.b16 %v924
        %v1015 = vunpack.c.l.b16 %v925
        %v1016 = vunpack.c.l.b16 %v926
        %v1017 = vunpack.c.l.b16 %v927
        %v1018 = vunpack.c.l.b16 %v928
        %v1019 = vunpack.c.l.b16 %v929
        %v1020 = vunpack.c.l.b16 %v930
        %v1021 = vunpack.c.l.b16 %v931
        %v1022 = vunpack.c.l.b16 %v932
        %v1023 = vunpack.c.l.b16 %v933
        %v1024 = vunpack.c.l.b16 %v934
        %v1025 = vpack.c.b16 %v1010, %v1009
        %v1026 = vpack.c.b16 %v1012, %v1011
        %v1027 = vpack.c.b16 %v1014, %v1013
        %v1028 = vpack.c.b16 %v1016, %v1015
        %v1029 = vpack.c.b16 %v1018, %v1017
        %v1030 = vpack.c.b16 %v1020, %v1019
        %v1031 = vpack.c.b16 %v1022, %v1021
        %v1032 = vpack.c.b16 %v1024, %v1023
        %1041 = vmatprep.subr.bf16.mxu0 0
        %1042 = vmatpush1.bf16.msra.mxu0 %v1032
        %1043 = vmatprep.subr.bf16.mxu0 0
        %1044 = vmatpush1.bf16.msra.mxu0 %v1031
        %1045 = vmatprep.subr.bf16.mxu0 0
        %1046 = vmatpush1.bf16.msra.mxu0 %v1030
        %1047 = vmatprep.subr.bf16.mxu0 0
        %1048 = vmatpush1.bf16.msra.mxu0 %v1029
        %1049 = vmatprep.subr.bf16.mxu0 0
        %1050 = vmatpush1.bf16.msra.mxu0 %v1028
        %1051 = vmatprep.subr.bf16.mxu0 0
        %1052 = vmatpush1.bf16.msra.mxu0 %v1027
        %1053 = vmatprep.subr.bf16.mxu0 0
        %1054 = vmatpush1.bf16.msra.mxu0 %v1026
        %1055 = vmatprep.subr.bf16.mxu0 0
        %1056 = vmatpush1.bf16.msra.mxu0 %v1025
        %1057 = vmatprep.subr.bf16.mxu0 0
        %1058 = vmatpush2.bf16.msra.mxu0 0
        %1059 = vmatprep.subr.bf16.mxu0 0
        %1060 = vmatpush2.bf16.msra.mxu0 0
        %1061 = vmatprep.subr.bf16.mxu0 0
        %1062 = vmatpush2.bf16.msra.mxu0 0
        %1063 = vmatprep.subr.bf16.mxu0 0
        %1064 = vmatpush2.bf16.msra.mxu0 0
        %1065 = vmatprep.subr.bf16.mxu0 0
        %1066 = vmatpush2.bf16.msra.mxu0 0
        %1067 = vmatprep.subr.bf16.mxu0 0
        %1068 = vmatpush2.bf16.msra.mxu0 0
        %1069 = vmatprep.subr.bf16.mxu0 0
        %1070 = vmatpush2.bf16.msra.mxu0 0
        %1071 = vmatprep.subr.bf16.mxu0 0
        %1072 = vmatpush2.bf16.msra.mxu0 0
        %1073 = vmatprep.mubr.bf16.mxu0 0
        %1074 = vmatmul.mubr.bf16.gmra.mxu0 %v973
        %v1075 = vpop.f32.mrf.mxu0
        %v1076 = vadd.f32 0.0, %v1075
        %v1077 = vpop.f32.mrf.mxu0
        %v1078 = vpop.f32.mrf.mxu0
        %v1079 = vadd.f32 0.0, %v1078
        %v1080 = vpop.f32.mrf.mxu0
        %1081 = vmatprep.mubr.bf16.mxu0 0
        %1082 = vmatmul.mubr.bf16.gmra.mxu0 %v974
        %v1083 = vpop.f32.mrf.mxu0
        %v1084 = vadd.f32 0.0, %v1083
        %v1085 = vpop.f32.mrf.mxu0
        %v1086 = vpop.f32.mrf.mxu0
        %v1087 = vadd.f32 0.0, %v1086
        %v1088 = vpop.f32.mrf.mxu0
        %1089 = vmatprep.mubr.bf16.mxu0 0
        %1090 = vmatmul.mubr.bf16.gmra.mxu0 %v975
        %v1091 = vpop.f32.mrf.mxu0
        %v1092 = vadd.f32 0.0, %v1091
        %v1093 = vpop.f32.mrf.mxu0
        %v1094 = vpop.f32.mrf.mxu0
        %v1095 = vadd.f32 0.0, %v1094
        %v1096 = vpop.f32.mrf.mxu0
        %1097 = vmatprep.mubr.bf16.mxu0 0
        %1098 = vmatmul.mubr.bf16.gmra.mxu0 %v976
        %v1099 = vpop.f32.mrf.mxu0
        %v1100 = vadd.f32 0.0, %v1099
        %v1101 = vpop.f32.mrf.mxu0
        %v1102 = vpop.f32.mrf.mxu0
        %v1103 = vadd.f32 0.0, %v1102
        %v1104 = vpop.f32.mrf.mxu0
        %1105 = vmatprep.mubr.bf16.mxu0 0
        %1106 = vmatmul.mubr.bf16.gmra.mxu0 %v977
        %v1107 = vpop.f32.mrf.mxu0
        %v1108 = vadd.f32 0.0, %v1107
        %v1109 = vpop.f32.mrf.mxu0
        %v1110 = vpop.f32.mrf.mxu0
        %v1111 = vadd.f32 0.0, %v1110
        %v1112 = vpop.f32.mrf.mxu0
        %1113 = vmatprep.mubr.bf16.mxu0 0
        %1114 = vmatmul.mubr.bf16.gmra.mxu0 %v978
        %v1115 = vpop.f32.mrf.mxu0
        %v1116 = vadd.f32 0.0, %v1115
        %v1117 = vpop.f32.mrf.mxu0
        %v1118 = vpop.f32.mrf.mxu0
        %v1119 = vadd.f32 0.0, %v1118
        %v1120 = vpop.f32.mrf.mxu0
        %1121 = vmatprep.mubr.bf16.mxu0 0
        %1122 = vmatmul.mubr.bf16.gmra.mxu0 %v979
        %v1123 = vpop.f32.mrf.mxu0
        %v1124 = vadd.f32 0.0, %v1123
        %v1125 = vpop.f32.mrf.mxu0
        %v1126 = vpop.f32.mrf.mxu0
        %v1127 = vadd.f32 0.0, %v1126
        %v1128 = vpop.f32.mrf.mxu0
        %1129 = vmatprep.mubr.bf16.mxu0 0
        %1130 = vmatmul.mubr.bf16.gmra.mxu0 %v980
        %v1131 = vpop.f32.mrf.mxu0
        %v1132 = vadd.f32 0.0, %v1131
        %v1133 = vpop.f32.mrf.mxu0
        %v1134 = vpop.f32.mrf.mxu0
        %v1135 = vadd.f32 0.0, %v1134
        %v1136 = vpop.f32.mrf.mxu0
        %1137 = vmatprep.mubr.bf16.mxu0 0
        %1138 = vmatmul.mubr.bf16.gmra.mxu0 %v981
        %v1139 = vpop.f32.mrf.mxu0
        %v1140 = vadd.f32 0.0, %v1139
        %v1141 = vpop.f32.mrf.mxu0
        %v1142 = vpop.f32.mrf.mxu0
        %v1143 = vadd.f32 0.0, %v1142
        %v1144 = vpop.f32.mrf.mxu0
        %1145 = vmatprep.mubr.bf16.mxu0 0
        %1146 = vmatmul.mubr.bf16.gmra.mxu0 %v982
        %v1147 = vpop.f32.mrf.mxu0
        %v1148 = vadd.f32 0.0, %v1147
        %v1149 = vpop.f32.mrf.mxu0
        %v1150 = vpop.f32.mrf.mxu0
        %v1151 = vpop.f32.mrf.mxu0
        %1152 = vdwg.mxu0
        %v1172 = vunpack.c.l.b16 %v863
        %v1173 = vunpack.c.l.b16 %v864
        %v1174 = vunpack.c.l.b16 %v865
        %v1175 = vunpack.c.l.b16 %v866
        %v1176 = vunpack.c.l.b16 %v867
        %v1177 = vunpack.c.l.b16 %v868
        %v1178 = vunpack.c.l.b16 %v869
        %v1179 = vunpack.c.l.b16 %v870
        %v1180 = vunpack.c.l.b16 %v871
        %v1181 = vunpack.c.l.b16 %v872
        %v1182 = vunpack.c.l.b16 %v873
        %v1183 = vunpack.c.l.b16 %v874
        %v1184 = vunpack.c.l.b16 %v875
        %v1185 = vunpack.c.l.b16 %v876
        %v1186 = vunpack.c.l.b16 %v877
        %v1187 = vunpack.c.l.b16 %v878
        %v1188 = vunpack.c.l.b16 %v879
        %v1189 = vunpack.c.l.b16 %v880
        %v1190 = vunpack.c.l.b16 %v881
        %v1191 = vpack.c.b16 %v1173, %v1172
        %v1192 = vpack.c.b16 %v1175, %v1174
        %v1193 = vpack.c.b16 %v1177, %v1176
        %v1194 = vpack.c.b16 %v1179, %v1178
        %v1195 = vpack.c.b16 %v1181, %v1180
        %v1196 = vpack.c.b16 %v1183, %v1182
        %v1197 = vpack.c.b16 %v1185, %v1184
        %v1198 = vpack.c.b16 %v1187, %v1186
        %v1199 = vpack.c.b16 %v1189, %v1188
        %v1200 = vpack.c.b16 %v1190, %v1190
        %v1227 = vunpack.c.l.b16 %v882
        %v1228 = vunpack.c.l.b16 %v883
        %v1229 = vunpack.c.l.b16 %v884
        %v1230 = vunpack.c.l.b16 %v885
        %v1231 = vunpack.c.l.b16 %v886
        %v1232 = vunpack.c.l.b16 %v887
        %v1233 = vunpack.c.l.b16 %v888
        %v1234 = vunpack.c.l.b16 %v889
        %v1235 = vunpack.c.l.b16 %v890
        %v1236 = vunpack.c.l.b16 %v891
        %v1237 = vunpack.c.l.b16 %v892
        %v1238 = vunpack.c.l.b16 %v893
        %v1239 = vunpack.c.l.b16 %v894
        %v1240 = vunpack.c.l.b16 %v895
        %v1241 = vunpack.c.l.b16 %v896
        %v1242 = vunpack.c.l.b16 %v897
        %v1243 = vpack.c.b16 %v1228, %v1227
        %v1244 = vpack.c.b16 %v1230, %v1229
        %v1245 = vpack.c.b16 %v1232, %v1231
        %v1246 = vpack.c.b16 %v1234, %v1233
        %v1247 = vpack.c.b16 %v1236, %v1235
        %v1248 = vpack.c.b16 %v1238, %v1237
        %v1249 = vpack.c.b16 %v1240, %v1239
        %v1250 = vpack.c.b16 %v1242, %v1241
        %1259 = vmatprep.subr.bf16.mxu0 0
        %1260 = vmatpush1.bf16.msra.mxu0 %v1250
        %1261 = vmatprep.subr.bf16.mxu0 0
        %1262 = vmatpush1.bf16.msra.mxu0 %v1249
        %1263 = vmatprep.subr.bf16.mxu0 0
        %1264 = vmatpush1.bf16.msra.mxu0 %v1248
        %1265 = vmatprep.subr.bf16.mxu0 0
        %1266 = vmatpush1.bf16.msra.mxu0 %v1247
        %1267 = vmatprep.subr.bf16.mxu0 0
        %1268 = vmatpush1.bf16.msra.mxu0 %v1246
        %1269 = vmatprep.subr.bf16.mxu0 0
        %1270 = vmatpush1.bf16.msra.mxu0 %v1245
        %1271 = vmatprep.subr.bf16.mxu0 0
        %1272 = vmatpush1.bf16.msra.mxu0 %v1244
        %1273 = vmatprep.subr.bf16.mxu0 0
        %1274 = vmatpush1.bf16.msra.mxu0 %v1243
        %1275 = vmatprep.subr.bf16.mxu0 0
        %1276 = vmatpush2.bf16.msra.mxu0 0
        %1277 = vmatprep.subr.bf16.mxu0 0
        %1278 = vmatpush2.bf16.msra.mxu0 0
        %1279 = vmatprep.subr.bf16.mxu0 0
        %1280 = vmatpush2.bf16.msra.mxu0 0
        %1281 = vmatprep.subr.bf16.mxu0 0
        %1282 = vmatpush2.bf16.msra.mxu0 0
        %1283 = vmatprep.subr.bf16.mxu0 0
        %1284 = vmatpush2.bf16.msra.mxu0 0
        %1285 = vmatprep.subr.bf16.mxu0 0
        %1286 = vmatpush2.bf16.msra.mxu0 0
        %1287 = vmatprep.subr.bf16.mxu0 0
        %1288 = vmatpush2.bf16.msra.mxu0 0
        %1289 = vmatprep.subr.bf16.mxu0 0
        %1290 = vmatpush2.bf16.msra.mxu0 0
        %1291 = vmatprep.mubr.bf16.mxu0 0
        %1292 = vmatmul.mubr.bf16.gmra.mxu0 %v1191
        %v1293 = vpop.f32.mrf.mxu0
        %v1294 = vadd.f32 %v1076, %v1293
        %v1295 = vpop.f32.mrf.mxu0
        %v1296 = vpop.f32.mrf.mxu0
        %v1297 = vadd.f32 %v1079, %v1296
        %v1298 = vpop.f32.mrf.mxu0
        %1299 = vmatprep.mubr.bf16.mxu0 0
        %1300 = vmatmul.mubr.bf16.gmra.mxu0 %v1192
        %v1301 = vpop.f32.mrf.mxu0
        %v1302 = vadd.f32 %v1084, %v1301
        %v1303 = vpop.f32.mrf.mxu0
        %v1304 = vpop.f32.mrf.mxu0
        %v1305 = vadd.f32 %v1087, %v1304
        %v1306 = vpop.f32.mrf.mxu0
        %1307 = vmatprep.mubr.bf16.mxu0 0
        %1308 = vmatmul.mubr.bf16.gmra.mxu0 %v1193
        %v1309 = vpop.f32.mrf.mxu0
        %v1310 = vadd.f32 %v1092, %v1309
        %v1311 = vpop.f32.mrf.mxu0
        %v1312 = vpop.f32.mrf.mxu0
        %v1313 = vadd.f32 %v1095, %v1312
        %v1314 = vpop.f32.mrf.mxu0
        %1315 = vmatprep.mubr.bf16.mxu0 0
        %1316 = vmatmul.mubr.bf16.gmra.mxu0 %v1194
        %v1317 = vpop.f32.mrf.mxu0
        %v1318 = vadd.f32 %v1100, %v1317
        %v1319 = vpop.f32.mrf.mxu0
        %v1320 = vpop.f32.mrf.mxu0
        %v1321 = vadd.f32 %v1103, %v1320
        %v1322 = vpop.f32.mrf.mxu0
        %1323 = vmatprep.mubr.bf16.mxu0 0
        %1324 = vmatmul.mubr.bf16.gmra.mxu0 %v1195
        %v1325 = vpop.f32.mrf.mxu0
        %v1326 = vadd.f32 %v1108, %v1325
        %v1327 = vpop.f32.mrf.mxu0
        %v1328 = vpop.f32.mrf.mxu0
        %v1329 = vadd.f32 %v1111, %v1328
        %v1330 = vpop.f32.mrf.mxu0
        %1331 = vmatprep.mubr.bf16.mxu0 0
        %1332 = vmatmul.mubr.bf16.gmra.mxu0 %v1196
        %v1333 = vpop.f32.mrf.mxu0
        %v1334 = vadd.f32 %v1116, %v1333
        %v1335 = vpop.f32.mrf.mxu0
        %v1336 = vpop.f32.mrf.mxu0
        %v1337 = vadd.f32 %v1119, %v1336
        %v1338 = vpop.f32.mrf.mxu0
        %1339 = vmatprep.mubr.bf16.mxu0 0
        %1340 = vmatmul.mubr.bf16.gmra.mxu0 %v1197
        %v1341 = vpop.f32.mrf.mxu0
        %v1342 = vadd.f32 %v1124, %v1341
        %v1343 = vpop.f32.mrf.mxu0
        %v1344 = vpop.f32.mrf.mxu0
        %v1345 = vadd.f32 %v1127, %v1344
        %v1346 = vpop.f32.mrf.mxu0
        %1347 = vmatprep.mubr.bf16.mxu0 0
        %1348 = vmatmul.mubr.bf16.gmra.mxu0 %v1198
        %v1349 = vpop.f32.mrf.mxu0
        %v1350 = vadd.f32 %v1132, %v1349
        %v1351 = vpop.f32.mrf.mxu0
        %v1352 = vpop.f32.mrf.mxu0
        %v1353 = vadd.f32 %v1135, %v1352
        %v1354 = vpop.f32.mrf.mxu0
        %1355 = vmatprep.mubr.bf16.mxu0 0
        %1356 = vmatmul.mubr.bf16.gmra.mxu0 %v1199
        %v1357 = vpop.f32.mrf.mxu0
        %v1358 = vadd.f32 %v1140, %v1357
        %v1359 = vpop.f32.mrf.mxu0
        %v1360 = vpop.f32.mrf.mxu0
        %v1361 = vadd.f32 %v1143, %v1360
        %v1362 = vpop.f32.mrf.mxu0
        %1363 = vmatprep.mubr.bf16.mxu0 0
        %1364 = vmatmul.mubr.bf16.gmra.mxu0 %v1200
        %v1365 = vpop.f32.mrf.mxu0
        %v1366 = vadd.f32 %v1148, %v1365
        %v1367 = vpop.f32.mrf.mxu0
        %v1368 = vpop.f32.mrf.mxu0
        %v1369 = vpop.f32.mrf.mxu0
        %1370 = vdwg.mxu0
        %v1371 = vld [vmem:[%s0] sm:$0xf]
        %v1372 = vld [vmem:[%s0 + $0x4] sm:$0xf]
        %v1373 = vld [vmem:[%s0 + $0x8] sm:$0xf]
        %v1374 = vld [vmem:[%s0 + $0xc] sm:$0xf]
        %v1375 = vld [vmem:[%s0 + $0x10] sm:$0xf]
        %v1376 = vld [vmem:[%s0 + $0x14] sm:$0xf]
        %v1377 = vld [vmem:[%s0 + $0x18] sm:$0xf]
        %v1378 = vld [vmem:[%s0 + $0x1c] sm:$0xf]
        %v1379 = vld [vmem:[%s0 + $0x20] sm:$0xf]
        %v1380 = vld [vmem:[%s0 + $0x24] sm:$0xf]
        %v1381 = vld [vmem:[%s0 + $0x28] sm:$0xf]
        %v1382 = vld [vmem:[%s0 + $0x2c] sm:$0xf]
        %v1383 = vld [vmem:[%s0 + $0x30] sm:$0xf]
        %v1384 = vld [vmem:[%s0 + $0x34] sm:$0xf]
        %v1385 = vld [vmem:[%s0 + $0x38] sm:$0xf]
        %v1386 = vld [vmem:[%s0 + $0x3c] sm:$0xf]
        %v1387 = vld [vmem:[%s0 + $0x40] sm:$0xf]
        %v1388 = vld [vmem:[%s0 + $0x44] sm:$0xf]
        %v1389 = vld [vmem:[%s0 + $0x48] sm:$0xf]
        %v1390 = vld [vmem:[%s0 + $0x4c] sm:$0x1]
        %s1391 = scalar_lea.vmem %s826, 128 [#allocation2]
        %v1392 = vld [vmem:[%s1391] sm:$0xf]
        %v1393 = vld [vmem:[%s1391 + $0x4] sm:$0xf]
        %v1394 = vld [vmem:[%s1391 + $0x8] sm:$0xf]
        %v1395 = vld [vmem:[%s1391 + $0xc] sm:$0xf]
        %v1396 = vld [vmem:[%s1391 + $0x10] sm:$0xf]
        %v1397 = vld [vmem:[%s1391 + $0x14] sm:$0xf]
        %v1398 = vld [vmem:[%s1391 + $0x18] sm:$0xf]
        %v1399 = vld [vmem:[%s1391 + $0x1c] sm:$0xf]
        %v1400 = vld [vmem:[%s1391 + $0x20] sm:$0xf]
        %v1401 = vld [vmem:[%s1391 + $0x24] sm:$0xf]
        %v1402 = vld [vmem:[%s1391 + $0x28] sm:$0xf]
        %v1403 = vld [vmem:[%s1391 + $0x2c] sm:$0xf]
        %v1404 = vld [vmem:[%s1391 + $0x30] sm:$0xf]
        %v1405 = vld [vmem:[%s1391 + $0x34] sm:$0xf]
        %v1406 = vld [vmem:[%s1391 + $0x38] sm:$0xf]
        %v1407 = vld [vmem:[%s1391 + $0x3c] sm:$0xf]
        %v1428 = vunpack.c.l.b16 %v1371
        %v1429 = vunpack.c.l.b16 %v1372
        %v1430 = vunpack.c.l.b16 %v1373
        %v1431 = vunpack.c.l.b16 %v1374
        %v1432 = vunpack.c.l.b16 %v1375
        %v1433 = vunpack.c.l.b16 %v1376
        %v1434 = vunpack.c.l.b16 %v1377
        %v1435 = vunpack.c.l.b16 %v1378
        %v1436 = vunpack.c.l.b16 %v1379
        %v1437 = vunpack.c.l.b16 %v1380
        %v1438 = vunpack.c.l.b16 %v1381
        %v1439 = vunpack.c.l.b16 %v1382
        %v1440 = vunpack.c.l.b16 %v1383
        %v1441 = vunpack.c.l.b16 %v1384
        %v1442 = vunpack.c.l.b16 %v1385
        %v1443 = vunpack.c.l.b16 %v1386
        %v1444 = vunpack.c.l.b16 %v1387
        %v1445 = vunpack.c.l.b16 %v1388
        %v1446 = vunpack.c.l.b16 %v1389
        %v1447 = vunpack.c.l.b16 %v1390
        %v1448 = vpack.c.b16 %v1429, %v1428
        %v1449 = vpack.c.b16 %v1431, %v1430
        %v1450 = vpack.c.b16 %v1433, %v1432
        %v1451 = vpack.c.b16 %v1435, %v1434
        %v1452 = vpack.c.b16 %v1437, %v1436
        %v1453 = vpack.c.b16 %v1439, %v1438
        %v1454 = vpack.c.b16 %v1441, %v1440
        %v1455 = vpack.c.b16 %v1443, %v1442
        %v1456 = vpack.c.b16 %v1445, %v1444
        %v1457 = vpack.c.b16 %v1447, %v1446
        %vm1458 = vsmask.f32 7424
        %v1460 = vshrl.u32 %v1448, 16
        %v1462 = vshll.u32 %v1448, 16
        %v1464 = vrot.slane %v1462, 1
        %v1465 = vor.u32 %v1460, %v1464
        %v1467 = vshll.u32 %v1449, 16
        %v1469 = vrot.slane %v1467, 1
        %v1470 = vsel %vm1458, %v1465, %v1469
        %v1471 = vshrl.u32 %v1449, 16
        %v1473 = vor.u32 %v1471, %v1469
        %v1475 = vshll.u32 %v1450, 16
        %v1477 = vrot.slane %v1475, 1
        %v1478 = vsel %vm1458, %v1473, %v1477
        %v1479 = vshrl.u32 %v1450, 16
        %v1481 = vor.u32 %v1479, %v1477
        %v1483 = vshll.u32 %v1451, 16
        %v1485 = vrot.slane %v1483, 1
        %v1486 = vsel %vm1458, %v1481, %v1485
        %v1487 = vshrl.u32 %v1451, 16
        %v1489 = vor.u32 %v1487, %v1485
        %v1491 = vshll.u32 %v1452, 16
        %v1493 = vrot.slane %v1491, 1
        %v1494 = vsel %vm1458, %v1489, %v1493
        %v1495 = vshrl.u32 %v1452, 16
        %v1497 = vor.u32 %v1495, %v1493
        %v1499 = vshll.u32 %v1453, 16
        %v1501 = vrot.slane %v1499, 1
        %v1502 = vsel %vm1458, %v1497, %v1501
        %v1503 = vshrl.u32 %v1453, 16
        %v1505 = vor.u32 %v1503, %v1501
        %v1507 = vshll.u32 %v1454, 16
        %v1509 = vrot.slane %v1507, 1
        %v1510 = vsel %vm1458, %v1505, %v1509
        %v1511 = vshrl.u32 %v1454, 16
        %v1513 = vor.u32 %v1511, %v1509
        %v1515 = vshll.u32 %v1455, 16
        %v1517 = vrot.slane %v1515, 1
        %v1518 = vsel %vm1458, %v1513, %v1517
        %v1519 = vshrl.u32 %v1455, 16
        %v1521 = vor.u32 %v1519, %v1517
        %v1523 = vshll.u32 %v1456, 16
        %v1525 = vrot.slane %v1523, 1
        %v1526 = vsel %vm1458, %v1521, %v1525
        %v1527 = vshrl.u32 %v1456, 16
        %v1529 = vor.u32 %v1527, %v1525
        %v1531 = vshll.u32 %v1457, 16
        %v1533 = vrot.slane %v1531, 1
        %v1534 = vsel %vm1458, %v1529, %v1533
        %v1535 = vshrl.u32 %v1457, 16
        %v1537 = vor.u32 %v1535, %v1533
        %v1564 = vunpack.c.l.b16 %v1392
        %v1565 = vunpack.c.l.b16 %v1393
        %v1566 = vunpack.c.l.b16 %v1394
        %v1567 = vunpack.c.l.b16 %v1395
        %v1568 = vunpack.c.l.b16 %v1396
        %v1569 = vunpack.c.l.b16 %v1397
        %v1570 = vunpack.c.l.b16 %v1398
        %v1571 = vunpack.c.l.b16 %v1399
        %v1572 = vunpack.c.l.b16 %v1400
        %v1573 = vunpack.c.l.b16 %v1401
        %v1574 = vunpack.c.l.b16 %v1402
        %v1575 = vunpack.c.l.b16 %v1403
        %v1576 = vunpack.c.l.b16 %v1404
        %v1577 = vunpack.c.l.b16 %v1405
        %v1578 = vunpack.c.l.b16 %v1406
        %v1579 = vunpack.c.l.b16 %v1407
        %v1580 = vpack.c.b16 %v1565, %v1564
        %v1581 = vpack.c.b16 %v1567, %v1566
        %v1582 = vpack.c.b16 %v1569, %v1568
        %v1583 = vpack.c.b16 %v1571, %v1570
        %v1584 = vpack.c.b16 %v1573, %v1572
        %v1585 = vpack.c.b16 %v1575, %v1574
        %v1586 = vpack.c.b16 %v1577, %v1576
        %v1587 = vpack.c.b16 %v1579, %v1578
        %1596 = vmatprep.subr.bf16.mxu0 0
        %1597 = vmatpush1.bf16.msra.mxu0 %v1587
        %1598 = vmatprep.subr.bf16.mxu0 0
        %1599 = vmatpush1.bf16.msra.mxu0 %v1586
        %1600 = vmatprep.subr.bf16.mxu0 0
        %1601 = vmatpush1.bf16.msra.mxu0 %v1585
        %1602 = vmatprep.subr.bf16.mxu0 0
        %1603 = vmatpush1.bf16.msra.mxu0 %v1584
        %1604 = vmatprep.subr.bf16.mxu0 0
        %1605 = vmatpush1.bf16.msra.mxu0 %v1583
        %1606 = vmatprep.subr.bf16.mxu0 0
        %1607 = vmatpush1.bf16.msra.mxu0 %v1582
        %1608 = vmatprep.subr.bf16.mxu0 0
        %1609 = vmatpush1.bf16.msra.mxu0 %v1581
        %1610 = vmatprep.subr.bf16.mxu0 0
        %1611 = vmatpush1.bf16.msra.mxu0 %v1580
        %1612 = vmatprep.subr.bf16.mxu0 0
        %1613 = vmatpush2.bf16.msra.mxu0 0
        %1614 = vmatprep.subr.bf16.mxu0 0
        %1615 = vmatpush2.bf16.msra.mxu0 0
        %1616 = vmatprep.subr.bf16.mxu0 0
        %1617 = vmatpush2.bf16.msra.mxu0 0
        %1618 = vmatprep.subr.bf16.mxu0 0
        %1619 = vmatpush2.bf16.msra.mxu0 0
        %1620 = vmatprep.subr.bf16.mxu0 0
        %1621 = vmatpush2.bf16.msra.mxu0 0
        %1622 = vmatprep.subr.bf16.mxu0 0
        %1623 = vmatpush2.bf16.msra.mxu0 0
        %1624 = vmatprep.subr.bf16.mxu0 0
        %1625 = vmatpush2.bf16.msra.mxu0 0
        %1626 = vmatprep.subr.bf16.mxu0 0
        %1627 = vmatpush2.bf16.msra.mxu0 0
        %1628 = vmatprep.mubr.bf16.mxu0 0
        %1629 = vmatmul.mubr.bf16.gmra.mxu0 %v1470
        %v1630 = vpop.f32.mrf.mxu0
        %v1631 = vadd.f32 0.0, %v1630
        %v1632 = vpop.f32.mrf.mxu0
        %v1633 = vpop.f32.mrf.mxu0
        %v1634 = vadd.f32 0.0, %v1633
        %v1635 = vpop.f32.mrf.mxu0
        %1636 = vmatprep.mubr.bf16.mxu0 0
        %1637 = vmatmul.mubr.bf16.gmra.mxu0 %v1478
        %v1638 = vpop.f32.mrf.mxu0
        %v1639 = vadd.f32 0.0, %v1638
        %v1640 = vpop.f32.mrf.mxu0
        %v1641 = vpop.f32.mrf.mxu0
        %v1642 = vadd.f32 0.0, %v1641
        %v1643 = vpop.f32.mrf.mxu0
        %1644 = vmatprep.mubr.bf16.mxu0 0
        %1645 = vmatmul.mubr.bf16.gmra.mxu0 %v1486
        %v1646 = vpop.f32.mrf.mxu0
        %v1647 = vadd.f32 0.0, %v1646
        %v1648 = vpop.f32.mrf.mxu0
        %v1649 = vpop.f32.mrf.mxu0
        %v1650 = vadd.f32 0.0, %v1649
        %v1651 = vpop.f32.mrf.mxu0
        %1652 = vmatprep.mubr.bf16.mxu0 0
        %1653 = vmatmul.mubr.bf16.gmra.mxu0 %v1494
        %v1654 = vpop.f32.mrf.mxu0
        %v1655 = vadd.f32 0.0, %v1654
        %v1656 = vpop.f32.mrf.mxu0
        %v1657 = vpop.f32.mrf.mxu0
        %v1658 = vadd.f32 0.0, %v1657
        %v1659 = vpop.f32.mrf.mxu0
        %1660 = vmatprep.mubr.bf16.mxu0 0
        %1661 = vmatmul.mubr.bf16.gmra.mxu0 %v1502
        %v1662 = vpop.f32.mrf.mxu0
        %v1663 = vadd.f32 0.0, %v1662
        %v1664 = vpop.f32.mrf.mxu0
        %v1665 = vpop.f32.mrf.mxu0
        %v1666 = vadd.f32 0.0, %v1665
        %v1667 = vpop.f32.mrf.mxu0
        %1668 = vmatprep.mubr.bf16.mxu0 0
        %1669 = vmatmul.mubr.bf16.gmra.mxu0 %v1510
        %v1670 = vpop.f32.mrf.mxu0
        %v1671 = vadd.f32 0.0, %v1670
        %v1672 = vpop.f32.mrf.mxu0
        %v1673 = vpop.f32.mrf.mxu0
        %v1674 = vadd.f32 0.0, %v1673
        %v1675 = vpop.f32.mrf.mxu0
        %1676 = vmatprep.mubr.bf16.mxu0 0
        %1677 = vmatmul.mubr.bf16.gmra.mxu0 %v1518
        %v1678 = vpop.f32.mrf.mxu0
        %v1679 = vadd.f32 0.0, %v1678
        %v1680 = vpop.f32.mrf.mxu0
        %v1681 = vpop.f32.mrf.mxu0
        %v1682 = vadd.f32 0.0, %v1681
        %v1683 = vpop.f32.mrf.mxu0
        %1684 = vmatprep.mubr.bf16.mxu0 0
        %1685 = vmatmul.mubr.bf16.gmra.mxu0 %v1526
        %v1686 = vpop.f32.mrf.mxu0
        %v1687 = vadd.f32 0.0, %v1686
        %v1688 = vpop.f32.mrf.mxu0
        %v1689 = vpop.f32.mrf.mxu0
        %v1690 = vadd.f32 0.0, %v1689
        %v1691 = vpop.f32.mrf.mxu0
        %1692 = vmatprep.mubr.bf16.mxu0 0
        %1693 = vmatmul.mubr.bf16.gmra.mxu0 %v1534
        %v1694 = vpop.f32.mrf.mxu0
        %v1695 = vadd.f32 0.0, %v1694
        %v1696 = vpop.f32.mrf.mxu0
        %v1697 = vpop.f32.mrf.mxu0
        %v1698 = vadd.f32 0.0, %v1697
        %v1699 = vpop.f32.mrf.mxu0
        %1700 = vmatprep.mubr.bf16.mxu0 0
        %1701 = vmatmul.mubr.bf16.gmra.mxu0 %v1537
        %v1702 = vpop.f32.mrf.mxu0
        %v1703 = vadd.f32 0.0, %v1702
        %v1704 = vpop.f32.mrf.mxu0
        %v1705 = vpop.f32.mrf.mxu0
        %v1706 = vpop.f32.mrf.mxu0
        %1707 = vdwg.mxu0
        %v1708 = vadd.f32 %v1294, %v1631
        %v1709 = vadd.f32 %v1297, %v1634
        %v1710 = vadd.f32 %v1302, %v1639
        %v1711 = vadd.f32 %v1305, %v1642
        %v1712 = vadd.f32 %v1310, %v1647
        %v1713 = vadd.f32 %v1313, %v1650
        %v1714 = vadd.f32 %v1318, %v1655
        %v1715 = vadd.f32 %v1321, %v1658
        %v1716 = vadd.f32 %v1326, %v1663
        %v1717 = vadd.f32 %v1329, %v1666
        %v1718 = vadd.f32 %v1334, %v1671
        %v1719 = vadd.f32 %v1337, %v1674
        %v1720 = vadd.f32 %v1342, %v1679
        %v1721 = vadd.f32 %v1345, %v1682
        %v1722 = vadd.f32 %v1350, %v1687
        %v1723 = vadd.f32 %v1353, %v1690
        %v1724 = vadd.f32 %v1358, %v1695
        %v1725 = vadd.f32 %v1361, %v1698
        %v1726 = vadd.f32 %v1366, %v1703
        %s1727 = scalar_lea.vmem %s0, 168
        %v1728 = vld [vmem:[%s1727] sm:$0xf]
        %v1729 = vld [vmem:[%s1727 + $0x4] sm:$0xf]
        %v1730 = vld [vmem:[%s1727 + $0x8] sm:$0xf]
        %v1731 = vld [vmem:[%s1727 + $0xc] sm:$0xf]
        %v1732 = vld [vmem:[%s1727 + $0x10] sm:$0xf]
        %v1733 = vld [vmem:[%s1727 + $0x14] sm:$0xf]
        %v1734 = vld [vmem:[%s1727 + $0x18] sm:$0xf]
        %v1735 = vld [vmem:[%s1727 + $0x1c] sm:$0xf]
        %v1736 = vld [vmem:[%s1727 + $0x20] sm:$0xf]
        %v1737 = vld [vmem:[%s1727 + $0x24] sm:$0xf]
        %v1738 = vld [vmem:[%s1727 + $0x28] sm:$0xf]
        %v1739 = vld [vmem:[%s1727 + $0x2c] sm:$0xf]
        %v1740 = vld [vmem:[%s1727 + $0x30] sm:$0xf]
        %v1741 = vld [vmem:[%s1727 + $0x34] sm:$0xf]
        %v1742 = vld [vmem:[%s1727 + $0x38] sm:$0xf]
        %v1743 = vld [vmem:[%s1727 + $0x3c] sm:$0xf]
        %v1744 = vld [vmem:[%s1727 + $0x40] sm:$0xf]
        %v1745 = vld [vmem:[%s1727 + $0x44] sm:$0xf]
        %v1746 = vld [vmem:[%s1727 + $0x48] sm:$0xf]
        %s1747 = scalar_lea.vmem %s826, 192 [#allocation2]
        %v1748 = vld [vmem:[%s1747] sm:$0xf]
        %v1749 = vld [vmem:[%s1747 + $0x4] sm:$0xf]
        %v1750 = vld [vmem:[%s1747 + $0x8] sm:$0xf]
        %v1751 = vld [vmem:[%s1747 + $0xc] sm:$0xf]
        %v1752 = vld [vmem:[%s1747 + $0x10] sm:$0xf]
        %v1753 = vld [vmem:[%s1747 + $0x14] sm:$0xf]
        %v1754 = vld [vmem:[%s1747 + $0x18] sm:$0xf]
        %v1755 = vld [vmem:[%s1747 + $0x1c] sm:$0xf]
        %v1756 = vld [vmem:[%s1747 + $0x20] sm:$0xf]
        %v1757 = vld [vmem:[%s1747 + $0x24] sm:$0xf]
        %v1758 = vld [vmem:[%s1747 + $0x28] sm:$0xf]
        %v1759 = vld [vmem:[%s1747 + $0x2c] sm:$0xf]
        %v1760 = vld [vmem:[%s1747 + $0x30] sm:$0xf]
        %v1761 = vld [vmem:[%s1747 + $0x34] sm:$0xf]
        %v1762 = vld [vmem:[%s1747 + $0x38] sm:$0xf]
        %v1763 = vld [vmem:[%s1747 + $0x3c] sm:$0xf]
        %v1783 = vunpack.c.l.b16 %v1728
        %v1784 = vunpack.c.l.b16 %v1729
        %v1785 = vunpack.c.l.b16 %v1730
        %v1786 = vunpack.c.l.b16 %v1731
        %v1787 = vunpack.c.l.b16 %v1732
        %v1788 = vunpack.c.l.b16 %v1733
        %v1789 = vunpack.c.l.b16 %v1734
        %v1790 = vunpack.c.l.b16 %v1735
        %v1791 = vunpack.c.l.b16 %v1736
        %v1792 = vunpack.c.l.b16 %v1737
        %v1793 = vunpack.c.l.b16 %v1738
        %v1794 = vunpack.c.l.b16 %v1739
        %v1795 = vunpack.c.l.b16 %v1740
        %v1796 = vunpack.c.l.b16 %v1741
        %v1797 = vunpack.c.l.b16 %v1742
        %v1798 = vunpack.c.l.b16 %v1743
        %v1799 = vunpack.c.l.b16 %v1744
        %v1800 = vunpack.c.l.b16 %v1745
        %v1801 = vunpack.c.l.b16 %v1746
        %v1802 = vpack.c.b16 %v1784, %v1783
        %v1803 = vpack.c.b16 %v1786, %v1785
        %v1804 = vpack.c.b16 %v1788, %v1787
        %v1805 = vpack.c.b16 %v1790, %v1789
        %v1806 = vpack.c.b16 %v1792, %v1791
        %v1807 = vpack.c.b16 %v1794, %v1793
        %v1808 = vpack.c.b16 %v1796, %v1795
        %v1809 = vpack.c.b16 %v1798, %v1797
        %v1810 = vpack.c.b16 %v1800, %v1799
        %v1811 = vpack.c.b16 %v1801, %v1801
        %v1838 = vunpack.c.l.b16 %v1748
        %v1839 = vunpack.c.l.b16 %v1749
        %v1840 = vunpack.c.l.b16 %v1750
        %v1841 = vunpack.c.l.b16 %v1751
        %v1842 = vunpack.c.l.b16 %v1752
        %v1843 = vunpack.c.l.b16 %v1753
        %v1844 = vunpack.c.l.b16 %v1754
        %v1845 = vunpack.c.l.b16 %v1755
        %v1846 = vunpack.c.l.b16 %v1756
        %v1847 = vunpack.c.l.b16 %v1757
        %v1848 = vunpack.c.l.b16 %v1758
        %v1849 = vunpack.c.l.b16 %v1759
        %v1850 = vunpack.c.l.b16 %v1760
        %v1851 = vunpack.c.l.b16 %v1761
        %v1852 = vunpack.c.l.b16 %v1762
        %v1853 = vunpack.c.l.b16 %v1763
        %v1854 = vpack.c.b16 %v1839, %v1838
        %v1855 = vpack.c.b16 %v1841, %v1840
        %v1856 = vpack.c.b16 %v1843, %v1842
        %v1857 = vpack.c.b16 %v1845, %v1844
        %v1858 = vpack.c.b16 %v1847, %v1846
        %v1859 = vpack.c.b16 %v1849, %v1848
        %v1860 = vpack.c.b16 %v1851, %v1850
        %v1861 = vpack.c.b16 %v1853, %v1852
        %1870 = vmatprep.subr.bf16.mxu0 0
        %1871 = vmatpush1.bf16.msra.mxu0 %v1861
        %1872 = vmatprep.subr.bf16.mxu0 0
        %1873 = vmatpush1.bf16.msra.mxu0 %v1860
        %1874 = vmatprep.subr.bf16.mxu0 0
        %1875 = vmatpush1.bf16.msra.mxu0 %v1859
        %1876 = vmatprep.subr.bf16.mxu0 0
        %1877 = vmatpush1.bf16.msra.mxu0 %v1858
        %1878 = vmatprep.subr.bf16.mxu0 0
        %1879 = vmatpush1.bf16.msra.mxu0 %v1857
        %1880 = vmatprep.subr.bf16.mxu0 0
        %1881 = vmatpush1.bf16.msra.mxu0 %v1856
        %1882 = vmatprep.subr.bf16.mxu0 0
        %1883 = vmatpush1.bf16.msra.mxu0 %v1855
        %1884 = vmatprep.subr.bf16.mxu0 0
        %1885 = vmatpush1.bf16.msra.mxu0 %v1854
        %1886 = vmatprep.subr.bf16.mxu0 0
        %1887 = vmatpush2.bf16.msra.mxu0 0
        %1888 = vmatprep.subr.bf16.mxu0 0
        %1889 = vmatpush2.bf16.msra.mxu0 0
        %1890 = vmatprep.subr.bf16.mxu0 0
        %1891 = vmatpush2.bf16.msra.mxu0 0
        %1892 = vmatprep.subr.bf16.mxu0 0
        %1893 = vmatpush2.bf16.msra.mxu0 0
        %1894 = vmatprep.subr.bf16.mxu0 0
        %1895 = vmatpush2.bf16.msra.mxu0 0
        %1896 = vmatprep.subr.bf16.mxu0 0
        %1897 = vmatpush2.bf16.msra.mxu0 0
        %1898 = vmatprep.subr.bf16.mxu0 0
        %1899 = vmatpush2.bf16.msra.mxu0 0
        %1900 = vmatprep.subr.bf16.mxu0 0
        %1901 = vmatpush2.bf16.msra.mxu0 0
        %1902 = vmatprep.mubr.bf16.mxu0 0
        %1903 = vmatmul.mubr.bf16.gmra.mxu0 %v1802
        %v1904 = vpop.f32.mrf.mxu0
        %v1905 = vadd.f32 0.0, %v1904
        %v1906 = vpop.f32.mrf.mxu0
        %v1907 = vpop.f32.mrf.mxu0
        %v1908 = vadd.f32 0.0, %v1907
        %v1909 = vpop.f32.mrf.mxu0
        %1910 = vmatprep.mubr.bf16.mxu0 0
        %1911 = vmatmul.mubr.bf16.gmra.mxu0 %v1803
        %v1912 = vpop.f32.mrf.mxu0
        %v1913 = vadd.f32 0.0, %v1912
        %v1914 = vpop.f32.mrf.mxu0
        %v1915 = vpop.f32.mrf.mxu0
        %v1916 = vadd.f32 0.0, %v1915
        %v1917 = vpop.f32.mrf.mxu0
        %1918 = vmatprep.mubr.bf16.mxu0 0
        %1919 = vmatmul.mubr.bf16.gmra.mxu0 %v1804
        %v1920 = vpop.f32.mrf.mxu0
        %v1921 = vadd.f32 0.0, %v1920
        %v1922 = vpop.f32.mrf.mxu0
        %v1923 = vpop.f32.mrf.mxu0
        %v1924 = vadd.f32 0.0, %v1923
        %v1925 = vpop.f32.mrf.mxu0
        %1926 = vmatprep.mubr.bf16.mxu0 0
        %1927 = vmatmul.mubr.bf16.gmra.mxu0 %v1805
        %v1928 = vpop.f32.mrf.mxu0
        %v1929 = vadd.f32 0.0, %v1928
        %v1930 = vpop.f32.mrf.mxu0
        %v1931 = vpop.f32.mrf.mxu0
        %v1932 = vadd.f32 0.0, %v1931
        %v1933 = vpop.f32.mrf.mxu0
        %1934 = vmatprep.mubr.bf16.mxu0 0
        %1935 = vmatmul.mubr.bf16.gmra.mxu0 %v1806
        %v1936 = vpop.f32.mrf.mxu0
        %v1937 = vadd.f32 0.0, %v1936
        %v1938 = vpop.f32.mrf.mxu0
        %v1939 = vpop.f32.mrf.mxu0
        %v1940 = vadd.f32 0.0, %v1939
        %v1941 = vpop.f32.mrf.mxu0
        %1942 = vmatprep.mubr.bf16.mxu0 0
        %1943 = vmatmul.mubr.bf16.gmra.mxu0 %v1807
        %v1944 = vpop.f32.mrf.mxu0
        %v1945 = vadd.f32 0.0, %v1944
        %v1946 = vpop.f32.mrf.mxu0
        %v1947 = vpop.f32.mrf.mxu0
        %v1948 = vadd.f32 0.0, %v1947
        %v1949 = vpop.f32.mrf.mxu0
        %1950 = vmatprep.mubr.bf16.mxu0 0
        %1951 = vmatmul.mubr.bf16.gmra.mxu0 %v1808
        %v1952 = vpop.f32.mrf.mxu0
        %v1953 = vadd.f32 0.0, %v1952
        %v1954 = vpop.f32.mrf.mxu0
        %v1955 = vpop.f32.mrf.mxu0
        %v1956 = vadd.f32 0.0, %v1955
        %v1957 = vpop.f32.mrf.mxu0
        %1958 = vmatprep.mubr.bf16.mxu0 0
        %1959 = vmatmul.mubr.bf16.gmra.mxu0 %v1809
        %v1960 = vpop.f32.mrf.mxu0
        %v1961 = vadd.f32 0.0, %v1960
        %v1962 = vpop.f32.mrf.mxu0
        %v1963 = vpop.f32.mrf.mxu0
        %v1964 = vadd.f32 0.0, %v1963
        %v1965 = vpop.f32.mrf.mxu0
        %1966 = vmatprep.mubr.bf16.mxu0 0
        %1967 = vmatmul.mubr.bf16.gmra.mxu0 %v1810
        %v1968 = vpop.f32.mrf.mxu0
        %v1969 = vadd.f32 0.0, %v1968
        %v1970 = vpop.f32.mrf.mxu0
        %v1971 = vpop.f32.mrf.mxu0
        %v1972 = vadd.f32 0.0, %v1971
        %v1973 = vpop.f32.mrf.mxu0
        %1974 = vmatprep.mubr.bf16.mxu0 0
        %1975 = vmatmul.mubr.bf16.gmra.mxu0 %v1811
        %v1976 = vpop.f32.mrf.mxu0
        %v1977 = vadd.f32 0.0, %v1976
        %v1978 = vpop.f32.mrf.mxu0
        %v1979 = vpop.f32.mrf.mxu0
        %v1980 = vpop.f32.mrf.mxu0
        %1981 = vdwg.mxu0
        %v1982 = vadd.f32 %v1708, %v1905
        %v1983 = vadd.f32 %v1709, %v1908
        %v1984 = vadd.f32 %v1710, %v1913
        %v1985 = vadd.f32 %v1711, %v1916
        %v1986 = vadd.f32 %v1712, %v1921
        %v1987 = vadd.f32 %v1713, %v1924
        %v1988 = vadd.f32 %v1714, %v1929
        %v1989 = vadd.f32 %v1715, %v1932
        %v1990 = vadd.f32 %v1716, %v1937
        %v1991 = vadd.f32 %v1717, %v1940
        %v1992 = vadd.f32 %v1718, %v1945
        %v1993 = vadd.f32 %v1719, %v1948
        %v1994 = vadd.f32 %v1720, %v1953
        %v1995 = vadd.f32 %v1721, %v1956
        %v1996 = vadd.f32 %v1722, %v1961
        %v1997 = vadd.f32 %v1723, %v1964
        %v1998 = vadd.f32 %v1724, %v1969
        %v1999 = vadd.f32 %v1725, %v1972
        %v2000 = vadd.f32 %v1726, %v1977
        %s2001 = scalar_lea.vmem %s0, 252
        %v2002 = vld [vmem:[%s2001] sm:$0xf]
        %v2003 = vld [vmem:[%s2001 + $0x4] sm:$0xf]
        %v2004 = vld [vmem:[%s2001 + $0x8] sm:$0xf]
        %v2005 = vld [vmem:[%s2001 + $0xc] sm:$0xf]
        %v2006 = vld [vmem:[%s2001 + $0x10] sm:$0xf]
        %v2007 = vld [vmem:[%s2001 + $0x14] sm:$0xf]
        %v2008 = vld [vmem:[%s2001 + $0x18] sm:$0xf]
        %v2009 = vld [vmem:[%s2001 + $0x1c] sm:$0xf]
        %v2010 = vld [vmem:[%s2001 + $0x20] sm:$0xf]
        %v2011 = vld [vmem:[%s2001 + $0x24] sm:$0xf]
        %v2012 = vld [vmem:[%s2001 + $0x28] sm:$0xf]
        %v2013 = vld [vmem:[%s2001 + $0x2c] sm:$0xf]
        %v2014 = vld [vmem:[%s2001 + $0x30] sm:$0xf]
        %v2015 = vld [vmem:[%s2001 + $0x34] sm:$0xf]
        %v2016 = vld [vmem:[%s2001 + $0x38] sm:$0xf]
        %v2017 = vld [vmem:[%s2001 + $0x3c] sm:$0xf]
        %v2018 = vld [vmem:[%s2001 + $0x40] sm:$0xf]
        %v2019 = vld [vmem:[%s2001 + $0x44] sm:$0xf]
        %v2020 = vld [vmem:[%s2001 + $0x48] sm:$0xf]
        %s2021 = scalar_lea.vmem %s826, 256 [#allocation2]
        %v2022 = vld [vmem:[%s2021] sm:$0xf]
        %v2023 = vld [vmem:[%s2021 + $0x4] sm:$0xf]
        %v2024 = vld [vmem:[%s2021 + $0x8] sm:$0xf]
        %v2025 = vld [vmem:[%s2021 + $0xc] sm:$0xf]
        %v2026 = vld [vmem:[%s2021 + $0x10] sm:$0xf]
        %v2027 = vld [vmem:[%s2021 + $0x14] sm:$0xf]
        %v2028 = vld [vmem:[%s2021 + $0x18] sm:$0xf]
        %v2029 = vld [vmem:[%s2021 + $0x1c] sm:$0xf]
        %v2030 = vld [vmem:[%s2021 + $0x20] sm:$0xf]
        %v2031 = vld [vmem:[%s2021 + $0x24] sm:$0xf]
        %v2032 = vld [vmem:[%s2021 + $0x28] sm:$0xf]
        %v2033 = vld [vmem:[%s2021 + $0x2c] sm:$0xf]
        %v2034 = vld [vmem:[%s2021 + $0x30] sm:$0xf]
        %v2035 = vld [vmem:[%s2021 + $0x34] sm:$0xf]
        %v2036 = vld [vmem:[%s2021 + $0x38] sm:$0xf]
        %v2037 = vld [vmem:[%s2021 + $0x3c] sm:$0xf]
        %v2057 = vunpack.c.l.b16 %v2002
        %v2058 = vunpack.c.l.b16 %v2003
        %v2059 = vunpack.c.l.b16 %v2004
        %v2060 = vunpack.c.l.b16 %v2005
        %v2061 = vunpack.c.l.b16 %v2006
        %v2062 = vunpack.c.l.b16 %v2007
        %v2063 = vunpack.c.l.b16 %v2008
        %v2064 = vunpack.c.l.b16 %v2009
        %v2065 = vunpack.c.l.b16 %v2010
        %v2066 = vunpack.c.l.b16 %v2011
        %v2067 = vunpack.c.l.b16 %v2012
        %v2068 = vunpack.c.l.b16 %v2013
        %v2069 = vunpack.c.l.b16 %v2014
        %v2070 = vunpack.c.l.b16 %v2015
        %v2071 = vunpack.c.l.b16 %v2016
        %v2072 = vunpack.c.l.b16 %v2017
        %v2073 = vunpack.c.l.b16 %v2018
        %v2074 = vunpack.c.l.b16 %v2019
        %v2075 = vunpack.c.l.b16 %v2020
        %v2076 = vpack.c.b16 %v2058, %v2057
        %v2077 = vpack.c.b16 %v2060, %v2059
        %v2078 = vpack.c.b16 %v2062, %v2061
        %v2079 = vpack.c.b16 %v2064, %v2063
        %v2080 = vpack.c.b16 %v2066, %v2065
        %v2081 = vpack.c.b16 %v2068, %v2067
        %v2082 = vpack.c.b16 %v2070, %v2069
        %v2083 = vpack.c.b16 %v2072, %v2071
        %v2084 = vpack.c.b16 %v2074, %v2073
        %v2085 = vpack.c.b16 %v2075, %v2075
        %v2112 = vunpack.c.l.b16 %v2022
        %v2113 = vunpack.c.l.b16 %v2023
        %v2114 = vunpack.c.l.b16 %v2024
        %v2115 = vunpack.c.l.b16 %v2025
        %v2116 = vunpack.c.l.b16 %v2026
        %v2117 = vunpack.c.l.b16 %v2027
        %v2118 = vunpack.c.l.b16 %v2028
        %v2119 = vunpack.c.l.b16 %v2029
        %v2120 = vunpack.c.l.b16 %v2030
        %v2121 = vunpack.c.l.b16 %v2031
        %v2122 = vunpack.c.l.b16 %v2032
        %v2123 = vunpack.c.l.b16 %v2033
        %v2124 = vunpack.c.l.b16 %v2034
        %v2125 = vunpack.c.l.b16 %v2035
        %v2126 = vunpack.c.l.b16 %v2036
        %v2127 = vunpack.c.l.b16 %v2037
        %v2128 = vpack.c.b16 %v2113, %v2112
        %v2129 = vpack.c.b16 %v2115, %v2114
        %v2130 = vpack.c.b16 %v2117, %v2116
        %v2131 = vpack.c.b16 %v2119, %v2118
        %v2132 = vpack.c.b16 %v2121, %v2120
        %v2133 = vpack.c.b16 %v2123, %v2122
        %v2134 = vpack.c.b16 %v2125, %v2124
        %v2135 = vpack.c.b16 %v2127, %v2126
        %2144 = vmatprep.subr.bf16.mxu0 0
        %2145 = vmatpush1.bf16.msra.mxu0 %v2135
        %2146 = vmatprep.subr.bf16.mxu0 0
        %2147 = vmatpush1.bf16.msra.mxu0 %v2134
        %2148 = vmatprep.subr.bf16.mxu0 0
        %2149 = vmatpush1.bf16.msra.mxu0 %v2133
        %2150 = vmatprep.subr.bf16.mxu0 0
        %2151 = vmatpush1.bf16.msra.mxu0 %v2132
        %2152 = vmatprep.subr.bf16.mxu0 0
        %2153 = vmatpush1.bf16.msra.mxu0 %v2131
        %2154 = vmatprep.subr.bf16.mxu0 0
        %2155 = vmatpush1.bf16.msra.mxu0 %v2130
        %2156 = vmatprep.subr.bf16.mxu0 0
        %2157 = vmatpush1.bf16.msra.mxu0 %v2129
        %2158 = vmatprep.subr.bf16.mxu0 0
        %2159 = vmatpush1.bf16.msra.mxu0 %v2128
        %2160 = vmatprep.subr.bf16.mxu0 0
        %2161 = vmatpush2.bf16.msra.mxu0 0
        %2162 = vmatprep.subr.bf16.mxu0 0
        %2163 = vmatpush2.bf16.msra.mxu0 0
        %2164 = vmatprep.subr.bf16.mxu0 0
        %2165 = vmatpush2.bf16.msra.mxu0 0
        %2166 = vmatprep.subr.bf16.mxu0 0
        %2167 = vmatpush2.bf16.msra.mxu0 0
        %2168 = vmatprep.subr.bf16.mxu0 0
        %2169 = vmatpush2.bf16.msra.mxu0 0
        %2170 = vmatprep.subr.bf16.mxu0 0
        %2171 = vmatpush2.bf16.msra.mxu0 0
        %2172 = vmatprep.subr.bf16.mxu0 0
        %2173 = vmatpush2.bf16.msra.mxu0 0
        %2174 = vmatprep.subr.bf16.mxu0 0
        %2175 = vmatpush2.bf16.msra.mxu0 0
        %2176 = vmatprep.mubr.bf16.mxu0 0
        %2177 = vmatmul.mubr.bf16.gmra.mxu0 %v2076
        %v2178 = vpop.f32.mrf.mxu0
        %v2179 = vadd.f32 0.0, %v2178
        %v2180 = vpop.f32.mrf.mxu0
        %v2181 = vpop.f32.mrf.mxu0
        %v2182 = vadd.f32 0.0, %v2181
        %v2183 = vpop.f32.mrf.mxu0
        %2184 = vmatprep.mubr.bf16.mxu0 0
        %2185 = vmatmul.mubr.bf16.gmra.mxu0 %v2077
        %v2186 = vpop.f32.mrf.mxu0
        %v2187 = vadd.f32 0.0, %v2186
        %v2188 = vpop.f32.mrf.mxu0
        %v2189 = vpop.f32.mrf.mxu0
        %v2190 = vadd.f32 0.0, %v2189
        %v2191 = vpop.f32.mrf.mxu0
        %2192 = vmatprep.mubr.bf16.mxu0 0
        %2193 = vmatmul.mubr.bf16.gmra.mxu0 %v2078
        %v2194 = vpop.f32.mrf.mxu0
        %v2195 = vadd.f32 0.0, %v2194
        %v2196 = vpop.f32.mrf.mxu0
        %v2197 = vpop.f32.mrf.mxu0
        %v2198 = vadd.f32 0.0, %v2197
        %v2199 = vpop.f32.mrf.mxu0
        %2200 = vmatprep.mubr.bf16.mxu0 0
        %2201 = vmatmul.mubr.bf16.gmra.mxu0 %v2079
        %v2202 = vpop.f32.mrf.mxu0
        %v2203 = vadd.f32 0.0, %v2202
        %v2204 = vpop.f32.mrf.mxu0
        %v2205 = vpop.f32.mrf.mxu0
        %v2206 = vadd.f32 0.0, %v2205
        %v2207 = vpop.f32.mrf.mxu0
        %2208 = vmatprep.mubr.bf16.mxu0 0
        %2209 = vmatmul.mubr.bf16.gmra.mxu0 %v2080
        %v2210 = vpop.f32.mrf.mxu0
        %v2211 = vadd.f32 0.0, %v2210
        %v2212 = vpop.f32.mrf.mxu0
        %v2213 = vpop.f32.mrf.mxu0
        %v2214 = vadd.f32 0.0, %v2213
        %v2215 = vpop.f32.mrf.mxu0
        %2216 = vmatprep.mubr.bf16.mxu0 0
        %2217 = vmatmul.mubr.bf16.gmra.mxu0 %v2081
        %v2218 = vpop.f32.mrf.mxu0
        %v2219 = vadd.f32 0.0, %v2218
        %v2220 = vpop.f32.mrf.mxu0
        %v2221 = vpop.f32.mrf.mxu0
        %v2222 = vadd.f32 0.0, %v2221
        %v2223 = vpop.f32.mrf.mxu0
        %2224 = vmatprep.mubr.bf16.mxu0 0
        %2225 = vmatmul.mubr.bf16.gmra.mxu0 %v2082
        %v2226 = vpop.f32.mrf.mxu0
        %v2227 = vadd.f32 0.0, %v2226
        %v2228 = vpop.f32.mrf.mxu0
        %v2229 = vpop.f32.mrf.mxu0
        %v2230 = vadd.f32 0.0, %v2229
        %v2231 = vpop.f32.mrf.mxu0
        %2232 = vmatprep.mubr.bf16.mxu0 0
        %2233 = vmatmul.mubr.bf16.gmra.mxu0 %v2083
        %v2234 = vpop.f32.mrf.mxu0
        %v2235 = vadd.f32 0.0, %v2234
        %v2236 = vpop.f32.mrf.mxu0
        %v2237 = vpop.f32.mrf.mxu0
        %v2238 = vadd.f32 0.0, %v2237
        %v2239 = vpop.f32.mrf.mxu0
        %2240 = vmatprep.mubr.bf16.mxu0 0
        %2241 = vmatmul.mubr.bf16.gmra.mxu0 %v2084
        %v2242 = vpop.f32.mrf.mxu0
        %v2243 = vadd.f32 0.0, %v2242
        %v2244 = vpop.f32.mrf.mxu0
        %v2245 = vpop.f32.mrf.mxu0
        %v2246 = vadd.f32 0.0, %v2245
        %v2247 = vpop.f32.mrf.mxu0
        %2248 = vmatprep.mubr.bf16.mxu0 0
        %2249 = vmatmul.mubr.bf16.gmra.mxu0 %v2085
        %v2250 = vpop.f32.mrf.mxu0
        %v2251 = vadd.f32 0.0, %v2250
        %v2252 = vpop.f32.mrf.mxu0
        %v2253 = vpop.f32.mrf.mxu0
        %v2254 = vpop.f32.mrf.mxu0
        %2255 = vdwg.mxu0
        %v2256 = vadd.f32 %v1982, %v2179
        %v2257 = vadd.f32 %v1983, %v2182
        %v2258 = vadd.f32 %v1984, %v2187
        %v2259 = vadd.f32 %v1985, %v2190
        %v2260 = vadd.f32 %v1986, %v2195
        %v2261 = vadd.f32 %v1987, %v2198
        %v2262 = vadd.f32 %v1988, %v2203
        %v2263 = vadd.f32 %v1989, %v2206
        %v2264 = vadd.f32 %v1990, %v2211
        %v2265 = vadd.f32 %v1991, %v2214
        %v2266 = vadd.f32 %v1992, %v2219
        %v2267 = vadd.f32 %v1993, %v2222
        %v2268 = vadd.f32 %v1994, %v2227
        %v2269 = vadd.f32 %v1995, %v2230
        %v2270 = vadd.f32 %v1996, %v2235
        %v2271 = vadd.f32 %v1997, %v2238
        %v2272 = vadd.f32 %v1998, %v2243
        %v2273 = vadd.f32 %v1999, %v2246
        %v2274 = vadd.f32 %v2000, %v2251
        %v2275 = vld [vmem:[%s1727] sm:$0xf]
        %v2276 = vld [vmem:[%s1727 + $0x4] sm:$0xf]
        %v2277 = vld [vmem:[%s1727 + $0x8] sm:$0xf]
        %v2278 = vld [vmem:[%s1727 + $0xc] sm:$0xf]
        %v2279 = vld [vmem:[%s1727 + $0x10] sm:$0xf]
        %v2280 = vld [vmem:[%s1727 + $0x14] sm:$0xf]
        %v2281 = vld [vmem:[%s1727 + $0x18] sm:$0xf]
        %v2282 = vld [vmem:[%s1727 + $0x1c] sm:$0xf]
        %v2283 = vld [vmem:[%s1727 + $0x20] sm:$0xf]
        %v2284 = vld [vmem:[%s1727 + $0x24] sm:$0xf]
        %v2285 = vld [vmem:[%s1727 + $0x28] sm:$0xf]
        %v2286 = vld [vmem:[%s1727 + $0x2c] sm:$0xf]
        %v2287 = vld [vmem:[%s1727 + $0x30] sm:$0xf]
        %v2288 = vld [vmem:[%s1727 + $0x34] sm:$0xf]
        %v2289 = vld [vmem:[%s1727 + $0x38] sm:$0xf]
        %v2290 = vld [vmem:[%s1727 + $0x3c] sm:$0xf]
        %v2291 = vld [vmem:[%s1727 + $0x40] sm:$0xf]
        %v2292 = vld [vmem:[%s1727 + $0x44] sm:$0xf]
        %v2293 = vld [vmem:[%s1727 + $0x48] sm:$0xf]
        %v2294 = vld [vmem:[%s1727 + $0x4c] sm:$0x1]
        %s2295 = scalar_lea.vmem %s826, 320 [#allocation2]
        %v2296 = vld [vmem:[%s2295] sm:$0xf]
        %v2297 = vld [vmem:[%s2295 + $0x4] sm:$0xf]
        %v2298 = vld [vmem:[%s2295 + $0x8] sm:$0xf]
        %v2299 = vld [vmem:[%s2295 + $0xc] sm:$0xf]
        %v2300 = vld [vmem:[%s2295 + $0x10] sm:$0xf]
        %v2301 = vld [vmem:[%s2295 + $0x14] sm:$0xf]
        %v2302 = vld [vmem:[%s2295 + $0x18] sm:$0xf]
        %v2303 = vld [vmem:[%s2295 + $0x1c] sm:$0xf]
        %v2304 = vld [vmem:[%s2295 + $0x20] sm:$0xf]
        %v2305 = vld [vmem:[%s2295 + $0x24] sm:$0xf]
        %v2306 = vld [vmem:[%s2295 + $0x28] sm:$0xf]
        %v2307 = vld [vmem:[%s2295 + $0x2c] sm:$0xf]
        %v2308 = vld [vmem:[%s2295 + $0x30] sm:$0xf]
        %v2309 = vld [vmem:[%s2295 + $0x34] sm:$0xf]
        %v2310 = vld [vmem:[%s2295 + $0x38] sm:$0xf]
        %v2311 = vld [vmem:[%s2295 + $0x3c] sm:$0xf]
        %v2332 = vunpack.c.l.b16 %v2275
        %v2333 = vunpack.c.l.b16 %v2276
        %v2334 = vunpack.c.l.b16 %v2277
        %v2335 = vunpack.c.l.b16 %v2278
        %v2336 = vunpack.c.l.b16 %v2279
        %v2337 = vunpack.c.l.b16 %v2280
        %v2338 = vunpack.c.l.b16 %v2281
        %v2339 = vunpack.c.l.b16 %v2282
        %v2340 = vunpack.c.l.b16 %v2283
        %v2341 = vunpack.c.l.b16 %v2284
        %v2342 = vunpack.c.l.b16 %v2285
        %v2343 = vunpack.c.l.b16 %v2286
        %v2344 = vunpack.c.l.b16 %v2287
        %v2345 = vunpack.c.l.b16 %v2288
        %v2346 = vunpack.c.l.b16 %v2289
        %v2347 = vunpack.c.l.b16 %v2290
        %v2348 = vunpack.c.l.b16 %v2291
        %v2349 = vunpack.c.l.b16 %v2292
        %v2350 = vunpack.c.l.b16 %v2293
        %v2351 = vunpack.c.l.b16 %v2294
        %v2352 = vpack.c.b16 %v2333, %v2332
        %v2353 = vpack.c.b16 %v2335, %v2334
        %v2354 = vpack.c.b16 %v2337, %v2336
        %v2355 = vpack.c.b16 %v2339, %v2338
        %v2356 = vpack.c.b16 %v2341, %v2340
        %v2357 = vpack.c.b16 %v2343, %v2342
        %v2358 = vpack.c.b16 %v2345, %v2344
        %v2359 = vpack.c.b16 %v2347, %v2346
        %v2360 = vpack.c.b16 %v2349, %v2348
        %v2361 = vpack.c.b16 %v2351, %v2350
        %v2363 = vshrl.u32 %v2352, 16
        %v2365 = vshll.u32 %v2352, 16
        %v2367 = vrot.slane %v2365, 1
        %v2368 = vor.u32 %v2363, %v2367
        %v2370 = vshll.u32 %v2353, 16
        %v2372 = vrot.slane %v2370, 1
        %v2373 = vsel %vm1458, %v2368, %v2372
        %v2374 = vshrl.u32 %v2353, 16
        %v2376 = vor.u32 %v2374, %v2372
        %v2378 = vshll.u32 %v2354, 16
        %v2380 = vrot.slane %v2378, 1
        %v2381 = vsel %vm1458, %v2376, %v2380
        %v2382 = vshrl.u32 %v2354, 16
        %v2384 = vor.u32 %v2382, %v2380
        %v2386 = vshll.u32 %v2355, 16
        %v2388 = vrot.slane %v2386, 1
        %v2389 = vsel %vm1458, %v2384, %v2388
        %v2390 = vshrl.u32 %v2355, 16
        %v2392 = vor.u32 %v2390, %v2388
        %v2394 = vshll.u32 %v2356, 16
        %v2396 = vrot.slane %v2394, 1
        %v2397 = vsel %vm1458, %v2392, %v2396
        %v2398 = vshrl.u32 %v2356, 16
        %v2400 = vor.u32 %v2398, %v2396
        %v2402 = vshll.u32 %v2357, 16
        %v2404 = vrot.slane %v2402, 1
        %v2405 = vsel %vm1458, %v2400, %v2404
        %v2406 = vshrl.u32 %v2357, 16
        %v2408 = vor.u32 %v2406, %v2404
        %v2410 = vshll.u32 %v2358, 16
        %v2412 = vrot.slane %v2410, 1
        %v2413 = vsel %vm1458, %v2408, %v2412
        %v2414 = vshrl.u32 %v2358, 16
        %v2416 = vor.u32 %v2414, %v2412
        %v2418 = vshll.u32 %v2359, 16
        %v2420 = vrot.slane %v2418, 1
        %v2421 = vsel %vm1458, %v2416, %v2420
        %v2422 = vshrl.u32 %v2359, 16
        %v2424 = vor.u32 %v2422, %v2420
        %v2426 = vshll.u32 %v2360, 16
        %v2428 = vrot.slane %v2426, 1
        %v2429 = vsel %vm1458, %v2424, %v2428
        %v2430 = vshrl.u32 %v2360, 16
        %v2432 = vor.u32 %v2430, %v2428
        %v2434 = vshll.u32 %v2361, 16
        %v2436 = vrot.slane %v2434, 1
        %v2437 = vsel %vm1458, %v2432, %v2436
        %v2438 = vshrl.u32 %v2361, 16
        %v2440 = vor.u32 %v2438, %v2436
        %v2467 = vunpack.c.l.b16 %v2296
        %v2468 = vunpack.c.l.b16 %v2297
        %v2469 = vunpack.c.l.b16 %v2298
        %v2470 = vunpack.c.l.b16 %v2299
        %v2471 = vunpack.c.l.b16 %v2300
        %v2472 = vunpack.c.l.b16 %v2301
        %v2473 = vunpack.c.l.b16 %v2302
        %v2474 = vunpack.c.l.b16 %v2303
        %v2475 = vunpack.c.l.b16 %v2304
        %v2476 = vunpack.c.l.b16 %v2305
        %v2477 = vunpack.c.l.b16 %v2306
        %v2478 = vunpack.c.l.b16 %v2307
        %v2479 = vunpack.c.l.b16 %v2308
        %v2480 = vunpack.c.l.b16 %v2309
        %v2481 = vunpack.c.l.b16 %v2310
        %v2482 = vunpack.c.l.b16 %v2311
        %v2483 = vpack.c.b16 %v2468, %v2467
        %v2484 = vpack.c.b16 %v2470, %v2469
        %v2485 = vpack.c.b16 %v2472, %v2471
        %v2486 = vpack.c.b16 %v2474, %v2473
        %v2487 = vpack.c.b16 %v2476, %v2475
        %v2488 = vpack.c.b16 %v2478, %v2477
        %v2489 = vpack.c.b16 %v2480, %v2479
        %v2490 = vpack.c.b16 %v2482, %v2481
        %2499 = vmatprep.subr.bf16.mxu0 0
        %2500 = vmatpush1.bf16.msra.mxu0 %v2490
        %2501 = vmatprep.subr.bf16.mxu0 0
        %2502 = vmatpush1.bf16.msra.mxu0 %v2489
        %2503 = vmatprep.subr.bf16.mxu0 0
        %2504 = vmatpush1.bf16.msra.mxu0 %v2488
        %2505 = vmatprep.subr.bf16.mxu0 0
        %2506 = vmatpush1.bf16.msra.mxu0 %v2487
        %2507 = vmatprep.subr.bf16.mxu0 0
        %2508 = vmatpush1.bf16.msra.mxu0 %v2486
        %2509 = vmatprep.subr.bf16.mxu0 0
        %2510 = vmatpush1.bf16.msra.mxu0 %v2485
        %2511 = vmatprep.subr.bf16.mxu0 0
        %2512 = vmatpush1.bf16.msra.mxu0 %v2484
        %2513 = vmatprep.subr.bf16.mxu0 0
        %2514 = vmatpush1.bf16.msra.mxu0 %v2483
        %2515 = vmatprep.subr.bf16.mxu0 0
        %2516 = vmatpush2.bf16.msra.mxu0 0
        %2517 = vmatprep.subr.bf16.mxu0 0
        %2518 = vmatpush2.bf16.msra.mxu0 0
        %2519 = vmatprep.subr.bf16.mxu0 0
        %2520 = vmatpush2.bf16.msra.mxu0 0
        %2521 = vmatprep.subr.bf16.mxu0 0
        %2522 = vmatpush2.bf16.msra.mxu0 0
        %2523 = vmatprep.subr.bf16.mxu0 0
        %2524 = vmatpush2.bf16.msra.mxu0 0
        %2525 = vmatprep.subr.bf16.mxu0 0
        %2526 = vmatpush2.bf16.msra.mxu0 0
        %2527 = vmatprep.subr.bf16.mxu0 0
        %2528 = vmatpush2.bf16.msra.mxu0 0
        %2529 = vmatprep.subr.bf16.mxu0 0
        %2530 = vmatpush2.bf16.msra.mxu0 0
        %2531 = vmatprep.mubr.bf16.mxu0 0
        %2532 = vmatmul.mubr.bf16.gmra.mxu0 %v2373
        %v2533 = vpop.f32.mrf.mxu0
        %v2534 = vadd.f32 0.0, %v2533
        %v2535 = vpop.f32.mrf.mxu0
        %v2536 = vpop.f32.mrf.mxu0
        %v2537 = vadd.f32 0.0, %v2536
        %v2538 = vpop.f32.mrf.mxu0
        %2539 = vmatprep.mubr.bf16.mxu0 0
        %2540 = vmatmul.mubr.bf16.gmra.mxu0 %v2381
        %v2541 = vpop.f32.mrf.mxu0
        %v2542 = vadd.f32 0.0, %v2541
        %v2543 = vpop.f32.mrf.mxu0
        %v2544 = vpop.f32.mrf.mxu0
        %v2545 = vadd.f32 0.0, %v2544
        %v2546 = vpop.f32.mrf.mxu0
        %2547 = vmatprep.mubr.bf16.mxu0 0
        %2548 = vmatmul.mubr.bf16.gmra.mxu0 %v2389
        %v2549 = vpop.f32.mrf.mxu0
        %v2550 = vadd.f32 0.0, %v2549
        %v2551 = vpop.f32.mrf.mxu0
        %v2552 = vpop.f32.mrf.mxu0
        %v2553 = vadd.f32 0.0, %v2552
        %v2554 = vpop.f32.mrf.mxu0
        %2555 = vmatprep.mubr.bf16.mxu0 0
        %2556 = vmatmul.mubr.bf16.gmra.mxu0 %v2397
        %v2557 = vpop.f32.mrf.mxu0
        %v2558 = vadd.f32 0.0, %v2557
        %v2559 = vpop.f32.mrf.mxu0
        %v2560 = vpop.f32.mrf.mxu0
        %v2561 = vadd.f32 0.0, %v2560
        %v2562 = vpop.f32.mrf.mxu0
        %2563 = vmatprep.mubr.bf16.mxu0 0
        %2564 = vmatmul.mubr.bf16.gmra.mxu0 %v2405
        %v2565 = vpop.f32.mrf.mxu0
        %v2566 = vadd.f32 0.0, %v2565
        %v2567 = vpop.f32.mrf.mxu0
        %v2568 = vpop.f32.mrf.mxu0
        %v2569 = vadd.f32 0.0, %v2568
        %v2570 = vpop.f32.mrf.mxu0
        %2571 = vmatprep.mubr.bf16.mxu0 0
        %2572 = vmatmul.mubr.bf16.gmra.mxu0 %v2413
        %v2573 = vpop.f32.mrf.mxu0
        %v2574 = vadd.f32 0.0, %v2573
        %v2575 = vpop.f32.mrf.mxu0
        %v2576 = vpop.f32.mrf.mxu0
        %v2577 = vadd.f32 0.0, %v2576
        %v2578 = vpop.f32.mrf.mxu0
        %2579 = vmatprep.mubr.bf16.mxu0 0
        %2580 = vmatmul.mubr.bf16.gmra.mxu0 %v2421
        %v2581 = vpop.f32.mrf.mxu0
        %v2582 = vadd.f32 0.0, %v2581
        %v2583 = vpop.f32.mrf.mxu0
        %v2584 = vpop.f32.mrf.mxu0
        %v2585 = vadd.f32 0.0, %v2584
        %v2586 = vpop.f32.mrf.mxu0
        %2587 = vmatprep.mubr.bf16.mxu0 0
        %2588 = vmatmul.mubr.bf16.gmra.mxu0 %v2429
        %v2589 = vpop.f32.mrf.mxu0
        %v2590 = vadd.f32 0.0, %v2589
        %v2591 = vpop.f32.mrf.mxu0
        %v2592 = vpop.f32.mrf.mxu0
        %v2593 = vadd.f32 0.0, %v2592
        %v2594 = vpop.f32.mrf.mxu0
        %2595 = vmatprep.mubr.bf16.mxu0 0
        %2596 = vmatmul.mubr.bf16.gmra.mxu0 %v2437
        %v2597 = vpop.f32.mrf.mxu0
        %v2598 = vadd.f32 0.0, %v2597
        %v2599 = vpop.f32.mrf.mxu0
        %v2600 = vpop.f32.mrf.mxu0
        %v2601 = vadd.f32 0.0, %v2600
        %v2602 = vpop.f32.mrf.mxu0
        %2603 = vmatprep.mubr.bf16.mxu0 0
        %2604 = vmatmul.mubr.bf16.gmra.mxu0 %v2440
        %v2605 = vpop.f32.mrf.mxu0
        %v2606 = vadd.f32 0.0, %v2605
        %v2607 = vpop.f32.mrf.mxu0
        %v2608 = vpop.f32.mrf.mxu0
        %v2609 = vpop.f32.mrf.mxu0
        %2610 = vdwg.mxu0
        %v2611 = vadd.f32 %v2256, %v2534
        %v2612 = vadd.f32 %v2257, %v2537
        %v2613 = vadd.f32 %v2258, %v2542
        %v2614 = vadd.f32 %v2259, %v2545
        %v2615 = vadd.f32 %v2260, %v2550
        %v2616 = vadd.f32 %v2261, %v2553
        %v2617 = vadd.f32 %v2262, %v2558
        %v2618 = vadd.f32 %v2263, %v2561
        %v2619 = vadd.f32 %v2264, %v2566
        %v2620 = vadd.f32 %v2265, %v2569
        %v2621 = vadd.f32 %v2266, %v2574
        %v2622 = vadd.f32 %v2267, %v2577
        %v2623 = vadd.f32 %v2268, %v2582
        %v2624 = vadd.f32 %v2269, %v2585
        %v2625 = vadd.f32 %v2270, %v2590
        %v2626 = vadd.f32 %v2271, %v2593
        %v2627 = vadd.f32 %v2272, %v2598
        %v2628 = vadd.f32 %v2273, %v2601
        %v2629 = vadd.f32 %v2274, %v2606
        %v2630 = vld [vmem:[%s0 + $0x4] sm:$0xf]
        %v2631 = vld [vmem:[%s0 + $0x8] sm:$0xf]
        %v2632 = vld [vmem:[%s0 + $0xc] sm:$0xf]
        %v2633 = vld [vmem:[%s0 + $0x10] sm:$0xf]
        %v2634 = vld [vmem:[%s0 + $0x14] sm:$0xf]
        %v2635 = vld [vmem:[%s0 + $0x18] sm:$0xf]
        %v2636 = vld [vmem:[%s0 + $0x1c] sm:$0xf]
        %v2637 = vld [vmem:[%s0 + $0x20] sm:$0xf]
        %v2638 = vld [vmem:[%s0 + $0x24] sm:$0xf]
        %v2639 = vld [vmem:[%s0 + $0x28] sm:$0xf]
        %v2640 = vld [vmem:[%s0 + $0x2c] sm:$0xf]
        %v2641 = vld [vmem:[%s0 + $0x30] sm:$0xf]
        %v2642 = vld [vmem:[%s0 + $0x34] sm:$0xf]
        %v2643 = vld [vmem:[%s0 + $0x38] sm:$0xf]
        %v2644 = vld [vmem:[%s0 + $0x3c] sm:$0xf]
        %v2645 = vld [vmem:[%s0 + $0x40] sm:$0xf]
        %v2646 = vld [vmem:[%s0 + $0x44] sm:$0xf]
        %v2647 = vld [vmem:[%s0 + $0x48] sm:$0xf]
        %v2648 = vld [vmem:[%s0 + $0x4c] sm:$0xf]
        %v2649 = vld [vmem:[%s0 + $0x50] sm:$0x1]
        %s2650 = scalar_lea.vmem %s826, 384 [#allocation2]
        %v2651 = vld [vmem:[%s2650] sm:$0xf]
        %v2652 = vld [vmem:[%s2650 + $0x4] sm:$0xf]
        %v2653 = vld [vmem:[%s2650 + $0x8] sm:$0xf]
        %v2654 = vld [vmem:[%s2650 + $0xc] sm:$0xf]
        %v2655 = vld [vmem:[%s2650 + $0x10] sm:$0xf]
        %v2656 = vld [vmem:[%s2650 + $0x14] sm:$0xf]
        %v2657 = vld [vmem:[%s2650 + $0x18] sm:$0xf]
        %v2658 = vld [vmem:[%s2650 + $0x1c] sm:$0xf]
        %v2659 = vld [vmem:[%s2650 + $0x20] sm:$0xf]
        %v2660 = vld [vmem:[%s2650 + $0x24] sm:$0xf]
        %v2661 = vld [vmem:[%s2650 + $0x28] sm:$0xf]
        %v2662 = vld [vmem:[%s2650 + $0x2c] sm:$0xf]
        %v2663 = vld [vmem:[%s2650 + $0x30] sm:$0xf]
        %v2664 = vld [vmem:[%s2650 + $0x34] sm:$0xf]
        %v2665 = vld [vmem:[%s2650 + $0x38] sm:$0xf]
        %v2666 = vld [vmem:[%s2650 + $0x3c] sm:$0xf]
        %v2687 = vunpack.c.l.b16 %v2630
        %v2688 = vunpack.c.l.b16 %v2631
        %v2689 = vunpack.c.l.b16 %v2632
        %v2690 = vunpack.c.l.b16 %v2633
        %v2691 = vunpack.c.l.b16 %v2634
        %v2692 = vunpack.c.l.b16 %v2635
        %v2693 = vunpack.c.l.b16 %v2636
        %v2694 = vunpack.c.l.b16 %v2637
        %v2695 = vunpack.c.l.b16 %v2638
        %v2696 = vunpack.c.l.b16 %v2639
        %v2697 = vunpack.c.l.b16 %v2640
        %v2698 = vunpack.c.l.b16 %v2641
        %v2699 = vunpack.c.l.b16 %v2642
        %v2700 = vunpack.c.l.b16 %v2643
        %v2701 = vunpack.c.l.b16 %v2644
        %v2702 = vunpack.c.l.b16 %v2645
        %v2703 = vunpack.c.l.b16 %v2646
        %v2704 = vunpack.c.l.b16 %v2647
        %v2705 = vunpack.c.l.b16 %v2648
        %v2706 = vunpack.c.l.b16 %v2649
        %v2707 = vpack.c.b16 %v2688, %v2687
        %v2708 = vpack.c.b16 %v2690, %v2689
        %v2709 = vpack.c.b16 %v2692, %v2691
        %v2710 = vpack.c.b16 %v2694, %v2693
        %v2711 = vpack.c.b16 %v2696, %v2695
        %v2712 = vpack.c.b16 %v2698, %v2697
        %v2713 = vpack.c.b16 %v2700, %v2699
        %v2714 = vpack.c.b16 %v2702, %v2701
        %v2715 = vpack.c.b16 %v2704, %v2703
        %v2716 = vpack.c.b16 %v2706, %v2705
        %v2718 = vshrl.u32 %v2707, 16
        %v2720 = vshll.u32 %v2707, 16
        %v2722 = vrot.slane %v2720, 1
        %v2723 = vor.u32 %v2718, %v2722
        %v2725 = vshll.u32 %v2708, 16
        %v2727 = vrot.slane %v2725, 1
        %v2728 = vsel %vm1458, %v2723, %v2727
        %v2729 = vshrl.u32 %v2708, 16
        %v2731 = vor.u32 %v2729, %v2727
        %v2733 = vshll.u32 %v2709, 16
        %v2735 = vrot.slane %v2733, 1
        %v2736 = vsel %vm1458, %v2731, %v2735
        %v2737 = vshrl.u32 %v2709, 16
        %v2739 = vor.u32 %v2737, %v2735
        %v2741 = vshll.u32 %v2710, 16
        %v2743 = vrot.slane %v2741, 1
        %v2744 = vsel %vm1458, %v2739, %v2743
        %v2745 = vshrl.u32 %v2710, 16
        %v2747 = vor.u32 %v2745, %v2743
        %v2749 = vshll.u32 %v2711, 16
        %v2751 = vrot.slane %v2749, 1
        %v2752 = vsel %vm1458, %v2747, %v2751
        %v2753 = vshrl.u32 %v2711, 16
        %v2755 = vor.u32 %v2753, %v2751
        %v2757 = vshll.u32 %v2712, 16
        %v2759 = vrot.slane %v2757, 1
        %v2760 = vsel %vm1458, %v2755, %v2759
        %v2761 = vshrl.u32 %v2712, 16
        %v2763 = vor.u32 %v2761, %v2759
        %v2765 = vshll.u32 %v2713, 16
        %v2767 = vrot.slane %v2765, 1
        %v2768 = vsel %vm1458, %v2763, %v2767
        %v2769 = vshrl.u32 %v2713, 16
        %v2771 = vor.u32 %v2769, %v2767
        %v2773 = vshll.u32 %v2714, 16
        %v2775 = vrot.slane %v2773, 1
        %v2776 = vsel %vm1458, %v2771, %v2775
        %v2777 = vshrl.u32 %v2714, 16
        %v2779 = vor.u32 %v2777, %v2775
        %v2781 = vshll.u32 %v2715, 16
        %v2783 = vrot.slane %v2781, 1
        %v2784 = vsel %vm1458, %v2779, %v2783
        %v2785 = vshrl.u32 %v2715, 16
        %v2787 = vor.u32 %v2785, %v2783
        %v2789 = vshll.u32 %v2716, 16
        %v2791 = vrot.slane %v2789, 1
        %v2792 = vsel %vm1458, %v2787, %v2791
        %v2793 = vshrl.u32 %v2716, 16
        %v2795 = vor.u32 %v2793, %v2791
        %v2822 = vunpack.c.l.b16 %v2651
        %v2823 = vunpack.c.l.b16 %v2652
        %v2824 = vunpack.c.l.b16 %v2653
        %v2825 = vunpack.c.l.b16 %v2654
        %v2826 = vunpack.c.l.b16 %v2655
        %v2827 = vunpack.c.l.b16 %v2656
        %v2828 = vunpack.c.l.b16 %v2657
        %v2829 = vunpack.c.l.b16 %v2658
        %v2830 = vunpack.c.l.b16 %v2659
        %v2831 = vunpack.c.l.b16 %v2660
        %v2832 = vunpack.c.l.b16 %v2661
        %v2833 = vunpack.c.l.b16 %v2662
        %v2834 = vunpack.c.l.b16 %v2663
        %v2835 = vunpack.c.l.b16 %v2664
        %v2836 = vunpack.c.l.b16 %v2665
        %v2837 = vunpack.c.l.b16 %v2666
        %v2838 = vpack.c.b16 %v2823, %v2822
        %v2839 = vpack.c.b16 %v2825, %v2824
        %v2840 = vpack.c.b16 %v2827, %v2826
        %v2841 = vpack.c.b16 %v2829, %v2828
        %v2842 = vpack.c.b16 %v2831, %v2830
        %v2843 = vpack.c.b16 %v2833, %v2832
        %v2844 = vpack.c.b16 %v2835, %v2834
        %v2845 = vpack.c.b16 %v2837, %v2836
        %2854 = vmatprep.subr.bf16.mxu0 0
        %2855 = vmatpush1.bf16.msra.mxu0 %v2845
        %2856 = vmatprep.subr.bf16.mxu0 0
        %2857 = vmatpush1.bf16.msra.mxu0 %v2844
        %2858 = vmatprep.subr.bf16.mxu0 0
        %2859 = vmatpush1.bf16.msra.mxu0 %v2843
        %2860 = vmatprep.subr.bf16.mxu0 0
        %2861 = vmatpush1.bf16.msra.mxu0 %v2842
        %2862 = vmatprep.subr.bf16.mxu0 0
        %2863 = vmatpush1.bf16.msra.mxu0 %v2841
        %2864 = vmatprep.subr.bf16.mxu0 0
        %2865 = vmatpush1.bf16.msra.mxu0 %v2840
        %2866 = vmatprep.subr.bf16.mxu0 0
        %2867 = vmatpush1.bf16.msra.mxu0 %v2839
        %2868 = vmatprep.subr.bf16.mxu0 0
        %2869 = vmatpush1.bf16.msra.mxu0 %v2838
        %2870 = vmatprep.subr.bf16.mxu0 0
        %2871 = vmatpush2.bf16.msra.mxu0 0
        %2872 = vmatprep.subr.bf16.mxu0 0
        %2873 = vmatpush2.bf16.msra.mxu0 0
        %2874 = vmatprep.subr.bf16.mxu0 0
        %2875 = vmatpush2.bf16.msra.mxu0 0
        %2876 = vmatprep.subr.bf16.mxu0 0
        %2877 = vmatpush2.bf16.msra.mxu0 0
        %2878 = vmatprep.subr.bf16.mxu0 0
        %2879 = vmatpush2.bf16.msra.mxu0 0
        %2880 = vmatprep.subr.bf16.mxu0 0
        %2881 = vmatpush2.bf16.msra.mxu0 0
        %2882 = vmatprep.subr.bf16.mxu0 0
        %2883 = vmatpush2.bf16.msra.mxu0 0
        %2884 = vmatprep.subr.bf16.mxu0 0
        %2885 = vmatpush2.bf16.msra.mxu0 0
        %2886 = vmatprep.mubr.bf16.mxu0 0
        %2887 = vmatmul.mubr.bf16.gmra.mxu0 %v2728
        %v2888 = vpop.f32.mrf.mxu0
        %v2889 = vadd.f32 0.0, %v2888
        %v2890 = vpop.f32.mrf.mxu0
        %v2891 = vpop.f32.mrf.mxu0
        %v2892 = vadd.f32 0.0, %v2891
        %v2893 = vpop.f32.mrf.mxu0
        %2894 = vmatprep.mubr.bf16.mxu0 0
        %2895 = vmatmul.mubr.bf16.gmra.mxu0 %v2736
        %v2896 = vpop.f32.mrf.mxu0
        %v2897 = vadd.f32 0.0, %v2896
        %v2898 = vpop.f32.mrf.mxu0
        %v2899 = vpop.f32.mrf.mxu0
        %v2900 = vadd.f32 0.0, %v2899
        %v2901 = vpop.f32.mrf.mxu0
        %2902 = vmatprep.mubr.bf16.mxu0 0
        %2903 = vmatmul.mubr.bf16.gmra.mxu0 %v2744
        %v2904 = vpop.f32.mrf.mxu0
        %v2905 = vadd.f32 0.0, %v2904
        %v2906 = vpop.f32.mrf.mxu0
        %v2907 = vpop.f32.mrf.mxu0
        %v2908 = vadd.f32 0.0, %v2907
        %v2909 = vpop.f32.mrf.mxu0
        %2910 = vmatprep.mubr.bf16.mxu0 0
        %2911 = vmatmul.mubr.bf16.gmra.mxu0 %v2752
        %v2912 = vpop.f32.mrf.mxu0
        %v2913 = vadd.f32 0.0, %v2912
        %v2914 = vpop.f32.mrf.mxu0
        %v2915 = vpop.f32.mrf.mxu0
        %v2916 = vadd.f32 0.0, %v2915
        %v2917 = vpop.f32.mrf.mxu0
        %2918 = vmatprep.mubr.bf16.mxu0 0
        %2919 = vmatmul.mubr.bf16.gmra.mxu0 %v2760
        %v2920 = vpop.f32.mrf.mxu0
        %v2921 = vadd.f32 0.0, %v2920
        %v2922 = vpop.f32.mrf.mxu0
        %v2923 = vpop.f32.mrf.mxu0
        %v2924 = vadd.f32 0.0, %v2923
        %v2925 = vpop.f32.mrf.mxu0
        %2926 = vmatprep.mubr.bf16.mxu0 0
        %2927 = vmatmul.mubr.bf16.gmra.mxu0 %v2768
        %v2928 = vpop.f32.mrf.mxu0
        %v2929 = vadd.f32 0.0, %v2928
        %v2930 = vpop.f32.mrf.mxu0
        %v2931 = vpop.f32.mrf.mxu0
        %v2932 = vadd.f32 0.0, %v2931
        %v2933 = vpop.f32.mrf.mxu0
        %2934 = vmatprep.mubr.bf16.mxu0 0
        %2935 = vmatmul.mubr.bf16.gmra.mxu0 %v2776
        %v2936 = vpop.f32.mrf.mxu0
        %v2937 = vadd.f32 0.0, %v2936
        %v2938 = vpop.f32.mrf.mxu0
        %v2939 = vpop.f32.mrf.mxu0
        %v2940 = vadd.f32 0.0, %v2939
        %v2941 = vpop.f32.mrf.mxu0
        %2942 = vmatprep.mubr.bf16.mxu0 0
        %2943 = vmatmul.mubr.bf16.gmra.mxu0 %v2784
        %v2944 = vpop.f32.mrf.mxu0
        %v2945 = vadd.f32 0.0, %v2944
        %v2946 = vpop.f32.mrf.mxu0
        %v2947 = vpop.f32.mrf.mxu0
        %v2948 = vadd.f32 0.0, %v2947
        %v2949 = vpop.f32.mrf.mxu0
        %2950 = vmatprep.mubr.bf16.mxu0 0
        %2951 = vmatmul.mubr.bf16.gmra.mxu0 %v2792
        %v2952 = vpop.f32.mrf.mxu0
        %v2953 = vadd.f32 0.0, %v2952
        %v2954 = vpop.f32.mrf.mxu0
        %v2955 = vpop.f32.mrf.mxu0
        %v2956 = vadd.f32 0.0, %v2955
        %v2957 = vpop.f32.mrf.mxu0
        %2958 = vmatprep.mubr.bf16.mxu0 0
        %2959 = vmatmul.mubr.bf16.gmra.mxu0 %v2795
        %v2960 = vpop.f32.mrf.mxu0
        %v2961 = vadd.f32 0.0, %v2960
        %v2962 = vpop.f32.mrf.mxu0
        %v2963 = vpop.f32.mrf.mxu0
        %v2964 = vpop.f32.mrf.mxu0
        %2965 = vdwg.mxu0
        %v2966 = vadd.f32 %v2611, %v2889
        %v2967 = vadd.f32 %v2612, %v2892
        %v2968 = vadd.f32 %v2613, %v2897
        %v2969 = vadd.f32 %v2614, %v2900
        %v2970 = vadd.f32 %v2615, %v2905
        %v2971 = vadd.f32 %v2616, %v2908
        %v2972 = vadd.f32 %v2617, %v2913
        %v2973 = vadd.f32 %v2618, %v2916
        %v2974 = vadd.f32 %v2619, %v2921
        %v2975 = vadd.f32 %v2620, %v2924
        %v2976 = vadd.f32 %v2621, %v2929
        %v2977 = vadd.f32 %v2622, %v2932
        %v2978 = vadd.f32 %v2623, %v2937
        %v2979 = vadd.f32 %v2624, %v2940
        %v2980 = vadd.f32 %v2625, %v2945
        %v2981 = vadd.f32 %v2626, %v2948
        %v2982 = vadd.f32 %v2627, %v2953
        %v2983 = vadd.f32 %v2628, %v2956
        %v2984 = vadd.f32 %v2629, %v2961
        %v2985 = vld [vmem:[%s898 + $0x4] sm:$0xf]
        %v2986 = vld [vmem:[%s898 + $0x8] sm:$0xf]
        %v2987 = vld [vmem:[%s898 + $0xc] sm:$0xf]
        %v2988 = vld [vmem:[%s898 + $0x10] sm:$0xf]
        %v2989 = vld [vmem:[%s898 + $0x14] sm:$0xf]
        %v2990 = vld [vmem:[%s898 + $0x18] sm:$0xf]
        %v2991 = vld [vmem:[%s898 + $0x1c] sm:$0xf]
        %v2992 = vld [vmem:[%s898 + $0x20] sm:$0xf]
        %v2993 = vld [vmem:[%s898 + $0x24] sm:$0xf]
        %v2994 = vld [vmem:[%s898 + $0x28] sm:$0xf]
        %v2995 = vld [vmem:[%s898 + $0x2c] sm:$0xf]
        %v2996 = vld [vmem:[%s898 + $0x30] sm:$0xf]
        %v2997 = vld [vmem:[%s898 + $0x34] sm:$0xf]
        %v2998 = vld [vmem:[%s898 + $0x38] sm:$0xf]
        %v2999 = vld [vmem:[%s898 + $0x3c] sm:$0xf]
        %v3000 = vld [vmem:[%s898 + $0x40] sm:$0xf]
        %v3001 = vld [vmem:[%s898 + $0x44] sm:$0xf]
        %v3002 = vld [vmem:[%s898 + $0x48] sm:$0xf]
        %v3003 = vld [vmem:[%s898 + $0x4c] sm:$0xf]
        %v3004 = vld [vmem:[%s898 + $0x50] sm:$0x1]
        %s3005 = scalar_lea.vmem %s826, 448 [#allocation2]
        %v3006 = vld [vmem:[%s3005] sm:$0xf]
        %v3007 = vld [vmem:[%s3005 + $0x4] sm:$0xf]
        %v3008 = vld [vmem:[%s3005 + $0x8] sm:$0xf]
        %v3009 = vld [vmem:[%s3005 + $0xc] sm:$0xf]
        %v3010 = vld [vmem:[%s3005 + $0x10] sm:$0xf]
        %v3011 = vld [vmem:[%s3005 + $0x14] sm:$0xf]
        %v3012 = vld [vmem:[%s3005 + $0x18] sm:$0xf]
        %v3013 = vld [vmem:[%s3005 + $0x1c] sm:$0xf]
        %v3014 = vld [vmem:[%s3005 + $0x20] sm:$0xf]
        %v3015 = vld [vmem:[%s3005 + $0x24] sm:$0xf]
        %v3016 = vld [vmem:[%s3005 + $0x28] sm:$0xf]
        %v3017 = vld [vmem:[%s3005 + $0x2c] sm:$0xf]
        %v3018 = vld [vmem:[%s3005 + $0x30] sm:$0xf]
        %v3019 = vld [vmem:[%s3005 + $0x34] sm:$0xf]
        %v3020 = vld [vmem:[%s3005 + $0x38] sm:$0xf]
        %v3021 = vld [vmem:[%s3005 + $0x3c] sm:$0xf]
        %v3042 = vunpack.c.l.b16 %v2985
        %v3043 = vunpack.c.l.b16 %v2986
        %v3044 = vunpack.c.l.b16 %v2987
        %v3045 = vunpack.c.l.b16 %v2988
        %v3046 = vunpack.c.l.b16 %v2989
        %v3047 = vunpack.c.l.b16 %v2990
        %v3048 = vunpack.c.l.b16 %v2991
        %v3049 = vunpack.c.l.b16 %v2992
        %v3050 = vunpack.c.l.b16 %v2993
        %v3051 = vunpack.c.l.b16 %v2994
        %v3052 = vunpack.c.l.b16 %v2995
        %v3053 = vunpack.c.l.b16 %v2996
        %v3054 = vunpack.c.l.b16 %v2997
        %v3055 = vunpack.c.l.b16 %v2998
        %v3056 = vunpack.c.l.b16 %v2999
        %v3057 = vunpack.c.l.b16 %v3000
        %v3058 = vunpack.c.l.b16 %v3001
        %v3059 = vunpack.c.l.b16 %v3002
        %v3060 = vunpack.c.l.b16 %v3003
        %v3061 = vunpack.c.l.b16 %v3004
        %v3062 = vpack.c.b16 %v3043, %v3042
        %v3063 = vpack.c.b16 %v3045, %v3044
        %v3064 = vpack.c.b16 %v3047, %v3046
        %v3065 = vpack.c.b16 %v3049, %v3048
        %v3066 = vpack.c.b16 %v3051, %v3050
        %v3067 = vpack.c.b16 %v3053, %v3052
        %v3068 = vpack.c.b16 %v3055, %v3054
        %v3069 = vpack.c.b16 %v3057, %v3056
        %v3070 = vpack.c.b16 %v3059, %v3058
        %v3071 = vpack.c.b16 %v3061, %v3060
        %v3073 = vshrl.u32 %v3062, 16
        %v3075 = vshll.u32 %v3062, 16
        %v3077 = vrot.slane %v3075, 1
        %v3078 = vor.u32 %v3073, %v3077
        %v3080 = vshll.u32 %v3063, 16
        %v3082 = vrot.slane %v3080, 1
        %v3083 = vsel %vm1458, %v3078, %v3082
        %v3084 = vshrl.u32 %v3063, 16
        %v3086 = vor.u32 %v3084, %v3082
        %v3088 = vshll.u32 %v3064, 16
        %v3090 = vrot.slane %v3088, 1
        %v3091 = vsel %vm1458, %v3086, %v3090
        %v3092 = vshrl.u32 %v3064, 16
        %v3094 = vor.u32 %v3092, %v3090
        %v3096 = vshll.u32 %v3065, 16
        %v3098 = vrot.slane %v3096, 1
        %v3099 = vsel %vm1458, %v3094, %v3098
        %v3100 = vshrl.u32 %v3065, 16
        %v3102 = vor.u32 %v3100, %v3098
        %v3104 = vshll.u32 %v3066, 16
        %v3106 = vrot.slane %v3104, 1
        %v3107 = vsel %vm1458, %v3102, %v3106
        %v3108 = vshrl.u32 %v3066, 16
        %v3110 = vor.u32 %v3108, %v3106
        %v3112 = vshll.u32 %v3067, 16
        %v3114 = vrot.slane %v3112, 1
        %v3115 = vsel %vm1458, %v3110, %v3114
        %v3116 = vshrl.u32 %v3067, 16
        %v3118 = vor.u32 %v3116, %v3114
        %v3120 = vshll.u32 %v3068, 16
        %v3122 = vrot.slane %v3120, 1
        %v3123 = vsel %vm1458, %v3118, %v3122
        %v3124 = vshrl.u32 %v3068, 16
        %v3126 = vor.u32 %v3124, %v3122
        %v3128 = vshll.u32 %v3069, 16
        %v3130 = vrot.slane %v3128, 1
        %v3131 = vsel %vm1458, %v3126, %v3130
        %v3132 = vshrl.u32 %v3069, 16
        %v3134 = vor.u32 %v3132, %v3130
        %v3136 = vshll.u32 %v3070, 16
        %v3138 = vrot.slane %v3136, 1
        %v3139 = vsel %vm1458, %v3134, %v3138
        %v3140 = vshrl.u32 %v3070, 16
        %v3142 = vor.u32 %v3140, %v3138
        %v3144 = vshll.u32 %v3071, 16
        %v3146 = vrot.slane %v3144, 1
        %v3147 = vsel %vm1458, %v3142, %v3146
        %v3148 = vshrl.u32 %v3071, 16
        %v3150 = vor.u32 %v3148, %v3146
        %v3177 = vunpack.c.l.b16 %v3006
        %v3178 = vunpack.c.l.b16 %v3007
        %v3179 = vunpack.c.l.b16 %v3008
        %v3180 = vunpack.c.l.b16 %v3009
        %v3181 = vunpack.c.l.b16 %v3010
        %v3182 = vunpack.c.l.b16 %v3011
        %v3183 = vunpack.c.l.b16 %v3012
        %v3184 = vunpack.c.l.b16 %v3013
        %v3185 = vunpack.c.l.b16 %v3014
        %v3186 = vunpack.c.l.b16 %v3015
        %v3187 = vunpack.c.l.b16 %v3016
        %v3188 = vunpack.c.l.b16 %v3017
        %v3189 = vunpack.c.l.b16 %v3018
        %v3190 = vunpack.c.l.b16 %v3019
        %v3191 = vunpack.c.l.b16 %v3020
        %v3192 = vunpack.c.l.b16 %v3021
        %v3193 = vpack.c.b16 %v3178, %v3177
        %v3194 = vpack.c.b16 %v3180, %v3179
        %v3195 = vpack.c.b16 %v3182, %v3181
        %v3196 = vpack.c.b16 %v3184, %v3183
        %v3197 = vpack.c.b16 %v3186, %v3185
        %v3198 = vpack.c.b16 %v3188, %v3187
        %v3199 = vpack.c.b16 %v3190, %v3189
        %v3200 = vpack.c.b16 %v3192, %v3191
        %3209 = vmatprep.subr.bf16.mxu0 0
        %3210 = vmatpush1.bf16.msra.mxu0 %v3200
        %3211 = vmatprep.subr.bf16.mxu0 0
        %3212 = vmatpush1.bf16.msra.mxu0 %v3199
        %3213 = vmatprep.subr.bf16.mxu0 0
        %3214 = vmatpush1.bf16.msra.mxu0 %v3198
        %3215 = vmatprep.subr.bf16.mxu0 0
        %3216 = vmatpush1.bf16.msra.mxu0 %v3197
        %3217 = vmatprep.subr.bf16.mxu0 0
        %3218 = vmatpush1.bf16.msra.mxu0 %v3196
        %3219 = vmatprep.subr.bf16.mxu0 0
        %3220 = vmatpush1.bf16.msra.mxu0 %v3195
        %3221 = vmatprep.subr.bf16.mxu0 0
        %3222 = vmatpush1.bf16.msra.mxu0 %v3194
        %3223 = vmatprep.subr.bf16.mxu0 0
        %3224 = vmatpush1.bf16.msra.mxu0 %v3193
        %3225 = vmatprep.subr.bf16.mxu0 0
        %3226 = vmatpush2.bf16.msra.mxu0 0
        %3227 = vmatprep.subr.bf16.mxu0 0
        %3228 = vmatpush2.bf16.msra.mxu0 0
        %3229 = vmatprep.subr.bf16.mxu0 0
        %3230 = vmatpush2.bf16.msra.mxu0 0
        %3231 = vmatprep.subr.bf16.mxu0 0
        %3232 = vmatpush2.bf16.msra.mxu0 0
        %3233 = vmatprep.subr.bf16.mxu0 0
        %3234 = vmatpush2.bf16.msra.mxu0 0
        %3235 = vmatprep.subr.bf16.mxu0 0
        %3236 = vmatpush2.bf16.msra.mxu0 0
        %3237 = vmatprep.subr.bf16.mxu0 0
        %3238 = vmatpush2.bf16.msra.mxu0 0
        %3239 = vmatprep.subr.bf16.mxu0 0
        %3240 = vmatpush2.bf16.msra.mxu0 0
        %3241 = vmatprep.mubr.bf16.mxu0 0
        %3242 = vmatmul.mubr.bf16.gmra.mxu0 %v3083
        %v3243 = vpop.f32.mrf.mxu0
        %v3244 = vadd.f32 0.0, %v3243
        %v3245 = vpop.f32.mrf.mxu0
        %v3246 = vpop.f32.mrf.mxu0
        %v3247 = vadd.f32 0.0, %v3246
        %v3248 = vpop.f32.mrf.mxu0
        %3249 = vmatprep.mubr.bf16.mxu0 0
        %3250 = vmatmul.mubr.bf16.gmra.mxu0 %v3091
        %v3251 = vpop.f32.mrf.mxu0
        %v3252 = vadd.f32 0.0, %v3251
        %v3253 = vpop.f32.mrf.mxu0
        %v3254 = vpop.f32.mrf.mxu0
        %v3255 = vadd.f32 0.0, %v3254
        %v3256 = vpop.f32.mrf.mxu0
        %3257 = vmatprep.mubr.bf16.mxu0 0
        %3258 = vmatmul.mubr.bf16.gmra.mxu0 %v3099
        %v3259 = vpop.f32.mrf.mxu0
        %v3260 = vadd.f32 0.0, %v3259
        %v3261 = vpop.f32.mrf.mxu0
        %v3262 = vpop.f32.mrf.mxu0
        %v3263 = vadd.f32 0.0, %v3262
        %v3264 = vpop.f32.mrf.mxu0
        %3265 = vmatprep.mubr.bf16.mxu0 0
        %3266 = vmatmul.mubr.bf16.gmra.mxu0 %v3107
        %v3267 = vpop.f32.mrf.mxu0
        %v3268 = vadd.f32 0.0, %v3267
        %v3269 = vpop.f32.mrf.mxu0
        %v3270 = vpop.f32.mrf.mxu0
        %v3271 = vadd.f32 0.0, %v3270
        %v3272 = vpop.f32.mrf.mxu0
        %3273 = vmatprep.mubr.bf16.mxu0 0
        %3274 = vmatmul.mubr.bf16.gmra.mxu0 %v3115
        %v3275 = vpop.f32.mrf.mxu0
        %v3276 = vadd.f32 0.0, %v3275
        %v3277 = vpop.f32.mrf.mxu0
        %v3278 = vpop.f32.mrf.mxu0
        %v3279 = vadd.f32 0.0, %v3278
        %v3280 = vpop.f32.mrf.mxu0
        %3281 = vmatprep.mubr.bf16.mxu0 0
        %3282 = vmatmul.mubr.bf16.gmra.mxu0 %v3123
        %v3283 = vpop.f32.mrf.mxu0
        %v3284 = vadd.f32 0.0, %v3283
        %v3285 = vpop.f32.mrf.mxu0
        %v3286 = vpop.f32.mrf.mxu0
        %v3287 = vadd.f32 0.0, %v3286
        %v3288 = vpop.f32.mrf.mxu0
        %3289 = vmatprep.mubr.bf16.mxu0 0
        %3290 = vmatmul.mubr.bf16.gmra.mxu0 %v3131
        %v3291 = vpop.f32.mrf.mxu0
        %v3292 = vadd.f32 0.0, %v3291
        %v3293 = vpop.f32.mrf.mxu0
        %v3294 = vpop.f32.mrf.mxu0
        %v3295 = vadd.f32 0.0, %v3294
        %v3296 = vpop.f32.mrf.mxu0
        %3297 = vmatprep.mubr.bf16.mxu0 0
        %3298 = vmatmul.mubr.bf16.gmra.mxu0 %v3139
        %v3299 = vpop.f32.mrf.mxu0
        %v3300 = vadd.f32 0.0, %v3299
        %v3301 = vpop.f32.mrf.mxu0
        %v3302 = vpop.f32.mrf.mxu0
        %v3303 = vadd.f32 0.0, %v3302
        %v3304 = vpop.f32.mrf.mxu0
        %3305 = vmatprep.mubr.bf16.mxu0 0
        %3306 = vmatmul.mubr.bf16.gmra.mxu0 %v3147
        %v3307 = vpop.f32.mrf.mxu0
        %v3308 = vadd.f32 0.0, %v3307
        %v3309 = vpop.f32.mrf.mxu0
        %v3310 = vpop.f32.mrf.mxu0
        %v3311 = vadd.f32 0.0, %v3310
        %v3312 = vpop.f32.mrf.mxu0
        %3313 = vmatprep.mubr.bf16.mxu0 0
        %3314 = vmatmul.mubr.bf16.gmra.mxu0 %v3150
        %v3315 = vpop.f32.mrf.mxu0
        %v3316 = vadd.f32 0.0, %v3315
        %v3317 = vpop.f32.mrf.mxu0
        %v3318 = vpop.f32.mrf.mxu0
        %v3319 = vpop.f32.mrf.mxu0
        %3320 = vdwg.mxu0
        %v3321 = vadd.f32 %v2966, %v3244
        %v3322 = vadd.f32 %v2967, %v3247
        %v3323 = vadd.f32 %v2968, %v3252
        %v3324 = vadd.f32 %v2969, %v3255
        %v3325 = vadd.f32 %v2970, %v3260
        %v3326 = vadd.f32 %v2971, %v3263
        %v3327 = vadd.f32 %v2972, %v3268
        %v3328 = vadd.f32 %v2973, %v3271
        %v3329 = vadd.f32 %v2974, %v3276
        %v3330 = vadd.f32 %v2975, %v3279
        %v3331 = vadd.f32 %v2976, %v3284
        %v3332 = vadd.f32 %v2977, %v3287
        %v3333 = vadd.f32 %v2978, %v3292
        %v3334 = vadd.f32 %v2979, %v3295
        %v3335 = vadd.f32 %v2980, %v3300
        %v3336 = vadd.f32 %v2981, %v3303
        %v3337 = vadd.f32 %v2982, %v3308
        %v3338 = vadd.f32 %v2983, %v3311
        %v3339 = vadd.f32 %v2984, %v3316
        %v3340 = vld [vmem:[%s0 + $0x4] sm:$0xe]
        %s3341 = scalar_lea.vmem %s826, 512 [#allocation2]
        %v3342 = vld [vmem:[%s3341] sm:$0xf]
        %v3343 = vld [vmem:[%s3341 + $0x4] sm:$0xf]
        %v3344 = vld [vmem:[%s3341 + $0x8] sm:$0xf]
        %v3345 = vld [vmem:[%s3341 + $0xc] sm:$0xf]
        %v3346 = vld [vmem:[%s3341 + $0x10] sm:$0xf]
        %v3347 = vld [vmem:[%s3341 + $0x14] sm:$0xf]
        %v3348 = vld [vmem:[%s3341 + $0x18] sm:$0xf]
        %v3349 = vld [vmem:[%s3341 + $0x1c] sm:$0xf]
        %v3350 = vld [vmem:[%s3341 + $0x20] sm:$0xf]
        %v3351 = vld [vmem:[%s3341 + $0x24] sm:$0xf]
        %v3352 = vld [vmem:[%s3341 + $0x28] sm:$0xf]
        %v3353 = vld [vmem:[%s3341 + $0x2c] sm:$0xf]
        %v3354 = vld [vmem:[%s3341 + $0x30] sm:$0xf]
        %v3355 = vld [vmem:[%s3341 + $0x34] sm:$0xf]
        %v3356 = vld [vmem:[%s3341 + $0x38] sm:$0xf]
        %v3357 = vld [vmem:[%s3341 + $0x3c] sm:$0xf]
        %v3359 = vunpack.c.l.b16 %v3340
        %v3360 = vpack.c.b16 %v2688, %v3359
        %vm3361 = vcmask 1046528
        %v3362 = vrot.slane %v3360, 1
        %v3363 = vrot.slane %v2708, 1
        %v3364 = vsel %vm3361, %v3362, %v3363
        %v3365 = vrot.slane %v2709, 1
        %v3366 = vsel %vm3361, %v3363, %v3365
        %v3367 = vrot.slane %v2710, 1
        %v3368 = vsel %vm3361, %v3365, %v3367
        %v3369 = vrot.slane %v2711, 1
        %v3370 = vsel %vm3361, %v3367, %v3369
        %v3371 = vrot.slane %v2712, 1
        %v3372 = vsel %vm3361, %v3369, %v3371
        %v3373 = vrot.slane %v2713, 1
        %v3374 = vsel %vm3361, %v3371, %v3373
        %v3375 = vrot.slane %v2714, 1
        %v3376 = vsel %vm3361, %v3373, %v3375
        %v3377 = vrot.slane %v2715, 1
        %v3378 = vsel %vm3361, %v3375, %v3377
        %v3379 = vrot.slane %v2716, 1
        %v3380 = vsel %vm3361, %v3377, %v3379
        %v3407 = vunpack.c.l.b16 %v3342
        %v3408 = vunpack.c.l.b16 %v3343
        %v3409 = vunpack.c.l.b16 %v3344
        %v3410 = vunpack.c.l.b16 %v3345
        %v3411 = vunpack.c.l.b16 %v3346
        %v3412 = vunpack.c.l.b16 %v3347
        %v3413 = vunpack.c.l.b16 %v3348
        %v3414 = vunpack.c.l.b16 %v3349
        %v3415 = vunpack.c.l.b16 %v3350
        %v3416 = vunpack.c.l.b16 %v3351
        %v3417 = vunpack.c.l.b16 %v3352
        %v3418 = vunpack.c.l.b16 %v3353
        %v3419 = vunpack.c.l.b16 %v3354
        %v3420 = vunpack.c.l.b16 %v3355
        %v3421 = vunpack.c.l.b16 %v3356
        %v3422 = vunpack.c.l.b16 %v3357
        %v3423 = vpack.c.b16 %v3408, %v3407
        %v3424 = vpack.c.b16 %v3410, %v3409
        %v3425 = vpack.c.b16 %v3412, %v3411
        %v3426 = vpack.c.b16 %v3414, %v3413
        %v3427 = vpack.c.b16 %v3416, %v3415
        %v3428 = vpack.c.b16 %v3418, %v3417
        %v3429 = vpack.c.b16 %v3420, %v3419
        %v3430 = vpack.c.b16 %v3422, %v3421
        %3439 = vmatprep.subr.bf16.mxu0 0
        %3440 = vmatpush1.bf16.msra.mxu0 %v3430
        %3441 = vmatprep.subr.bf16.mxu0 0
        %3442 = vmatpush1.bf16.msra.mxu0 %v3429
        %3443 = vmatprep.subr.bf16.mxu0 0
        %3444 = vmatpush1.bf16.msra.mxu0 %v3428
        %3445 = vmatprep.subr.bf16.mxu0 0
        %3446 = vmatpush1.bf16.msra.mxu0 %v3427
        %3447 = vmatprep.subr.bf16.mxu0 0
        %3448 = vmatpush1.bf16.msra.mxu0 %v3426
        %3449 = vmatprep.subr.bf16.mxu0 0
        %3450 = vmatpush1.bf16.msra.mxu0 %v3425
        %3451 = vmatprep.subr.bf16.mxu0 0
        %3452 = vmatpush1.bf16.msra.mxu0 %v3424
        %3453 = vmatprep.subr.bf16.mxu0 0
        %3454 = vmatpush1.bf16.msra.mxu0 %v3423
        %3455 = vmatprep.subr.bf16.mxu0 0
        %3456 = vmatpush2.bf16.msra.mxu0 0
        %3457 = vmatprep.subr.bf16.mxu0 0
        %3458 = vmatpush2.bf16.msra.mxu0 0
        %3459 = vmatprep.subr.bf16.mxu0 0
        %3460 = vmatpush2.bf16.msra.mxu0 0
        %3461 = vmatprep.subr.bf16.mxu0 0
        %3462 = vmatpush2.bf16.msra.mxu0 0
        %3463 = vmatprep.subr.bf16.mxu0 0
        %3464 = vmatpush2.bf16.msra.mxu0 0
        %3465 = vmatprep.subr.bf16.mxu0 0
        %3466 = vmatpush2.bf16.msra.mxu0 0
        %3467 = vmatprep.subr.bf16.mxu0 0
        %3468 = vmatpush2.bf16.msra.mxu0 0
        %3469 = vmatprep.subr.bf16.mxu0 0
        %3470 = vmatpush2.bf16.msra.mxu0 0
        %3471 = vmatprep.mubr.bf16.mxu0 0
        %3472 = vmatmul.mubr.bf16.gmra.mxu0 %v3364
        %v3473 = vpop.f32.mrf.mxu0
        %v3474 = vadd.f32 0.0, %v3473
        %v3475 = vpop.f32.mrf.mxu0
        %v3476 = vpop.f32.mrf.mxu0
        %v3477 = vadd.f32 0.0, %v3476
        %v3478 = vpop.f32.mrf.mxu0
        %3479 = vmatprep.mubr.bf16.mxu0 0
        %3480 = vmatmul.mubr.bf16.gmra.mxu0 %v3366
        %v3481 = vpop.f32.mrf.mxu0
        %v3482 = vadd.f32 0.0, %v3481
        %v3483 = vpop.f32.mrf.mxu0
        %v3484 = vpop.f32.mrf.mxu0
        %v3485 = vadd.f32 0.0, %v3484
        %v3486 = vpop.f32.mrf.mxu0
        %3487 = vmatprep.mubr.bf16.mxu0 0
        %3488 = vmatmul.mubr.bf16.gmra.mxu0 %v3368
        %v3489 = vpop.f32.mrf.mxu0
        %v3490 = vadd.f32 0.0, %v3489
        %v3491 = vpop.f32.mrf.mxu0
        %v3492 = vpop.f32.mrf.mxu0
        %v3493 = vadd.f32 0.0, %v3492
        %v3494 = vpop.f32.mrf.mxu0
        %3495 = vmatprep.mubr.bf16.mxu0 0
        %3496 = vmatmul.mubr.bf16.gmra.mxu0 %v3370
        %v3497 = vpop.f32.mrf.mxu0
        %v3498 = vadd.f32 0.0, %v3497
        %v3499 = vpop.f32.mrf.mxu0
        %v3500 = vpop.f32.mrf.mxu0
        %v3501 = vadd.f32 0.0, %v3500
        %v3502 = vpop.f32.mrf.mxu0
        %3503 = vmatprep.mubr.bf16.mxu0 0
        %3504 = vmatmul.mubr.bf16.gmra.mxu0 %v3372
        %v3505 = vpop.f32.mrf.mxu0
        %v3506 = vadd.f32 0.0, %v3505
        %v3507 = vpop.f32.mrf.mxu0
        %v3508 = vpop.f32.mrf.mxu0
        %v3509 = vadd.f32 0.0, %v3508
        %v3510 = vpop.f32.mrf.mxu0
        %3511 = vmatprep.mubr.bf16.mxu0 0
        %3512 = vmatmul.mubr.bf16.gmra.mxu0 %v3374
        %v3513 = vpop.f32.mrf.mxu0
        %v3514 = vadd.f32 0.0, %v3513
        %v3515 = vpop.f32.mrf.mxu0
        %v3516 = vpop.f32.mrf.mxu0
        %v3517 = vadd.f32 0.0, %v3516
        %v3518 = vpop.f32.mrf.mxu0
        %3519 = vmatprep.mubr.bf16.mxu0 0
        %3520 = vmatmul.mubr.bf16.gmra.mxu0 %v3376
        %v3521 = vpop.f32.mrf.mxu0
        %v3522 = vadd.f32 0.0, %v3521
        %v3523 = vpop.f32.mrf.mxu0
        %v3524 = vpop.f32.mrf.mxu0
        %v3525 = vadd.f32 0.0, %v3524
        %v3526 = vpop.f32.mrf.mxu0
        %3527 = vmatprep.mubr.bf16.mxu0 0
        %3528 = vmatmul.mubr.bf16.gmra.mxu0 %v3378
        %v3529 = vpop.f32.mrf.mxu0
        %v3530 = vadd.f32 0.0, %v3529
        %v3531 = vpop.f32.mrf.mxu0
        %v3532 = vpop.f32.mrf.mxu0
        %v3533 = vadd.f32 0.0, %v3532
        %v3534 = vpop.f32.mrf.mxu0
        %3535 = vmatprep.mubr.bf16.mxu0 0
        %3536 = vmatmul.mubr.bf16.gmra.mxu0 %v3380
        %v3537 = vpop.f32.mrf.mxu0
        %v3538 = vadd.f32 0.0, %v3537
        %v3539 = vpop.f32.mrf.mxu0
        %v3540 = vpop.f32.mrf.mxu0
        %v3541 = vadd.f32 0.0, %v3540
        %v3542 = vpop.f32.mrf.mxu0
        %3543 = vmatprep.mubr.bf16.mxu0 0
        %3544 = vmatmul.mubr.bf16.gmra.mxu0 %v3379
        %v3545 = vpop.f32.mrf.mxu0
        %v3546 = vadd.f32 0.0, %v3545
        %v3547 = vpop.f32.mrf.mxu0
        %v3548 = vpop.f32.mrf.mxu0
        %v3549 = vpop.f32.mrf.mxu0
        %3550 = vdwg.mxu0
        %v3551 = vadd.f32 %v3321, %v3474
        %v3552 = vadd.f32 %v3322, %v3477
        %v3553 = vadd.f32 %v3323, %v3482
        %v3554 = vadd.f32 %v3324, %v3485
        %v3555 = vadd.f32 %v3325, %v3490
        %v3556 = vadd.f32 %v3326, %v3493
        %v3557 = vadd.f32 %v3327, %v3498
        %v3558 = vadd.f32 %v3328, %v3501
        %v3559 = vadd.f32 %v3329, %v3506
        %v3560 = vadd.f32 %v3330, %v3509
        %v3561 = vadd.f32 %v3331, %v3514
        %v3562 = vadd.f32 %v3332, %v3517
        %v3563 = vadd.f32 %v3333, %v3522
        %v3564 = vadd.f32 %v3334, %v3525
        %v3565 = vadd.f32 %v3335, %v3530
        %v3566 = vadd.f32 %v3336, %v3533
        %v3567 = vadd.f32 %v3337, %v3538
        %v3568 = vadd.f32 %v3338, %v3541
        %v3569 = vadd.f32 %v3339, %v3546
        %v3570 = vld [vmem:[%s2] sm:$0xff]
        %v3571 = vld [vmem:[%s2 + $0x8] sm:$0xff]
        %v3572 = vld [vmem:[%s2 + $0x10] sm:$0xff]
        %v3573 = vld [vmem:[%s2 + $0x18] sm:$0xff]
        %v3574 = vld [vmem:[%s2 + $0x20] sm:$0xff]
        %v3575 = vld [vmem:[%s2 + $0x28] sm:$0xff]
        %v3576 = vld [vmem:[%s2 + $0x30] sm:$0xff]
        %v3577 = vld [vmem:[%s2 + $0x38] sm:$0xff]
        %v3578 = vld [vmem:[%s2 + $0x40] sm:$0xff]
        %v3579 = vld [vmem:[%s2 + $0x48] sm:$0xff]
        %v3580 = vld [vmem:[%s2 + $0x50] sm:$0xff]
        %v3581 = vld [vmem:[%s2 + $0x58] sm:$0xff]
        %v3582 = vld [vmem:[%s2 + $0x60] sm:$0xff]
        %v3583 = vld [vmem:[%s2 + $0x68] sm:$0xff]
        %v3584 = vld [vmem:[%s2 + $0x70] sm:$0xff]
        %v3585 = vld [vmem:[%s2 + $0x78] sm:$0xff]
        %v3586 = vld [vmem:[%s2 + $0x80] sm:$0xff]
        %v3587 = vld [vmem:[%s2 + $0x88] sm:$0xff]
        %v3588 = vld [vmem:[%s2 + $0x90] sm:$0xff]
        %v3589 = vld [vmem:[%s858] sm:$0x1]
        %v3590 = vld [vmem:[%s861] sm:$0x1]
        %3592 = vset.pattern.permute.xlu0 0
        %3593 = vperm.xlu0 %3592, %v3570
        %v3594 = vpop.permute.xlu0 %3593
        %3597 = vset.pattern.permute.xlu0 0
        %3598 = vperm.xlu0 %3597, %v3571
        %v3599 = vpop.permute.xlu0 %3598
        %3602 = vset.pattern.permute.xlu0 0
        %3603 = vperm.xlu0 %3602, %v3572
        %v3604 = vpop.permute.xlu0 %3603
        %3607 = vset.pattern.permute.xlu0 0
        %3608 = vperm.xlu0 %3607, %v3573
        %v3609 = vpop.permute.xlu0 %3608
        %3612 = vset.pattern.permute.xlu0 0
        %3613 = vperm.xlu0 %3612, %v3574
        %v3614 = vpop.permute.xlu0 %3613
        %3617 = vset.pattern.permute.xlu0 0
        %3618 = vperm.xlu0 %3617, %v3575
        %v3619 = vpop.permute.xlu0 %3618
        %3622 = vset.pattern.permute.xlu0 0
        %3623 = vperm.xlu0 %3622, %v3576
        %v3624 = vpop.permute.xlu0 %3623
        %3627 = vset.pattern.permute.xlu0 0
        %3628 = vperm.xlu0 %3627, %v3577
        %v3629 = vpop.permute.xlu0 %3628
        %3632 = vset.pattern.permute.xlu0 0
        %3633 = vperm.xlu0 %3632, %v3578
        %v3634 = vpop.permute.xlu0 %3633
        %3637 = vset.pattern.permute.xlu0 0
        %3638 = vperm.xlu0 %3637, %v3579
        %v3639 = vpop.permute.xlu0 %3638
        %3642 = vset.pattern.permute.xlu0 0
        %3643 = vperm.xlu0 %3642, %v3580
        %v3644 = vpop.permute.xlu0 %3643
        %3647 = vset.pattern.permute.xlu0 0
        %3648 = vperm.xlu0 %3647, %v3581
        %v3649 = vpop.permute.xlu0 %3648
        %3652 = vset.pattern.permute.xlu0 0
        %3653 = vperm.xlu0 %3652, %v3582
        %v3654 = vpop.permute.xlu0 %3653
        %3657 = vset.pattern.permute.xlu0 0
        %3658 = vperm.xlu0 %3657, %v3583
        %v3659 = vpop.permute.xlu0 %3658
        %3662 = vset.pattern.permute.xlu0 0
        %3663 = vperm.xlu0 %3662, %v3584
        %v3664 = vpop.permute.xlu0 %3663
        %3667 = vset.pattern.permute.xlu0 0
        %3668 = vperm.xlu0 %3667, %v3585
        %v3669 = vpop.permute.xlu0 %3668
        %3672 = vset.pattern.permute.xlu0 0
        %3673 = vperm.xlu0 %3672, %v3586
        %v3674 = vpop.permute.xlu0 %3673
        %3677 = vset.pattern.permute.xlu0 0
        %3678 = vperm.xlu0 %3677, %v3587
        %v3679 = vpop.permute.xlu0 %3678
        %3682 = vset.pattern.permute.xlu0 0
        %3683 = vperm.xlu0 %3682, %v3588
        %v3684 = vpop.permute.xlu0 %3683
        %v3686 = vmul.f32 %v3551, %v3594
        %v3687 = vmul.f32 %v3552, %v3599
        %v3688 = vmul.f32 %v3553, %v3604
        %v3689 = vmul.f32 %v3554, %v3609
        %v3690 = vmul.f32 %v3555, %v3614
        %v3691 = vmul.f32 %v3556, %v3619
        %v3692 = vmul.f32 %v3557, %v3624
        %v3693 = vmul.f32 %v3558, %v3629
        %v3694 = vmul.f32 %v3559, %v3634
        %v3695 = vmul.f32 %v3560, %v3639
        %v3696 = vmul.f32 %v3561, %v3644
        %v3697 = vmul.f32 %v3562, %v3649
        %v3698 = vmul.f32 %v3563, %v3654
        %v3699 = vmul.f32 %v3564, %v3659
        %v3700 = vmul.f32 %v3565, %v3664
        %v3701 = vmul.f32 %v3566, %v3669
        %v3702 = vmul.f32 %v3567, %v3674
        %v3703 = vmul.f32 %v3568, %v3679
        %v3704 = vmul.f32 %v3569, %v3684
        %v3705 = vadd.f32 %v3686, %v3687
        %v3706 = vadd.f32 %v3705, %v3688
        %v3707 = vadd.f32 %v3706, %v3689
        %v3708 = vadd.f32 %v3707, %v3690
        %v3709 = vadd.f32 %v3708, %v3691
        %v3710 = vadd.f32 %v3709, %v3692
        %v3711 = vadd.f32 %v3710, %v3693
        %v3712 = vadd.f32 %v3711, %v3694
        %v3713 = vadd.f32 %v3712, %v3695
        %v3714 = vadd.f32 %v3713, %v3696
        %v3715 = vadd.f32 %v3714, %v3697
        %v3716 = vadd.f32 %v3715, %v3698
        %v3717 = vadd.f32 %v3716, %v3699
        %v3718 = vadd.f32 %v3717, %v3700
        %v3719 = vadd.f32 %v3718, %v3701
        %v3720 = vadd.f32 %v3719, %v3702
        %v3721 = vadd.f32 %v3720, %v3703
        %v3722 = vadd.f32 %v3721, %v3704
        %v3723 = vrot.slane %v3722, 4
        %v3724 = vadd.f32 %v3722, %v3723
        %v3725 = vrot.slane %v3724, 2
        %v3726 = vadd.f32 %v3724, %v3725
        %v3727 = vrot.slane %v3726, 1
        %v3728 = vadd.f32 %v3726, %v3727
        %v3729 = vmul.f32 %v3686, %v3551
        %v3730 = vmul.f32 %v3687, %v3552
        %v3731 = vmul.f32 %v3688, %v3553
        %v3732 = vmul.f32 %v3689, %v3554
        %v3733 = vmul.f32 %v3690, %v3555
        %v3734 = vmul.f32 %v3691, %v3556
        %v3735 = vmul.f32 %v3692, %v3557
        %v3736 = vmul.f32 %v3693, %v3558
        %v3737 = vmul.f32 %v3694, %v3559
        %v3738 = vmul.f32 %v3695, %v3560
        %v3739 = vmul.f32 %v3696, %v3561
        %v3740 = vmul.f32 %v3697, %v3562
        %v3741 = vmul.f32 %v3698, %v3563
        %v3742 = vmul.f32 %v3699, %v3564
        %v3743 = vmul.f32 %v3700, %v3565
        %v3744 = vmul.f32 %v3701, %v3566
        %v3745 = vmul.f32 %v3702, %v3567
        %v3746 = vmul.f32 %v3703, %v3568
        %v3747 = vmul.f32 %v3704, %v3569
        %v3748 = vadd.f32 %v3729, %v3730
        %v3749 = vadd.f32 %v3748, %v3731
        %v3750 = vadd.f32 %v3749, %v3732
        %v3751 = vadd.f32 %v3750, %v3733
        %v3752 = vadd.f32 %v3751, %v3734
        %v3753 = vadd.f32 %v3752, %v3735
        %v3754 = vadd.f32 %v3753, %v3736
        %v3755 = vadd.f32 %v3754, %v3737
        %v3756 = vadd.f32 %v3755, %v3738
        %v3757 = vadd.f32 %v3756, %v3739
        %v3758 = vadd.f32 %v3757, %v3740
        %v3759 = vadd.f32 %v3758, %v3741
        %v3760 = vadd.f32 %v3759, %v3742
        %v3761 = vadd.f32 %v3760, %v3743
        %v3762 = vadd.f32 %v3761, %v3744
        %v3763 = vadd.f32 %v3762, %v3745
        %v3764 = vadd.f32 %v3763, %v3746
        %v3765 = vadd.f32 %v3764, %v3747
        %v3766 = vrot.slane %v3765, 4
        %v3767 = vadd.f32 %v3765, %v3766
        %v3768 = vrot.slane %v3767, 2
        %v3769 = vadd.f32 %v3767, %v3768
        %v3770 = vrot.slane %v3769, 1
        %v3771 = vadd.f32 %v3769, %v3770
        %v3772 = vmul.f32 %v3728, 0.0078125
        %v3773 = vmul.f32 %v3771, 0.0078125
        %v3774 = vmul.f32 %v3772, %v3772
        %v3775 = vsub.f32 %v3773, %v3774
        %v3776 = vmax.f32 %v3775, 0.0
        %v3777 = vadd.f32 %v3776, 1e-05
        %v3778 = vrsqrt.pop %v3777
        %v3779 = vmul.f32 %v3589, %v3778
        %v3780 = vmul.f32 %v3772, %v3779
        %v3781 = vsub.f32 %v3590, %v3780
        %v3783 = vlaneseq
        %v3784 = vshrl.u32 %v3783, 7
        %v3785 = vsub.s32 0, %v3784
        %v3786 = vrot.slane %v3779, %v3785
        %v3788 = vmul.f32 %v3551, %v3786
        %v3789 = vmul.f32 %v3552, %v3786
        %v3790 = vmul.f32 %v3553, %v3786
        %v3791 = vmul.f32 %v3554, %v3786
        %v3792 = vmul.f32 %v3555, %v3786
        %v3793 = vmul.f32 %v3556, %v3786
        %v3794 = vmul.f32 %v3557, %v3786
        %v3795 = vmul.f32 %v3558, %v3786
        %v3796 = vmul.f32 %v3559, %v3786
        %v3797 = vmul.f32 %v3560, %v3786
        %v3798 = vmul.f32 %v3561, %v3786
        %v3799 = vmul.f32 %v3562, %v3786
        %v3800 = vmul.f32 %v3563, %v3786
        %v3801 = vmul.f32 %v3564, %v3786
        %v3802 = vmul.f32 %v3565, %v3786
        %v3803 = vmul.f32 %v3566, %v3786
        %v3804 = vmul.f32 %v3567, %v3786
        %v3805 = vmul.f32 %v3568, %v3786
        %v3806 = vmul.f32 %v3569, %v3786
        %v3808 = vlaneseq
        %v3809 = vshrl.u32 %v3808, 7
        %v3810 = vsub.s32 0, %v3809
        %v3811 = vrot.slane %v3781, %v3810
        %v3813 = vadd.f32 %v3788, %v3811
        %v3814 = vadd.f32 %v3789, %v3811
        %v3815 = vadd.f32 %v3790, %v3811
        %v3816 = vadd.f32 %v3791, %v3811
        %v3817 = vadd.f32 %v3792, %v3811
        %v3818 = vadd.f32 %v3793, %v3811
        %v3819 = vadd.f32 %v3794, %v3811
        %v3820 = vadd.f32 %v3795, %v3811
        %v3821 = vadd.f32 %v3796, %v3811
        %v3822 = vadd.f32 %v3797, %v3811
        %v3823 = vadd.f32 %v3798, %v3811
        %v3824 = vadd.f32 %v3799, %v3811
        %v3825 = vadd.f32 %v3800, %v3811
        %v3826 = vadd.f32 %v3801, %v3811
        %v3827 = vadd.f32 %v3802, %v3811
        %v3828 = vadd.f32 %v3803, %v3811
        %v3829 = vadd.f32 %v3804, %v3811
        %v3830 = vadd.f32 %v3805, %v3811
        %v3831 = vadd.f32 %v3806, %v3811
        %v3832 = vmax.f32 %v3813, 0.0
        %v3833 = vmax.f32 %v3814, 0.0
        %v3834 = vmax.f32 %v3815, 0.0
        %v3835 = vmax.f32 %v3816, 0.0
        %v3836 = vmax.f32 %v3817, 0.0
        %v3837 = vmax.f32 %v3818, 0.0
        %v3838 = vmax.f32 %v3819, 0.0
        %v3839 = vmax.f32 %v3820, 0.0
        %v3840 = vmax.f32 %v3821, 0.0
        %v3841 = vmax.f32 %v3822, 0.0
        %v3842 = vmax.f32 %v3823, 0.0
        %v3843 = vmax.f32 %v3824, 0.0
        %v3844 = vmax.f32 %v3825, 0.0
        %v3845 = vmax.f32 %v3826, 0.0
        %v3846 = vmax.f32 %v3827, 0.0
        %v3847 = vmax.f32 %v3828, 0.0
        %v3848 = vmax.f32 %v3829, 0.0
        %v3849 = vmax.f32 %v3830, 0.0
        %v3850 = vmax.f32 %v3831, 0.0
        %v3851 = vpack.c.bf16 %v3833, %v3832
        %v3852 = vpack.c.bf16 %v3835, %v3834
        %v3853 = vpack.c.bf16 %v3837, %v3836
        %v3854 = vpack.c.bf16 %v3839, %v3838
        %v3855 = vpack.c.bf16 %v3841, %v3840
        %v3856 = vpack.c.bf16 %v3843, %v3842
        %v3857 = vpack.c.bf16 %v3845, %v3844
        %v3858 = vpack.c.bf16 %v3847, %v3846
        %v3859 = vpack.c.bf16 %v3849, %v3848
        %v3860 = vpack.c.bf16 %v3850, %v3850
        %v3871 = vunpack.c.l.b16 %v3851
        %v3872 = vunpack.c.h.b16 %v3851
        %v3873 = vunpack.c.l.b16 %v3852
        %v3874 = vunpack.c.h.b16 %v3852
        %v3875 = vunpack.c.l.b16 %v3853
        %v3876 = vunpack.c.h.b16 %v3853
        %v3877 = vunpack.c.l.b16 %v3854
        %v3878 = vunpack.c.h.b16 %v3854
        %v3879 = vunpack.c.l.b16 %v3855
        %v3880 = vunpack.c.h.b16 %v3855
        %v3881 = vunpack.c.l.b16 %v3856
        %v3882 = vunpack.c.h.b16 %v3856
        %v3883 = vunpack.c.l.b16 %v3857
        %v3884 = vunpack.c.h.b16 %v3857
        %v3885 = vunpack.c.l.b16 %v3858
        %v3886 = vunpack.c.h.b16 %v3858
        %v3887 = vunpack.c.l.b16 %v3859
        %v3888 = vunpack.c.h.b16 %v3859
        %v3889 = vunpack.c.l.b16 %v3860
        %v3890 = vpack.c.b16 %v3871, %v3871
        %v3891 = vpack.c.b16 %v3872, %v3872
        %v3892 = vpack.c.b16 %v3873, %v3873
        %v3893 = vpack.c.b16 %v3874, %v3874
        %v3894 = vpack.c.b16 %v3875, %v3875
        %v3895 = vpack.c.b16 %v3876, %v3876
        %v3896 = vpack.c.b16 %v3877, %v3877
        %v3897 = vpack.c.b16 %v3878, %v3878
        %v3898 = vpack.c.b16 %v3879, %v3879
        %v3899 = vpack.c.b16 %v3880, %v3880
        %v3900 = vpack.c.b16 %v3881, %v3881
        %v3901 = vpack.c.b16 %v3882, %v3882
        %v3902 = vpack.c.b16 %v3883, %v3883
        %v3903 = vpack.c.b16 %v3884, %v3884
        %v3904 = vpack.c.b16 %v3885, %v3885
        %v3905 = vpack.c.b16 %v3886, %v3886
        %v3906 = vpack.c.b16 %v3887, %v3887
        %v3907 = vpack.c.b16 %v3888, %v3888
        %v3908 = vpack.c.b16 %v3889, %v3889
        %3928 = vst [vmem:[%s855] sm:$0xf] %v3890
        %3929 = vst [vmem:[%s855 + $0x4] sm:$0xf] %v3891
        %3930 = vst [vmem:[%s855 + $0x8] sm:$0xf] %v3892
        %3931 = vst [vmem:[%s855 + $0xc] sm:$0xf] %v3893
        %3932 = vst [vmem:[%s855 + $0x10] sm:$0xf] %v3894
        %3933 = vst [vmem:[%s855 + $0x14] sm:$0xf] %v3895
        %3934 = vst [vmem:[%s855 + $0x18] sm:$0xf] %v3896
        %3935 = vst [vmem:[%s855 + $0x1c] sm:$0xf] %v3897
        %3936 = vst [vmem:[%s855 + $0x20] sm:$0xf] %v3898
        %3937 = vst [vmem:[%s855 + $0x24] sm:$0xf] %v3899
        %3938 = vst [vmem:[%s855 + $0x28] sm:$0xf] %v3900
        %3939 = vst [vmem:[%s855 + $0x2c] sm:$0xf] %v3901
        %3940 = vst [vmem:[%s855 + $0x30] sm:$0xf] %v3902
        %3941 = vst [vmem:[%s855 + $0x34] sm:$0xf] %v3903
        %3942 = vst [vmem:[%s855 + $0x38] sm:$0xf] %v3904
        %3943 = vst [vmem:[%s855 + $0x3c] sm:$0xf] %v3905
        %3944 = vst [vmem:[%s855 + $0x40] sm:$0xf] %v3906
        %3945 = vst [vmem:[%s855 + $0x44] sm:$0xf] %v3907
        %3946 = vst [vmem:[%s855 + $0x48] sm:$0xf] %v3908
        %s3947 = sand.u32 %s144, 1
        %s3948 = sand.u32 %s144, 1
        %s3949 = smul.addr %s3948, 76
        %s3950 = scalar_lea.vmem [#allocation3], %s3949
        // Predicated region
        $region82: #{basic_block_forward.2} parent=76 // pred_check
          %p3951 = pneg %p154
        $region83: #{basic_block_forward.2} parent=76 // pred_check_branch
          %3953 = sbr.rel (%p3951) target = $region85
        $region84: #{basic_block_forward.2} parent=76 // pred_region
          %s3954 = smul.addr %s16, 4
          %s3955 = scalar_lea.vmem %s5, %s3954
          // Predicated region
          $region86: #{basic_block_forward.2} parent=84 // pred_check
            _
          $region87: #{basic_block_forward.2} parent=84 // pred_check_branch
            %3957 = sbr.rel (0) target = $region89
          $region88: #{basic_block_forward.2} parent=84 // pred_region
            // Predicated region
            $region90: #{basic_block_forward.2} parent=88 // pred_check
              _
            $region91: #{basic_block_forward.2} parent=88 // pred_check_branch
              %3959 = sbr.rel target = $region93
            $region92: #{basic_block_forward.2} parent=88 // pred_region
              // Predicated region
              $region105: #{basic_block_forward.2} parent=92 // pred_check
                _
              $region106: #{basic_block_forward.2} parent=92 // pred_check_branch
                %4011 = sbr.rel (0) target = $region108
              $region107: #{basic_block_forward.2} parent=92 // pred_region
                loop: start=0, step=1, limit=1
                $region109: #{basic_block_forward.2} parent=107 // loop_pre_header
                  _
                $region110: #{basic_block_forward.2} parent=107 // loop_header
                  %s4013 = sphi 0, %s4017
                  %p4014 = scmp.ge.s32.totalorder %s4013, 1
                  %s4018 = sphi %s3950, %s3950
                  %s4019 = sphi %s3955, %s3955
                $region111: #{basic_block_forward.2} parent=107 // loop_header_branch
                  %4016 = sbr.rel (%p4014) target = $region115
                $region112: #{basic_block_forward.2} parent=107 // loop_body
                  _
                $region113: #{basic_block_forward.2} parent=107 // loop_footer
                  %s4017 = sadd.s32 1, %s4013
                $region114: #{basic_block_forward.2} parent=107 // loop_footer_branch
                  %4012 = sbr.rel target = $region110
                $region115: #{basic_block_forward.2} parent=107 // loop_exit
                  _
                %s4021 = ssub.s32 16, 1
                loop: start=0, step=1, limit=1
                $region116: #{basic_block_forward.2} parent=107 // loop_pre_header
                  _
                $region117: #{basic_block_forward.2} parent=107 // loop_header
                  %s4023 = sphi 0, %s4027
                  %p4024 = scmp.ge.s32.totalorder %s4023, 1
                  %s4028 = sphi %s3950, %s3950
                  %s4029 = sphi %s3955, %s3955
                $region118: #{basic_block_forward.2} parent=107 // loop_header_branch
                  %4026 = sbr.rel (%p4024) target = $region122
                $region119: #{basic_block_forward.2} parent=107 // loop_body
                  %v4030 = vld [vmem:[%s4028] sm:%s4021]
                  %4031 = vst [vmem:[%s4029] sm:%s4021] %v4030
                  %v4032 = vld [vmem:[%s4028 + $0x4] sm:%s4021]
                  %4033 = vst [vmem:[%s4029 + $0x8] sm:%s4021] %v4032
                  %v4034 = vld [vmem:[%s4028 + $0x8] sm:%s4021]
                  %4035 = vst [vmem:[%s4029 + $0x10] sm:%s4021] %v4034
                  %v4036 = vld [vmem:[%s4028 + $0xc] sm:%s4021]
                  %4037 = vst [vmem:[%s4029 + $0x18] sm:%s4021] %v4036
                  %v4038 = vld [vmem:[%s4028 + $0x10] sm:%s4021]
                  %4039 = vst [vmem:[%s4029 + $0x20] sm:%s4021] %v4038
                  %v4040 = vld [vmem:[%s4028 + $0x14] sm:%s4021]
                  %4041 = vst [vmem:[%s4029 + $0x28] sm:%s4021] %v4040
                  %v4042 = vld [vmem:[%s4028 + $0x18] sm:%s4021]
                  %4043 = vst [vmem:[%s4029 + $0x30] sm:%s4021] %v4042
                  %v4044 = vld [vmem:[%s4028 + $0x1c] sm:%s4021]
                  %4045 = vst [vmem:[%s4029 + $0x38] sm:%s4021] %v4044
                  %v4046 = vld [vmem:[%s4028 + $0x20] sm:%s4021]
                  %4047 = vst [vmem:[%s4029 + $0x40] sm:%s4021] %v4046
                  %v4048 = vld [vmem:[%s4028 + $0x24] sm:%s4021]
                  %4049 = vst [vmem:[%s4029 + $0x48] sm:%s4021] %v4048
                  %v4050 = vld [vmem:[%s4028 + $0x28] sm:%s4021]
                  %4051 = vst [vmem:[%s4029 + $0x50] sm:%s4021] %v4050
                  %v4052 = vld [vmem:[%s4028 + $0x2c] sm:%s4021]
                  %4053 = vst [vmem:[%s4029 + $0x58] sm:%s4021] %v4052
                  %v4054 = vld [vmem:[%s4028 + $0x30] sm:%s4021]
                  %4055 = vst [vmem:[%s4029 + $0x60] sm:%s4021] %v4054
                  %v4056 = vld [vmem:[%s4028 + $0x34] sm:%s4021]
                  %4057 = vst [vmem:[%s4029 + $0x68] sm:%s4021] %v4056
                  %v4058 = vld [vmem:[%s4028 + $0x38] sm:%s4021]
                  %4059 = vst [vmem:[%s4029 + $0x70] sm:%s4021] %v4058
                  %v4060 = vld [vmem:[%s4028 + $0x3c] sm:%s4021]
                  %4061 = vst [vmem:[%s4029 + $0x78] sm:%s4021] %v4060
                  %v4062 = vld [vmem:[%s4028 + $0x40] sm:%s4021]
                  %4063 = vst [vmem:[%s4029 + $0x80] sm:%s4021] %v4062
                  %v4064 = vld [vmem:[%s4028 + $0x44] sm:%s4021]
                  %4065 = vst [vmem:[%s4029 + $0x88] sm:%s4021] %v4064
                  %v4066 = vld [vmem:[%s4028 + $0x48] sm:%s4021]
                  %4067 = vst [vmem:[%s4029 + $0x90] sm:%s4021] %v4066
                $region120: #{basic_block_forward.2} parent=107 // loop_footer
                  %s4027 = sadd.s32 1, %s4023
                $region121: #{basic_block_forward.2} parent=107 // loop_footer_branch
                  %4022 = sbr.rel target = $region117
                $region122: #{basic_block_forward.2} parent=107 // loop_exit
                  _
              $region108: #{basic_block_forward.2} parent=92 // pred_fallthru
                _
            $region93: #{basic_block_forward.2} parent=88 // pred_fallthru
              _
            // Predicated region
            $region94: #{basic_block_forward.2} parent=88 // pred_check
              _
            $region95: #{basic_block_forward.2} parent=88 // pred_check_branch
              %3961 = sbr.rel (0) target = $region97
            $region96: #{basic_block_forward.2} parent=88 // pred_region
              %s3963 = ssub.s32 16, 1
              loop: start=0, step=1, limit=1
              $region98: #{basic_block_forward.2} parent=96 // loop_pre_header
                _
              $region99: #{basic_block_forward.2} parent=96 // loop_header
                %s3965 = sphi 0, %s3969
                %p3966 = scmp.ge.s32.totalorder %s3965, 1
                %s3970 = sphi %s3950, %s3950
                %s3971 = sphi %s3955, %s3955
              $region100: #{basic_block_forward.2} parent=96 // loop_header_branch
                %3968 = sbr.rel (%p3966) target = $region104
              $region101: #{basic_block_forward.2} parent=96 // loop_body
                %v3972 = vld [vmem:[%s3970] sm:%s3963]
                %3973 = vst [vmem:[%s3971] sm:%s3963] %v3972
                %v3974 = vld [vmem:[%s3970 + $0x4] sm:%s3963]
                %3975 = vst [vmem:[%s3971 + $0x8] sm:%s3963] %v3974
                %v3976 = vld [vmem:[%s3970 + $0x8] sm:%s3963]
                %3977 = vst [vmem:[%s3971 + $0x10] sm:%s3963] %v3976
                %v3978 = vld [vmem:[%s3970 + $0xc] sm:%s3963]
                %3979 = vst [vmem:[%s3971 + $0x18] sm:%s3963] %v3978
                %v3980 = vld [vmem:[%s3970 + $0x10] sm:%s3963]
                %3981 = vst [vmem:[%s3971 + $0x20] sm:%s3963] %v3980
                %v3982 = vld [vmem:[%s3970 + $0x14] sm:%s3963]
                %3983 = vst [vmem:[%s3971 + $0x28] sm:%s3963] %v3982
                %v3984 = vld [vmem:[%s3970 + $0x18] sm:%s3963]
                %3985 = vst [vmem:[%s3971 + $0x30] sm:%s3963] %v3984
                %v3986 = vld [vmem:[%s3970 + $0x1c] sm:%s3963]
                %3987 = vst [vmem:[%s3971 + $0x38] sm:%s3963] %v3986
                %v3988 = vld [vmem:[%s3970 + $0x20] sm:%s3963]
                %3989 = vst [vmem:[%s3971 + $0x40] sm:%s3963] %v3988
                %v3990 = vld [vmem:[%s3970 + $0x24] sm:%s3963]
                %3991 = vst [vmem:[%s3971 + $0x48] sm:%s3963] %v3990
                %v3992 = vld [vmem:[%s3970 + $0x28] sm:%s3963]
                %3993 = vst [vmem:[%s3971 + $0x50] sm:%s3963] %v3992
                %v3994 = vld [vmem:[%s3970 + $0x2c] sm:%s3963]
                %3995 = vst [vmem:[%s3971 + $0x58] sm:%s3963] %v3994
                %v3996 = vld [vmem:[%s3970 + $0x30] sm:%s3963]
                %3997 = vst [vmem:[%s3971 + $0x60] sm:%s3963] %v3996
                %v3998 = vld [vmem:[%s3970 + $0x34] sm:%s3963]
                %3999 = vst [vmem:[%s3971 + $0x68] sm:%s3963] %v3998
                %v4000 = vld [vmem:[%s3970 + $0x38] sm:%s3963]
                %4001 = vst [vmem:[%s3971 + $0x70] sm:%s3963] %v4000
                %v4002 = vld [vmem:[%s3970 + $0x3c] sm:%s3963]
                %4003 = vst [vmem:[%s3971 + $0x78] sm:%s3963] %v4002
                %v4004 = vld [vmem:[%s3970 + $0x40] sm:%s3963]
                %4005 = vst [vmem:[%s3971 + $0x80] sm:%s3963] %v4004
                %v4006 = vld [vmem:[%s3970 + $0x44] sm:%s3963]
                %4007 = vst [vmem:[%s3971 + $0x88] sm:%s3963] %v4006
                %v4008 = vld [vmem:[%s3970 + $0x48] sm:%s3963]
                %4009 = vst [vmem:[%s3971 + $0x90] sm:%s3963] %v4008
              $region102: #{basic_block_forward.2} parent=96 // loop_footer
                %s3969 = sadd.s32 1, %s3965
              $region103: #{basic_block_forward.2} parent=96 // loop_footer_branch
                %3964 = sbr.rel target = $region99
              $region104: #{basic_block_forward.2} parent=96 // loop_exit
                _
            $region97: #{basic_block_forward.2} parent=88 // pred_fallthru
              _
          $region89: #{basic_block_forward.2} parent=84 // pred_fallthru
            _
          %4068 = vnop
        $region85: #{basic_block_forward.2} parent=76 // pred_fallthru
          _
      $region77: #{basic_block_forward.2} parent=5 // pred_fallthru
        _
      %p4069 = scmp.le.s32.totalorder 2, %s11
      // Predicated region
      $region123: #{basic_block_forward.2} parent=5 // pred_check
        %p4070 = pneg %p4069
      $region124: #{basic_block_forward.2} parent=5 // pred_check_branch
        %4072 = sbr.rel (%p4070) target = $region126
      $region125: #{basic_block_forward.2} parent=5 // pred_region
        %s4073 = ssub.s32 %s11, 2
        // Predicated region
        $region127: #{basic_block_forward.2} parent=125 // pred_check
          %p4074 = pneg %p160
        $region128: #{basic_block_forward.2} parent=125 // pred_check_branch
          %4076 = sbr.rel (%p4074) target = $region130
        $region129: #{basic_block_forward.2} parent=125 // pred_region
          %s4077 = sand.u32 %s145, 1
          %s4078 = sand.u32 %s145, 1
          %s4079 = smul.addr %s4078, 76
          %s4080 = scalar_lea.vmem [#allocation3], %s4079
        $region130: #{basic_block_forward.2} parent=125 // pred_fallthru
          _
      $region126: #{basic_block_forward.2} parent=5 // pred_fallthru
        _
    $region6: #{basic_block_forward.2} parent=1 // loop_footer
      %s15 = sadd.s32 1, %s11
    $region7: #{basic_block_forward.2} parent=1 // loop_footer_branch
      %10 = sbr.rel target = $region3
    $region8: #{basic_block_forward.2} parent=1 // loop_exit
      _

// kernel: basic_block_forward.3
$region0: #{basic_block_forward.3}
  #allocation0 [shape = 'u32[]', space=smem, size = 0x4, offset = 0x4, fixed_abs, tag = 'smem constant byte address 0x4 - core index']
  #allocation1 [shape = 'u32[144,128]{1,0:T(1,128)}', space=vmem, size = 0x12000, scoped, tag = 'internal scratch']
  %s0 = inlined_call_operand.vmem [shape: bf16[1,200,256], index: 0, kind: input, shape index: {}]
  %s1 = inlined_call_operand.vmem [shape: bf16[9,256,256], index: 1, kind: input, shape index: {}]
  %s2 = inlined_call_operand.vmem [shape: f32[178,1], index: 2, kind: input, shape index: {}]
  %s3 = inlined_call_operand.vmem [shape: f32[1,256], index: 3, kind: input, shape index: {}]
  %s4 = inlined_call_operand.vmem [shape: f32[1,256], index: 4, kind: input, shape index: {}]
  %s5 = inlined_call_operand.vmem [shape: bf16[178,128], index: 5, kind: input, shape index: {}]
  %s6 = inlined_call_operand.vmem [shape: bf16[128,256], index: 6, kind: input, shape index: {}]
  %s7 = inlined_call_operand.vmem [shape: f32[1,256], index: 7, kind: input, shape index: {}]
  %s8 = inlined_call_operand.vmem [shape: f32[1,256], index: 8, kind: input, shape index: {}]
  %s9 = inlined_call_operand.vmem [shape: f32[178,256], index: 9, kind: output, shape index: {}]
  %s10 = sld [smem:[#allocation0]]
  $region185: #{basic_block_forward.3} parent=0
    _
  %s12 = ssub.s32 1, %s10
  %s13 = scalar_select 0, %s12, %s10
  $region1: #{basic_block_forward.3} parent=0
    #allocation2 [shape = 'u8[1179648]{0}', space=vmem, size = 0x120000, scoped, tag = 'input window, operand 1']
    #allocation3 [shape = 'u8[65536]{0}', space=vmem, size = 0x10000, scoped, tag = 'input window, operand 6']
    #allocation4 [shape = 'u8[188416]{0}', space=vmem, size = 0x2e000, scoped, tag = 'output window, operand 0']
    loop: start=0, step=1, limit=4
    $region2: #{basic_block_forward.3} parent=1 // loop_pre_header
      _
    $region3: #{basic_block_forward.3} parent=1 // loop_header
      %s15 = sphi 0, %s19
      %p16 = scmp.ge.s32.totalorder %s15, 4
      %s23 = sphi 0, %s23
      %s25 = sphi 0, %s23
      %s26 = sphi 0, %s25
      %s40 = sphi 0, %s26
      %s46 = sphi 0, %s48
      %s49 = sphi 0, %s46
      %s50 = sphi 0, %s49
      %s66 = sphi 0, %s50
      %s70 = sphi 0, %s70
      %s72 = sphi 0, %s70
      %s73 = sphi 0, %s72
      %s87 = sphi 0, %s73
      %s93 = sphi 0, %s95
      %s96 = sphi 0, %s93
      %s97 = sphi 0, %s96
      %s113 = sphi 0, %s97
      %s119 = sphi 0, %s121
      %s122 = sphi 0, %s119
      %s123 = sphi 0, %s122
      %s139 = sphi 0, %s123
      %s143 = sphi 0, %s143
      %s145 = sphi 0, %s143
      %s146 = sphi 0, %s145
      %s160 = sphi 0, %s146
      %s166 = sphi 0, %s168
      %s169 = sphi 0, %s166
      %s170 = sphi 0, %s169
      %s186 = sphi 0, %s170
      %s192 = sphi 0, %s194
      %s195 = sphi 0, %s192
      %s196 = sphi 0, %s195
      %s212 = sphi 0, %s196
      %s218 = sphi 0, %s220
      %s221 = sphi 0, %s218
      %s222 = sphi 0, %s221
      %s238 = sphi 0, %s222
      %s244 = sphi 0, %s246
      %s247 = sphi 0, %s244
      %s248 = sphi 0, %s247
      %s264 = sphi 0, %s248
    $region4: #{basic_block_forward.3} parent=1 // loop_header_branch
      %18 = sbr.rel (%p16) target = $region8
    $region5: #{basic_block_forward.3} parent=1 // loop_body
      %s20 = ssub.s32 %s15, 1
      %s21 = ssub.s32 %s15, 2
      %s22 = sadd.s32 %s15, 1
      %s24 = sadd.s32 %s23, 1
      %p27 = scmp.eq.s32.totalorder %s15, 1
      %p28 = scmp.ne.s32.totalorder %s23, %s25
      %p29 = scmp.eq.s32.totalorder %s15, 0
      %p30 = por %p28, %p29
      %p31 = scmp.ne.s32.totalorder %s23, %s25
      %p32 = scmp.eq.s32.totalorder %s20, 1
      %p33 = por %p31, %p32
      %p34 = scmp.ne.s32.totalorder %s25, %s26
      %p35 = scmp.eq.s32.totalorder %s20, 0
      %p36 = por %p34, %p35
      %p37 = scmp.ne.s32.totalorder %s25, %s26
      %p38 = scmp.eq.s32.totalorder %s21, 1
      %p39 = por %p37, %p38
      %p41 = scmp.ne.s32.totalorder %s26, %s40
      %p42 = scmp.eq.s32.totalorder %s21, 0
      %p43 = por %p41, %p42
      %s44 = ssub.s32 %s15, %s22
      %p45 = scmp.eq.s32.totalorder %s44, 0
      %s47 = sadd.s32 %s46, 1
      %s48 = scalar_select %p45, %s46, %s47
      %p51 = pneg %p45
      %p52 = scmp.eq.s32.totalorder %s15, 1
      %p53 = por %p51, %p52
      %p54 = scmp.ne.s32.totalorder %s46, %s49
      %p55 = scmp.eq.s32.totalorder %s15, 0
      %p56 = por %p54, %p55
      %p57 = scmp.ne.s32.totalorder %s46, %s49
      %p58 = scmp.eq.s32.totalorder %s20, 1
      %p59 = por %p57, %p58
      %p60 = scmp.ne.s32.totalorder %s49, %s50
      %p61 = scmp.eq.s32.totalorder %s20, 0
      %p62 = por %p60, %p61
      %p63 = scmp.ne.s32.totalorder %s49, %s50
      %p64 = scmp.eq.s32.totalorder %s21, 1
      %p65 = por %p63, %p64
      %p67 = scmp.ne.s32.totalorder %s50, %s66
      %p68 = scmp.eq.s32.totalorder %s21, 0
      %p69 = por %p67, %p68
      %s71 = sadd.s32 %s70, 1
      %p74 = scmp.eq.s32.totalorder %s15, 1
      %p75 = scmp.ne.s32.totalorder %s70, %s72
      %p76 = scmp.eq.s32.totalorder %s15, 0
      %p77 = por %p75, %p76
      %p78 = scmp.ne.s32.totalorder %s70, %s72
      %p79 = scmp.eq.s32.totalorder %s20, 1
      %p80 = por %p78, %p79
      %p81 = scmp.ne.s32.totalorder %s72, %s73
      %p82 = scmp.eq.s32.totalorder %s20, 0
      %p83 = por %p81, %p82
      %p84 = scmp.ne.s32.totalorder %s72, %s73
      %p85 = scmp.eq.s32.totalorder %s21, 1
      %p86 = por %p84, %p85
      %p88 = scmp.ne.s32.totalorder %s73, %s87
      %p89 = scmp.eq.s32.totalorder %s21, 0
      %p90 = por %p88, %p89
      %s91 = ssub.s32 %s15, %s22
      %p92 = scmp.eq.s32.totalorder %s91, 0
      %s94 = sadd.s32 %s93, 1
      %s95 = scalar_select %p92, %s93, %s94
      %p98 = pneg %p92
      %p99 = scmp.eq.s32.totalorder %s15, 1
      %p100 = por %p98, %p99
      %p101 = scmp.ne.s32.totalorder %s93, %s96
      %p102 = scmp.eq.s32.totalorder %s15, 0
      %p103 = por %p101, %p102
      %p104 = scmp.ne.s32.totalorder %s93, %s96
      %p105 = scmp.eq.s32.totalorder %s20, 1
      %p106 = por %p104, %p105
      %p107 = scmp.ne.s32.totalorder %s96, %s97
      %p108 = scmp.eq.s32.totalorder %s20, 0
      %p109 = por %p107, %p108
      %p110 = scmp.ne.s32.totalorder %s96, %s97
      %p111 = scmp.eq.s32.totalorder %s21, 1
      %p112 = por %p110, %p111
      %p114 = scmp.ne.s32.totalorder %s97, %s113
      %p115 = scmp.eq.s32.totalorder %s21, 0
      %p116 = por %p114, %p115
      %s117 = ssub.s32 %s15, %s22
      %p118 = scmp.eq.s32.totalorder %s117, 0
      %s120 = sadd.s32 %s119, 1
      %s121 = scalar_select %p118, %s119, %s120
      %p124 = pneg %p118
      %p125 = scmp.eq.s32.totalorder %s15, 1
      %p126 = por %p124, %p125
      %p127 = scmp.ne.s32.totalorder %s119, %s122
      %p128 = scmp.eq.s32.totalorder %s15, 0
      %p129 = por %p127, %p128
      %p130 = scmp.ne.s32.totalorder %s119, %s122
      %p131 = scmp.eq.s32.totalorder %s20, 1
      %p132 = por %p130, %p131
      %p133 = scmp.ne.s32.totalorder %s122, %s123
      %p134 = scmp.eq.s32.totalorder %s20, 0
      %p135 = por %p133, %p134
      %p136 = scmp.ne.s32.totalorder %s122, %s123
      %p137 = scmp.eq.s32.totalorder %s21, 1
      %p138 = por %p136, %p137
      %p140 = scmp.ne.s32.totalorder %s123, %s139
      %p141 = scmp.eq.s32.totalorder %s21, 0
      %p142 = por %p140, %p141
      %s144 = sadd.s32 %s143, 1
      %p147 = scmp.eq.s32.totalorder %s15, 1
      %p148 = scmp.ne.s32.totalorder %s143, %s145
      %p149 = scmp.eq.s32.totalorder %s15, 0
      %p150 = por %p148, %p149
      %p151 = scmp.ne.s32.totalorder %s143, %s145
      %p152 = scmp.eq.s32.totalorder %s20, 1
      %p153 = por %p151, %p152
      %p154 = scmp.ne.s32.totalorder %s145, %s146
      %p155 = scmp.eq.s32.totalorder %s20, 0
      %p156 = por %p154, %p155
      %p157 = scmp.ne.s32.totalorder %s145, %s146
      %p158 = scmp.eq.s32.totalorder %s21, 1
      %p159 = por %p157, %p158
      %p161 = scmp.ne.s32.totalorder %s146, %s160
      %p162 = scmp.eq.s32.totalorder %s21, 0
      %p163 = por %p161, %p162
      %s164 = ssub.s32 %s15, %s22
      %p165 = scmp.eq.s32.totalorder %s164, 0
      %s167 = sadd.s32 %s166, 1
      %s168 = scalar_select %p165, %s166, %s167
      %p171 = pneg %p165
      %p172 = scmp.eq.s32.totalorder %s15, 1
      %p173 = por %p171, %p172
      %p174 = scmp.ne.s32.totalorder %s166, %s169
      %p175 = scmp.eq.s32.totalorder %s15, 0
      %p176 = por %p174, %p175
      %p177 = scmp.ne.s32.totalorder %s166, %s169
      %p178 = scmp.eq.s32.totalorder %s20, 1
      %p179 = por %p177, %p178
      %p180 = scmp.ne.s32.totalorder %s169, %s170
      %p181 = scmp.eq.s32.totalorder %s20, 0
      %p182 = por %p180, %p181
      %p183 = scmp.ne.s32.totalorder %s169, %s170
      %p184 = scmp.eq.s32.totalorder %s21, 1
      %p185 = por %p183, %p184
      %p187 = scmp.ne.s32.totalorder %s170, %s186
      %p188 = scmp.eq.s32.totalorder %s21, 0
      %p189 = por %p187, %p188
      %s190 = ssub.s32 %s15, %s22
      %p191 = scmp.eq.s32.totalorder %s190, 0
      %s193 = sadd.s32 %s192, 1
      %s194 = scalar_select %p191, %s192, %s193
      %p197 = pneg %p191
      %p198 = scmp.eq.s32.totalorder %s15, 1
      %p199 = por %p197, %p198
      %p200 = scmp.ne.s32.totalorder %s192, %s195
      %p201 = scmp.eq.s32.totalorder %s15, 0
      %p202 = por %p200, %p201
      %p203 = scmp.ne.s32.totalorder %s192, %s195
      %p204 = scmp.eq.s32.totalorder %s20, 1
      %p205 = por %p203, %p204
      %p206 = scmp.ne.s32.totalorder %s195, %s196
      %p207 = scmp.eq.s32.totalorder %s20, 0
      %p208 = por %p206, %p207
      %p209 = scmp.ne.s32.totalorder %s195, %s196
      %p210 = scmp.eq.s32.totalorder %s21, 1
      %p211 = por %p209, %p210
      %p213 = scmp.ne.s32.totalorder %s196, %s212
      %p214 = scmp.eq.s32.totalorder %s21, 0
      %p215 = por %p213, %p214
      %s216 = ssub.s32 %s15, %s22
      %p217 = scmp.eq.s32.totalorder %s216, 0
      %s219 = sadd.s32 %s218, 1
      %s220 = scalar_select %p217, %s218, %s219
      %p223 = pneg %p217
      %p224 = scmp.eq.s32.totalorder %s15, 1
      %p225 = por %p223, %p224
      %p226 = scmp.ne.s32.totalorder %s218, %s221
      %p227 = scmp.eq.s32.totalorder %s15, 0
      %p228 = por %p226, %p227
      %p229 = scmp.ne.s32.totalorder %s218, %s221
      %p230 = scmp.eq.s32.totalorder %s20, 1
      %p231 = por %p229, %p230
      %p232 = scmp.ne.s32.totalorder %s221, %s222
      %p233 = scmp.eq.s32.totalorder %s20, 0
      %p234 = por %p232, %p233
      %p235 = scmp.ne.s32.totalorder %s221, %s222
      %p236 = scmp.eq.s32.totalorder %s21, 1
      %p237 = por %p235, %p236
      %p239 = scmp.ne.s32.totalorder %s222, %s238
      %p240 = scmp.eq.s32.totalorder %s21, 0
      %p241 = por %p239, %p240
      %s242 = ssub.s32 %s15, %s22
      %p243 = scmp.eq.s32.totalorder %s242, 0
      %s245 = sadd.s32 %s244, 1
      %s246 = scalar_select %p243, %s244, %s245
      %p249 = pneg %p243
      %p250 = scmp.eq.s32.totalorder %s15, 1
      %p251 = por %p249, %p250
      %p252 = scmp.ne.s32.totalorder %s244, %s247
      %p253 = scmp.eq.s32.totalorder %s15, 0
      %p254 = por %p252, %p253
      %p255 = scmp.ne.s32.totalorder %s244, %s247
      %p256 = scmp.eq.s32.totalorder %s20, 1
      %p257 = por %p255, %p256
      %p258 = scmp.ne.s32.totalorder %s247, %s248
      %p259 = scmp.eq.s32.totalorder %s20, 0
      %p260 = por %p258, %p259
      %p261 = scmp.ne.s32.totalorder %s247, %s248
      %p262 = scmp.eq.s32.totalorder %s21, 1
      %p263 = por %p261, %p262
      %p265 = scmp.ne.s32.totalorder %s248, %s264
      %p266 = scmp.eq.s32.totalorder %s21, 0
      %p267 = por %p265, %p266
      %p268 = scmp.le.s32.totalorder 1, %s15
      %p269 = scmp.lt.s32.totalorder %s15, 3
      %p270 = pnand %p268, %p269
      %p271 = pneg %p270
      // Predicated region
      $region9: #{basic_block_forward.3} parent=5 // pred_check
        _
      $region10: #{basic_block_forward.3} parent=5 // pred_check_branch
        %273 = sbr.rel (%p270) target = $region12
      $region11: #{basic_block_forward.3} parent=5 // pred_region
        %s274 = ssub.s32 %s15, 1
        // Predicated region
        $region13: #{basic_block_forward.3} parent=11 // pred_check
          %p275 = pneg %p36
        $region14: #{basic_block_forward.3} parent=11 // pred_check_branch
          %277 = sbr.rel (%p275) target = $region16
        $region15: #{basic_block_forward.3} parent=11 // pred_region
          _
        $region16: #{basic_block_forward.3} parent=11 // pred_fallthru
          _
        // Predicated region
        $region17: #{basic_block_forward.3} parent=11 // pred_check
          %p278 = pneg %p83
        $region18: #{basic_block_forward.3} parent=11 // pred_check_branch
          %280 = sbr.rel (%p278) target = $region20
        $region19: #{basic_block_forward.3} parent=11 // pred_region
          _
        $region20: #{basic_block_forward.3} parent=11 // pred_fallthru
          _
        // Predicated region
        $region21: #{basic_block_forward.3} parent=11 // pred_check
          %p281 = pneg %p156
        $region22: #{basic_block_forward.3} parent=11 // pred_check_branch
          %283 = sbr.rel (%p281) target = $region24
        $region23: #{basic_block_forward.3} parent=11 // pred_region
          _
        $region24: #{basic_block_forward.3} parent=11 // pred_fallthru
          _
      $region12: #{basic_block_forward.3} parent=5 // pred_fallthru
        _
      %p284 = scmp.lt.s32.totalorder %s15, 2
      // Predicated region
      $region25: #{basic_block_forward.3} parent=5 // pred_check
        %p285 = pneg %p284
      $region26: #{basic_block_forward.3} parent=5 // pred_check_branch
        %287 = sbr.rel (%p285) target = $region28
      $region27: #{basic_block_forward.3} parent=5 // pred_region
        // Predicated region
        $region29: #{basic_block_forward.3} parent=27 // pred_check
          %p288 = pneg %p56
        $region30: #{basic_block_forward.3} parent=27 // pred_check_branch
          %290 = sbr.rel (%p288) target = $region32
        $region31: #{basic_block_forward.3} parent=27 // pred_region
          %s291 = sand.u32 %s46, 1
          %s292 = sand.u32 %s46, 1
          %s293 = smul.addr %s292, 1152
          %s294 = scalar_lea.vmem [#allocation2], %s293
          %s295 = smul.addr %s15, 4
          %s296 = scalar_lea.vmem %s1, %s295
          // Predicated region
          $region33: #{basic_block_forward.3} parent=31 // pred_check
            _
          $region34: #{basic_block_forward.3} parent=31 // pred_check_branch
            %298 = sbr.rel (0) target = $region36
          $region35: #{basic_block_forward.3} parent=31 // pred_region
            // Predicated region
            $region37: #{basic_block_forward.3} parent=35 // pred_check
              _
            $region38: #{basic_block_forward.3} parent=35 // pred_check_branch
              %300 = sbr.rel target = $region40
            $region39: #{basic_block_forward.3} parent=35 // pred_region
              // Predicated region
              $region52: #{basic_block_forward.3} parent=39 // pred_check
                _
              $region53: #{basic_block_forward.3} parent=39 // pred_check_branch
                %890 = sbr.rel (0) target = $region55
              $region54: #{basic_block_forward.3} parent=39 // pred_region
                loop: start=0, step=1, limit=1
                $region56: #{basic_block_forward.3} parent=54 // loop_pre_header
                  _
                $region57: #{basic_block_forward.3} parent=54 // loop_header
                  %s892 = sphi 0, %s896
                  %p893 = scmp.ge.s32.totalorder %s892, 1
                  %s897 = sphi %s296, %s296
                  %s898 = sphi %s294, %s294
                $region58: #{basic_block_forward.3} parent=54 // loop_header_branch
                  %895 = sbr.rel (%p893) target = $region62
                $region59: #{basic_block_forward.3} parent=54 // loop_body
                  _
                $region60: #{basic_block_forward.3} parent=54 // loop_footer
                  %s896 = sadd.s32 1, %s892
                $region61: #{basic_block_forward.3} parent=54 // loop_footer_branch
                  %891 = sbr.rel target = $region57
                $region62: #{basic_block_forward.3} parent=54 // loop_exit
                  _
                %s900 = ssub.s32 16, 1
                loop: start=0, step=1, limit=1
                $region63: #{basic_block_forward.3} parent=54 // loop_pre_header
                  _
                $region64: #{basic_block_forward.3} parent=54 // loop_header
                  %s902 = sphi 0, %s906
                  %p903 = scmp.ge.s32.totalorder %s902, 1
                  %s907 = sphi %s296, %s296
                  %s908 = sphi %s294, %s294
                $region65: #{basic_block_forward.3} parent=54 // loop_header_branch
                  %905 = sbr.rel (%p903) target = $region69
                $region66: #{basic_block_forward.3} parent=54 // loop_body
                  %v909 = vld [vmem:[%s907] sm:%s900]
                  %910 = vst [vmem:[%s908] sm:%s900] %v909
                  %v911 = vld [vmem:[%s907 + $0x8] sm:%s900]
                  %912 = vst [vmem:[%s908 + $0x4] sm:%s900] %v911
                  %v913 = vld [vmem:[%s907 + $0x10] sm:%s900]
                  %914 = vst [vmem:[%s908 + $0x8] sm:%s900] %v913
                  %v915 = vld [vmem:[%s907 + $0x18] sm:%s900]
                  %916 = vst [vmem:[%s908 + $0xc] sm:%s900] %v915
                  %v917 = vld [vmem:[%s907 + $0x20] sm:%s900]
                  %918 = vst [vmem:[%s908 + $0x10] sm:%s900] %v917
                  %v919 = vld [vmem:[%s907 + $0x28] sm:%s900]
                  %920 = vst [vmem:[%s908 + $0x14] sm:%s900] %v919
                  %v921 = vld [vmem:[%s907 + $0x30] sm:%s900]
                  %922 = vst [vmem:[%s908 + $0x18] sm:%s900] %v921
                  %v923 = vld [vmem:[%s907 + $0x38] sm:%s900]
                  %924 = vst [vmem:[%s908 + $0x1c] sm:%s900] %v923
                  %v925 = vld [vmem:[%s907 + $0x40] sm:%s900]
                  %926 = vst [vmem:[%s908 + $0x20] sm:%s900] %v925
                  %v927 = vld [vmem:[%s907 + $0x48] sm:%s900]
                  %928 = vst [vmem:[%s908 + $0x24] sm:%s900] %v927
                  %v929 = vld [vmem:[%s907 + $0x50] sm:%s900]
                  %930 = vst [vmem:[%s908 + $0x28] sm:%s900] %v929
                  %v931 = vld [vmem:[%s907 + $0x58] sm:%s900]
                  %932 = vst [vmem:[%s908 + $0x2c] sm:%s900] %v931
                  %v933 = vld [vmem:[%s907 + $0x60] sm:%s900]
                  %934 = vst [vmem:[%s908 + $0x30] sm:%s900] %v933
                  %v935 = vld [vmem:[%s907 + $0x68] sm:%s900]
                  %936 = vst [vmem:[%s908 + $0x34] sm:%s900] %v935
                  %v937 = vld [vmem:[%s907 + $0x70] sm:%s900]
                  %938 = vst [vmem:[%s908 + $0x38] sm:%s900] %v937
                  %v939 = vld [vmem:[%s907 + $0x78] sm:%s900]
                  %940 = vst [vmem:[%s908 + $0x3c] sm:%s900] %v939
                  %v941 = vld [vmem:[%s907 + $0x80] sm:%s900]
                  %942 = vst [vmem:[%s908 + $0x40] sm:%s900] %v941
                  %v943 = vld [vmem:[%s907 + $0x88] sm:%s900]
                  %944 = vst [vmem:[%s908 + $0x44] sm:%s900] %v943
                  %v945 = vld [vmem:[%s907 + $0x90] sm:%s900]
                  %946 = vst [vmem:[%s908 + $0x48] sm:%s900] %v945
                  %v947 = vld [vmem:[%s907 + $0x98] sm:%s900]
                  %948 = vst [vmem:[%s908 + $0x4c] sm:%s900] %v947
                  %v949 = vld [vmem:[%s907 + $0xa0] sm:%s900]
                  %950 = vst [vmem:[%s908 + $0x50] sm:%s900] %v949
                  %v951 = vld [vmem:[%s907 + $0xa8] sm:%s900]
                  %952 = vst [vmem:[%s908 + $0x54] sm:%s900] %v951
                  %v953 = vld [vmem:[%s907 + $0xb0] sm:%s900]
                  %954 = vst [vmem:[%s908 + $0x58] sm:%s900] %v953
                  %v955 = vld [vmem:[%s907 + $0xb8] sm:%s900]
                  %956 = vst [vmem:[%s908 + $0x5c] sm:%s900] %v955
                  %v957 = vld [vmem:[%s907 + $0xc0] sm:%s900]
                  %958 = vst [vmem:[%s908 + $0x60] sm:%s900] %v957
                  %v959 = vld [vmem:[%s907 + $0xc8] sm:%s900]
                  %960 = vst [vmem:[%s908 + $0x64] sm:%s900] %v959
                  %v961 = vld [vmem:[%s907 + $0xd0] sm:%s900]
                  %962 = vst [vmem:[%s908 + $0x68] sm:%s900] %v961
                  %v963 = vld [vmem:[%s907 + $0xd8] sm:%s900]
                  %964 = vst [vmem:[%s908 + $0x6c] sm:%s900] %v963
                  %v965 = vld [vmem:[%s907 + $0xe0] sm:%s900]
                  %966 = vst [vmem:[%s908 + $0x70] sm:%s900] %v965
                  %v967 = vld [vmem:[%s907 + $0xe8] sm:%s900]
                  %968 = vst [vmem:[%s908 + $0x74] sm:%s900] %v967
                  %v969 = vld [vmem:[%s907 + $0xf0] sm:%s900]
                  %970 = vst [vmem:[%s908 + $0x78] sm:%s900] %v969
                  %v971 = vld [vmem:[%s907 + $0xf8] sm:%s900]
                  %972 = vst [vmem:[%s908 + $0x7c] sm:%s900] %v971
                  %v973 = vld [vmem:[%s907 + $0x100] sm:%s900]
                  %974 = vst [vmem:[%s908 + $0x80] sm:%s900] %v973
                  %v975 = vld [vmem:[%s907 + $0x108] sm:%s900]
                  %976 = vst [vmem:[%s908 + $0x84] sm:%s900] %v975
                  %v977 = vld [vmem:[%s907 + $0x110] sm:%s900]
                  %978 = vst [vmem:[%s908 + $0x88] sm:%s900] %v977
                  %v979 = vld [vmem:[%s907 + $0x118] sm:%s900]
                  %980 = vst [vmem:[%s908 + $0x8c] sm:%s900] %v979
                  %v981 = vld [vmem:[%s907 + $0x120] sm:%s900]
                  %982 = vst [vmem:[%s908 + $0x90] sm:%s900] %v981
                  %v983 = vld [vmem:[%s907 + $0x128] sm:%s900]
                  %984 = vst [vmem:[%s908 + $0x94] sm:%s900] %v983
                  %v985 = vld [vmem:[%s907 + $0x130] sm:%s900]
                  %986 = vst [vmem:[%s908 + $0x98] sm:%s900] %v985
                  %v987 = vld [vmem:[%s907 + $0x138] sm:%s900]
                  %988 = vst [vmem:[%s908 + $0x9c] sm:%s900] %v987
                  %v989 = vld [vmem:[%s907 + $0x140] sm:%s900]
                  %990 = vst [vmem:[%s908 + $0xa0] sm:%s900] %v989
                  %v991 = vld [vmem:[%s907 + $0x148] sm:%s900]
                  %992 = vst [vmem:[%s908 + $0xa4] sm:%s900] %v991
                  %v993 = vld [vmem:[%s907 + $0x150] sm:%s900]
                  %994 = vst [vmem:[%s908 + $0xa8] sm:%s900] %v993
                  %v995 = vld [vmem:[%s907 + $0x158] sm:%s900]
                  %996 = vst [vmem:[%s908 + $0xac] sm:%s900] %v995
                  %v997 = vld [vmem:[%s907 + $0x160] sm:%s900]
                  %998 = vst [vmem:[%s908 + $0xb0] sm:%s900] %v997
                  %v999 = vld [vmem:[%s907 + $0x168] sm:%s900]
                  %1000 = vst [vmem:[%s908 + $0xb4] sm:%s900] %v999
                  %v1001 = vld [vmem:[%s907 + $0x170] sm:%s900]
                  %1002 = vst [vmem:[%s908 + $0xb8] sm:%s900] %v1001
                  %v1003 = vld [vmem:[%s907 + $0x178] sm:%s900]
                  %1004 = vst [vmem:[%s908 + $0xbc] sm:%s900] %v1003
                  %v1005 = vld [vmem:[%s907 + $0x180] sm:%s900]
                  %1006 = vst [vmem:[%s908 + $0xc0] sm:%s900] %v1005
                  %v1007 = vld [vmem:[%s907 + $0x188] sm:%s900]
                  %1008 = vst [vmem:[%s908 + $0xc4] sm:%s900] %v1007
                  %v1009 = vld [vmem:[%s907 + $0x190] sm:%s900]
                  %1010 = vst [vmem:[%s908 + $0xc8] sm:%s900] %v1009
                  %v1011 = vld [vmem:[%s907 + $0x198] sm:%s900]
                  %1012 = vst [vmem:[%s908 + $0xcc] sm:%s900] %v1011
                  %v1013 = vld [vmem:[%s907 + $0x1a0] sm:%s900]
                  %1014 = vst [vmem:[%s908 + $0xd0] sm:%s900] %v1013
                  %v1015 = vld [vmem:[%s907 + $0x1a8] sm:%s900]
                  %1016 = vst [vmem:[%s908 + $0xd4] sm:%s900] %v1015
                  %v1017 = vld [vmem:[%s907 + $0x1b0] sm:%s900]
                  %1018 = vst [vmem:[%s908 + $0xd8] sm:%s900] %v1017
                  %v1019 = vld [vmem:[%s907 + $0x1b8] sm:%s900]
                  %1020 = vst [vmem:[%s908 + $0xdc] sm:%s900] %v1019
                  %v1021 = vld [vmem:[%s907 + $0x1c0] sm:%s900]
                  %1022 = vst [vmem:[%s908 + $0xe0] sm:%s900] %v1021
                  %v1023 = vld [vmem:[%s907 + $0x1c8] sm:%s900]
                  %1024 = vst [vmem:[%s908 + $0xe4] sm:%s900] %v1023
                  %v1025 = vld [vmem:[%s907 + $0x1d0] sm:%s900]
                  %1026 = vst [vmem:[%s908 + $0xe8] sm:%s900] %v1025
                  %v1027 = vld [vmem:[%s907 + $0x1d8] sm:%s900]
                  %1028 = vst [vmem:[%s908 + $0xec] sm:%s900] %v1027
                  %v1029 = vld [vmem:[%s907 + $0x1e0] sm:%s900]
                  %1030 = vst [vmem:[%s908 + $0xf0] sm:%s900] %v1029
                  %v1031 = vld [vmem:[%s907 + $0x1e8] sm:%s900]
                  %1032 = vst [vmem:[%s908 + $0xf4] sm:%s900] %v1031
                  %v1033 = vld [vmem:[%s907 + $0x1f0] sm:%s900]
                  %1034 = vst [vmem:[%s908 + $0xf8] sm:%s900] %v1033
                  %v1035 = vld [vmem:[%s907 + $0x1f8] sm:%s900]
                  %1036 = vst [vmem:[%s908 + $0xfc] sm:%s900] %v1035
                  %v1037 = vld [vmem:[%s907 + $0x200] sm:%s900]
                  %1038 = vst [vmem:[%s908 + $0x100] sm:%s900] %v1037
                  %v1039 = vld [vmem:[%s907 + $0x208] sm:%s900]
                  %1040 = vst [vmem:[%s908 + $0x104] sm:%s900] %v1039
                  %v1041 = vld [vmem:[%s907 + $0x210] sm:%s900]
                  %1042 = vst [vmem:[%s908 + $0x108] sm:%s900] %v1041
                  %v1043 = vld [vmem:[%s907 + $0x218] sm:%s900]
                  %1044 = vst [vmem:[%s908 + $0x10c] sm:%s900] %v1043
                  %v1045 = vld [vmem:[%s907 + $0x220] sm:%s900]
                  %1046 = vst [vmem:[%s908 + $0x110] sm:%s900] %v1045
                  %v1047 = vld [vmem:[%s907 + $0x228] sm:%s900]
                  %1048 = vst [vmem:[%s908 + $0x114] sm:%s900] %v1047
                  %v1049 = vld [vmem:[%s907 + $0x230] sm:%s900]
                  %1050 = vst [vmem:[%s908 + $0x118] sm:%s900] %v1049
                  %v1051 = vld [vmem:[%s907 + $0x238] sm:%s900]
                  %1052 = vst [vmem:[%s908 + $0x11c] sm:%s900] %v1051
                  %v1053 = vld [vmem:[%s907 + $0x240] sm:%s900]
                  %1054 = vst [vmem:[%s908 + $0x120] sm:%s900] %v1053
                  %v1055 = vld [vmem:[%s907 + $0x248] sm:%s900]
                  %1056 = vst [vmem:[%s908 + $0x124] sm:%s900] %v1055
                  %v1057 = vld [vmem:[%s907 + $0x250] sm:%s900]
                  %1058 = vst [vmem:[%s908 + $0x128] sm:%s900] %v1057
                  %v1059 = vld [vmem:[%s907 + $0x258] sm:%s900]
                  %1060 = vst [vmem:[%s908 + $0x12c] sm:%s900] %v1059
                  %v1061 = vld [vmem:[%s907 + $0x260] sm:%s900]
                  %1062 = vst [vmem:[%s908 + $0x130] sm:%s900] %v1061
                  %v1063 = vld [vmem:[%s907 + $0x268] sm:%s900]
                  %1064 = vst [vmem:[%s908 + $0x134] sm:%s900] %v1063
                  %v1065 = vld [vmem:[%s907 + $0x270] sm:%s900]
                  %1066 = vst [vmem:[%s908 + $0x138] sm:%s900] %v1065
                  %v1067 = vld [vmem:[%s907 + $0x278] sm:%s900]
                  %1068 = vst [vmem:[%s908 + $0x13c] sm:%s900] %v1067
                  %v1069 = vld [vmem:[%s907 + $0x280] sm:%s900]
                  %1070 = vst [vmem:[%s908 + $0x140] sm:%s900] %v1069
                  %v1071 = vld [vmem:[%s907 + $0x288] sm:%s900]
                  %1072 = vst [vmem:[%s908 + $0x144] sm:%s900] %v1071
                  %v1073 = vld [vmem:[%s907 + $0x290] sm:%s900]
                  %1074 = vst [vmem:[%s908 + $0x148] sm:%s900] %v1073
                  %v1075 = vld [vmem:[%s907 + $0x298] sm:%s900]
                  %1076 = vst [vmem:[%s908 + $0x14c] sm:%s900] %v1075
                  %v1077 = vld [vmem:[%s907 + $0x2a0] sm:%s900]
                  %1078 = vst [vmem:[%s908 + $0x150] sm:%s900] %v1077
                  %v1079 = vld [vmem:[%s907 + $0x2a8] sm:%s900]
                  %1080 = vst [vmem:[%s908 + $0x154] sm:%s900] %v1079
                  %v1081 = vld [vmem:[%s907 + $0x2b0] sm:%s900]
                  %1082 = vst [vmem:[%s908 + $0x158] sm:%s900] %v1081
                  %v1083 = vld [vmem:[%s907 + $0x2b8] sm:%s900]
                  %1084 = vst [vmem:[%s908 + $0x15c] sm:%s900] %v1083
                  %v1085 = vld [vmem:[%s907 + $0x2c0] sm:%s900]
                  %1086 = vst [vmem:[%s908 + $0x160] sm:%s900] %v1085
                  %v1087 = vld [vmem:[%s907 + $0x2c8] sm:%s900]
                  %1088 = vst [vmem:[%s908 + $0x164] sm:%s900] %v1087
                  %v1089 = vld [vmem:[%s907 + $0x2d0] sm:%s900]
                  %1090 = vst [vmem:[%s908 + $0x168] sm:%s900] %v1089
                  %v1091 = vld [vmem:[%s907 + $0x2d8] sm:%s900]
                  %1092 = vst [vmem:[%s908 + $0x16c] sm:%s900] %v1091
                  %v1093 = vld [vmem:[%s907 + $0x2e0] sm:%s900]
                  %1094 = vst [vmem:[%s908 + $0x170] sm:%s900] %v1093
                  %v1095 = vld [vmem:[%s907 + $0x2e8] sm:%s900]
                  %1096 = vst [vmem:[%s908 + $0x174] sm:%s900] %v1095
                  %v1097 = vld [vmem:[%s907 + $0x2f0] sm:%s900]
                  %1098 = vst [vmem:[%s908 + $0x178] sm:%s900] %v1097
                  %v1099 = vld [vmem:[%s907 + $0x2f8] sm:%s900]
                  %1100 = vst [vmem:[%s908 + $0x17c] sm:%s900] %v1099
                  %v1101 = vld [vmem:[%s907 + $0x300] sm:%s900]
                  %1102 = vst [vmem:[%s908 + $0x180] sm:%s900] %v1101
                  %v1103 = vld [vmem:[%s907 + $0x308] sm:%s900]
                  %1104 = vst [vmem:[%s908 + $0x184] sm:%s900] %v1103
                  %v1105 = vld [vmem:[%s907 + $0x310] sm:%s900]
                  %1106 = vst [vmem:[%s908 + $0x188] sm:%s900] %v1105
                  %v1107 = vld [vmem:[%s907 + $0x318] sm:%s900]
                  %1108 = vst [vmem:[%s908 + $0x18c] sm:%s900] %v1107
                  %v1109 = vld [vmem:[%s907 + $0x320] sm:%s900]
                  %1110 = vst [vmem:[%s908 + $0x190] sm:%s900] %v1109
                  %v1111 = vld [vmem:[%s907 + $0x328] sm:%s900]
                  %1112 = vst [vmem:[%s908 + $0x194] sm:%s900] %v1111
                  %v1113 = vld [vmem:[%s907 + $0x330] sm:%s900]
                  %1114 = vst [vmem:[%s908 + $0x198] sm:%s900] %v1113
                  %v1115 = vld [vmem:[%s907 + $0x338] sm:%s900]
                  %1116 = vst [vmem:[%s908 + $0x19c] sm:%s900] %v1115
                  %v1117 = vld [vmem:[%s907 + $0x340] sm:%s900]
                  %1118 = vst [vmem:[%s908 + $0x1a0] sm:%s900] %v1117
                  %v1119 = vld [vmem:[%s907 + $0x348] sm:%s900]
                  %1120 = vst [vmem:[%s908 + $0x1a4] sm:%s900] %v1119
                  %v1121 = vld [vmem:[%s907 + $0x350] sm:%s900]
                  %1122 = vst [vmem:[%s908 + $0x1a8] sm:%s900] %v1121
                  %v1123 = vld [vmem:[%s907 + $0x358] sm:%s900]
                  %1124 = vst [vmem:[%s908 + $0x1ac] sm:%s900] %v1123
                  %v1125 = vld [vmem:[%s907 + $0x360] sm:%s900]
                  %1126 = vst [vmem:[%s908 + $0x1b0] sm:%s900] %v1125
                  %v1127 = vld [vmem:[%s907 + $0x368] sm:%s900]
                  %1128 = vst [vmem:[%s908 + $0x1b4] sm:%s900] %v1127
                  %v1129 = vld [vmem:[%s907 + $0x370] sm:%s900]
                  %1130 = vst [vmem:[%s908 + $0x1b8] sm:%s900] %v1129
                  %v1131 = vld [vmem:[%s907 + $0x378] sm:%s900]
                  %1132 = vst [vmem:[%s908 + $0x1bc] sm:%s900] %v1131
                  %v1133 = vld [vmem:[%s907 + $0x380] sm:%s900]
                  %1134 = vst [vmem:[%s908 + $0x1c0] sm:%s900] %v1133
                  %v1135 = vld [vmem:[%s907 + $0x388] sm:%s900]
                  %1136 = vst [vmem:[%s908 + $0x1c4] sm:%s900] %v1135
                  %v1137 = vld [vmem:[%s907 + $0x390] sm:%s900]
                  %1138 = vst [vmem:[%s908 + $0x1c8] sm:%s900] %v1137
                  %v1139 = vld [vmem:[%s907 + $0x398] sm:%s900]
                  %1140 = vst [vmem:[%s908 + $0x1cc] sm:%s900] %v1139
                  %v1141 = vld [vmem:[%s907 + $0x3a0] sm:%s900]
                  %1142 = vst [vmem:[%s908 + $0x1d0] sm:%s900] %v1141
                  %v1143 = vld [vmem:[%s907 + $0x3a8] sm:%s900]
                  %1144 = vst [vmem:[%s908 + $0x1d4] sm:%s900] %v1143
                  %v1145 = vld [vmem:[%s907 + $0x3b0] sm:%s900]
                  %1146 = vst [vmem:[%s908 + $0x1d8] sm:%s900] %v1145
                  %v1147 = vld [vmem:[%s907 + $0x3b8] sm:%s900]
                  %1148 = vst [vmem:[%s908 + $0x1dc] sm:%s900] %v1147
                  %v1149 = vld [vmem:[%s907 + $0x3c0] sm:%s900]
                  %1150 = vst [vmem:[%s908 + $0x1e0] sm:%s900] %v1149
                  %v1151 = vld [vmem:[%s907 + $0x3c8] sm:%s900]
                  %1152 = vst [vmem:[%s908 + $0x1e4] sm:%s900] %v1151
                  %v1153 = vld [vmem:[%s907 + $0x3d0] sm:%s900]
                  %1154 = vst [vmem:[%s908 + $0x1e8] sm:%s900] %v1153
                  %v1155 = vld [vmem:[%s907 + $0x3d8] sm:%s900]
                  %1156 = vst [vmem:[%s908 + $0x1ec] sm:%s900] %v1155
                  %v1157 = vld [vmem:[%s907 + $0x3e0] sm:%s900]
                  %1158 = vst [vmem:[%s908 + $0x1f0] sm:%s900] %v1157
                  %v1159 = vld [vmem:[%s907 + $0x3e8] sm:%s900]
                  %1160 = vst [vmem:[%s908 + $0x1f4] sm:%s900] %v1159
                  %v1161 = vld [vmem:[%s907 + $0x3f0] sm:%s900]
                  %1162 = vst [vmem:[%s908 + $0x1f8] sm:%s900] %v1161
                  %v1163 = vld [vmem:[%s907 + $0x3f8] sm:%s900]
                  %1164 = vst [vmem:[%s908 + $0x1fc] sm:%s900] %v1163
                  %v1165 = vld [vmem:[%s907 + $0x400] sm:%s900]
                  %1166 = vst [vmem:[%s908 + $0x200] sm:%s900] %v1165
                  %v1167 = vld [vmem:[%s907 + $0x408] sm:%s900]
                  %1168 = vst [vmem:[%s908 + $0x204] sm:%s900] %v1167
                  %v1169 = vld [vmem:[%s907 + $0x410] sm:%s900]
                  %1170 = vst [vmem:[%s908 + $0x208] sm:%s900] %v1169
                  %v1171 = vld [vmem:[%s907 + $0x418] sm:%s900]
                  %1172 = vst [vmem:[%s908 + $0x20c] sm:%s900] %v1171
                  %v1173 = vld [vmem:[%s907 + $0x420] sm:%s900]
                  %1174 = vst [vmem:[%s908 + $0x210] sm:%s900] %v1173
                  %v1175 = vld [vmem:[%s907 + $0x428] sm:%s900]
                  %1176 = vst [vmem:[%s908 + $0x214] sm:%s900] %v1175
                  %v1177 = vld [vmem:[%s907 + $0x430] sm:%s900]
                  %1178 = vst [vmem:[%s908 + $0x218] sm:%s900] %v1177
                  %v1179 = vld [vmem:[%s907 + $0x438] sm:%s900]
                  %1180 = vst [vmem:[%s908 + $0x21c] sm:%s900] %v1179
                  %v1181 = vld [vmem:[%s907 + $0x440] sm:%s900]
                  %1182 = vst [vmem:[%s908 + $0x220] sm:%s900] %v1181
                  %v1183 = vld [vmem:[%s907 + $0x448] sm:%s900]
                  %1184 = vst [vmem:[%s908 + $0x224] sm:%s900] %v1183
                  %v1185 = vld [vmem:[%s907 + $0x450] sm:%s900]
                  %1186 = vst [vmem:[%s908 + $0x228] sm:%s900] %v1185
                  %v1187 = vld [vmem:[%s907 + $0x458] sm:%s900]
                  %1188 = vst [vmem:[%s908 + $0x22c] sm:%s900] %v1187
                  %v1189 = vld [vmem:[%s907 + $0x460] sm:%s900]
                  %1190 = vst [vmem:[%s908 + $0x230] sm:%s900] %v1189
                  %v1191 = vld [vmem:[%s907 + $0x468] sm:%s900]
                  %1192 = vst [vmem:[%s908 + $0x234] sm:%s900] %v1191
                  %v1193 = vld [vmem:[%s907 + $0x470] sm:%s900]
                  %1194 = vst [vmem:[%s908 + $0x238] sm:%s900] %v1193
                  %v1195 = vld [vmem:[%s907 + $0x478] sm:%s900]
                  %1196 = vst [vmem:[%s908 + $0x23c] sm:%s900] %v1195
                  %v1197 = vld [vmem:[%s907 + $0x480] sm:%s900]
                  %1198 = vst [vmem:[%s908 + $0x240] sm:%s900] %v1197
                  %v1199 = vld [vmem:[%s907 + $0x488] sm:%s900]
                  %1200 = vst [vmem:[%s908 + $0x244] sm:%s900] %v1199
                  %v1201 = vld [vmem:[%s907 + $0x490] sm:%s900]
                  %1202 = vst [vmem:[%s908 + $0x248] sm:%s900] %v1201
                  %v1203 = vld [vmem:[%s907 + $0x498] sm:%s900]
                  %1204 = vst [vmem:[%s908 + $0x24c] sm:%s900] %v1203
                  %v1205 = vld [vmem:[%s907 + $0x4a0] sm:%s900]
                  %1206 = vst [vmem:[%s908 + $0x250] sm:%s900] %v1205
                  %v1207 = vld [vmem:[%s907 + $0x4a8] sm:%s900]
                  %1208 = vst [vmem:[%s908 + $0x254] sm:%s900] %v1207
                  %v1209 = vld [vmem:[%s907 + $0x4b0] sm:%s900]
                  %1210 = vst [vmem:[%s908 + $0x258] sm:%s900] %v1209
                  %v1211 = vld [vmem:[%s907 + $0x4b8] sm:%s900]
                  %1212 = vst [vmem:[%s908 + $0x25c] sm:%s900] %v1211
                  %v1213 = vld [vmem:[%s907 + $0x4c0] sm:%s900]
                  %1214 = vst [vmem:[%s908 + $0x260] sm:%s900] %v1213
                  %v1215 = vld [vmem:[%s907 + $0x4c8] sm:%s900]
                  %1216 = vst [vmem:[%s908 + $0x264] sm:%s900] %v1215
                  %v1217 = vld [vmem:[%s907 + $0x4d0] sm:%s900]
                  %1218 = vst [vmem:[%s908 + $0x268] sm:%s900] %v1217
                  %v1219 = vld [vmem:[%s907 + $0x4d8] sm:%s900]
                  %1220 = vst [vmem:[%s908 + $0x26c] sm:%s900] %v1219
                  %v1221 = vld [vmem:[%s907 + $0x4e0] sm:%s900]
                  %1222 = vst [vmem:[%s908 + $0x270] sm:%s900] %v1221
                  %v1223 = vld [vmem:[%s907 + $0x4e8] sm:%s900]
                  %1224 = vst [vmem:[%s908 + $0x274] sm:%s900] %v1223
                  %v1225 = vld [vmem:[%s907 + $0x4f0] sm:%s900]
                  %1226 = vst [vmem:[%s908 + $0x278] sm:%s900] %v1225
                  %v1227 = vld [vmem:[%s907 + $0x4f8] sm:%s900]
                  %1228 = vst [vmem:[%s908 + $0x27c] sm:%s900] %v1227
                  %v1229 = vld [vmem:[%s907 + $0x500] sm:%s900]
                  %1230 = vst [vmem:[%s908 + $0x280] sm:%s900] %v1229
                  %v1231 = vld [vmem:[%s907 + $0x508] sm:%s900]
                  %1232 = vst [vmem:[%s908 + $0x284] sm:%s900] %v1231
                  %v1233 = vld [vmem:[%s907 + $0x510] sm:%s900]
                  %1234 = vst [vmem:[%s908 + $0x288] sm:%s900] %v1233
                  %v1235 = vld [vmem:[%s907 + $0x518] sm:%s900]
                  %1236 = vst [vmem:[%s908 + $0x28c] sm:%s900] %v1235
                  %v1237 = vld [vmem:[%s907 + $0x520] sm:%s900]
                  %1238 = vst [vmem:[%s908 + $0x290] sm:%s900] %v1237
                  %v1239 = vld [vmem:[%s907 + $0x528] sm:%s900]
                  %1240 = vst [vmem:[%s908 + $0x294] sm:%s900] %v1239
                  %v1241 = vld [vmem:[%s907 + $0x530] sm:%s900]
                  %1242 = vst [vmem:[%s908 + $0x298] sm:%s900] %v1241
                  %v1243 = vld [vmem:[%s907 + $0x538] sm:%s900]
                  %1244 = vst [vmem:[%s908 + $0x29c] sm:%s900] %v1243
                  %v1245 = vld [vmem:[%s907 + $0x540] sm:%s900]
                  %1246 = vst [vmem:[%s908 + $0x2a0] sm:%s900] %v1245
                  %v1247 = vld [vmem:[%s907 + $0x548] sm:%s900]
                  %1248 = vst [vmem:[%s908 + $0x2a4] sm:%s900] %v1247
                  %v1249 = vld [vmem:[%s907 + $0x550] sm:%s900]
                  %1250 = vst [vmem:[%s908 + $0x2a8] sm:%s900] %v1249
                  %v1251 = vld [vmem:[%s907 + $0x558] sm:%s900]
                  %1252 = vst [vmem:[%s908 + $0x2ac] sm:%s900] %v1251
                  %v1253 = vld [vmem:[%s907 + $0x560] sm:%s900]
                  %1254 = vst [vmem:[%s908 + $0x2b0] sm:%s900] %v1253
                  %v1255 = vld [vmem:[%s907 + $0x568] sm:%s900]
                  %1256 = vst [vmem:[%s908 + $0x2b4] sm:%s900] %v1255
                  %v1257 = vld [vmem:[%s907 + $0x570] sm:%s900]
                  %1258 = vst [vmem:[%s908 + $0x2b8] sm:%s900] %v1257
                  %v1259 = vld [vmem:[%s907 + $0x578] sm:%s900]
                  %1260 = vst [vmem:[%s908 + $0x2bc] sm:%s900] %v1259
                  %v1261 = vld [vmem:[%s907 + $0x580] sm:%s900]
                  %1262 = vst [vmem:[%s908 + $0x2c0] sm:%s900] %v1261
                  %v1263 = vld [vmem:[%s907 + $0x588] sm:%s900]
                  %1264 = vst [vmem:[%s908 + $0x2c4] sm:%s900] %v1263
                  %v1265 = vld [vmem:[%s907 + $0x590] sm:%s900]
                  %1266 = vst [vmem:[%s908 + $0x2c8] sm:%s900] %v1265
                  %v1267 = vld [vmem:[%s907 + $0x598] sm:%s900]
                  %1268 = vst [vmem:[%s908 + $0x2cc] sm:%s900] %v1267
                  %v1269 = vld [vmem:[%s907 + $0x5a0] sm:%s900]
                  %1270 = vst [vmem:[%s908 + $0x2d0] sm:%s900] %v1269
                  %v1271 = vld [vmem:[%s907 + $0x5a8] sm:%s900]
                  %1272 = vst [vmem:[%s908 + $0x2d4] sm:%s900] %v1271
                  %v1273 = vld [vmem:[%s907 + $0x5b0] sm:%s900]
                  %1274 = vst [vmem:[%s908 + $0x2d8] sm:%s900] %v1273
                  %v1275 = vld [vmem:[%s907 + $0x5b8] sm:%s900]
                  %1276 = vst [vmem:[%s908 + $0x2dc] sm:%s900] %v1275
                  %v1277 = vld [vmem:[%s907 + $0x5c0] sm:%s900]
                  %1278 = vst [vmem:[%s908 + $0x2e0] sm:%s900] %v1277
                  %v1279 = vld [vmem:[%s907 + $0x5c8] sm:%s900]
                  %1280 = vst [vmem:[%s908 + $0x2e4] sm:%s900] %v1279
                  %v1281 = vld [vmem:[%s907 + $0x5d0] sm:%s900]
                  %1282 = vst [vmem:[%s908 + $0x2e8] sm:%s900] %v1281
                  %v1283 = vld [vmem:[%s907 + $0x5d8] sm:%s900]
                  %1284 = vst [vmem:[%s908 + $0x2ec] sm:%s900] %v1283
                  %v1285 = vld [vmem:[%s907 + $0x5e0] sm:%s900]
                  %1286 = vst [vmem:[%s908 + $0x2f0] sm:%s900] %v1285
                  %v1287 = vld [vmem:[%s907 + $0x5e8] sm:%s900]
                  %1288 = vst [vmem:[%s908 + $0x2f4] sm:%s900] %v1287
                  %v1289 = vld [vmem:[%s907 + $0x5f0] sm:%s900]
                  %1290 = vst [vmem:[%s908 + $0x2f8] sm:%s900] %v1289
                  %v1291 = vld [vmem:[%s907 + $0x5f8] sm:%s900]
                  %1292 = vst [vmem:[%s908 + $0x2fc] sm:%s900] %v1291
                  %v1293 = vld [vmem:[%s907 + $0x600] sm:%s900]
                  %1294 = vst [vmem:[%s908 + $0x300] sm:%s900] %v1293
                  %v1295 = vld [vmem:[%s907 + $0x608] sm:%s900]
                  %1296 = vst [vmem:[%s908 + $0x304] sm:%s900] %v1295
                  %v1297 = vld [vmem:[%s907 + $0x610] sm:%s900]
                  %1298 = vst [vmem:[%s908 + $0x308] sm:%s900] %v1297
                  %v1299 = vld [vmem:[%s907 + $0x618] sm:%s900]
                  %1300 = vst [vmem:[%s908 + $0x30c] sm:%s900] %v1299
                  %v1301 = vld [vmem:[%s907 + $0x620] sm:%s900]
                  %1302 = vst [vmem:[%s908 + $0x310] sm:%s900] %v1301
                  %v1303 = vld [vmem:[%s907 + $0x628] sm:%s900]
                  %1304 = vst [vmem:[%s908 + $0x314] sm:%s900] %v1303
                  %v1305 = vld [vmem:[%s907 + $0x630] sm:%s900]
                  %1306 = vst [vmem:[%s908 + $0x318] sm:%s900] %v1305
                  %v1307 = vld [vmem:[%s907 + $0x638] sm:%s900]
                  %1308 = vst [vmem:[%s908 + $0x31c] sm:%s900] %v1307
                  %v1309 = vld [vmem:[%s907 + $0x640] sm:%s900]
                  %1310 = vst [vmem:[%s908 + $0x320] sm:%s900] %v1309
                  %v1311 = vld [vmem:[%s907 + $0x648] sm:%s900]
                  %1312 = vst [vmem:[%s908 + $0x324] sm:%s900] %v1311
                  %v1313 = vld [vmem:[%s907 + $0x650] sm:%s900]
                  %1314 = vst [vmem:[%s908 + $0x328] sm:%s900] %v1313
                  %v1315 = vld [vmem:[%s907 + $0x658] sm:%s900]
                  %1316 = vst [vmem:[%s908 + $0x32c] sm:%s900] %v1315
                  %v1317 = vld [vmem:[%s907 + $0x660] sm:%s900]
                  %1318 = vst [vmem:[%s908 + $0x330] sm:%s900] %v1317
                  %v1319 = vld [vmem:[%s907 + $0x668] sm:%s900]
                  %1320 = vst [vmem:[%s908 + $0x334] sm:%s900] %v1319
                  %v1321 = vld [vmem:[%s907 + $0x670] sm:%s900]
                  %1322 = vst [vmem:[%s908 + $0x338] sm:%s900] %v1321
                  %v1323 = vld [vmem:[%s907 + $0x678] sm:%s900]
                  %1324 = vst [vmem:[%s908 + $0x33c] sm:%s900] %v1323
                  %v1325 = vld [vmem:[%s907 + $0x680] sm:%s900]
                  %1326 = vst [vmem:[%s908 + $0x340] sm:%s900] %v1325
                  %v1327 = vld [vmem:[%s907 + $0x688] sm:%s900]
                  %1328 = vst [vmem:[%s908 + $0x344] sm:%s900] %v1327
                  %v1329 = vld [vmem:[%s907 + $0x690] sm:%s900]
                  %1330 = vst [vmem:[%s908 + $0x348] sm:%s900] %v1329
                  %v1331 = vld [vmem:[%s907 + $0x698] sm:%s900]
                  %1332 = vst [vmem:[%s908 + $0x34c] sm:%s900] %v1331
                  %v1333 = vld [vmem:[%s907 + $0x6a0] sm:%s900]
                  %1334 = vst [vmem:[%s908 + $0x350] sm:%s900] %v1333
                  %v1335 = vld [vmem:[%s907 + $0x6a8] sm:%s900]
                  %1336 = vst [vmem:[%s908 + $0x354] sm:%s900] %v1335
                  %v1337 = vld [vmem:[%s907 + $0x6b0] sm:%s900]
                  %1338 = vst [vmem:[%s908 + $0x358] sm:%s900] %v1337
                  %v1339 = vld [vmem:[%s907 + $0x6b8] sm:%s900]
                  %1340 = vst [vmem:[%s908 + $0x35c] sm:%s900] %v1339
                  %v1341 = vld [vmem:[%s907 + $0x6c0] sm:%s900]
                  %1342 = vst [vmem:[%s908 + $0x360] sm:%s900] %v1341
                  %v1343 = vld [vmem:[%s907 + $0x6c8] sm:%s900]
                  %1344 = vst [vmem:[%s908 + $0x364] sm:%s900] %v1343
                  %v1345 = vld [vmem:[%s907 + $0x6d0] sm:%s900]
                  %1346 = vst [vmem:[%s908 + $0x368] sm:%s900] %v1345
                  %v1347 = vld [vmem:[%s907 + $0x6d8] sm:%s900]
                  %1348 = vst [vmem:[%s908 + $0x36c] sm:%s900] %v1347
                  %v1349 = vld [vmem:[%s907 + $0x6e0] sm:%s900]
                  %1350 = vst [vmem:[%s908 + $0x370] sm:%s900] %v1349
                  %v1351 = vld [vmem:[%s907 + $0x6e8] sm:%s900]
                  %1352 = vst [vmem:[%s908 + $0x374] sm:%s900] %v1351
                  %v1353 = vld [vmem:[%s907 + $0x6f0] sm:%s900]
                  %1354 = vst [vmem:[%s908 + $0x378] sm:%s900] %v1353
                  %v1355 = vld [vmem:[%s907 + $0x6f8] sm:%s900]
                  %1356 = vst [vmem:[%s908 + $0x37c] sm:%s900] %v1355
                  %v1357 = vld [vmem:[%s907 + $0x700] sm:%s900]
                  %1358 = vst [vmem:[%s908 + $0x380] sm:%s900] %v1357
                  %v1359 = vld [vmem:[%s907 + $0x708] sm:%s900]
                  %1360 = vst [vmem:[%s908 + $0x384] sm:%s900] %v1359
                  %v1361 = vld [vmem:[%s907 + $0x710] sm:%s900]
                  %1362 = vst [vmem:[%s908 + $0x388] sm:%s900] %v1361
                  %v1363 = vld [vmem:[%s907 + $0x718] sm:%s900]
                  %1364 = vst [vmem:[%s908 + $0x38c] sm:%s900] %v1363
                  %v1365 = vld [vmem:[%s907 + $0x720] sm:%s900]
                  %1366 = vst [vmem:[%s908 + $0x390] sm:%s900] %v1365
                  %v1367 = vld [vmem:[%s907 + $0x728] sm:%s900]
                  %1368 = vst [vmem:[%s908 + $0x394] sm:%s900] %v1367
                  %v1369 = vld [vmem:[%s907 + $0x730] sm:%s900]
                  %1370 = vst [vmem:[%s908 + $0x398] sm:%s900] %v1369
                  %v1371 = vld [vmem:[%s907 + $0x738] sm:%s900]
                  %1372 = vst [vmem:[%s908 + $0x39c] sm:%s900] %v1371
                  %v1373 = vld [vmem:[%s907 + $0x740] sm:%s900]
                  %1374 = vst [vmem:[%s908 + $0x3a0] sm:%s900] %v1373
                  %v1375 = vld [vmem:[%s907 + $0x748] sm:%s900]
                  %1376 = vst [vmem:[%s908 + $0x3a4] sm:%s900] %v1375
                  %v1377 = vld [vmem:[%s907 + $0x750] sm:%s900]
                  %1378 = vst [vmem:[%s908 + $0x3a8] sm:%s900] %v1377
                  %v1379 = vld [vmem:[%s907 + $0x758] sm:%s900]
                  %1380 = vst [vmem:[%s908 + $0x3ac] sm:%s900] %v1379
                  %v1381 = vld [vmem:[%s907 + $0x760] sm:%s900]
                  %1382 = vst [vmem:[%s908 + $0x3b0] sm:%s900] %v1381
                  %v1383 = vld [vmem:[%s907 + $0x768] sm:%s900]
                  %1384 = vst [vmem:[%s908 + $0x3b4] sm:%s900] %v1383
                  %v1385 = vld [vmem:[%s907 + $0x770] sm:%s900]
                  %1386 = vst [vmem:[%s908 + $0x3b8] sm:%s900] %v1385
                  %v1387 = vld [vmem:[%s907 + $0x778] sm:%s900]
                  %1388 = vst [vmem:[%s908 + $0x3bc] sm:%s900] %v1387
                  %v1389 = vld [vmem:[%s907 + $0x780] sm:%s900]
                  %1390 = vst [vmem:[%s908 + $0x3c0] sm:%s900] %v1389
                  %v1391 = vld [vmem:[%s907 + $0x788] sm:%s900]
                  %1392 = vst [vmem:[%s908 + $0x3c4] sm:%s900] %v1391
                  %v1393 = vld [vmem:[%s907 + $0x790] sm:%s900]
                  %1394 = vst [vmem:[%s908 + $0x3c8] sm:%s900] %v1393
                  %v1395 = vld [vmem:[%s907 + $0x798] sm:%s900]
                  %1396 = vst [vmem:[%s908 + $0x3cc] sm:%s900] %v1395
                  %v1397 = vld [vmem:[%s907 + $0x7a0] sm:%s900]
                  %1398 = vst [vmem:[%s908 + $0x3d0] sm:%s900] %v1397
                  %v1399 = vld [vmem:[%s907 + $0x7a8] sm:%s900]
                  %1400 = vst [vmem:[%s908 + $0x3d4] sm:%s900] %v1399
                  %v1401 = vld [vmem:[%s907 + $0x7b0] sm:%s900]
                  %1402 = vst [vmem:[%s908 + $0x3d8] sm:%s900] %v1401
                  %v1403 = vld [vmem:[%s907 + $0x7b8] sm:%s900]
                  %1404 = vst [vmem:[%s908 + $0x3dc] sm:%s900] %v1403
                  %v1405 = vld [vmem:[%s907 + $0x7c0] sm:%s900]
                  %1406 = vst [vmem:[%s908 + $0x3e0] sm:%s900] %v1405
                  %v1407 = vld [vmem:[%s907 + $0x7c8] sm:%s900]
                  %1408 = vst [vmem:[%s908 + $0x3e4] sm:%s900] %v1407
                  %v1409 = vld [vmem:[%s907 + $0x7d0] sm:%s900]
                  %1410 = vst [vmem:[%s908 + $0x3e8] sm:%s900] %v1409
                  %v1411 = vld [vmem:[%s907 + $0x7d8] sm:%s900]
                  %1412 = vst [vmem:[%s908 + $0x3ec] sm:%s900] %v1411
                  %v1413 = vld [vmem:[%s907 + $0x7e0] sm:%s900]
                  %1414 = vst [vmem:[%s908 + $0x3f0] sm:%s900] %v1413
                  %v1415 = vld [vmem:[%s907 + $0x7e8] sm:%s900]
                  %1416 = vst [vmem:[%s908 + $0x3f4] sm:%s900] %v1415
                  %v1417 = vld [vmem:[%s907 + $0x7f0] sm:%s900]
                  %1418 = vst [vmem:[%s908 + $0x3f8] sm:%s900] %v1417
                  %v1419 = vld [vmem:[%s907 + $0x7f8] sm:%s900]
                  %1420 = vst [vmem:[%s908 + $0x3fc] sm:%s900] %v1419
                  %v1421 = vld [vmem:[%s907 + $0x800] sm:%s900]
                  %1422 = vst [vmem:[%s908 + $0x400] sm:%s900] %v1421
                  %v1423 = vld [vmem:[%s907 + $0x808] sm:%s900]
                  %1424 = vst [vmem:[%s908 + $0x404] sm:%s900] %v1423
                  %v1425 = vld [vmem:[%s907 + $0x810] sm:%s900]
                  %1426 = vst [vmem:[%s908 + $0x408] sm:%s900] %v1425
                  %v1427 = vld [vmem:[%s907 + $0x818] sm:%s900]
                  %1428 = vst [vmem:[%s908 + $0x40c] sm:%s900] %v1427
                  %v1429 = vld [vmem:[%s907 + $0x820] sm:%s900]
                  %1430 = vst [vmem:[%s908 + $0x410] sm:%s900] %v1429
                  %v1431 = vld [vmem:[%s907 + $0x828] sm:%s900]
                  %1432 = vst [vmem:[%s908 + $0x414] sm:%s900] %v1431
                  %v1433 = vld [vmem:[%s907 + $0x830] sm:%s900]
                  %1434 = vst [vmem:[%s908 + $0x418] sm:%s900] %v1433
                  %v1435 = vld [vmem:[%s907 + $0x838] sm:%s900]
                  %1436 = vst [vmem:[%s908 + $0x41c] sm:%s900] %v1435
                  %v1437 = vld [vmem:[%s907 + $0x840] sm:%s900]
                  %1438 = vst [vmem:[%s908 + $0x420] sm:%s900] %v1437
                  %v1439 = vld [vmem:[%s907 + $0x848] sm:%s900]
                  %1440 = vst [vmem:[%s908 + $0x424] sm:%s900] %v1439
                  %v1441 = vld [vmem:[%s907 + $0x850] sm:%s900]
                  %1442 = vst [vmem:[%s908 + $0x428] sm:%s900] %v1441
                  %v1443 = vld [vmem:[%s907 + $0x858] sm:%s900]
                  %1444 = vst [vmem:[%s908 + $0x42c] sm:%s900] %v1443
                  %v1445 = vld [vmem:[%s907 + $0x860] sm:%s900]
                  %1446 = vst [vmem:[%s908 + $0x430] sm:%s900] %v1445
                  %v1447 = vld [vmem:[%s907 + $0x868] sm:%s900]
                  %1448 = vst [vmem:[%s908 + $0x434] sm:%s900] %v1447
                  %v1449 = vld [vmem:[%s907 + $0x870] sm:%s900]
                  %1450 = vst [vmem:[%s908 + $0x438] sm:%s900] %v1449
                  %v1451 = vld [vmem:[%s907 + $0x878] sm:%s900]
                  %1452 = vst [vmem:[%s908 + $0x43c] sm:%s900] %v1451
                  %v1453 = vld [vmem:[%s907 + $0x880] sm:%s900]
                  %1454 = vst [vmem:[%s908 + $0x440] sm:%s900] %v1453
                  %v1455 = vld [vmem:[%s907 + $0x888] sm:%s900]
                  %1456 = vst [vmem:[%s908 + $0x444] sm:%s900] %v1455
                  %v1457 = vld [vmem:[%s907 + $0x890] sm:%s900]
                  %1458 = vst [vmem:[%s908 + $0x448] sm:%s900] %v1457
                  %v1459 = vld [vmem:[%s907 + $0x898] sm:%s900]
                  %1460 = vst [vmem:[%s908 + $0x44c] sm:%s900] %v1459
                  %v1461 = vld [vmem:[%s907 + $0x8a0] sm:%s900]
                  %1462 = vst [vmem:[%s908 + $0x450] sm:%s900] %v1461
                  %v1463 = vld [vmem:[%s907 + $0x8a8] sm:%s900]
                  %1464 = vst [vmem:[%s908 + $0x454] sm:%s900] %v1463
                  %v1465 = vld [vmem:[%s907 + $0x8b0] sm:%s900]
                  %1466 = vst [vmem:[%s908 + $0x458] sm:%s900] %v1465
                  %v1467 = vld [vmem:[%s907 + $0x8b8] sm:%s900]
                  %1468 = vst [vmem:[%s908 + $0x45c] sm:%s900] %v1467
                  %v1469 = vld [vmem:[%s907 + $0x8c0] sm:%s900]
                  %1470 = vst [vmem:[%s908 + $0x460] sm:%s900] %v1469
                  %v1471 = vld [vmem:[%s907 + $0x8c8] sm:%s900]
                  %1472 = vst [vmem:[%s908 + $0x464] sm:%s900] %v1471
                  %v1473 = vld [vmem:[%s907 + $0x8d0] sm:%s900]
                  %1474 = vst [vmem:[%s908 + $0x468] sm:%s900] %v1473
                  %v1475 = vld [vmem:[%s907 + $0x8d8] sm:%s900]
                  %1476 = vst [vmem:[%s908 + $0x46c] sm:%s900] %v1475
                  %v1477 = vld [vmem:[%s907 + $0x8e0] sm:%s900]
                  %1478 = vst [vmem:[%s908 + $0x470] sm:%s900] %v1477
                  %v1479 = vld [vmem:[%s907 + $0x8e8] sm:%s900]
                  %1480 = vst [vmem:[%s908 + $0x474] sm:%s900] %v1479
                  %v1481 = vld [vmem:[%s907 + $0x8f0] sm:%s900]
                  %1482 = vst [vmem:[%s908 + $0x478] sm:%s900] %v1481
                  %v1483 = vld [vmem:[%s907 + $0x8f8] sm:%s900]
                  %1484 = vst [vmem:[%s908 + $0x47c] sm:%s900] %v1483
                $region67: #{basic_block_forward.3} parent=54 // loop_footer
                  %s906 = sadd.s32 1, %s902
                $region68: #{basic_block_forward.3} parent=54 // loop_footer_branch
                  %901 = sbr.rel target = $region64
                $region69: #{basic_block_forward.3} parent=54 // loop_exit
                  _
              $region55: #{basic_block_forward.3} parent=39 // pred_fallthru
                _
            $region40: #{basic_block_forward.3} parent=35 // pred_fallthru
              _
            // Predicated region
            $region41: #{basic_block_forward.3} parent=35 // pred_check
              _
            $region42: #{basic_block_forward.3} parent=35 // pred_check_branch
              %302 = sbr.rel (0) target = $region44
            $region43: #{basic_block_forward.3} parent=35 // pred_region
              %s304 = ssub.s32 16, 1
              loop: start=0, step=1, limit=1
              $region45: #{basic_block_forward.3} parent=43 // loop_pre_header
                _
              $region46: #{basic_block_forward.3} parent=43 // loop_header
                %s306 = sphi 0, %s310
                %p307 = scmp.ge.s32.totalorder %s306, 1
                %s311 = sphi %s296, %s296
                %s312 = sphi %s294, %s294
              $region47: #{basic_block_forward.3} parent=43 // loop_header_branch
                %309 = sbr.rel (%p307) target = $region51
              $region48: #{basic_block_forward.3} parent=43 // loop_body
                %v313 = vld [vmem:[%s311] sm:%s304]
                %314 = vst [vmem:[%s312] sm:%s304] %v313
                %v315 = vld [vmem:[%s311 + $0x8] sm:%s304]
                %316 = vst [vmem:[%s312 + $0x4] sm:%s304] %v315
                %v317 = vld [vmem:[%s311 + $0x10] sm:%s304]
                %318 = vst [vmem:[%s312 + $0x8] sm:%s304] %v317
                %v319 = vld [vmem:[%s311 + $0x18] sm:%s304]
                %320 = vst [vmem:[%s312 + $0xc] sm:%s304] %v319
                %v321 = vld [vmem:[%s311 + $0x20] sm:%s304]
                %322 = vst [vmem:[%s312 + $0x10] sm:%s304] %v321
                %v323 = vld [vmem:[%s311 + $0x28] sm:%s304]
                %324 = vst [vmem:[%s312 + $0x14] sm:%s304] %v323
                %v325 = vld [vmem:[%s311 + $0x30] sm:%s304]
                %326 = vst [vmem:[%s312 + $0x18] sm:%s304] %v325
                %v327 = vld [vmem:[%s311 + $0x38] sm:%s304]
                %328 = vst [vmem:[%s312 + $0x1c] sm:%s304] %v327
                %v329 = vld [vmem:[%s311 + $0x40] sm:%s304]
                %330 = vst [vmem:[%s312 + $0x20] sm:%s304] %v329
                %v331 = vld [vmem:[%s311 + $0x48] sm:%s304]
                %332 = vst [vmem:[%s312 + $0x24] sm:%s304] %v331
                %v333 = vld [vmem:[%s311 + $0x50] sm:%s304]
                %334 = vst [vmem:[%s312 + $0x28] sm:%s304] %v333
                %v335 = vld [vmem:[%s311 + $0x58] sm:%s304]
                %336 = vst [vmem:[%s312 + $0x2c] sm:%s304] %v335
                %v337 = vld [vmem:[%s311 + $0x60] sm:%s304]
                %338 = vst [vmem:[%s312 + $0x30] sm:%s304] %v337
                %v339 = vld [vmem:[%s311 + $0x68] sm:%s304]
                %340 = vst [vmem:[%s312 + $0x34] sm:%s304] %v339
                %v341 = vld [vmem:[%s311 + $0x70] sm:%s304]
                %342 = vst [vmem:[%s312 + $0x38] sm:%s304] %v341
                %v343 = vld [vmem:[%s311 + $0x78] sm:%s304]
                %344 = vst [vmem:[%s312 + $0x3c] sm:%s304] %v343
                %v345 = vld [vmem:[%s311 + $0x80] sm:%s304]
                %346 = vst [vmem:[%s312 + $0x40] sm:%s304] %v345
                %v347 = vld [vmem:[%s311 + $0x88] sm:%s304]
                %348 = vst [vmem:[%s312 + $0x44] sm:%s304] %v347
                %v349 = vld [vmem:[%s311 + $0x90] sm:%s304]
                %350 = vst [vmem:[%s312 + $0x48] sm:%s304] %v349
                %v351 = vld [vmem:[%s311 + $0x98] sm:%s304]
                %352 = vst [vmem:[%s312 + $0x4c] sm:%s304] %v351
                %v353 = vld [vmem:[%s311 + $0xa0] sm:%s304]
                %354 = vst [vmem:[%s312 + $0x50] sm:%s304] %v353
                %v355 = vld [vmem:[%s311 + $0xa8] sm:%s304]
                %356 = vst [vmem:[%s312 + $0x54] sm:%s304] %v355
                %v357 = vld [vmem:[%s311 + $0xb0] sm:%s304]
                %358 = vst [vmem:[%s312 + $0x58] sm:%s304] %v357
                %v359 = vld [vmem:[%s311 + $0xb8] sm:%s304]
                %360 = vst [vmem:[%s312 + $0x5c] sm:%s304] %v359
                %v361 = vld [vmem:[%s311 + $0xc0] sm:%s304]
                %362 = vst [vmem:[%s312 + $0x60] sm:%s304] %v361
                %v363 = vld [vmem:[%s311 + $0xc8] sm:%s304]
                %364 = vst [vmem:[%s312 + $0x64] sm:%s304] %v363
                %v365 = vld [vmem:[%s311 + $0xd0] sm:%s304]
                %366 = vst [vmem:[%s312 + $0x68] sm:%s304] %v365
                %v367 = vld [vmem:[%s311 + $0xd8] sm:%s304]
                %368 = vst [vmem:[%s312 + $0x6c] sm:%s304] %v367
                %v369 = vld [vmem:[%s311 + $0xe0] sm:%s304]
                %370 = vst [vmem:[%s312 + $0x70] sm:%s304] %v369
                %v371 = vld [vmem:[%s311 + $0xe8] sm:%s304]
                %372 = vst [vmem:[%s312 + $0x74] sm:%s304] %v371
                %v373 = vld [vmem:[%s311 + $0xf0] sm:%s304]
                %374 = vst [vmem:[%s312 + $0x78] sm:%s304] %v373
                %v375 = vld [vmem:[%s311 + $0xf8] sm:%s304]
                %376 = vst [vmem:[%s312 + $0x7c] sm:%s304] %v375
                %v377 = vld [vmem:[%s311 + $0x100] sm:%s304]
                %378 = vst [vmem:[%s312 + $0x80] sm:%s304] %v377
                %v379 = vld [vmem:[%s311 + $0x108] sm:%s304]
                %380 = vst [vmem:[%s312 + $0x84] sm:%s304] %v379
                %v381 = vld [vmem:[%s311 + $0x110] sm:%s304]
                %382 = vst [vmem:[%s312 + $0x88] sm:%s304] %v381
                %v383 = vld [vmem:[%s311 + $0x118] sm:%s304]
                %384 = vst [vmem:[%s312 + $0x8c] sm:%s304] %v383
                %v385 = vld [vmem:[%s311 + $0x120] sm:%s304]
                %386 = vst [vmem:[%s312 + $0x90] sm:%s304] %v385
                %v387 = vld [vmem:[%s311 + $0x128] sm:%s304]
                %388 = vst [vmem:[%s312 + $0x94] sm:%s304] %v387
                %v389 = vld [vmem:[%s311 + $0x130] sm:%s304]
                %390 = vst [vmem:[%s312 + $0x98] sm:%s304] %v389
                %v391 = vld [vmem:[%s311 + $0x138] sm:%s304]
                %392 = vst [vmem:[%s312 + $0x9c] sm:%s304] %v391
                %v393 = vld [vmem:[%s311 + $0x140] sm:%s304]
                %394 = vst [vmem:[%s312 + $0xa0] sm:%s304] %v393
                %v395 = vld [vmem:[%s311 + $0x148] sm:%s304]
                %396 = vst [vmem:[%s312 + $0xa4] sm:%s304] %v395
                %v397 = vld [vmem:[%s311 + $0x150] sm:%s304]
                %398 = vst [vmem:[%s312 + $0xa8] sm:%s304] %v397
                %v399 = vld [vmem:[%s311 + $0x158] sm:%s304]
                %400 = vst [vmem:[%s312 + $0xac] sm:%s304] %v399
                %v401 = vld [vmem:[%s311 + $0x160] sm:%s304]
                %402 = vst [vmem:[%s312 + $0xb0] sm:%s304] %v401
                %v403 = vld [vmem:[%s311 + $0x168] sm:%s304]
                %404 = vst [vmem:[%s312 + $0xb4] sm:%s304] %v403
                %v405 = vld [vmem:[%s311 + $0x170] sm:%s304]
                %406 = vst [vmem:[%s312 + $0xb8] sm:%s304] %v405
                %v407 = vld [vmem:[%s311 + $0x178] sm:%s304]
                %408 = vst [vmem:[%s312 + $0xbc] sm:%s304] %v407
                %v409 = vld [vmem:[%s311 + $0x180] sm:%s304]
                %410 = vst [vmem:[%s312 + $0xc0] sm:%s304] %v409
                %v411 = vld [vmem:[%s311 + $0x188] sm:%s304]
                %412 = vst [vmem:[%s312 + $0xc4] sm:%s304] %v411
                %v413 = vld [vmem:[%s311 + $0x190] sm:%s304]
                %414 = vst [vmem:[%s312 + $0xc8] sm:%s304] %v413
                %v415 = vld [vmem:[%s311 + $0x198] sm:%s304]
                %416 = vst [vmem:[%s312 + $0xcc] sm:%s304] %v415
                %v417 = vld [vmem:[%s311 + $0x1a0] sm:%s304]
                %418 = vst [vmem:[%s312 + $0xd0] sm:%s304] %v417
                %v419 = vld [vmem:[%s311 + $0x1a8] sm:%s304]
                %420 = vst [vmem:[%s312 + $0xd4] sm:%s304] %v419
                %v421 = vld [vmem:[%s311 + $0x1b0] sm:%s304]
                %422 = vst [vmem:[%s312 + $0xd8] sm:%s304] %v421
                %v423 = vld [vmem:[%s311 + $0x1b8] sm:%s304]
                %424 = vst [vmem:[%s312 + $0xdc] sm:%s304] %v423
                %v425 = vld [vmem:[%s311 + $0x1c0] sm:%s304]
                %426 = vst [vmem:[%s312 + $0xe0] sm:%s304] %v425
                %v427 = vld [vmem:[%s311 + $0x1c8] sm:%s304]
                %428 = vst [vmem:[%s312 + $0xe4] sm:%s304] %v427
                %v429 = vld [vmem:[%s311 + $0x1d0] sm:%s304]
                %430 = vst [vmem:[%s312 + $0xe8] sm:%s304] %v429
                %v431 = vld [vmem:[%s311 + $0x1d8] sm:%s304]
                %432 = vst [vmem:[%s312 + $0xec] sm:%s304] %v431
                %v433 = vld [vmem:[%s311 + $0x1e0] sm:%s304]
                %434 = vst [vmem:[%s312 + $0xf0] sm:%s304] %v433
                %v435 = vld [vmem:[%s311 + $0x1e8] sm:%s304]
                %436 = vst [vmem:[%s312 + $0xf4] sm:%s304] %v435
                %v437 = vld [vmem:[%s311 + $0x1f0] sm:%s304]
                %438 = vst [vmem:[%s312 + $0xf8] sm:%s304] %v437
                %v439 = vld [vmem:[%s311 + $0x1f8] sm:%s304]
                %440 = vst [vmem:[%s312 + $0xfc] sm:%s304] %v439
                %v441 = vld [vmem:[%s311 + $0x200] sm:%s304]
                %442 = vst [vmem:[%s312 + $0x100] sm:%s304] %v441
                %v443 = vld [vmem:[%s311 + $0x208] sm:%s304]
                %444 = vst [vmem:[%s312 + $0x104] sm:%s304] %v443
                %v445 = vld [vmem:[%s311 + $0x210] sm:%s304]
                %446 = vst [vmem:[%s312 + $0x108] sm:%s304] %v445
                %v447 = vld [vmem:[%s311 + $0x218] sm:%s304]
                %448 = vst [vmem:[%s312 + $0x10c] sm:%s304] %v447
                %v449 = vld [vmem:[%s311 + $0x220] sm:%s304]
                %450 = vst [vmem:[%s312 + $0x110] sm:%s304] %v449
                %v451 = vld [vmem:[%s311 + $0x228] sm:%s304]
                %452 = vst [vmem:[%s312 + $0x114] sm:%s304] %v451
                %v453 = vld [vmem:[%s311 + $0x230] sm:%s304]
                %454 = vst [vmem:[%s312 + $0x118] sm:%s304] %v453
                %v455 = vld [vmem:[%s311 + $0x238] sm:%s304]
                %456 = vst [vmem:[%s312 + $0x11c] sm:%s304] %v455
                %v457 = vld [vmem:[%s311 + $0x240] sm:%s304]
                %458 = vst [vmem:[%s312 + $0x120] sm:%s304] %v457
                %v459 = vld [vmem:[%s311 + $0x248] sm:%s304]
                %460 = vst [vmem:[%s312 + $0x124] sm:%s304] %v459
                %v461 = vld [vmem:[%s311 + $0x250] sm:%s304]
                %462 = vst [vmem:[%s312 + $0x128] sm:%s304] %v461
                %v463 = vld [vmem:[%s311 + $0x258] sm:%s304]
                %464 = vst [vmem:[%s312 + $0x12c] sm:%s304] %v463
                %v465 = vld [vmem:[%s311 + $0x260] sm:%s304]
                %466 = vst [vmem:[%s312 + $0x130] sm:%s304] %v465
                %v467 = vld [vmem:[%s311 + $0x268] sm:%s304]
                %468 = vst [vmem:[%s312 + $0x134] sm:%s304] %v467
                %v469 = vld [vmem:[%s311 + $0x270] sm:%s304]
                %470 = vst [vmem:[%s312 + $0x138] sm:%s304] %v469
                %v471 = vld [vmem:[%s311 + $0x278] sm:%s304]
                %472 = vst [vmem:[%s312 + $0x13c] sm:%s304] %v471
                %v473 = vld [vmem:[%s311 + $0x280] sm:%s304]
                %474 = vst [vmem:[%s312 + $0x140] sm:%s304] %v473
                %v475 = vld [vmem:[%s311 + $0x288] sm:%s304]
                %476 = vst [vmem:[%s312 + $0x144] sm:%s304] %v475
                %v477 = vld [vmem:[%s311 + $0x290] sm:%s304]
                %478 = vst [vmem:[%s312 + $0x148] sm:%s304] %v477
                %v479 = vld [vmem:[%s311 + $0x298] sm:%s304]
                %480 = vst [vmem:[%s312 + $0x14c] sm:%s304] %v479
                %v481 = vld [vmem:[%s311 + $0x2a0] sm:%s304]
                %482 = vst [vmem:[%s312 + $0x150] sm:%s304] %v481
                %v483 = vld [vmem:[%s311 + $0x2a8] sm:%s304]
                %484 = vst [vmem:[%s312 + $0x154] sm:%s304] %v483
                %v485 = vld [vmem:[%s311 + $0x2b0] sm:%s304]
                %486 = vst [vmem:[%s312 + $0x158] sm:%s304] %v485
                %v487 = vld [vmem:[%s311 + $0x2b8] sm:%s304]
                %488 = vst [vmem:[%s312 + $0x15c] sm:%s304] %v487
                %v489 = vld [vmem:[%s311 + $0x2c0] sm:%s304]
                %490 = vst [vmem:[%s312 + $0x160] sm:%s304] %v489
                %v491 = vld [vmem:[%s311 + $0x2c8] sm:%s304]
                %492 = vst [vmem:[%s312 + $0x164] sm:%s304] %v491
                %v493 = vld [vmem:[%s311 + $0x2d0] sm:%s304]
                %494 = vst [vmem:[%s312 + $0x168] sm:%s304] %v493
                %v495 = vld [vmem:[%s311 + $0x2d8] sm:%s304]
                %496 = vst [vmem:[%s312 + $0x16c] sm:%s304] %v495
                %v497 = vld [vmem:[%s311 + $0x2e0] sm:%s304]
                %498 = vst [vmem:[%s312 + $0x170] sm:%s304] %v497
                %v499 = vld [vmem:[%s311 + $0x2e8] sm:%s304]
                %500 = vst [vmem:[%s312 + $0x174] sm:%s304] %v499
                %v501 = vld [vmem:[%s311 + $0x2f0] sm:%s304]
                %502 = vst [vmem:[%s312 + $0x178] sm:%s304] %v501
                %v503 = vld [vmem:[%s311 + $0x2f8] sm:%s304]
                %504 = vst [vmem:[%s312 + $0x17c] sm:%s304] %v503
                %v505 = vld [vmem:[%s311 + $0x300] sm:%s304]
                %506 = vst [vmem:[%s312 + $0x180] sm:%s304] %v505
                %v507 = vld [vmem:[%s311 + $0x308] sm:%s304]
                %508 = vst [vmem:[%s312 + $0x184] sm:%s304] %v507
                %v509 = vld [vmem:[%s311 + $0x310] sm:%s304]
                %510 = vst [vmem:[%s312 + $0x188] sm:%s304] %v509
                %v511 = vld [vmem:[%s311 + $0x318] sm:%s304]
                %512 = vst [vmem:[%s312 + $0x18c] sm:%s304] %v511
                %v513 = vld [vmem:[%s311 + $0x320] sm:%s304]
                %514 = vst [vmem:[%s312 + $0x190] sm:%s304] %v513
                %v515 = vld [vmem:[%s311 + $0x328] sm:%s304]
                %516 = vst [vmem:[%s312 + $0x194] sm:%s304] %v515
                %v517 = vld [vmem:[%s311 + $0x330] sm:%s304]
                %518 = vst [vmem:[%s312 + $0x198] sm:%s304] %v517
                %v519 = vld [vmem:[%s311 + $0x338] sm:%s304]
                %520 = vst [vmem:[%s312 + $0x19c] sm:%s304] %v519
                %v521 = vld [vmem:[%s311 + $0x340] sm:%s304]
                %522 = vst [vmem:[%s312 + $0x1a0] sm:%s304] %v521
                %v523 = vld [vmem:[%s311 + $0x348] sm:%s304]
                %524 = vst [vmem:[%s312 + $0x1a4] sm:%s304] %v523
                %v525 = vld [vmem:[%s311 + $0x350] sm:%s304]
                %526 = vst [vmem:[%s312 + $0x1a8] sm:%s304] %v525
                %v527 = vld [vmem:[%s311 + $0x358] sm:%s304]
                %528 = vst [vmem:[%s312 + $0x1ac] sm:%s304] %v527
                %v529 = vld [vmem:[%s311 + $0x360] sm:%s304]
                %530 = vst [vmem:[%s312 + $0x1b0] sm:%s304] %v529
                %v531 = vld [vmem:[%s311 + $0x368] sm:%s304]
                %532 = vst [vmem:[%s312 + $0x1b4] sm:%s304] %v531
                %v533 = vld [vmem:[%s311 + $0x370] sm:%s304]
                %534 = vst [vmem:[%s312 + $0x1b8] sm:%s304] %v533
                %v535 = vld [vmem:[%s311 + $0x378] sm:%s304]
                %536 = vst [vmem:[%s312 + $0x1bc] sm:%s304] %v535
                %v537 = vld [vmem:[%s311 + $0x380] sm:%s304]
                %538 = vst [vmem:[%s312 + $0x1c0] sm:%s304] %v537
                %v539 = vld [vmem:[%s311 + $0x388] sm:%s304]
                %540 = vst [vmem:[%s312 + $0x1c4] sm:%s304] %v539
                %v541 = vld [vmem:[%s311 + $0x390] sm:%s304]
                %542 = vst [vmem:[%s312 + $0x1c8] sm:%s304] %v541
                %v543 = vld [vmem:[%s311 + $0x398] sm:%s304]
                %544 = vst [vmem:[%s312 + $0x1cc] sm:%s304] %v543
                %v545 = vld [vmem:[%s311 + $0x3a0] sm:%s304]
                %546 = vst [vmem:[%s312 + $0x1d0] sm:%s304] %v545
                %v547 = vld [vmem:[%s311 + $0x3a8] sm:%s304]
                %548 = vst [vmem:[%s312 + $0x1d4] sm:%s304] %v547
                %v549 = vld [vmem:[%s311 + $0x3b0] sm:%s304]
                %550 = vst [vmem:[%s312 + $0x1d8] sm:%s304] %v549
                %v551 = vld [vmem:[%s311 + $0x3b8] sm:%s304]
                %552 = vst [vmem:[%s312 + $0x1dc] sm:%s304] %v551
                %v553 = vld [vmem:[%s311 + $0x3c0] sm:%s304]
                %554 = vst [vmem:[%s312 + $0x1e0] sm:%s304] %v553
                %v555 = vld [vmem:[%s311 + $0x3c8] sm:%s304]
                %556 = vst [vmem:[%s312 + $0x1e4] sm:%s304] %v555
                %v557 = vld [vmem:[%s311 + $0x3d0] sm:%s304]
                %558 = vst [vmem:[%s312 + $0x1e8] sm:%s304] %v557
                %v559 = vld [vmem:[%s311 + $0x3d8] sm:%s304]
                %560 = vst [vmem:[%s312 + $0x1ec] sm:%s304] %v559
                %v561 = vld [vmem:[%s311 + $0x3e0] sm:%s304]
                %562 = vst [vmem:[%s312 + $0x1f0] sm:%s304] %v561
                %v563 = vld [vmem:[%s311 + $0x3e8] sm:%s304]
                %564 = vst [vmem:[%s312 + $0x1f4] sm:%s304] %v563
                %v565 = vld [vmem:[%s311 + $0x3f0] sm:%s304]
                %566 = vst [vmem:[%s312 + $0x1f8] sm:%s304] %v565
                %v567 = vld [vmem:[%s311 + $0x3f8] sm:%s304]
                %568 = vst [vmem:[%s312 + $0x1fc] sm:%s304] %v567
                %v569 = vld [vmem:[%s311 + $0x400] sm:%s304]
                %570 = vst [vmem:[%s312 + $0x200] sm:%s304] %v569
                %v571 = vld [vmem:[%s311 + $0x408] sm:%s304]
                %572 = vst [vmem:[%s312 + $0x204] sm:%s304] %v571
                %v573 = vld [vmem:[%s311 + $0x410] sm:%s304]
                %574 = vst [vmem:[%s312 + $0x208] sm:%s304] %v573
                %v575 = vld [vmem:[%s311 + $0x418] sm:%s304]
                %576 = vst [vmem:[%s312 + $0x20c] sm:%s304] %v575
                %v577 = vld [vmem:[%s311 + $0x420] sm:%s304]
                %578 = vst [vmem:[%s312 + $0x210] sm:%s304] %v577
                %v579 = vld [vmem:[%s311 + $0x428] sm:%s304]
                %580 = vst [vmem:[%s312 + $0x214] sm:%s304] %v579
                %v581 = vld [vmem:[%s311 + $0x430] sm:%s304]
                %582 = vst [vmem:[%s312 + $0x218] sm:%s304] %v581
                %v583 = vld [vmem:[%s311 + $0x438] sm:%s304]
                %584 = vst [vmem:[%s312 + $0x21c] sm:%s304] %v583
                %v585 = vld [vmem:[%s311 + $0x440] sm:%s304]
                %586 = vst [vmem:[%s312 + $0x220] sm:%s304] %v585
                %v587 = vld [vmem:[%s311 + $0x448] sm:%s304]
                %588 = vst [vmem:[%s312 + $0x224] sm:%s304] %v587
                %v589 = vld [vmem:[%s311 + $0x450] sm:%s304]
                %590 = vst [vmem:[%s312 + $0x228] sm:%s304] %v589
                %v591 = vld [vmem:[%s311 + $0x458] sm:%s304]
                %592 = vst [vmem:[%s312 + $0x22c] sm:%s304] %v591
                %v593 = vld [vmem:[%s311 + $0x460] sm:%s304]
                %594 = vst [vmem:[%s312 + $0x230] sm:%s304] %v593
                %v595 = vld [vmem:[%s311 + $0x468] sm:%s304]
                %596 = vst [vmem:[%s312 + $0x234] sm:%s304] %v595
                %v597 = vld [vmem:[%s311 + $0x470] sm:%s304]
                %598 = vst [vmem:[%s312 + $0x238] sm:%s304] %v597
                %v599 = vld [vmem:[%s311 + $0x478] sm:%s304]
                %600 = vst [vmem:[%s312 + $0x23c] sm:%s304] %v599
                %v601 = vld [vmem:[%s311 + $0x480] sm:%s304]
                %602 = vst [vmem:[%s312 + $0x240] sm:%s304] %v601
                %v603 = vld [vmem:[%s311 + $0x488] sm:%s304]
                %604 = vst [vmem:[%s312 + $0x244] sm:%s304] %v603
                %v605 = vld [vmem:[%s311 + $0x490] sm:%s304]
                %606 = vst [vmem:[%s312 + $0x248] sm:%s304] %v605
                %v607 = vld [vmem:[%s311 + $0x498] sm:%s304]
                %608 = vst [vmem:[%s312 + $0x24c] sm:%s304] %v607
                %v609 = vld [vmem:[%s311 + $0x4a0] sm:%s304]
                %610 = vst [vmem:[%s312 + $0x250] sm:%s304] %v609
                %v611 = vld [vmem:[%s311 + $0x4a8] sm:%s304]
                %612 = vst [vmem:[%s312 + $0x254] sm:%s304] %v611
                %v613 = vld [vmem:[%s311 + $0x4b0] sm:%s304]
                %614 = vst [vmem:[%s312 + $0x258] sm:%s304] %v613
                %v615 = vld [vmem:[%s311 + $0x4b8] sm:%s304]
                %616 = vst [vmem:[%s312 + $0x25c] sm:%s304] %v615
                %v617 = vld [vmem:[%s311 + $0x4c0] sm:%s304]
                %618 = vst [vmem:[%s312 + $0x260] sm:%s304] %v617
                %v619 = vld [vmem:[%s311 + $0x4c8] sm:%s304]
                %620 = vst [vmem:[%s312 + $0x264] sm:%s304] %v619
                %v621 = vld [vmem:[%s311 + $0x4d0] sm:%s304]
                %622 = vst [vmem:[%s312 + $0x268] sm:%s304] %v621
                %v623 = vld [vmem:[%s311 + $0x4d8] sm:%s304]
                %624 = vst [vmem:[%s312 + $0x26c] sm:%s304] %v623
                %v625 = vld [vmem:[%s311 + $0x4e0] sm:%s304]
                %626 = vst [vmem:[%s312 + $0x270] sm:%s304] %v625
                %v627 = vld [vmem:[%s311 + $0x4e8] sm:%s304]
                %628 = vst [vmem:[%s312 + $0x274] sm:%s304] %v627
                %v629 = vld [vmem:[%s311 + $0x4f0] sm:%s304]
                %630 = vst [vmem:[%s312 + $0x278] sm:%s304] %v629
                %v631 = vld [vmem:[%s311 + $0x4f8] sm:%s304]
                %632 = vst [vmem:[%s312 + $0x27c] sm:%s304] %v631
                %v633 = vld [vmem:[%s311 + $0x500] sm:%s304]
                %634 = vst [vmem:[%s312 + $0x280] sm:%s304] %v633
                %v635 = vld [vmem:[%s311 + $0x508] sm:%s304]
                %636 = vst [vmem:[%s312 + $0x284] sm:%s304] %v635
                %v637 = vld [vmem:[%s311 + $0x510] sm:%s304]
                %638 = vst [vmem:[%s312 + $0x288] sm:%s304] %v637
                %v639 = vld [vmem:[%s311 + $0x518] sm:%s304]
                %640 = vst [vmem:[%s312 + $0x28c] sm:%s304] %v639
                %v641 = vld [vmem:[%s311 + $0x520] sm:%s304]
                %642 = vst [vmem:[%s312 + $0x290] sm:%s304] %v641
                %v643 = vld [vmem:[%s311 + $0x528] sm:%s304]
                %644 = vst [vmem:[%s312 + $0x294] sm:%s304] %v643
                %v645 = vld [vmem:[%s311 + $0x530] sm:%s304]
                %646 = vst [vmem:[%s312 + $0x298] sm:%s304] %v645
                %v647 = vld [vmem:[%s311 + $0x538] sm:%s304]
                %648 = vst [vmem:[%s312 + $0x29c] sm:%s304] %v647
                %v649 = vld [vmem:[%s311 + $0x540] sm:%s304]
                %650 = vst [vmem:[%s312 + $0x2a0] sm:%s304] %v649
                %v651 = vld [vmem:[%s311 + $0x548] sm:%s304]
                %652 = vst [vmem:[%s312 + $0x2a4] sm:%s304] %v651
                %v653 = vld [vmem:[%s311 + $0x550] sm:%s304]
                %654 = vst [vmem:[%s312 + $0x2a8] sm:%s304] %v653
                %v655 = vld [vmem:[%s311 + $0x558] sm:%s304]
                %656 = vst [vmem:[%s312 + $0x2ac] sm:%s304] %v655
                %v657 = vld [vmem:[%s311 + $0x560] sm:%s304]
                %658 = vst [vmem:[%s312 + $0x2b0] sm:%s304] %v657
                %v659 = vld [vmem:[%s311 + $0x568] sm:%s304]
                %660 = vst [vmem:[%s312 + $0x2b4] sm:%s304] %v659
                %v661 = vld [vmem:[%s311 + $0x570] sm:%s304]
                %662 = vst [vmem:[%s312 + $0x2b8] sm:%s304] %v661
                %v663 = vld [vmem:[%s311 + $0x578] sm:%s304]
                %664 = vst [vmem:[%s312 + $0x2bc] sm:%s304] %v663
                %v665 = vld [vmem:[%s311 + $0x580] sm:%s304]
                %666 = vst [vmem:[%s312 + $0x2c0] sm:%s304] %v665
                %v667 = vld [vmem:[%s311 + $0x588] sm:%s304]
                %668 = vst [vmem:[%s312 + $0x2c4] sm:%s304] %v667
                %v669 = vld [vmem:[%s311 + $0x590] sm:%s304]
                %670 = vst [vmem:[%s312 + $0x2c8] sm:%s304] %v669
                %v671 = vld [vmem:[%s311 + $0x598] sm:%s304]
                %672 = vst [vmem:[%s312 + $0x2cc] sm:%s304] %v671
                %v673 = vld [vmem:[%s311 + $0x5a0] sm:%s304]
                %674 = vst [vmem:[%s312 + $0x2d0] sm:%s304] %v673
                %v675 = vld [vmem:[%s311 + $0x5a8] sm:%s304]
                %676 = vst [vmem:[%s312 + $0x2d4] sm:%s304] %v675
                %v677 = vld [vmem:[%s311 + $0x5b0] sm:%s304]
                %678 = vst [vmem:[%s312 + $0x2d8] sm:%s304] %v677
                %v679 = vld [vmem:[%s311 + $0x5b8] sm:%s304]
                %680 = vst [vmem:[%s312 + $0x2dc] sm:%s304] %v679
                %v681 = vld [vmem:[%s311 + $0x5c0] sm:%s304]
                %682 = vst [vmem:[%s312 + $0x2e0] sm:%s304] %v681
                %v683 = vld [vmem:[%s311 + $0x5c8] sm:%s304]
                %684 = vst [vmem:[%s312 + $0x2e4] sm:%s304] %v683
                %v685 = vld [vmem:[%s311 + $0x5d0] sm:%s304]
                %686 = vst [vmem:[%s312 + $0x2e8] sm:%s304] %v685
                %v687 = vld [vmem:[%s311 + $0x5d8] sm:%s304]
                %688 = vst [vmem:[%s312 + $0x2ec] sm:%s304] %v687
                %v689 = vld [vmem:[%s311 + $0x5e0] sm:%s304]
                %690 = vst [vmem:[%s312 + $0x2f0] sm:%s304] %v689
                %v691 = vld [vmem:[%s311 + $0x5e8] sm:%s304]
                %692 = vst [vmem:[%s312 + $0x2f4] sm:%s304] %v691
                %v693 = vld [vmem:[%s311 + $0x5f0] sm:%s304]
                %694 = vst [vmem:[%s312 + $0x2f8] sm:%s304] %v693
                %v695 = vld [vmem:[%s311 + $0x5f8] sm:%s304]
                %696 = vst [vmem:[%s312 + $0x2fc] sm:%s304] %v695
                %v697 = vld [vmem:[%s311 + $0x600] sm:%s304]
                %698 = vst [vmem:[%s312 + $0x300] sm:%s304] %v697
                %v699 = vld [vmem:[%s311 + $0x608] sm:%s304]
                %700 = vst [vmem:[%s312 + $0x304] sm:%s304] %v699
                %v701 = vld [vmem:[%s311 + $0x610] sm:%s304]
                %702 = vst [vmem:[%s312 + $0x308] sm:%s304] %v701
                %v703 = vld [vmem:[%s311 + $0x618] sm:%s304]
                %704 = vst [vmem:[%s312 + $0x30c] sm:%s304] %v703
                %v705 = vld [vmem:[%s311 + $0x620] sm:%s304]
                %706 = vst [vmem:[%s312 + $0x310] sm:%s304] %v705
                %v707 = vld [vmem:[%s311 + $0x628] sm:%s304]
                %708 = vst [vmem:[%s312 + $0x314] sm:%s304] %v707
                %v709 = vld [vmem:[%s311 + $0x630] sm:%s304]
                %710 = vst [vmem:[%s312 + $0x318] sm:%s304] %v709
                %v711 = vld [vmem:[%s311 + $0x638] sm:%s304]
                %712 = vst [vmem:[%s312 + $0x31c] sm:%s304] %v711
                %v713 = vld [vmem:[%s311 + $0x640] sm:%s304]
                %714 = vst [vmem:[%s312 + $0x320] sm:%s304] %v713
                %v715 = vld [vmem:[%s311 + $0x648] sm:%s304]
                %716 = vst [vmem:[%s312 + $0x324] sm:%s304] %v715
                %v717 = vld [vmem:[%s311 + $0x650] sm:%s304]
                %718 = vst [vmem:[%s312 + $0x328] sm:%s304] %v717
                %v719 = vld [vmem:[%s311 + $0x658] sm:%s304]
                %720 = vst [vmem:[%s312 + $0x32c] sm:%s304] %v719
                %v721 = vld [vmem:[%s311 + $0x660] sm:%s304]
                %722 = vst [vmem:[%s312 + $0x330] sm:%s304] %v721
                %v723 = vld [vmem:[%s311 + $0x668] sm:%s304]
                %724 = vst [vmem:[%s312 + $0x334] sm:%s304] %v723
                %v725 = vld [vmem:[%s311 + $0x670] sm:%s304]
                %726 = vst [vmem:[%s312 + $0x338] sm:%s304] %v725
                %v727 = vld [vmem:[%s311 + $0x678] sm:%s304]
                %728 = vst [vmem:[%s312 + $0x33c] sm:%s304] %v727
                %v729 = vld [vmem:[%s311 + $0x680] sm:%s304]
                %730 = vst [vmem:[%s312 + $0x340] sm:%s304] %v729
                %v731 = vld [vmem:[%s311 + $0x688] sm:%s304]
                %732 = vst [vmem:[%s312 + $0x344] sm:%s304] %v731
                %v733 = vld [vmem:[%s311 + $0x690] sm:%s304]
                %734 = vst [vmem:[%s312 + $0x348] sm:%s304] %v733
                %v735 = vld [vmem:[%s311 + $0x698] sm:%s304]
                %736 = vst [vmem:[%s312 + $0x34c] sm:%s304] %v735
                %v737 = vld [vmem:[%s311 + $0x6a0] sm:%s304]
                %738 = vst [vmem:[%s312 + $0x350] sm:%s304] %v737
                %v739 = vld [vmem:[%s311 + $0x6a8] sm:%s304]
                %740 = vst [vmem:[%s312 + $0x354] sm:%s304] %v739
                %v741 = vld [vmem:[%s311 + $0x6b0] sm:%s304]
                %742 = vst [vmem:[%s312 + $0x358] sm:%s304] %v741
                %v743 = vld [vmem:[%s311 + $0x6b8] sm:%s304]
                %744 = vst [vmem:[%s312 + $0x35c] sm:%s304] %v743
                %v745 = vld [vmem:[%s311 + $0x6c0] sm:%s304]
                %746 = vst [vmem:[%s312 + $0x360] sm:%s304] %v745
                %v747 = vld [vmem:[%s311 + $0x6c8] sm:%s304]
                %748 = vst [vmem:[%s312 + $0x364] sm:%s304] %v747
                %v749 = vld [vmem:[%s311 + $0x6d0] sm:%s304]
                %750 = vst [vmem:[%s312 + $0x368] sm:%s304] %v749
                %v751 = vld [vmem:[%s311 + $0x6d8] sm:%s304]
                %752 = vst [vmem:[%s312 + $0x36c] sm:%s304] %v751
                %v753 = vld [vmem:[%s311 + $0x6e0] sm:%s304]
                %754 = vst [vmem:[%s312 + $0x370] sm:%s304] %v753
                %v755 = vld [vmem:[%s311 + $0x6e8] sm:%s304]
                %756 = vst [vmem:[%s312 + $0x374] sm:%s304] %v755
                %v757 = vld [vmem:[%s311 + $0x6f0] sm:%s304]
                %758 = vst [vmem:[%s312 + $0x378] sm:%s304] %v757
                %v759 = vld [vmem:[%s311 + $0x6f8] sm:%s304]
                %760 = vst [vmem:[%s312 + $0x37c] sm:%s304] %v759
                %v761 = vld [vmem:[%s311 + $0x700] sm:%s304]
                %762 = vst [vmem:[%s312 + $0x380] sm:%s304] %v761
                %v763 = vld [vmem:[%s311 + $0x708] sm:%s304]
                %764 = vst [vmem:[%s312 + $0x384] sm:%s304] %v763
                %v765 = vld [vmem:[%s311 + $0x710] sm:%s304]
                %766 = vst [vmem:[%s312 + $0x388] sm:%s304] %v765
                %v767 = vld [vmem:[%s311 + $0x718] sm:%s304]
                %768 = vst [vmem:[%s312 + $0x38c] sm:%s304] %v767
                %v769 = vld [vmem:[%s311 + $0x720] sm:%s304]
                %770 = vst [vmem:[%s312 + $0x390] sm:%s304] %v769
                %v771 = vld [vmem:[%s311 + $0x728] sm:%s304]
                %772 = vst [vmem:[%s312 + $0x394] sm:%s304] %v771
                %v773 = vld [vmem:[%s311 + $0x730] sm:%s304]
                %774 = vst [vmem:[%s312 + $0x398] sm:%s304] %v773
                %v775 = vld [vmem:[%s311 + $0x738] sm:%s304]
                %776 = vst [vmem:[%s312 + $0x39c] sm:%s304] %v775
                %v777 = vld [vmem:[%s311 + $0x740] sm:%s304]
                %778 = vst [vmem:[%s312 + $0x3a0] sm:%s304] %v777
                %v779 = vld [vmem:[%s311 + $0x748] sm:%s304]
                %780 = vst [vmem:[%s312 + $0x3a4] sm:%s304] %v779
                %v781 = vld [vmem:[%s311 + $0x750] sm:%s304]
                %782 = vst [vmem:[%s312 + $0x3a8] sm:%s304] %v781
                %v783 = vld [vmem:[%s311 + $0x758] sm:%s304]
                %784 = vst [vmem:[%s312 + $0x3ac] sm:%s304] %v783
                %v785 = vld [vmem:[%s311 + $0x760] sm:%s304]
                %786 = vst [vmem:[%s312 + $0x3b0] sm:%s304] %v785
                %v787 = vld [vmem:[%s311 + $0x768] sm:%s304]
                %788 = vst [vmem:[%s312 + $0x3b4] sm:%s304] %v787
                %v789 = vld [vmem:[%s311 + $0x770] sm:%s304]
                %790 = vst [vmem:[%s312 + $0x3b8] sm:%s304] %v789
                %v791 = vld [vmem:[%s311 + $0x778] sm:%s304]
                %792 = vst [vmem:[%s312 + $0x3bc] sm:%s304] %v791
                %v793 = vld [vmem:[%s311 + $0x780] sm:%s304]
                %794 = vst [vmem:[%s312 + $0x3c0] sm:%s304] %v793
                %v795 = vld [vmem:[%s311 + $0x788] sm:%s304]
                %796 = vst [vmem:[%s312 + $0x3c4] sm:%s304] %v795
                %v797 = vld [vmem:[%s311 + $0x790] sm:%s304]
                %798 = vst [vmem:[%s312 + $0x3c8] sm:%s304] %v797
                %v799 = vld [vmem:[%s311 + $0x798] sm:%s304]
                %800 = vst [vmem:[%s312 + $0x3cc] sm:%s304] %v799
                %v801 = vld [vmem:[%s311 + $0x7a0] sm:%s304]
                %802 = vst [vmem:[%s312 + $0x3d0] sm:%s304] %v801
                %v803 = vld [vmem:[%s311 + $0x7a8] sm:%s304]
                %804 = vst [vmem:[%s312 + $0x3d4] sm:%s304] %v803
                %v805 = vld [vmem:[%s311 + $0x7b0] sm:%s304]
                %806 = vst [vmem:[%s312 + $0x3d8] sm:%s304] %v805
                %v807 = vld [vmem:[%s311 + $0x7b8] sm:%s304]
                %808 = vst [vmem:[%s312 + $0x3dc] sm:%s304] %v807
                %v809 = vld [vmem:[%s311 + $0x7c0] sm:%s304]
                %810 = vst [vmem:[%s312 + $0x3e0] sm:%s304] %v809
                %v811 = vld [vmem:[%s311 + $0x7c8] sm:%s304]
                %812 = vst [vmem:[%s312 + $0x3e4] sm:%s304] %v811
                %v813 = vld [vmem:[%s311 + $0x7d0] sm:%s304]
                %814 = vst [vmem:[%s312 + $0x3e8] sm:%s304] %v813
                %v815 = vld [vmem:[%s311 + $0x7d8] sm:%s304]
                %816 = vst [vmem:[%s312 + $0x3ec] sm:%s304] %v815
                %v817 = vld [vmem:[%s311 + $0x7e0] sm:%s304]
                %818 = vst [vmem:[%s312 + $0x3f0] sm:%s304] %v817
                %v819 = vld [vmem:[%s311 + $0x7e8] sm:%s304]
                %820 = vst [vmem:[%s312 + $0x3f4] sm:%s304] %v819
                %v821 = vld [vmem:[%s311 + $0x7f0] sm:%s304]
                %822 = vst [vmem:[%s312 + $0x3f8] sm:%s304] %v821
                %v823 = vld [vmem:[%s311 + $0x7f8] sm:%s304]
                %824 = vst [vmem:[%s312 + $0x3fc] sm:%s304] %v823
                %v825 = vld [vmem:[%s311 + $0x800] sm:%s304]
                %826 = vst [vmem:[%s312 + $0x400] sm:%s304] %v825
                %v827 = vld [vmem:[%s311 + $0x808] sm:%s304]
                %828 = vst [vmem:[%s312 + $0x404] sm:%s304] %v827
                %v829 = vld [vmem:[%s311 + $0x810] sm:%s304]
                %830 = vst [vmem:[%s312 + $0x408] sm:%s304] %v829
                %v831 = vld [vmem:[%s311 + $0x818] sm:%s304]
                %832 = vst [vmem:[%s312 + $0x40c] sm:%s304] %v831
                %v833 = vld [vmem:[%s311 + $0x820] sm:%s304]
                %834 = vst [vmem:[%s312 + $0x410] sm:%s304] %v833
                %v835 = vld [vmem:[%s311 + $0x828] sm:%s304]
                %836 = vst [vmem:[%s312 + $0x414] sm:%s304] %v835
                %v837 = vld [vmem:[%s311 + $0x830] sm:%s304]
                %838 = vst [vmem:[%s312 + $0x418] sm:%s304] %v837
                %v839 = vld [vmem:[%s311 + $0x838] sm:%s304]
                %840 = vst [vmem:[%s312 + $0x41c] sm:%s304] %v839
                %v841 = vld [vmem:[%s311 + $0x840] sm:%s304]
                %842 = vst [vmem:[%s312 + $0x420] sm:%s304] %v841
                %v843 = vld [vmem:[%s311 + $0x848] sm:%s304]
                %844 = vst [vmem:[%s312 + $0x424] sm:%s304] %v843
                %v845 = vld [vmem:[%s311 + $0x850] sm:%s304]
                %846 = vst [vmem:[%s312 + $0x428] sm:%s304] %v845
                %v847 = vld [vmem:[%s311 + $0x858] sm:%s304]
                %848 = vst [vmem:[%s312 + $0x42c] sm:%s304] %v847
                %v849 = vld [vmem:[%s311 + $0x860] sm:%s304]
                %850 = vst [vmem:[%s312 + $0x430] sm:%s304] %v849
                %v851 = vld [vmem:[%s311 + $0x868] sm:%s304]
                %852 = vst [vmem:[%s312 + $0x434] sm:%s304] %v851
                %v853 = vld [vmem:[%s311 + $0x870] sm:%s304]
                %854 = vst [vmem:[%s312 + $0x438] sm:%s304] %v853
                %v855 = vld [vmem:[%s311 + $0x878] sm:%s304]
                %856 = vst [vmem:[%s312 + $0x43c] sm:%s304] %v855
                %v857 = vld [vmem:[%s311 + $0x880] sm:%s304]
                %858 = vst [vmem:[%s312 + $0x440] sm:%s304] %v857
                %v859 = vld [vmem:[%s311 + $0x888] sm:%s304]
                %860 = vst [vmem:[%s312 + $0x444] sm:%s304] %v859
                %v861 = vld [vmem:[%s311 + $0x890] sm:%s304]
                %862 = vst [vmem:[%s312 + $0x448] sm:%s304] %v861
                %v863 = vld [vmem:[%s311 + $0x898] sm:%s304]
                %864 = vst [vmem:[%s312 + $0x44c] sm:%s304] %v863
                %v865 = vld [vmem:[%s311 + $0x8a0] sm:%s304]
                %866 = vst [vmem:[%s312 + $0x450] sm:%s304] %v865
                %v867 = vld [vmem:[%s311 + $0x8a8] sm:%s304]
                %868 = vst [vmem:[%s312 + $0x454] sm:%s304] %v867
                %v869 = vld [vmem:[%s311 + $0x8b0] sm:%s304]
                %870 = vst [vmem:[%s312 + $0x458] sm:%s304] %v869
                %v871 = vld [vmem:[%s311 + $0x8b8] sm:%s304]
                %872 = vst [vmem:[%s312 + $0x45c] sm:%s304] %v871
                %v873 = vld [vmem:[%s311 + $0x8c0] sm:%s304]
                %874 = vst [vmem:[%s312 + $0x460] sm:%s304] %v873
                %v875 = vld [vmem:[%s311 + $0x8c8] sm:%s304]
                %876 = vst [vmem:[%s312 + $0x464] sm:%s304] %v875
                %v877 = vld [vmem:[%s311 + $0x8d0] sm:%s304]
                %878 = vst [vmem:[%s312 + $0x468] sm:%s304] %v877
                %v879 = vld [vmem:[%s311 + $0x8d8] sm:%s304]
                %880 = vst [vmem:[%s312 + $0x46c] sm:%s304] %v879
                %v881 = vld [vmem:[%s311 + $0x8e0] sm:%s304]
                %882 = vst [vmem:[%s312 + $0x470] sm:%s304] %v881
                %v883 = vld [vmem:[%s311 + $0x8e8] sm:%s304]
                %884 = vst [vmem:[%s312 + $0x474] sm:%s304] %v883
                %v885 = vld [vmem:[%s311 + $0x8f0] sm:%s304]
                %886 = vst [vmem:[%s312 + $0x478] sm:%s304] %v885
                %v887 = vld [vmem:[%s311 + $0x8f8] sm:%s304]
                %888 = vst [vmem:[%s312 + $0x47c] sm:%s304] %v887
              $region49: #{basic_block_forward.3} parent=43 // loop_footer
                %s310 = sadd.s32 1, %s306
              $region50: #{basic_block_forward.3} parent=43 // loop_footer_branch
                %305 = sbr.rel target = $region46
              $region51: #{basic_block_forward.3} parent=43 // loop_exit
                _
            $region44: #{basic_block_forward.3} parent=35 // pred_fallthru
              _
          $region36: #{basic_block_forward.3} parent=31 // pred_fallthru
            _
          %1485 = vnop
        $region32: #{basic_block_forward.3} parent=27 // pred_fallthru
          _
        // Predicated region
        $region70: #{basic_block_forward.3} parent=27 // pred_check
          %p1486 = pneg %p103
        $region71: #{basic_block_forward.3} parent=27 // pred_check_branch
          %1488 = sbr.rel (%p1486) target = $region73
        $region72: #{basic_block_forward.3} parent=27 // pred_region
          %p1489 = scmp.lt.s32.totalorder %s15, 1
          %s1490 = scalar_select %p1489, %s15, 1
          %s1491 = scalar_lea.vmem %s3, %s1490
        $region73: #{basic_block_forward.3} parent=27 // pred_fallthru
          _
        // Predicated region
        $region74: #{basic_block_forward.3} parent=27 // pred_check
          %p1492 = pneg %p129
        $region75: #{basic_block_forward.3} parent=27 // pred_check_branch
          %1494 = sbr.rel (%p1492) target = $region77
        $region76: #{basic_block_forward.3} parent=27 // pred_region
          %p1495 = scmp.lt.s32.totalorder %s15, 1
          %s1496 = scalar_select %p1495, %s15, 1
          %s1497 = scalar_lea.vmem %s4, %s1496
        $region77: #{basic_block_forward.3} parent=27 // pred_fallthru
          _
        // Predicated region
        $region78: #{basic_block_forward.3} parent=27 // pred_check
          %p1498 = pneg %p176
        $region79: #{basic_block_forward.3} parent=27 // pred_check_branch
          %1500 = sbr.rel (%p1498) target = $region81
        $region80: #{basic_block_forward.3} parent=27 // pred_region
          %s1501 = sand.u32 %s166, 1
          %s1502 = sand.u32 %s166, 1
          %s1503 = smul.addr %s1502, 64
          %s1504 = scalar_lea.vmem [#allocation3], %s1503
          %s1505 = smul.addr %s15, 4
          %s1506 = scalar_lea.vmem %s6, %s1505
          // Predicated region
          $region82: #{basic_block_forward.3} parent=80 // pred_check
            _
          $region83: #{basic_block_forward.3} parent=80 // pred_check_branch
            %1508 = sbr.rel (0) target = $region85
          $region84: #{basic_block_forward.3} parent=80 // pred_region
            // Predicated region
            $region86: #{basic_block_forward.3} parent=84 // pred_check
              _
            $region87: #{basic_block_forward.3} parent=84 // pred_check_branch
              %1510 = sbr.rel target = $region89
            $region88: #{basic_block_forward.3} parent=84 // pred_region
              // Predicated region
              $region101: #{basic_block_forward.3} parent=88 // pred_check
                _
              $region102: #{basic_block_forward.3} parent=88 // pred_check_branch
                %1556 = sbr.rel (0) target = $region104
              $region103: #{basic_block_forward.3} parent=88 // pred_region
                loop: start=0, step=1, limit=1
                $region105: #{basic_block_forward.3} parent=103 // loop_pre_header
                  _
                $region106: #{basic_block_forward.3} parent=103 // loop_header
                  %s1558 = sphi 0, %s1562
                  %p1559 = scmp.ge.s32.totalorder %s1558, 1
                  %s1563 = sphi %s1506, %s1506
                  %s1564 = sphi %s1504, %s1504
                $region107: #{basic_block_forward.3} parent=103 // loop_header_branch
                  %1561 = sbr.rel (%p1559) target = $region111
                $region108: #{basic_block_forward.3} parent=103 // loop_body
                  _
                $region109: #{basic_block_forward.3} parent=103 // loop_footer
                  %s1562 = sadd.s32 1, %s1558
                $region110: #{basic_block_forward.3} parent=103 // loop_footer_branch
                  %1557 = sbr.rel target = $region106
                $region111: #{basic_block_forward.3} parent=103 // loop_exit
                  _
                %s1566 = ssub.s32 16, 1
                loop: start=0, step=1, limit=1
                $region112: #{basic_block_forward.3} parent=103 // loop_pre_header
                  _
                $region113: #{basic_block_forward.3} parent=103 // loop_header
                  %s1568 = sphi 0, %s1572
                  %p1569 = scmp.ge.s32.totalorder %s1568, 1
                  %s1573 = sphi %s1506, %s1506
                  %s1574 = sphi %s1504, %s1504
                $region114: #{basic_block_forward.3} parent=103 // loop_header_branch
                  %1571 = sbr.rel (%p1569) target = $region118
                $region115: #{basic_block_forward.3} parent=103 // loop_body
                  %v1575 = vld [vmem:[%s1573] sm:%s1566]
                  %1576 = vst [vmem:[%s1574] sm:%s1566] %v1575
                  %v1577 = vld [vmem:[%s1573 + $0x8] sm:%s1566]
                  %1578 = vst [vmem:[%s1574 + $0x4] sm:%s1566] %v1577
                  %v1579 = vld [vmem:[%s1573 + $0x10] sm:%s1566]
                  %1580 = vst [vmem:[%s1574 + $0x8] sm:%s1566] %v1579
                  %v1581 = vld [vmem:[%s1573 + $0x18] sm:%s1566]
                  %1582 = vst [vmem:[%s1574 + $0xc] sm:%s1566] %v1581
                  %v1583 = vld [vmem:[%s1573 + $0x20] sm:%s1566]
                  %1584 = vst [vmem:[%s1574 + $0x10] sm:%s1566] %v1583
                  %v1585 = vld [vmem:[%s1573 + $0x28] sm:%s1566]
                  %1586 = vst [vmem:[%s1574 + $0x14] sm:%s1566] %v1585
                  %v1587 = vld [vmem:[%s1573 + $0x30] sm:%s1566]
                  %1588 = vst [vmem:[%s1574 + $0x18] sm:%s1566] %v1587
                  %v1589 = vld [vmem:[%s1573 + $0x38] sm:%s1566]
                  %1590 = vst [vmem:[%s1574 + $0x1c] sm:%s1566] %v1589
                  %v1591 = vld [vmem:[%s1573 + $0x40] sm:%s1566]
                  %1592 = vst [vmem:[%s1574 + $0x20] sm:%s1566] %v1591
                  %v1593 = vld [vmem:[%s1573 + $0x48] sm:%s1566]
                  %1594 = vst [vmem:[%s1574 + $0x24] sm:%s1566] %v1593
                  %v1595 = vld [vmem:[%s1573 + $0x50] sm:%s1566]
                  %1596 = vst [vmem:[%s1574 + $0x28] sm:%s1566] %v1595
                  %v1597 = vld [vmem:[%s1573 + $0x58] sm:%s1566]
                  %1598 = vst [vmem:[%s1574 + $0x2c] sm:%s1566] %v1597
                  %v1599 = vld [vmem:[%s1573 + $0x60] sm:%s1566]
                  %1600 = vst [vmem:[%s1574 + $0x30] sm:%s1566] %v1599
                  %v1601 = vld [vmem:[%s1573 + $0x68] sm:%s1566]
                  %1602 = vst [vmem:[%s1574 + $0x34] sm:%s1566] %v1601
                  %v1603 = vld [vmem:[%s1573 + $0x70] sm:%s1566]
                  %1604 = vst [vmem:[%s1574 + $0x38] sm:%s1566] %v1603
                  %v1605 = vld [vmem:[%s1573 + $0x78] sm:%s1566]
                  %1606 = vst [vmem:[%s1574 + $0x3c] sm:%s1566] %v1605
                $region116: #{basic_block_forward.3} parent=103 // loop_footer
                  %s1572 = sadd.s32 1, %s1568
                $region117: #{basic_block_forward.3} parent=103 // loop_footer_branch
                  %1567 = sbr.rel target = $region113
                $region118: #{basic_block_forward.3} parent=103 // loop_exit
                  _
              $region104: #{basic_block_forward.3} parent=88 // pred_fallthru
                _
            $region89: #{basic_block_forward.3} parent=84 // pred_fallthru
              _
            // Predicated region
            $region90: #{basic_block_forward.3} parent=84 // pred_check
              _
            $region91: #{basic_block_forward.3} parent=84 // pred_check_branch
              %1512 = sbr.rel (0) target = $region93
            $region92: #{basic_block_forward.3} parent=84 // pred_region
              %s1514 = ssub.s32 16, 1
              loop: start=0, step=1, limit=1
              $region94: #{basic_block_forward.3} parent=92 // loop_pre_header
                _
              $region95: #{basic_block_forward.3} parent=92 // loop_header
                %s1516 = sphi 0, %s1520
                %p1517 = scmp.ge.s32.totalorder %s1516, 1
                %s1521 = sphi %s1506, %s1506
                %s1522 = sphi %s1504, %s1504
              $region96: #{basic_block_forward.3} parent=92 // loop_header_branch
                %1519 = sbr.rel (%p1517) target = $region100
              $region97: #{basic_block_forward.3} parent=92 // loop_body
                %v1523 = vld [vmem:[%s1521] sm:%s1514]
                %1524 = vst [vmem:[%s1522] sm:%s1514] %v1523
                %v1525 = vld [vmem:[%s1521 + $0x8] sm:%s1514]
                %1526 = vst [vmem:[%s1522 + $0x4] sm:%s1514] %v1525
                %v1527 = vld [vmem:[%s1521 + $0x10] sm:%s1514]
                %1528 = vst [vmem:[%s1522 + $0x8] sm:%s1514] %v1527
                %v1529 = vld [vmem:[%s1521 + $0x18] sm:%s1514]
                %1530 = vst [vmem:[%s1522 + $0xc] sm:%s1514] %v1529
                %v1531 = vld [vmem:[%s1521 + $0x20] sm:%s1514]
                %1532 = vst [vmem:[%s1522 + $0x10] sm:%s1514] %v1531
                %v1533 = vld [vmem:[%s1521 + $0x28] sm:%s1514]
                %1534 = vst [vmem:[%s1522 + $0x14] sm:%s1514] %v1533
                %v1535 = vld [vmem:[%s1521 + $0x30] sm:%s1514]
                %1536 = vst [vmem:[%s1522 + $0x18] sm:%s1514] %v1535
                %v1537 = vld [vmem:[%s1521 + $0x38] sm:%s1514]
                %1538 = vst [vmem:[%s1522 + $0x1c] sm:%s1514] %v1537
                %v1539 = vld [vmem:[%s1521 + $0x40] sm:%s1514]
                %1540 = vst [vmem:[%s1522 + $0x20] sm:%s1514] %v1539
                %v1541 = vld [vmem:[%s1521 + $0x48] sm:%s1514]
                %1542 = vst [vmem:[%s1522 + $0x24] sm:%s1514] %v1541
                %v1543 = vld [vmem:[%s1521 + $0x50] sm:%s1514]
                %1544 = vst [vmem:[%s1522 + $0x28] sm:%s1514] %v1543
                %v1545 = vld [vmem:[%s1521 + $0x58] sm:%s1514]
                %1546 = vst [vmem:[%s1522 + $0x2c] sm:%s1514] %v1545
                %v1547 = vld [vmem:[%s1521 + $0x60] sm:%s1514]
                %1548 = vst [vmem:[%s1522 + $0x30] sm:%s1514] %v1547
                %v1549 = vld [vmem:[%s1521 + $0x68] sm:%s1514]
                %1550 = vst [vmem:[%s1522 + $0x34] sm:%s1514] %v1549
                %v1551 = vld [vmem:[%s1521 + $0x70] sm:%s1514]
                %1552 = vst [vmem:[%s1522 + $0x38] sm:%s1514] %v1551
                %v1553 = vld [vmem:[%s1521 + $0x78] sm:%s1514]
                %1554 = vst [vmem:[%s1522 + $0x3c] sm:%s1514] %v1553
              $region98: #{basic_block_forward.3} parent=92 // loop_footer
                %s1520 = sadd.s32 1, %s1516
              $region99: #{basic_block_forward.3} parent=92 // loop_footer_branch
                %1515 = sbr.rel target = $region95
              $region100: #{basic_block_forward.3} parent=92 // loop_exit
                _
            $region93: #{basic_block_forward.3} parent=84 // pred_fallthru
              _
          $region85: #{basic_block_forward.3} parent=80 // pred_fallthru
            _
          %1607 = vnop
        $region81: #{basic_block_forward.3} parent=27 // pred_fallthru
          _
        // Predicated region
        $region119: #{basic_block_forward.3} parent=27 // pred_check
          %p1608 = pneg %p202
        $region120: #{basic_block_forward.3} parent=27 // pred_check_branch
          %1610 = sbr.rel (%p1608) target = $region122
        $region121: #{basic_block_forward.3} parent=27 // pred_region
          %p1611 = scmp.lt.s32.totalorder %s15, 1
          %s1612 = scalar_select %p1611, %s15, 1
          %s1613 = scalar_lea.vmem %s7, %s1612
        $region122: #{basic_block_forward.3} parent=27 // pred_fallthru
          _
        // Predicated region
        $region123: #{basic_block_forward.3} parent=27 // pred_check
          %p1614 = pneg %p228
        $region124: #{basic_block_forward.3} parent=27 // pred_check_branch
          %1616 = sbr.rel (%p1614) target = $region126
        $region125: #{basic_block_forward.3} parent=27 // pred_region
          %p1617 = scmp.lt.s32.totalorder %s15, 1
          %s1618 = scalar_select %p1617, %s15, 1
          %s1619 = scalar_lea.vmem %s8, %s1618
        $region126: #{basic_block_forward.3} parent=27 // pred_fallthru
          _
      $region28: #{basic_block_forward.3} parent=5 // pred_fallthru
        _
      %p1620 = scmp.le.s32.totalorder 1, %s15
      %p1621 = scmp.lt.s32.totalorder %s15, 3
      %p1622 = pnand %p1620, %p1621
      %p1623 = pneg %p1622
      // Predicated region
      $region127: #{basic_block_forward.3} parent=5 // pred_check
        _
      $region128: #{basic_block_forward.3} parent=5 // pred_check_branch
        %1625 = sbr.rel (%p1622) target = $region130
      $region129: #{basic_block_forward.3} parent=5 // pred_region
        %s1626 = ssub.s32 %s15, 1
        %s1627 = sand.u32 %s49, 1
        %s1628 = sand.u32 %s49, 1
        %s1629 = smul.addr %s1628, 1152
        %s1630 = scalar_lea.vmem [#allocation2], %s1629
        // Predicated region
        $region131: #{basic_block_forward.3} parent=129 // pred_check
          %p1631 = pneg %p62
        $region132: #{basic_block_forward.3} parent=129 // pred_check_branch
          %1633 = sbr.rel (%p1631) target = $region134
        $region133: #{basic_block_forward.3} parent=129 // pred_region
          _
        $region134: #{basic_block_forward.3} parent=129 // pred_fallthru
          _
        %s1634 = sand.u32 %s169, 1
        %s1635 = sand.u32 %s169, 1
        %s1636 = smul.addr %s1635, 64
        %s1637 = scalar_lea.vmem [#allocation3], %s1636
        // Predicated region
        $region135: #{basic_block_forward.3} parent=129 // pred_check
          %p1638 = pneg %p182
        $region136: #{basic_block_forward.3} parent=129 // pred_check_branch
          %1640 = sbr.rel (%p1638) target = $region138
        $region137: #{basic_block_forward.3} parent=129 // pred_region
          _
        $region138: #{basic_block_forward.3} parent=129 // pred_fallthru
          _
        %p1641 = pneg %p36
        %p1642 = pneg %p33
        %s1643 = sand.u32 %s49, 1
        %s1644 = sand.u32 %s49, 1
        %s1645 = smul.addr %s1644, 1152
        %s1646 = scalar_lea.vmem [#allocation2], %s1645
        %p1647 = pneg %p62
        %p1648 = pneg %p59
        %p1649 = pneg %p83
        %p1650 = pneg %p80
        %p1651 = scmp.lt.s32.totalorder %s20, 1
        %s1652 = scalar_select %p1651, %s20, 1
        %s1653 = scalar_lea.vmem %s3, %s1652
        %p1654 = pneg %p109
        %p1655 = pneg %p106
        %p1656 = scmp.lt.s32.totalorder %s20, 1
        %s1657 = scalar_select %p1656, %s20, 1
        %s1658 = scalar_lea.vmem %s4, %s1657
        %p1659 = pneg %p135
        %p1660 = pneg %p132
        %p1661 = pneg %p156
        %p1662 = pneg %p153
        %s1663 = sand.u32 %s169, 1
        %s1664 = sand.u32 %s169, 1
        %s1665 = smul.addr %s1664, 64
        %s1666 = scalar_lea.vmem [#allocation3], %s1665
        %p1667 = pneg %p182
        %p1668 = pneg %p179
        %p1669 = scmp.lt.s32.totalorder %s20, 1
        %s1670 = scalar_select %p1669, %s20, 1
        %s1671 = scalar_lea.vmem %s7, %s1670
        %p1672 = pneg %p208
        %p1673 = pneg %p205
        %p1674 = scmp.lt.s32.totalorder %s20, 1
        %s1675 = scalar_select %p1674, %s20, 1
        %s1676 = scalar_lea.vmem %s8, %s1675
        %p1677 = pneg %p234
        %p1678 = pneg %p231
        %p1679 = pneg %p260
        %p1680 = pneg %p257
        %s1681 = sand.u32 %s247, 1
        %s1682 = sand.u32 %s247, 1
        %s1683 = smul.addr %s1682, 184
        %s1684 = scalar_lea.vmem [#allocation4], %s1683
        %p1685 = scmp.lt.s32.totalorder %s20, 1
        %s1686 = scalar_select %p1685, %s20, 1
        %s1687 = scalar_lea.vmem %s3, %s1686
        %p1688 = scmp.lt.s32.totalorder %s20, 1
        %s1689 = scalar_select %p1688, %s20, 1
        %s1690 = scalar_lea.vmem %s4, %s1689
        %p1691 = scmp.lt.s32.totalorder %s20, 1
        %s1692 = scalar_select %p1691, %s20, 1
        %s1693 = scalar_lea.vmem %s7, %s1692
        %p1694 = scmp.lt.s32.totalorder %s20, 1
        %s1695 = scalar_select %p1694, %s20, 1
        %s1696 = scalar_lea.vmem %s8, %s1695
        %v1698 = vld [vmem:[%s0] sm:$0xff]
        %v1699 = vld [vmem:[%s0 + $0x8] sm:$0xff]
        %v1700 = vld [vmem:[%s0 + $0x10] sm:$0xff]
        %v1701 = vld [vmem:[%s0 + $0x18] sm:$0xff]
        %v1702 = vld [vmem:[%s0 + $0x20] sm:$0xff]
        %v1703 = vld [vmem:[%s0 + $0x28] sm:$0xff]
        %v1704 = vld [vmem:[%s0 + $0x30] sm:$0xff]
        %v1705 = vld [vmem:[%s0 + $0x38] sm:$0xff]
        %v1706 = vld [vmem:[%s0 + $0x40] sm:$0xff]
        %v1707 = vld [vmem:[%s0 + $0x48] sm:$0xff]
        %v1708 = vld [vmem:[%s0 + $0x50] sm:$0xff]
        %v1709 = vld [vmem:[%s0 + $0x58] sm:$0xff]
        %v1710 = vld [vmem:[%s0 + $0x60] sm:$0xff]
        %v1711 = vld [vmem:[%s0 + $0x68] sm:$0xff]
        %v1712 = vld [vmem:[%s0 + $0x70] sm:$0xff]
        %v1713 = vld [vmem:[%s0 + $0x78] sm:$0xff]
        %v1714 = vld [vmem:[%s0 + $0x80] sm:$0xff]
        %v1715 = vld [vmem:[%s0 + $0x88] sm:$0xff]
        %v1716 = vld [vmem:[%s0 + $0x90] sm:$0xff]
        %v1717 = vld [vmem:[%s0 + $0x98] sm:$0xff]
        %v1718 = vld [vmem:[%s0 + $0xa0] sm:$0xff]
        %v1719 = vld [vmem:[%s0 + $0xa8] sm:$0xff]
        %v1720 = vld [vmem:[%s0 + $0xb0] sm:$0x11]
        %v1721 = vld [vmem:[%s1630] sm:$0xf]
        %v1722 = vld [vmem:[%s1630 + $0x4] sm:$0xf]
        %v1723 = vld [vmem:[%s1630 + $0x8] sm:$0xf]
        %v1724 = vld [vmem:[%s1630 + $0xc] sm:$0xf]
        %v1725 = vld [vmem:[%s1630 + $0x10] sm:$0xf]
        %v1726 = vld [vmem:[%s1630 + $0x14] sm:$0xf]
        %v1727 = vld [vmem:[%s1630 + $0x18] sm:$0xf]
        %v1728 = vld [vmem:[%s1630 + $0x1c] sm:$0xf]
        %v1729 = vld [vmem:[%s1630 + $0x20] sm:$0xf]
        %v1730 = vld [vmem:[%s1630 + $0x24] sm:$0xf]
        %v1731 = vld [vmem:[%s1630 + $0x28] sm:$0xf]
        %v1732 = vld [vmem:[%s1630 + $0x2c] sm:$0xf]
        %v1733 = vld [vmem:[%s1630 + $0x30] sm:$0xf]
        %v1734 = vld [vmem:[%s1630 + $0x34] sm:$0xf]
        %v1735 = vld [vmem:[%s1630 + $0x38] sm:$0xf]
        %v1736 = vld [vmem:[%s1630 + $0x3c] sm:$0xf]
        %v1737 = vld [vmem:[%s1630 + $0x40] sm:$0xf]
        %v1738 = vld [vmem:[%s1630 + $0x44] sm:$0xf]
        %v1739 = vld [vmem:[%s1630 + $0x48] sm:$0xf]
        %v1740 = vld [vmem:[%s1630 + $0x4c] sm:$0xf]
        %v1741 = vld [vmem:[%s1630 + $0x50] sm:$0xf]
        %v1742 = vld [vmem:[%s1630 + $0x54] sm:$0xf]
        %v1743 = vld [vmem:[%s1630 + $0x58] sm:$0xf]
        %v1744 = vld [vmem:[%s1630 + $0x5c] sm:$0xf]
        %v1745 = vld [vmem:[%s1630 + $0x60] sm:$0xf]
        %v1746 = vld [vmem:[%s1630 + $0x64] sm:$0xf]
        %v1747 = vld [vmem:[%s1630 + $0x68] sm:$0xf]
        %v1748 = vld [vmem:[%s1630 + $0x6c] sm:$0xf]
        %v1749 = vld [vmem:[%s1630 + $0x70] sm:$0xf]
        %v1750 = vld [vmem:[%s1630 + $0x74] sm:$0xf]
        %v1751 = vld [vmem:[%s1630 + $0x78] sm:$0xf]
        %v1752 = vld [vmem:[%s1630 + $0x7c] sm:$0xf]
        %v1753 = vld [vmem:[%s0 + $0xb0] sm:$0x33]
        %s1754 = scalar_lea.vmem %s1630, 128 [#allocation2]
        %v1755 = vld [vmem:[%s1754] sm:$0xf]
        %v1756 = vld [vmem:[%s1754 + $0x4] sm:$0xf]
        %v1757 = vld [vmem:[%s1754 + $0x8] sm:$0xf]
        %v1758 = vld [vmem:[%s1754 + $0xc] sm:$0xf]
        %v1759 = vld [vmem:[%s1754 + $0x10] sm:$0xf]
        %v1760 = vld [vmem:[%s1754 + $0x14] sm:$0xf]
        %v1761 = vld [vmem:[%s1754 + $0x18] sm:$0xf]
        %v1762 = vld [vmem:[%s1754 + $0x1c] sm:$0xf]
        %v1763 = vld [vmem:[%s1754 + $0x20] sm:$0xf]
        %v1764 = vld [vmem:[%s1754 + $0x24] sm:$0xf]
        %v1765 = vld [vmem:[%s1754 + $0x28] sm:$0xf]
        %v1766 = vld [vmem:[%s1754 + $0x2c] sm:$0xf]
        %v1767 = vld [vmem:[%s1754 + $0x30] sm:$0xf]
        %v1768 = vld [vmem:[%s1754 + $0x34] sm:$0xf]
        %v1769 = vld [vmem:[%s1754 + $0x38] sm:$0xf]
        %v1770 = vld [vmem:[%s1754 + $0x3c] sm:$0xf]
        %v1771 = vld [vmem:[%s1754 + $0x40] sm:$0xf]
        %v1772 = vld [vmem:[%s1754 + $0x44] sm:$0xf]
        %v1773 = vld [vmem:[%s1754 + $0x48] sm:$0xf]
        %v1774 = vld [vmem:[%s1754 + $0x4c] sm:$0xf]
        %v1775 = vld [vmem:[%s1754 + $0x50] sm:$0xf]
        %v1776 = vld [vmem:[%s1754 + $0x54] sm:$0xf]
        %v1777 = vld [vmem:[%s1754 + $0x58] sm:$0xf]
        %v1778 = vld [vmem:[%s1754 + $0x5c] sm:$0xf]
        %v1779 = vld [vmem:[%s1754 + $0x60] sm:$0xf]
        %v1780 = vld [vmem:[%s1754 + $0x64] sm:$0xf]
        %v1781 = vld [vmem:[%s1754 + $0x68] sm:$0xf]
        %v1782 = vld [vmem:[%s1754 + $0x6c] sm:$0xf]
        %v1783 = vld [vmem:[%s1754 + $0x70] sm:$0xf]
        %v1784 = vld [vmem:[%s1754 + $0x74] sm:$0xf]
        %v1785 = vld [vmem:[%s1754 + $0x78] sm:$0xf]
        %v1786 = vld [vmem:[%s1754 + $0x7c] sm:$0xf]
        %v1810 = vunpack.c.l.b16 %v1698
        %v1811 = vunpack.c.h.b16 %v1698
        %v1812 = vunpack.c.l.b16 %v1699
        %v1813 = vunpack.c.h.b16 %v1699
        %v1814 = vunpack.c.l.b16 %v1700
        %v1815 = vunpack.c.h.b16 %v1700
        %v1816 = vunpack.c.l.b16 %v1701
        %v1817 = vunpack.c.h.b16 %v1701
        %v1818 = vunpack.c.l.b16 %v1702
        %v1819 = vunpack.c.h.b16 %v1702
        %v1820 = vunpack.c.l.b16 %v1703
        %v1821 = vunpack.c.h.b16 %v1703
        %v1822 = vunpack.c.l.b16 %v1704
        %v1823 = vunpack.c.h.b16 %v1704
        %v1824 = vunpack.c.l.b16 %v1705
        %v1825 = vunpack.c.h.b16 %v1705
        %v1826 = vunpack.c.l.b16 %v1706
        %v1827 = vunpack.c.h.b16 %v1706
        %v1828 = vunpack.c.l.b16 %v1707
        %v1829 = vunpack.c.h.b16 %v1707
        %v1830 = vunpack.c.l.b16 %v1708
        %v1831 = vunpack.c.h.b16 %v1708
        %v1832 = vunpack.c.l.b16 %v1709
        %v1833 = vunpack.c.h.b16 %v1709
        %v1834 = vunpack.c.l.b16 %v1710
        %v1835 = vunpack.c.h.b16 %v1710
        %v1836 = vunpack.c.l.b16 %v1711
        %v1837 = vunpack.c.h.b16 %v1711
        %v1838 = vunpack.c.l.b16 %v1712
        %v1839 = vunpack.c.h.b16 %v1712
        %v1840 = vunpack.c.l.b16 %v1713
        %v1841 = vunpack.c.h.b16 %v1713
        %v1842 = vunpack.c.l.b16 %v1714
        %v1843 = vunpack.c.h.b16 %v1714
        %v1844 = vunpack.c.l.b16 %v1715
        %v1845 = vunpack.c.h.b16 %v1715
        %v1846 = vunpack.c.l.b16 %v1716
        %v1847 = vunpack.c.h.b16 %v1716
        %v1848 = vunpack.c.l.b16 %v1717
        %v1849 = vunpack.c.h.b16 %v1717
        %v1850 = vunpack.c.l.b16 %v1718
        %v1851 = vunpack.c.h.b16 %v1718
        %v1852 = vunpack.c.l.b16 %v1719
        %v1853 = vunpack.c.h.b16 %v1719
        %v1854 = vunpack.c.l.b16 %v1753
        %v1855 = vunpack.c.h.b16 %v1753
        %v1856 = vpack.c.b16 %v1812, %v1810
        %v1857 = vpack.c.b16 %v1813, %v1811
        %v1858 = vpack.c.b16 %v1816, %v1814
        %v1859 = vpack.c.b16 %v1817, %v1815
        %v1860 = vpack.c.b16 %v1820, %v1818
        %v1861 = vpack.c.b16 %v1821, %v1819
        %v1862 = vpack.c.b16 %v1824, %v1822
        %v1863 = vpack.c.b16 %v1825, %v1823
        %v1864 = vpack.c.b16 %v1828, %v1826
        %v1865 = vpack.c.b16 %v1829, %v1827
        %v1866 = vpack.c.b16 %v1832, %v1830
        %v1867 = vpack.c.b16 %v1833, %v1831
        %v1868 = vpack.c.b16 %v1836, %v1834
        %v1869 = vpack.c.b16 %v1837, %v1835
        %v1870 = vpack.c.b16 %v1840, %v1838
        %v1871 = vpack.c.b16 %v1841, %v1839
        %v1872 = vpack.c.b16 %v1844, %v1842
        %v1873 = vpack.c.b16 %v1845, %v1843
        %v1874 = vpack.c.b16 %v1848, %v1846
        %v1875 = vpack.c.b16 %v1849, %v1847
        %v1876 = vpack.c.b16 %v1852, %v1850
        %v1877 = vpack.c.b16 %v1853, %v1851
        %v1878 = vpack.c.b16 %v1854, %v1854
        %v1879 = vpack.c.b16 %v1855, %v1855
        %vm1880 = vsmask.f32 7424
        %v1882 = vshrl.u32 %v1856, 16
        %v1884 = vshll.u32 %v1856, 16
        %v1886 = vrot.slane %v1884, 1
        %v1887 = vor.u32 %v1882, %v1886
        %v1889 = vshll.u32 %v1858, 16
        %v1891 = vrot.slane %v1889, 1
        %v1892 = vsel %vm1880, %v1887, %v1891
        %v1894 = vshrl.u32 %v1857, 16
        %v1896 = vshll.u32 %v1857, 16
        %v1898 = vrot.slane %v1896, 1
        %v1899 = vor.u32 %v1894, %v1898
        %v1901 = vshll.u32 %v1859, 16
        %v1903 = vrot.slane %v1901, 1
        %v1904 = vsel %vm1880, %v1899, %v1903
        %v1905 = vshrl.u32 %v1858, 16
        %v1907 = vor.u32 %v1905, %v1891
        %v1909 = vshll.u32 %v1860, 16
        %v1911 = vrot.slane %v1909, 1
        %v1912 = vsel %vm1880, %v1907, %v1911
        %v1913 = vshrl.u32 %v1859, 16
        %v1915 = vor.u32 %v1913, %v1903
        %v1917 = vshll.u32 %v1861, 16
        %v1919 = vrot.slane %v1917, 1
        %v1920 = vsel %vm1880, %v1915, %v1919
        %v1921 = vshrl.u32 %v1860, 16
        %v1923 = vor.u32 %v1921, %v1911
        %v1925 = vshll.u32 %v1862, 16
        %v1927 = vrot.slane %v1925, 1
        %v1928 = vsel %vm1880, %v1923, %v1927
        %v1929 = vshrl.u32 %v1861, 16
        %v1931 = vor.u32 %v1929, %v1919
        %v1933 = vshll.u32 %v1863, 16
        %v1935 = vrot.slane %v1933, 1
        %v1936 = vsel %vm1880, %v1931, %v1935
        %v1937 = vshrl.u32 %v1862, 16
        %v1939 = vor.u32 %v1937, %v1927
        %v1941 = vshll.u32 %v1864, 16
        %v1943 = vrot.slane %v1941, 1
        %v1944 = vsel %vm1880, %v1939, %v1943
        %v1945 = vshrl.u32 %v1863, 16
        %v1947 = vor.u32 %v1945, %v1935
        %v1949 = vshll.u32 %v1865, 16
        %v1951 = vrot.slane %v1949, 1
        %v1952 = vsel %vm1880, %v1947, %v1951
        %v1953 = vshrl.u32 %v1864, 16
        %v1955 = vor.u32 %v1953, %v1943
        %v1957 = vshll.u32 %v1866, 16
        %v1959 = vrot.slane %v1957, 1
        %v1960 = vsel %vm1880, %v1955, %v1959
        %v1961 = vshrl.u32 %v1865, 16
        %v1963 = vor.u32 %v1961, %v1951
        %v1965 = vshll.u32 %v1867, 16
        %v1967 = vrot.slane %v1965, 1
        %v1968 = vsel %vm1880, %v1963, %v1967
        %v1969 = vshrl.u32 %v1866, 16
        %v1971 = vor.u32 %v1969, %v1959
        %v1973 = vshll.u32 %v1868, 16
        %v1975 = vrot.slane %v1973, 1
        %v1976 = vsel %vm1880, %v1971, %v1975
        %v1977 = vshrl.u32 %v1867, 16
        %v1979 = vor.u32 %v1977, %v1967
        %v1981 = vshll.u32 %v1869, 16
        %v1983 = vrot.slane %v1981, 1
        %v1984 = vsel %vm1880, %v1979, %v1983
        %v1985 = vshrl.u32 %v1868, 16
        %v1987 = vor.u32 %v1985, %v1975
        %v1989 = vshll.u32 %v1870, 16
        %v1991 = vrot.slane %v1989, 1
        %v1992 = vsel %vm1880, %v1987, %v1991
        %v1993 = vshrl.u32 %v1869, 16
        %v1995 = vor.u32 %v1993, %v1983
        %v1997 = vshll.u32 %v1871, 16
        %v1999 = vrot.slane %v1997, 1
        %v2000 = vsel %vm1880, %v1995, %v1999
        %v2001 = vshrl.u32 %v1870, 16
        %v2003 = vor.u32 %v2001, %v1991
        %v2005 = vshll.u32 %v1872, 16
        %v2007 = vrot.slane %v2005, 1
        %v2008 = vsel %vm1880, %v2003, %v2007
        %v2009 = vshrl.u32 %v1871, 16
        %v2011 = vor.u32 %v2009, %v1999
        %v2013 = vshll.u32 %v1873, 16
        %v2015 = vrot.slane %v2013, 1
        %v2016 = vsel %vm1880, %v2011, %v2015
        %v2017 = vshrl.u32 %v1872, 16
        %v2019 = vor.u32 %v2017, %v2007
        %v2021 = vshll.u32 %v1874, 16
        %v2023 = vrot.slane %v2021, 1
        %v2024 = vsel %vm1880, %v2019, %v2023
        %v2025 = vshrl.u32 %v1873, 16
        %v2027 = vor.u32 %v2025, %v2015
        %v2029 = vshll.u32 %v1875, 16
        %v2031 = vrot.slane %v2029, 1
        %v2032 = vsel %vm1880, %v2027, %v2031
        %v2033 = vshrl.u32 %v1874, 16
        %v2035 = vor.u32 %v2033, %v2023
        %v2037 = vshll.u32 %v1876, 16
        %v2039 = vrot.slane %v2037, 1
        %v2040 = vsel %vm1880, %v2035, %v2039
        %v2041 = vshrl.u32 %v1875, 16
        %v2043 = vor.u32 %v2041, %v2031
        %v2045 = vshll.u32 %v1877, 16
        %v2047 = vrot.slane %v2045, 1
        %v2048 = vsel %vm1880, %v2043, %v2047
        %v2049 = vshrl.u32 %v1876, 16
        %v2051 = vor.u32 %v2049, %v2039
        %v2053 = vshll.u32 %v1878, 16
        %v2055 = vrot.slane %v2053, 1
        %v2056 = vsel %vm1880, %v2051, %v2055
        %v2057 = vshrl.u32 %v1877, 16
        %v2059 = vor.u32 %v2057, %v2047
        %v2061 = vshll.u32 %v1879, 16
        %v2063 = vrot.slane %v2061, 1
        %v2064 = vsel %vm1880, %v2059, %v2063
        %v2065 = vshrl.u32 %v1878, 16
        %v2067 = vor.u32 %v2065, %v2055
        %v2068 = vshrl.u32 %v1879, 16
        %v2070 = vor.u32 %v2068, %v2063
        %v2127 = vunpack.c.l.b16 %v1755
        %v2128 = vunpack.c.l.b16 %v1756
        %v2129 = vunpack.c.l.b16 %v1757
        %v2130 = vunpack.c.l.b16 %v1758
        %v2131 = vunpack.c.l.b16 %v1759
        %v2132 = vunpack.c.l.b16 %v1760
        %v2133 = vunpack.c.l.b16 %v1761
        %v2134 = vunpack.c.l.b16 %v1762
        %v2135 = vunpack.c.l.b16 %v1763
        %v2136 = vunpack.c.l.b16 %v1764
        %v2137 = vunpack.c.l.b16 %v1765
        %v2138 = vunpack.c.l.b16 %v1766
        %v2139 = vunpack.c.l.b16 %v1767
        %v2140 = vunpack.c.l.b16 %v1768
        %v2141 = vunpack.c.l.b16 %v1769
        %v2142 = vunpack.c.l.b16 %v1770
        %v2143 = vunpack.c.l.b16 %v1771
        %v2144 = vunpack.c.l.b16 %v1772
        %v2145 = vunpack.c.l.b16 %v1773
        %v2146 = vunpack.c.l.b16 %v1774
        %v2147 = vunpack.c.l.b16 %v1775
        %v2148 = vunpack.c.l.b16 %v1776
        %v2149 = vunpack.c.l.b16 %v1777
        %v2150 = vunpack.c.l.b16 %v1778
        %v2151 = vunpack.c.l.b16 %v1779
        %v2152 = vunpack.c.l.b16 %v1780
        %v2153 = vunpack.c.l.b16 %v1781
        %v2154 = vunpack.c.l.b16 %v1782
        %v2155 = vunpack.c.l.b16 %v1783
        %v2156 = vunpack.c.l.b16 %v1784
        %v2157 = vunpack.c.l.b16 %v1785
        %v2158 = vunpack.c.l.b16 %v1786
        %v2159 = vpack.c.b16 %v2128, %v2127
        %v2160 = vpack.c.b16 %v2130, %v2129
        %v2161 = vpack.c.b16 %v2132, %v2131
        %v2162 = vpack.c.b16 %v2134, %v2133
        %v2163 = vpack.c.b16 %v2136, %v2135
        %v2164 = vpack.c.b16 %v2138, %v2137
        %v2165 = vpack.c.b16 %v2140, %v2139
        %v2166 = vpack.c.b16 %v2142, %v2141
        %v2167 = vpack.c.b16 %v2144, %v2143
        %v2168 = vpack.c.b16 %v2146, %v2145
        %v2169 = vpack.c.b16 %v2148, %v2147
        %v2170 = vpack.c.b16 %v2150, %v2149
        %v2171 = vpack.c.b16 %v2152, %v2151
        %v2172 = vpack.c.b16 %v2154, %v2153
        %v2173 = vpack.c.b16 %v2156, %v2155
        %v2174 = vpack.c.b16 %v2158, %v2157
        %2191 = vmatprep.subr.bf16.mxu0 0
        %2192 = vmatpush1.bf16.msra.mxu0 %v2166
        %2193 = vmatprep.subr.bf16.mxu0 0
        %2194 = vmatpush1.bf16.msra.mxu0 %v2165
        %2195 = vmatprep.subr.bf16.mxu0 0
        %2196 = vmatpush1.bf16.msra.mxu0 %v2164
        %2197 = vmatprep.subr.bf16.mxu0 0
        %2198 = vmatpush1.bf16.msra.mxu0 %v2163
        %2199 = vmatprep.subr.bf16.mxu0 0
        %2200 = vmatpush1.bf16.msra.mxu0 %v2162
        %2201 = vmatprep.subr.bf16.mxu0 0
        %2202 = vmatpush1.bf16.msra.mxu0 %v2161
        %2203 = vmatprep.subr.bf16.mxu0 0
        %2204 = vmatpush1.bf16.msra.mxu0 %v2160
        %2205 = vmatprep.subr.bf16.mxu0 0
        %2206 = vmatpush1.bf16.msra.mxu0 %v2159
        %2207 = vmatprep.subr.bf16.mxu0 0
        %2208 = vmatpush2.bf16.msra.mxu0 %v2174
        %2209 = vmatprep.subr.bf16.mxu0 0
        %2210 = vmatpush2.bf16.msra.mxu0 %v2173
        %2211 = vmatprep.subr.bf16.mxu0 0
        %2212 = vmatpush2.bf16.msra.mxu0 %v2172
        %2213 = vmatprep.subr.bf16.mxu0 0
        %2214 = vmatpush2.bf16.msra.mxu0 %v2171
        %2215 = vmatprep.subr.bf16.mxu0 0
        %2216 = vmatpush2.bf16.msra.mxu0 %v2170
        %2217 = vmatprep.subr.bf16.mxu0 0
        %2218 = vmatpush2.bf16.msra.mxu0 %v2169
        %2219 = vmatprep.subr.bf16.mxu0 0
        %2220 = vmatpush2.bf16.msra.mxu0 %v2168
        %2221 = vmatprep.subr.bf16.mxu0 0
        %2222 = vmatpush2.bf16.msra.mxu0 %v2167
        %2223 = vmatprep.mubr.bf16.mxu0 %v1904
        %2224 = vmatmul.mubr.bf16.gmra.mxu0 %v1892
        %v2225 = vpop.f32.mrf.mxu0
        %v2226 = vadd.f32 0.0, %v2225
        %v2227 = vpop.f32.mrf.mxu0
        %v2228 = vpop.f32.mrf.mxu0
        %v2229 = vadd.f32 0.0, %v2228
        %v2230 = vpop.f32.mrf.mxu0
        %2231 = vmatprep.mubr.bf16.mxu0 %v1920
        %2232 = vmatmul.mubr.bf16.gmra.mxu0 %v1912
        %v2233 = vpop.f32.mrf.mxu0
        %v2234 = vadd.f32 0.0, %v2233
        %v2235 = vpop.f32.mrf.mxu0
        %v2236 = vpop.f32.mrf.mxu0
        %v2237 = vadd.f32 0.0, %v2236
        %v2238 = vpop.f32.mrf.mxu0
        %2239 = vmatprep.mubr.bf16.mxu0 %v1936
        %2240 = vmatmul.mubr.bf16.gmra.mxu0 %v1928
        %v2241 = vpop.f32.mrf.mxu0
        %v2242 = vadd.f32 0.0, %v2241
        %v2243 = vpop.f32.mrf.mxu0
        %v2244 = vpop.f32.mrf.mxu0
        %v2245 = vadd.f32 0.0, %v2244
        %v2246 = vpop.f32.mrf.mxu0
        %2247 = vmatprep.mubr.bf16.mxu0 %v1952
        %2248 = vmatmul.mubr.bf16.gmra.mxu0 %v1944
        %v2249 = vpop.f32.mrf.mxu0
        %v2250 = vadd.f32 0.0, %v2249
        %v2251 = vpop.f32.mrf.mxu0
        %v2252 = vpop.f32.mrf.mxu0
        %v2253 = vadd.f32 0.0, %v2252
        %v2254 = vpop.f32.mrf.mxu0
        %2255 = vmatprep.mubr.bf16.mxu0 %v1968
        %2256 = vmatmul.mubr.bf16.gmra.mxu0 %v1960
        %v2257 = vpop.f32.mrf.mxu0
        %v2258 = vadd.f32 0.0, %v2257
        %v2259 = vpop.f32.mrf.mxu0
        %v2260 = vpop.f32.mrf.mxu0
        %v2261 = vadd.f32 0.0, %v2260
        %v2262 = vpop.f32.mrf.mxu0
        %2263 = vmatprep.mubr.bf16.mxu0 %v1984
        %2264 = vmatmul.mubr.bf16.gmra.mxu0 %v1976
        %v2265 = vpop.f32.mrf.mxu0
        %v2266 = vadd.f32 0.0, %v2265
        %v2267 = vpop.f32.mrf.mxu0
        %v2268 = vpop.f32.mrf.mxu0
        %v2269 = vadd.f32 0.0, %v2268
        %v2270 = vpop.f32.mrf.mxu0
        %2271 = vmatprep.mubr.bf16.mxu0 %v2000
        %2272 = vmatmul.mubr.bf16.gmra.mxu0 %v1992
        %v2273 = vpop.f32.mrf.mxu0
        %v2274 = vadd.f32 0.0, %v2273
        %v2275 = vpop.f32.mrf.mxu0
        %v2276 = vpop.f32.mrf.mxu0
        %v2277 = vadd.f32 0.0, %v2276
        %v2278 = vpop.f32.mrf.mxu0
        %2279 = vmatprep.mubr.bf16.mxu0 %v2016
        %2280 = vmatmul.mubr.bf16.gmra.mxu0 %v2008
        %v2281 = vpop.f32.mrf.mxu0
        %v2282 = vadd.f32 0.0, %v2281
        %v2283 = vpop.f32.mrf.mxu0
        %v2284 = vpop.f32.mrf.mxu0
        %v2285 = vadd.f32 0.0, %v2284
        %v2286 = vpop.f32.mrf.mxu0
        %2287 = vmatprep.mubr.bf16.mxu0 %v2032
        %2288 = vmatmul.mubr.bf16.gmra.mxu0 %v2024
        %v2289 = vpop.f32.mrf.mxu0
        %v2290 = vadd.f32 0.0, %v2289
        %v2291 = vpop.f32.mrf.mxu0
        %v2292 = vpop.f32.mrf.mxu0
        %v2293 = vadd.f32 0.0, %v2292
        %v2294 = vpop.f32.mrf.mxu0
        %2295 = vmatprep.mubr.bf16.mxu0 %v2048
        %2296 = vmatmul.mubr.bf16.gmra.mxu0 %v2040
        %v2297 = vpop.f32.mrf.mxu0
        %v2298 = vadd.f32 0.0, %v2297
        %v2299 = vpop.f32.mrf.mxu0
        %v2300 = vpop.f32.mrf.mxu0
        %v2301 = vadd.f32 0.0, %v2300
        %v2302 = vpop.f32.mrf.mxu0
        %2303 = vmatprep.mubr.bf16.mxu0 %v2064
        %2304 = vmatmul.mubr.bf16.gmra.mxu0 %v2056
        %v2305 = vpop.f32.mrf.mxu0
        %v2306 = vadd.f32 0.0, %v2305
        %v2307 = vpop.f32.mrf.mxu0
        %v2308 = vpop.f32.mrf.mxu0
        %v2309 = vadd.f32 0.0, %v2308
        %v2310 = vpop.f32.mrf.mxu0
        %2311 = vmatprep.mubr.bf16.mxu0 %v2070
        %2312 = vmatmul.mubr.bf16.gmra.mxu0 %v2067
        %v2313 = vpop.f32.mrf.mxu0
        %v2314 = vadd.f32 0.0, %v2313
        %v2315 = vpop.f32.mrf.mxu0
        %v2316 = vpop.f32.mrf.mxu0
        %v2317 = vpop.f32.mrf.mxu0
        %2318 = vdwg.mxu0
        %v2320 = vunpack.c.l.b16 %v1720
        %v2321 = vunpack.c.h.b16 %v1720
        %v2322 = vpack.c.b16 %v2320, %v2320
        %v2323 = vpack.c.b16 %v2321, %v2321
        %v2380 = vunpack.c.l.b16 %v1721
        %v2381 = vunpack.c.l.b16 %v1722
        %v2382 = vunpack.c.l.b16 %v1723
        %v2383 = vunpack.c.l.b16 %v1724
        %v2384 = vunpack.c.l.b16 %v1725
        %v2385 = vunpack.c.l.b16 %v1726
        %v2386 = vunpack.c.l.b16 %v1727
        %v2387 = vunpack.c.l.b16 %v1728
        %v2388 = vunpack.c.l.b16 %v1729
        %v2389 = vunpack.c.l.b16 %v1730
        %v2390 = vunpack.c.l.b16 %v1731
        %v2391 = vunpack.c.l.b16 %v1732
        %v2392 = vunpack.c.l.b16 %v1733
        %v2393 = vunpack.c.l.b16 %v1734
        %v2394 = vunpack.c.l.b16 %v1735
        %v2395 = vunpack.c.l.b16 %v1736
        %v2396 = vunpack.c.l.b16 %v1737
        %v2397 = vunpack.c.l.b16 %v1738
        %v2398 = vunpack.c.l.b16 %v1739
        %v2399 = vunpack.c.l.b16 %v1740
        %v2400 = vunpack.c.l.b16 %v1741
        %v2401 = vunpack.c.l.b16 %v1742
        %v2402 = vunpack.c.l.b16 %v1743
        %v2403 = vunpack.c.l.b16 %v1744
        %v2404 = vunpack.c.l.b16 %v1745
        %v2405 = vunpack.c.l.b16 %v1746
        %v2406 = vunpack.c.l.b16 %v1747
        %v2407 = vunpack.c.l.b16 %v1748
        %v2408 = vunpack.c.l.b16 %v1749
        %v2409 = vunpack.c.l.b16 %v1750
        %v2410 = vunpack.c.l.b16 %v1751
        %v2411 = vunpack.c.l.b16 %v1752
        %v2412 = vpack.c.b16 %v2381, %v2380
        %v2413 = vpack.c.b16 %v2383, %v2382
        %v2414 = vpack.c.b16 %v2385, %v2384
        %v2415 = vpack.c.b16 %v2387, %v2386
        %v2416 = vpack.c.b16 %v2389, %v2388
        %v2417 = vpack.c.b16 %v2391, %v2390
        %v2418 = vpack.c.b16 %v2393, %v2392
        %v2419 = vpack.c.b16 %v2395, %v2394
        %v2420 = vpack.c.b16 %v2397, %v2396
        %v2421 = vpack.c.b16 %v2399, %v2398
        %v2422 = vpack.c.b16 %v2401, %v2400
        %v2423 = vpack.c.b16 %v2403, %v2402
        %v2424 = vpack.c.b16 %v2405, %v2404
        %v2425 = vpack.c.b16 %v2407, %v2406
        %v2426 = vpack.c.b16 %v2409, %v2408
        %v2427 = vpack.c.b16 %v2411, %v2410
        %2444 = vmatprep.subr.bf16.mxu0 0
        %2445 = vmatpush1.bf16.msra.mxu0 %v2419
        %2446 = vmatprep.subr.bf16.mxu0 0
        %2447 = vmatpush1.bf16.msra.mxu0 %v2418
        %2448 = vmatprep.subr.bf16.mxu0 0
        %2449 = vmatpush1.bf16.msra.mxu0 %v2417
        %2450 = vmatprep.subr.bf16.mxu0 0
        %2451 = vmatpush1.bf16.msra.mxu0 %v2416
        %2452 = vmatprep.subr.bf16.mxu0 0
        %2453 = vmatpush1.bf16.msra.mxu0 %v2415
        %2454 = vmatprep.subr.bf16.mxu0 0
        %2455 = vmatpush1.bf16.msra.mxu0 %v2414
        %2456 = vmatprep.subr.bf16.mxu0 0
        %2457 = vmatpush1.bf16.msra.mxu0 %v2413
        %2458 = vmatprep.subr.bf16.mxu0 0
        %2459 = vmatpush1.bf16.msra.mxu0 %v2412
        %2460 = vmatprep.subr.bf16.mxu0 0
        %2461 = vmatpush2.bf16.msra.mxu0 %v2427
        %2462 = vmatprep.subr.bf16.mxu0 0
        %2463 = vmatpush2.bf16.msra.mxu0 %v2426
        %2464 = vmatprep.subr.bf16.mxu0 0
        %2465 = vmatpush2.bf16.msra.mxu0 %v2425
        %2466 = vmatprep.subr.bf16.mxu0 0
        %2467 = vmatpush2.bf16.msra.mxu0 %v2424
        %2468 = vmatprep.subr.bf16.mxu0 0
        %2469 = vmatpush2.bf16.msra.mxu0 %v2423
        %2470 = vmatprep.subr.bf16.mxu0 0
        %2471 = vmatpush2.bf16.msra.mxu0 %v2422
        %2472 = vmatprep.subr.bf16.mxu0 0
        %2473 = vmatpush2.bf16.msra.mxu0 %v2421
        %2474 = vmatprep.subr.bf16.mxu0 0
        %2475 = vmatpush2.bf16.msra.mxu0 %v2420
        %2476 = vmatprep.mubr.bf16.mxu0 %v1857
        %2477 = vmatmul.mubr.bf16.gmra.mxu0 %v1856
        %v2478 = vpop.f32.mrf.mxu0
        %v2479 = vadd.f32 %v2226, %v2478
        %v2480 = vpop.f32.mrf.mxu0
        %v2481 = vpop.f32.mrf.mxu0
        %v2482 = vadd.f32 %v2229, %v2481
        %v2483 = vpop.f32.mrf.mxu0
        %2484 = vmatprep.mubr.bf16.mxu0 %v1859
        %2485 = vmatmul.mubr.bf16.gmra.mxu0 %v1858
        %v2486 = vpop.f32.mrf.mxu0
        %v2487 = vadd.f32 %v2234, %v2486
        %v2488 = vpop.f32.mrf.mxu0
        %v2489 = vpop.f32.mrf.mxu0
        %v2490 = vadd.f32 %v2237, %v2489
        %v2491 = vpop.f32.mrf.mxu0
        %2492 = vmatprep.mubr.bf16.mxu0 %v1861
        %2493 = vmatmul.mubr.bf16.gmra.mxu0 %v1860
        %v2494 = vpop.f32.mrf.mxu0
        %v2495 = vadd.f32 %v2242, %v2494
        %v2496 = vpop.f32.mrf.mxu0
        %v2497 = vpop.f32.mrf.mxu0
        %v2498 = vadd.f32 %v2245, %v2497
        %v2499 = vpop.f32.mrf.mxu0
        %2500 = vmatprep.mubr.bf16.mxu0 %v1863
        %2501 = vmatmul.mubr.bf16.gmra.mxu0 %v1862
        %v2502 = vpop.f32.mrf.mxu0
        %v2503 = vadd.f32 %v2250, %v2502
        %v2504 = vpop.f32.mrf.mxu0
        %v2505 = vpop.f32.mrf.mxu0
        %v2506 = vadd.f32 %v2253, %v2505
        %v2507 = vpop.f32.mrf.mxu0
        %2508 = vmatprep.mubr.bf16.mxu0 %v1865
        %2509 = vmatmul.mubr.bf16.gmra.mxu0 %v1864
        %v2510 = vpop.f32.mrf.mxu0
        %v2511 = vadd.f32 %v2258, %v2510
        %v2512 = vpop.f32.mrf.mxu0
        %v2513 = vpop.f32.mrf.mxu0
        %v2514 = vadd.f32 %v2261, %v2513
        %v2515 = vpop.f32.mrf.mxu0
        %2516 = vmatprep.mubr.bf16.mxu0 %v1867
        %2517 = vmatmul.mubr.bf16.gmra.mxu0 %v1866
        %v2518 = vpop.f32.mrf.mxu0
        %v2519 = vadd.f32 %v2266, %v2518
        %v2520 = vpop.f32.mrf.mxu0
        %v2521 = vpop.f32.mrf.mxu0
        %v2522 = vadd.f32 %v2269, %v2521
        %v2523 = vpop.f32.mrf.mxu0
        %2524 = vmatprep.mubr.bf16.mxu0 %v1869
        %2525 = vmatmul.mubr.bf16.gmra.mxu0 %v1868
        %v2526 = vpop.f32.mrf.mxu0
        %v2527 = vadd.f32 %v2274, %v2526
        %v2528 = vpop.f32.mrf.mxu0
        %v2529 = vpop.f32.mrf.mxu0
        %v2530 = vadd.f32 %v2277, %v2529
        %v2531 = vpop.f32.mrf.mxu0
        %2532 = vmatprep.mubr.bf16.mxu0 %v1871
        %2533 = vmatmul.mubr.bf16.gmra.mxu0 %v1870
        %v2534 = vpop.f32.mrf.mxu0
        %v2535 = vadd.f32 %v2282, %v2534
        %v2536 = vpop.f32.mrf.mxu0
        %v2537 = vpop.f32.mrf.mxu0
        %v2538 = vadd.f32 %v2285, %v2537
        %v2539 = vpop.f32.mrf.mxu0
        %2540 = vmatprep.mubr.bf16.mxu0 %v1873
        %2541 = vmatmul.mubr.bf16.gmra.mxu0 %v1872
        %v2542 = vpop.f32.mrf.mxu0
        %v2543 = vadd.f32 %v2290, %v2542
        %v2544 = vpop.f32.mrf.mxu0
        %v2545 = vpop.f32.mrf.mxu0
        %v2546 = vadd.f32 %v2293, %v2545
        %v2547 = vpop.f32.mrf.mxu0
        %2548 = vmatprep.mubr.bf16.mxu0 %v1875
        %2549 = vmatmul.mubr.bf16.gmra.mxu0 %v1874
        %v2550 = vpop.f32.mrf.mxu0
        %v2551 = vadd.f32 %v2298, %v2550
        %v2552 = vpop.f32.mrf.mxu0
        %v2553 = vpop.f32.mrf.mxu0
        %v2554 = vadd.f32 %v2301, %v2553
        %v2555 = vpop.f32.mrf.mxu0
        %2556 = vmatprep.mubr.bf16.mxu0 %v1877
        %2557 = vmatmul.mubr.bf16.gmra.mxu0 %v1876
        %v2558 = vpop.f32.mrf.mxu0
        %v2559 = vadd.f32 %v2306, %v2558
        %v2560 = vpop.f32.mrf.mxu0
        %v2561 = vpop.f32.mrf.mxu0
        %v2562 = vadd.f32 %v2309, %v2561
        %v2563 = vpop.f32.mrf.mxu0
        %2564 = vmatprep.mubr.bf16.mxu0 %v2323
        %2565 = vmatmul.mubr.bf16.gmra.mxu0 %v2322
        %v2566 = vpop.f32.mrf.mxu0
        %v2567 = vadd.f32 %v2314, %v2566
        %v2568 = vpop.f32.mrf.mxu0
        %v2569 = vpop.f32.mrf.mxu0
        %v2570 = vpop.f32.mrf.mxu0
        %2571 = vdwg.mxu0
        %v2572 = vld [vmem:[%s0] sm:$0xee]
        %s2573 = scalar_lea.vmem %s1630, 256 [#allocation2]
        %v2574 = vld [vmem:[%s2573] sm:$0xf]
        %v2575 = vld [vmem:[%s2573 + $0x4] sm:$0xf]
        %v2576 = vld [vmem:[%s2573 + $0x8] sm:$0xf]
        %v2577 = vld [vmem:[%s2573 + $0xc] sm:$0xf]
        %v2578 = vld [vmem:[%s2573 + $0x10] sm:$0xf]
        %v2579 = vld [vmem:[%s2573 + $0x14] sm:$0xf]
        %v2580 = vld [vmem:[%s2573 + $0x18] sm:$0xf]
        %v2581 = vld [vmem:[%s2573 + $0x1c] sm:$0xf]
        %v2582 = vld [vmem:[%s2573 + $0x20] sm:$0xf]
        %v2583 = vld [vmem:[%s2573 + $0x24] sm:$0xf]
        %v2584 = vld [vmem:[%s2573 + $0x28] sm:$0xf]
        %v2585 = vld [vmem:[%s2573 + $0x2c] sm:$0xf]
        %v2586 = vld [vmem:[%s2573 + $0x30] sm:$0xf]
        %v2587 = vld [vmem:[%s2573 + $0x34] sm:$0xf]
        %v2588 = vld [vmem:[%s2573 + $0x38] sm:$0xf]
        %v2589 = vld [vmem:[%s2573 + $0x3c] sm:$0xf]
        %v2590 = vld [vmem:[%s2573 + $0x40] sm:$0xf]
        %v2591 = vld [vmem:[%s2573 + $0x44] sm:$0xf]
        %v2592 = vld [vmem:[%s2573 + $0x48] sm:$0xf]
        %v2593 = vld [vmem:[%s2573 + $0x4c] sm:$0xf]
        %v2594 = vld [vmem:[%s2573 + $0x50] sm:$0xf]
        %v2595 = vld [vmem:[%s2573 + $0x54] sm:$0xf]
        %v2596 = vld [vmem:[%s2573 + $0x58] sm:$0xf]
        %v2597 = vld [vmem:[%s2573 + $0x5c] sm:$0xf]
        %v2598 = vld [vmem:[%s2573 + $0x60] sm:$0xf]
        %v2599 = vld [vmem:[%s2573 + $0x64] sm:$0xf]
        %v2600 = vld [vmem:[%s2573 + $0x68] sm:$0xf]
        %v2601 = vld [vmem:[%s2573 + $0x6c] sm:$0xf]
        %v2602 = vld [vmem:[%s2573 + $0x70] sm:$0xf]
        %v2603 = vld [vmem:[%s2573 + $0x74] sm:$0xf]
        %v2604 = vld [vmem:[%s2573 + $0x78] sm:$0xf]
        %v2605 = vld [vmem:[%s2573 + $0x7c] sm:$0xf]
        %v2607 = vunpack.c.l.b16 %v2572
        %v2608 = vunpack.c.h.b16 %v2572
        %v2609 = vpack.c.b16 %v1812, %v2607
        %v2610 = vpack.c.b16 %v1813, %v2608
        %vm2611 = vcmask 1046528
        %v2612 = vrot.slane %v2609, 1
        %v2613 = vrot.slane %v1858, 1
        %v2614 = vsel %vm2611, %v2612, %v2613
        %v2615 = vrot.slane %v2610, 1
        %v2616 = vrot.slane %v1859, 1
        %v2617 = vsel %vm2611, %v2615, %v2616
        %v2618 = vrot.slane %v1860, 1
        %v2619 = vsel %vm2611, %v2613, %v2618
        %v2620 = vrot.slane %v1861, 1
        %v2621 = vsel %vm2611, %v2616, %v2620
        %v2622 = vrot.slane %v1862, 1
        %v2623 = vsel %vm2611, %v2618, %v2622
        %v2624 = vrot.slane %v1863, 1
        %v2625 = vsel %vm2611, %v2620, %v2624
        %v2626 = vrot.slane %v1864, 1
        %v2627 = vsel %vm2611, %v2622, %v2626
        %v2628 = vrot.slane %v1865, 1
        %v2629 = vsel %vm2611, %v2624, %v2628
        %v2630 = vrot.slane %v1866, 1
        %v2631 = vsel %vm2611, %v2626, %v2630
        %v2632 = vrot.slane %v1867, 1
        %v2633 = vsel %vm2611, %v2628, %v2632
        %v2634 = vrot.slane %v1868, 1
        %v2635 = vsel %vm2611, %v2630, %v2634
        %v2636 = vrot.slane %v1869, 1
        %v2637 = vsel %vm2611, %v2632, %v2636
        %v2638 = vrot.slane %v1870, 1
        %v2639 = vsel %vm2611, %v2634, %v2638
        %v2640 = vrot.slane %v1871, 1
        %v2641 = vsel %vm2611, %v2636, %v2640
        %v2642 = vrot.slane %v1872, 1
        %v2643 = vsel %vm2611, %v2638, %v2642
        %v2644 = vrot.slane %v1873, 1
        %v2645 = vsel %vm2611, %v2640, %v2644
        %v2646 = vrot.slane %v1874, 1
        %v2647 = vsel %vm2611, %v2642, %v2646
        %v2648 = vrot.slane %v1875, 1
        %v2649 = vsel %vm2611, %v2644, %v2648
        %v2650 = vrot.slane %v1876, 1
        %v2651 = vsel %vm2611, %v2646, %v2650
        %v2652 = vrot.slane %v1877, 1
        %v2653 = vsel %vm2611, %v2648, %v2652
        %v2654 = vrot.slane %v1878, 1
        %v2655 = vsel %vm2611, %v2650, %v2654
        %v2656 = vrot.slane %v1879, 1
        %v2657 = vsel %vm2611, %v2652, %v2656
        %v2714 = vunpack.c.l.b16 %v2574
        %v2715 = vunpack.c.l.b16 %v2575
        %v2716 = vunpack.c.l.b16 %v2576
        %v2717 = vunpack.c.l.b16 %v2577
        %v2718 = vunpack.c.l.b16 %v2578
        %v2719 = vunpack.c.l.b16 %v2579
        %v2720 = vunpack.c.l.b16 %v2580
        %v2721 = vunpack.c.l.b16 %v2581
        %v2722 = vunpack.c.l.b16 %v2582
        %v2723 = vunpack.c.l.b16 %v2583
        %v2724 = vunpack.c.l.b16 %v2584
        %v2725 = vunpack.c.l.b16 %v2585
        %v2726 = vunpack.c.l.b16 %v2586
        %v2727 = vunpack.c.l.b16 %v2587
        %v2728 = vunpack.c.l.b16 %v2588
        %v2729 = vunpack.c.l.b16 %v2589
        %v2730 = vunpack.c.l.b16 %v2590
        %v2731 = vunpack.c.l.b16 %v2591
        %v2732 = vunpack.c.l.b16 %v2592
        %v2733 = vunpack.c.l.b16 %v2593
        %v2734 = vunpack.c.l.b16 %v2594
        %v2735 = vunpack.c.l.b16 %v2595
        %v2736 = vunpack.c.l.b16 %v2596
        %v2737 = vunpack.c.l.b16 %v2597
        %v2738 = vunpack.c.l.b16 %v2598
        %v2739 = vunpack.c.l.b16 %v2599
        %v2740 = vunpack.c.l.b16 %v2600
        %v2741 = vunpack.c.l.b16 %v2601
        %v2742 = vunpack.c.l.b16 %v2602
        %v2743 = vunpack.c.l.b16 %v2603
        %v2744 = vunpack.c.l.b16 %v2604
        %v2745 = vunpack.c.l.b16 %v2605
        %v2746 = vpack.c.b16 %v2715, %v2714
        %v2747 = vpack.c.b16 %v2717, %v2716
        %v2748 = vpack.c.b16 %v2719, %v2718
        %v2749 = vpack.c.b16 %v2721, %v2720
        %v2750 = vpack.c.b16 %v2723, %v2722
        %v2751 = vpack.c.b16 %v2725, %v2724
        %v2752 = vpack.c.b16 %v2727, %v2726
        %v2753 = vpack.c.b16 %v2729, %v2728
        %v2754 = vpack.c.b16 %v2731, %v2730
        %v2755 = vpack.c.b16 %v2733, %v2732
        %v2756 = vpack.c.b16 %v2735, %v2734
        %v2757 = vpack.c.b16 %v2737, %v2736
        %v2758 = vpack.c.b16 %v2739, %v2738
        %v2759 = vpack.c.b16 %v2741, %v2740
        %v2760 = vpack.c.b16 %v2743, %v2742
        %v2761 = vpack.c.b16 %v2745, %v2744
        %2778 = vmatprep.subr.bf16.mxu0 0
        %2779 = vmatpush1.bf16.msra.mxu0 %v2753
        %2780 = vmatprep.subr.bf16.mxu0 0
        %2781 = vmatpush1.bf16.msra.mxu0 %v2752
        %2782 = vmatprep.subr.bf16.mxu0 0
        %2783 = vmatpush1.bf16.msra.mxu0 %v2751
        %2784 = vmatprep.subr.bf16.mxu0 0
        %2785 = vmatpush1.bf16.msra.mxu0 %v2750
        %2786 = vmatprep.subr.bf16.mxu0 0
        %2787 = vmatpush1.bf16.msra.mxu0 %v2749
        %2788 = vmatprep.subr.bf16.mxu0 0
        %2789 = vmatpush1.bf16.msra.mxu0 %v2748
        %2790 = vmatprep.subr.bf16.mxu0 0
        %2791 = vmatpush1.bf16.msra.mxu0 %v2747
        %2792 = vmatprep.subr.bf16.mxu0 0
        %2793 = vmatpush1.bf16.msra.mxu0 %v2746
        %2794 = vmatprep.subr.bf16.mxu0 0
        %2795 = vmatpush2.bf16.msra.mxu0 %v2761
        %2796 = vmatprep.subr.bf16.mxu0 0
        %2797 = vmatpush2.bf16.msra.mxu0 %v2760
        %2798 = vmatprep.subr.bf16.mxu0 0
        %2799 = vmatpush2.bf16.msra.mxu0 %v2759
        %2800 = vmatprep.subr.bf16.mxu0 0
        %2801 = vmatpush2.bf16.msra.mxu0 %v2758
        %2802 = vmatprep.subr.bf16.mxu0 0
        %2803 = vmatpush2.bf16.msra.mxu0 %v2757
        %2804 = vmatprep.subr.bf16.mxu0 0
        %2805 = vmatpush2.bf16.msra.mxu0 %v2756
        %2806 = vmatprep.subr.bf16.mxu0 0
        %2807 = vmatpush2.bf16.msra.mxu0 %v2755
        %2808 = vmatprep.subr.bf16.mxu0 0
        %2809 = vmatpush2.bf16.msra.mxu0 %v2754
        %2810 = vmatprep.mubr.bf16.mxu0 %v2617
        %2811 = vmatmul.mubr.bf16.gmra.mxu0 %v2614
        %v2812 = vpop.f32.mrf.mxu0
        %v2813 = vadd.f32 0.0, %v2812
        %v2814 = vpop.f32.mrf.mxu0
        %v2815 = vpop.f32.mrf.mxu0
        %v2816 = vadd.f32 0.0, %v2815
        %v2817 = vpop.f32.mrf.mxu0
        %2818 = vmatprep.mubr.bf16.mxu0 %v2621
        %2819 = vmatmul.mubr.bf16.gmra.mxu0 %v2619
        %v2820 = vpop.f32.mrf.mxu0
        %v2821 = vadd.f32 0.0, %v2820
        %v2822 = vpop.f32.mrf.mxu0
        %v2823 = vpop.f32.mrf.mxu0
        %v2824 = vadd.f32 0.0, %v2823
        %v2825 = vpop.f32.mrf.mxu0
        %2826 = vmatprep.mubr.bf16.mxu0 %v2625
        %2827 = vmatmul.mubr.bf16.gmra.mxu0 %v2623
        %v2828 = vpop.f32.mrf.mxu0
        %v2829 = vadd.f32 0.0, %v2828
        %v2830 = vpop.f32.mrf.mxu0
        %v2831 = vpop.f32.mrf.mxu0
        %v2832 = vadd.f32 0.0, %v2831
        %v2833 = vpop.f32.mrf.mxu0
        %2834 = vmatprep.mubr.bf16.mxu0 %v2629
        %2835 = vmatmul.mubr.bf16.gmra.mxu0 %v2627
        %v2836 = vpop.f32.mrf.mxu0
        %v2837 = vadd.f32 0.0, %v2836
        %v2838 = vpop.f32.mrf.mxu0
        %v2839 = vpop.f32.mrf.mxu0
        %v2840 = vadd.f32 0.0, %v2839
        %v2841 = vpop.f32.mrf.mxu0
        %2842 = vmatprep.mubr.bf16.mxu0 %v2633
        %2843 = vmatmul.mubr.bf16.gmra.mxu0 %v2631
        %v2844 = vpop.f32.mrf.mxu0
        %v2845 = vadd.f32 0.0, %v2844
        %v2846 = vpop.f32.mrf.mxu0
        %v2847 = vpop.f32.mrf.mxu0
        %v2848 = vadd.f32 0.0, %v2847
        %v2849 = vpop.f32.mrf.mxu0
        %2850 = vmatprep.mubr.bf16.mxu0 %v2637
        %2851 = vmatmul.mubr.bf16.gmra.mxu0 %v2635
        %v2852 = vpop.f32.mrf.mxu0
        %v2853 = vadd.f32 0.0, %v2852
        %v2854 = vpop.f32.mrf.mxu0
        %v2855 = vpop.f32.mrf.mxu0
        %v2856 = vadd.f32 0.0, %v2855
        %v2857 = vpop.f32.mrf.mxu0
        %2858 = vmatprep.mubr.bf16.mxu0 %v2641
        %2859 = vmatmul.mubr.bf16.gmra.mxu0 %v2639
        %v2860 = vpop.f32.mrf.mxu0
        %v2861 = vadd.f32 0.0, %v2860
        %v2862 = vpop.f32.mrf.mxu0
        %v2863 = vpop.f32.mrf.mxu0
        %v2864 = vadd.f32 0.0, %v2863
        %v2865 = vpop.f32.mrf.mxu0
        %2866 = vmatprep.mubr.bf16.mxu0 %v2645
        %2867 = vmatmul.mubr.bf16.gmra.mxu0 %v2643
        %v2868 = vpop.f32.mrf.mxu0
        %v2869 = vadd.f32 0.0, %v2868
        %v2870 = vpop.f32.mrf.mxu0
        %v2871 = vpop.f32.mrf.mxu0
        %v2872 = vadd.f32 0.0, %v2871
        %v2873 = vpop.f32.mrf.mxu0
        %2874 = vmatprep.mubr.bf16.mxu0 %v2649
        %2875 = vmatmul.mubr.bf16.gmra.mxu0 %v2647
        %v2876 = vpop.f32.mrf.mxu0
        %v2877 = vadd.f32 0.0, %v2876
        %v2878 = vpop.f32.mrf.mxu0
        %v2879 = vpop.f32.mrf.mxu0
        %v2880 = vadd.f32 0.0, %v2879
        %v2881 = vpop.f32.mrf.mxu0
        %2882 = vmatprep.mubr.bf16.mxu0 %v2653
        %2883 = vmatmul.mubr.bf16.gmra.mxu0 %v2651
        %v2884 = vpop.f32.mrf.mxu0
        %v2885 = vadd.f32 0.0, %v2884
        %v2886 = vpop.f32.mrf.mxu0
        %v2887 = vpop.f32.mrf.mxu0
        %v2888 = vadd.f32 0.0, %v2887
        %v2889 = vpop.f32.mrf.mxu0
        %2890 = vmatprep.mubr.bf16.mxu0 %v2657
        %2891 = vmatmul.mubr.bf16.gmra.mxu0 %v2655
        %v2892 = vpop.f32.mrf.mxu0
        %v2893 = vadd.f32 0.0, %v2892
        %v2894 = vpop.f32.mrf.mxu0
        %v2895 = vpop.f32.mrf.mxu0
        %v2896 = vadd.f32 0.0, %v2895
        %v2897 = vpop.f32.mrf.mxu0
        %2898 = vmatprep.mubr.bf16.mxu0 %v2656
        %2899 = vmatmul.mubr.bf16.gmra.mxu0 %v2654
        %v2900 = vpop.f32.mrf.mxu0
        %v2901 = vadd.f32 0.0, %v2900
        %v2902 = vpop.f32.mrf.mxu0
        %v2903 = vpop.f32.mrf.mxu0
        %v2904 = vpop.f32.mrf.mxu0
        %2905 = vdwg.mxu0
        %v2906 = vadd.f32 %v2479, %v2813
        %v2907 = vadd.f32 %v2482, %v2816
        %v2908 = vadd.f32 %v2487, %v2821
        %v2909 = vadd.f32 %v2490, %v2824
        %v2910 = vadd.f32 %v2495, %v2829
        %v2911 = vadd.f32 %v2498, %v2832
        %v2912 = vadd.f32 %v2503, %v2837
        %v2913 = vadd.f32 %v2506, %v2840
        %v2914 = vadd.f32 %v2511, %v2845
        %v2915 = vadd.f32 %v2514, %v2848
        %v2916 = vadd.f32 %v2519, %v2853
        %v2917 = vadd.f32 %v2522, %v2856
        %v2918 = vadd.f32 %v2527, %v2861
        %v2919 = vadd.f32 %v2530, %v2864
        %v2920 = vadd.f32 %v2535, %v2869
        %v2921 = vadd.f32 %v2538, %v2872
        %v2922 = vadd.f32 %v2543, %v2877
        %v2923 = vadd.f32 %v2546, %v2880
        %v2924 = vadd.f32 %v2551, %v2885
        %v2925 = vadd.f32 %v2554, %v2888
        %v2926 = vadd.f32 %v2559, %v2893
        %v2927 = vadd.f32 %v2562, %v2896
        %v2928 = vadd.f32 %v2567, %v2901
        %v2929 = vld [vmem:[%s0 + $0x8] sm:$0xee]
        %v2930 = vld [vmem:[%s0 + $0x10] sm:$0xff]
        %v2931 = vld [vmem:[%s0 + $0x18] sm:$0xff]
        %v2932 = vld [vmem:[%s0 + $0x20] sm:$0xff]
        %v2933 = vld [vmem:[%s0 + $0x28] sm:$0xff]
        %v2934 = vld [vmem:[%s0 + $0x30] sm:$0xff]
        %v2935 = vld [vmem:[%s0 + $0x38] sm:$0xff]
        %v2936 = vld [vmem:[%s0 + $0x40] sm:$0xff]
        %v2937 = vld [vmem:[%s0 + $0x48] sm:$0xff]
        %v2938 = vld [vmem:[%s0 + $0x50] sm:$0xff]
        %v2939 = vld [vmem:[%s0 + $0x58] sm:$0xff]
        %v2940 = vld [vmem:[%s0 + $0x60] sm:$0xff]
        %v2941 = vld [vmem:[%s0 + $0x68] sm:$0xff]
        %v2942 = vld [vmem:[%s0 + $0x70] sm:$0xff]
        %v2943 = vld [vmem:[%s0 + $0x78] sm:$0xff]
        %v2944 = vld [vmem:[%s0 + $0x80] sm:$0xff]
        %v2945 = vld [vmem:[%s0 + $0x88] sm:$0xff]
        %v2946 = vld [vmem:[%s0 + $0x90] sm:$0xff]
        %v2947 = vld [vmem:[%s0 + $0x98] sm:$0xff]
        %v2948 = vld [vmem:[%s0 + $0xa0] sm:$0xff]
        %v2949 = vld [vmem:[%s0 + $0xa8] sm:$0xff]
        %v2950 = vld [vmem:[%s0 + $0xb0] sm:$0xff]
        %v2951 = vld [vmem:[%s0 + $0xb8] sm:$0x33]
        %s2952 = scalar_lea.vmem %s1630, 384 [#allocation2]
        %v2953 = vld [vmem:[%s2952] sm:$0xf]
        %v2954 = vld [vmem:[%s2952 + $0x4] sm:$0xf]
        %v2955 = vld [vmem:[%s2952 + $0x8] sm:$0xf]
        %v2956 = vld [vmem:[%s2952 + $0xc] sm:$0xf]
        %v2957 = vld [vmem:[%s2952 + $0x10] sm:$0xf]
        %v2958 = vld [vmem:[%s2952 + $0x14] sm:$0xf]
        %v2959 = vld [vmem:[%s2952 + $0x18] sm:$0xf]
        %v2960 = vld [vmem:[%s2952 + $0x1c] sm:$0xf]
        %v2961 = vld [vmem:[%s2952 + $0x20] sm:$0xf]
        %v2962 = vld [vmem:[%s2952 + $0x24] sm:$0xf]
        %v2963 = vld [vmem:[%s2952 + $0x28] sm:$0xf]
        %v2964 = vld [vmem:[%s2952 + $0x2c] sm:$0xf]
        %v2965 = vld [vmem:[%s2952 + $0x30] sm:$0xf]
        %v2966 = vld [vmem:[%s2952 + $0x34] sm:$0xf]
        %v2967 = vld [vmem:[%s2952 + $0x38] sm:$0xf]
        %v2968 = vld [vmem:[%s2952 + $0x3c] sm:$0xf]
        %v2969 = vld [vmem:[%s2952 + $0x40] sm:$0xf]
        %v2970 = vld [vmem:[%s2952 + $0x44] sm:$0xf]
        %v2971 = vld [vmem:[%s2952 + $0x48] sm:$0xf]
        %v2972 = vld [vmem:[%s2952 + $0x4c] sm:$0xf]
        %v2973 = vld [vmem:[%s2952 + $0x50] sm:$0xf]
        %v2974 = vld [vmem:[%s2952 + $0x54] sm:$0xf]
        %v2975 = vld [vmem:[%s2952 + $0x58] sm:$0xf]
        %v2976 = vld [vmem:[%s2952 + $0x5c] sm:$0xf]
        %v2977 = vld [vmem:[%s2952 + $0x60] sm:$0xf]
        %v2978 = vld [vmem:[%s2952 + $0x64] sm:$0xf]
        %v2979 = vld [vmem:[%s2952 + $0x68] sm:$0xf]
        %v2980 = vld [vmem:[%s2952 + $0x6c] sm:$0xf]
        %v2981 = vld [vmem:[%s2952 + $0x70] sm:$0xf]
        %v2982 = vld [vmem:[%s2952 + $0x74] sm:$0xf]
        %v2983 = vld [vmem:[%s2952 + $0x78] sm:$0xf]
        %v2984 = vld [vmem:[%s2952 + $0x7c] sm:$0xf]
        %v3008 = vunpack.c.l.b16 %v2929
        %v3009 = vunpack.c.h.b16 %v2929
        %v3010 = vunpack.c.l.b16 %v2930
        %v3011 = vunpack.c.h.b16 %v2930
        %v3012 = vunpack.c.l.b16 %v2931
        %v3013 = vunpack.c.h.b16 %v2931
        %v3014 = vunpack.c.l.b16 %v2932
        %v3015 = vunpack.c.h.b16 %v2932
        %v3016 = vunpack.c.l.b16 %v2933
        %v3017 = vunpack.c.h.b16 %v2933
        %v3018 = vunpack.c.l.b16 %v2934
        %v3019 = vunpack.c.h.b16 %v2934
        %v3020 = vunpack.c.l.b16 %v2935
        %v3021 = vunpack.c.h.b16 %v2935
        %v3022 = vunpack.c.l.b16 %v2936
        %v3023 = vunpack.c.h.b16 %v2936
        %v3024 = vunpack.c.l.b16 %v2937
        %v3025 = vunpack.c.h.b16 %v2937
        %v3026 = vunpack.c.l.b16 %v2938
        %v3027 = vunpack.c.h.b16 %v2938
        %v3028 = vunpack.c.l.b16 %v2939
        %v3029 = vunpack.c.h.b16 %v2939
        %v3030 = vunpack.c.l.b16 %v2940
        %v3031 = vunpack.c.h.b16 %v2940
        %v3032 = vunpack.c.l.b16 %v2941
        %v3033 = vunpack.c.h.b16 %v2941
        %v3034 = vunpack.c.l.b16 %v2942
        %v3035 = vunpack.c.h.b16 %v2942
        %v3036 = vunpack.c.l.b16 %v2943
        %v3037 = vunpack.c.h.b16 %v2943
        %v3038 = vunpack.c.l.b16 %v2944
        %v3039 = vunpack.c.h.b16 %v2944
        %v3040 = vunpack.c.l.b16 %v2945
        %v3041 = vunpack.c.h.b16 %v2945
        %v3042 = vunpack.c.l.b16 %v2946
        %v3043 = vunpack.c.h.b16 %v2946
        %v3044 = vunpack.c.l.b16 %v2947
        %v3045 = vunpack.c.h.b16 %v2947
        %v3046 = vunpack.c.l.b16 %v2948
        %v3047 = vunpack.c.h.b16 %v2948
        %v3048 = vunpack.c.l.b16 %v2949
        %v3049 = vunpack.c.h.b16 %v2949
        %v3050 = vunpack.c.l.b16 %v2950
        %v3051 = vunpack.c.h.b16 %v2950
        %v3052 = vunpack.c.l.b16 %v2951
        %v3053 = vunpack.c.h.b16 %v2951
        %v3054 = vpack.c.b16 %v3010, %v3008
        %v3055 = vpack.c.b16 %v3011, %v3009
        %v3056 = vpack.c.b16 %v3014, %v3012
        %v3057 = vpack.c.b16 %v3015, %v3013
        %v3058 = vpack.c.b16 %v3018, %v3016
        %v3059 = vpack.c.b16 %v3019, %v3017
        %v3060 = vpack.c.b16 %v3022, %v3020
        %v3061 = vpack.c.b16 %v3023, %v3021
        %v3062 = vpack.c.b16 %v3026, %v3024
        %v3063 = vpack.c.b16 %v3027, %v3025
        %v3064 = vpack.c.b16 %v3030, %v3028
        %v3065 = vpack.c.b16 %v3031, %v3029
        %v3066 = vpack.c.b16 %v3034, %v3032
        %v3067 = vpack.c.b16 %v3035, %v3033
        %v3068 = vpack.c.b16 %v3038, %v3036
        %v3069 = vpack.c.b16 %v3039, %v3037
        %v3070 = vpack.c.b16 %v3042, %v3040
        %v3071 = vpack.c.b16 %v3043, %v3041
        %v3072 = vpack.c.b16 %v3046, %v3044
        %v3073 = vpack.c.b16 %v3047, %v3045
        %v3074 = vpack.c.b16 %v3050, %v3048
        %v3075 = vpack.c.b16 %v3051, %v3049
        %v3076 = vpack.c.b16 %v3052, %v3052
        %v3077 = vpack.c.b16 %v3053, %v3053
        %v3078 = vrot.slane %v3054, 1
        %v3079 = vrot.slane %v3056, 1
        %v3080 = vsel %vm2611, %v3078, %v3079
        %v3081 = vrot.slane %v3055, 1
        %v3082 = vrot.slane %v3057, 1
        %v3083 = vsel %vm2611, %v3081, %v3082
        %v3084 = vrot.slane %v3058, 1
        %v3085 = vsel %vm2611, %v3079, %v3084
        %v3086 = vrot.slane %v3059, 1
        %v3087 = vsel %vm2611, %v3082, %v3086
        %v3088 = vrot.slane %v3060, 1
        %v3089 = vsel %vm2611, %v3084, %v3088
        %v3090 = vrot.slane %v3061, 1
        %v3091 = vsel %vm2611, %v3086, %v3090
        %v3092 = vrot.slane %v3062, 1
        %v3093 = vsel %vm2611, %v3088, %v3092
        %v3094 = vrot.slane %v3063, 1
        %v3095 = vsel %vm2611, %v3090, %v3094
        %v3096 = vrot.slane %v3064, 1
        %v3097 = vsel %vm2611, %v3092, %v3096
        %v3098 = vrot.slane %v3065, 1
        %v3099 = vsel %vm2611, %v3094, %v3098
        %v3100 = vrot.slane %v3066, 1
        %v3101 = vsel %vm2611, %v3096, %v3100
        %v3102 = vrot.slane %v3067, 1
        %v3103 = vsel %vm2611, %v3098, %v3102
        %v3104 = vrot.slane %v3068, 1
        %v3105 = vsel %vm2611, %v3100, %v3104
        %v3106 = vrot.slane %v3069, 1
        %v3107 = vsel %vm2611, %v3102, %v3106
        %v3108 = vrot.slane %v3070, 1
        %v3109 = vsel %vm2611, %v3104, %v3108
        %v3110 = vrot.slane %v3071, 1
        %v3111 = vsel %vm2611, %v3106, %v3110
        %v3112 = vrot.slane %v3072, 1
        %v3113 = vsel %vm2611, %v3108, %v3112
        %v3114 = vrot.slane %v3073, 1
        %v3115 = vsel %vm2611, %v3110, %v3114
        %v3116 = vrot.slane %v3074, 1
        %v3117 = vsel %vm2611, %v3112, %v3116
        %v3118 = vrot.slane %v3075, 1
        %v3119 = vsel %vm2611, %v3114, %v3118
        %v3120 = vrot.slane %v3076, 1
        %v3121 = vsel %vm2611, %v3116, %v3120
        %v3122 = vrot.slane %v3077, 1
        %v3123 = vsel %vm2611, %v3118, %v3122
        %v3180 = vunpack.c.l.b16 %v2953
        %v3181 = vunpack.c.l.b16 %v2954
        %v3182 = vunpack.c.l.b16 %v2955
        %v3183 = vunpack.c.l.b16 %v2956
        %v3184 = vunpack.c.l.b16 %v2957
        %v3185 = vunpack.c.l.b16 %v2958
        %v3186 = vunpack.c.l.b16 %v2959
        %v3187 = vunpack.c.l.b16 %v2960
        %v3188 = vunpack.c.l.b16 %v2961
        %v3189 = vunpack.c.l.b16 %v2962
        %v3190 = vunpack.c.l.b16 %v2963
        %v3191 = vunpack.c.l.b16 %v2964
        %v3192 = vunpack.c.l.b16 %v2965
        %v3193 = vunpack.c.l.b16 %v2966
        %v3194 = vunpack.c.l.b16 %v2967
        %v3195 = vunpack.c.l.b16 %v2968
        %v3196 = vunpack.c.l.b16 %v2969
        %v3197 = vunpack.c.l.b16 %v2970
        %v3198 = vunpack.c.l.b16 %v2971
        %v3199 = vunpack.c.l.b16 %v2972
        %v3200 = vunpack.c.l.b16 %v2973
        %v3201 = vunpack.c.l.b16 %v2974
        %v3202 = vunpack.c.l.b16 %v2975
        %v3203 = vunpack.c.l.b16 %v2976
        %v3204 = vunpack.c.l.b16 %v2977
        %v3205 = vunpack.c.l.b16 %v2978
        %v3206 = vunpack.c.l.b16 %v2979
        %v3207 = vunpack.c.l.b16 %v2980
        %v3208 = vunpack.c.l.b16 %v2981
        %v3209 = vunpack.c.l.b16 %v2982
        %v3210 = vunpack.c.l.b16 %v2983
        %v3211 = vunpack.c.l.b16 %v2984
        %v3212 = vpack.c.b16 %v3181, %v3180
        %v3213 = vpack.c.b16 %v3183, %v3182
        %v3214 = vpack.c.b16 %v3185, %v3184
        %v3215 = vpack.c.b16 %v3187, %v3186
        %v3216 = vpack.c.b16 %v3189, %v3188
        %v3217 = vpack.c.b16 %v3191, %v3190
        %v3218 = vpack.c.b16 %v3193, %v3192
        %v3219 = vpack.c.b16 %v3195, %v3194
        %v3220 = vpack.c.b16 %v3197, %v3196
        %v3221 = vpack.c.b16 %v3199, %v3198
        %v3222 = vpack.c.b16 %v3201, %v3200
        %v3223 = vpack.c.b16 %v3203, %v3202
        %v3224 = vpack.c.b16 %v3205, %v3204
        %v3225 = vpack.c.b16 %v3207, %v3206
        %v3226 = vpack.c.b16 %v3209, %v3208
        %v3227 = vpack.c.b16 %v3211, %v3210
        %3244 = vmatprep.subr.bf16.mxu0 0
        %3245 = vmatpush1.bf16.msra.mxu0 %v3219
        %3246 = vmatprep.subr.bf16.mxu0 0
        %3247 = vmatpush1.bf16.msra.mxu0 %v3218
        %3248 = vmatprep.subr.bf16.mxu0 0
        %3249 = vmatpush1.bf16.msra.mxu0 %v3217
        %3250 = vmatprep.subr.bf16.mxu0 0
        %3251 = vmatpush1.bf16.msra.mxu0 %v3216
        %3252 = vmatprep.subr.bf16.mxu0 0
        %3253 = vmatpush1.bf16.msra.mxu0 %v3215
        %3254 = vmatprep.subr.bf16.mxu0 0
        %3255 = vmatpush1.bf16.msra.mxu0 %v3214
        %3256 = vmatprep.subr.bf16.mxu0 0
        %3257 = vmatpush1.bf16.msra.mxu0 %v3213
        %3258 = vmatprep.subr.bf16.mxu0 0
        %3259 = vmatpush1.bf16.msra.mxu0 %v3212
        %3260 = vmatprep.subr.bf16.mxu0 0
        %3261 = vmatpush2.bf16.msra.mxu0 %v3227
        %3262 = vmatprep.subr.bf16.mxu0 0
        %3263 = vmatpush2.bf16.msra.mxu0 %v3226
        %3264 = vmatprep.subr.bf16.mxu0 0
        %3265 = vmatpush2.bf16.msra.mxu0 %v3225
        %3266 = vmatprep.subr.bf16.mxu0 0
        %3267 = vmatpush2.bf16.msra.mxu0 %v3224
        %3268 = vmatprep.subr.bf16.mxu0 0
        %3269 = vmatpush2.bf16.msra.mxu0 %v3223
        %3270 = vmatprep.subr.bf16.mxu0 0
        %3271 = vmatpush2.bf16.msra.mxu0 %v3222
        %3272 = vmatprep.subr.bf16.mxu0 0
        %3273 = vmatpush2.bf16.msra.mxu0 %v3221
        %3274 = vmatprep.subr.bf16.mxu0 0
        %3275 = vmatpush2.bf16.msra.mxu0 %v3220
        %3276 = vmatprep.mubr.bf16.mxu0 %v3083
        %3277 = vmatmul.mubr.bf16.gmra.mxu0 %v3080
        %v3278 = vpop.f32.mrf.mxu0
        %v3279 = vadd.f32 0.0, %v3278
        %v3280 = vpop.f32.mrf.mxu0
        %v3281 = vpop.f32.mrf.mxu0
        %v3282 = vadd.f32 0.0, %v3281
        %v3283 = vpop.f32.mrf.mxu0
        %3284 = vmatprep.mubr.bf16.mxu0 %v3087
        %3285 = vmatmul.mubr.bf16.gmra.mxu0 %v3085
        %v3286 = vpop.f32.mrf.mxu0
        %v3287 = vadd.f32 0.0, %v3286
        %v3288 = vpop.f32.mrf.mxu0
        %v3289 = vpop.f32.mrf.mxu0
        %v3290 = vadd.f32 0.0, %v3289
        %v3291 = vpop.f32.mrf.mxu0
        %3292 = vmatprep.mubr.bf16.mxu0 %v3091
        %3293 = vmatmul.mubr.bf16.gmra.mxu0 %v3089
        %v3294 = vpop.f32.mrf.mxu0
        %v3295 = vadd.f32 0.0, %v3294
        %v3296 = vpop.f32.mrf.mxu0
        %v3297 = vpop.f32.mrf.mxu0
        %v3298 = vadd.f32 0.0, %v3297
        %v3299 = vpop.f32.mrf.mxu0
        %3300 = vmatprep.mubr.bf16.mxu0 %v3095
        %3301 = vmatmul.mubr.bf16.gmra.mxu0 %v3093
        %v3302 = vpop.f32.mrf.mxu0
        %v3303 = vadd.f32 0.0, %v3302
        %v3304 = vpop.f32.mrf.mxu0
        %v3305 = vpop.f32.mrf.mxu0
        %v3306 = vadd.f32 0.0, %v3305
        %v3307 = vpop.f32.mrf.mxu0
        %3308 = vmatprep.mubr.bf16.mxu0 %v3099
        %3309 = vmatmul.mubr.bf16.gmra.mxu0 %v3097
        %v3310 = vpop.f32.mrf.mxu0
        %v3311 = vadd.f32 0.0, %v3310
        %v3312 = vpop.f32.mrf.mxu0
        %v3313 = vpop.f32.mrf.mxu0
        %v3314 = vadd.f32 0.0, %v3313
        %v3315 = vpop.f32.mrf.mxu0
        %3316 = vmatprep.mubr.bf16.mxu0 %v3103
        %3317 = vmatmul.mubr.bf16.gmra.mxu0 %v3101
        %v3318 = vpop.f32.mrf.mxu0
        %v3319 = vadd.f32 0.0, %v3318
        %v3320 = vpop.f32.mrf.mxu0
        %v3321 = vpop.f32.mrf.mxu0
        %v3322 = vadd.f32 0.0, %v3321
        %v3323 = vpop.f32.mrf.mxu0
        %3324 = vmatprep.mubr.bf16.mxu0 %v3107
        %3325 = vmatmul.mubr.bf16.gmra.mxu0 %v3105
        %v3326 = vpop.f32.mrf.mxu0
        %v3327 = vadd.f32 0.0, %v3326
        %v3328 = vpop.f32.mrf.mxu0
        %v3329 = vpop.f32.mrf.mxu0
        %v3330 = vadd.f32 0.0, %v3329
        %v3331 = vpop.f32.mrf.mxu0
        %3332 = vmatprep.mubr.bf16.mxu0 %v3111
        %3333 = vmatmul.mubr.bf16.gmra.mxu0 %v3109
        %v3334 = vpop.f32.mrf.mxu0
        %v3335 = vadd.f32 0.0, %v3334
        %v3336 = vpop.f32.mrf.mxu0
        %v3337 = vpop.f32.mrf.mxu0
        %v3338 = vadd.f32 0.0, %v3337
        %v3339 = vpop.f32.mrf.mxu0
        %3340 = vmatprep.mubr.bf16.mxu0 %v3115
        %3341 = vmatmul.mubr.bf16.gmra.mxu0 %v3113
        %v3342 = vpop.f32.mrf.mxu0
        %v3343 = vadd.f32 0.0, %v3342
        %v3344 = vpop.f32.mrf.mxu0
        %v3345 = vpop.f32.mrf.mxu0
        %v3346 = vadd.f32 0.0, %v3345
        %v3347 = vpop.f32.mrf.mxu0
        %3348 = vmatprep.mubr.bf16.mxu0 %v3119
        %3349 = vmatmul.mubr.bf16.gmra.mxu0 %v3117
        %v3350 = vpop.f32.mrf.mxu0
        %v3351 = vadd.f32 0.0, %v3350
        %v3352 = vpop.f32.mrf.mxu0
        %v3353 = vpop.f32.mrf.mxu0
        %v3354 = vadd.f32 0.0, %v3353
        %v3355 = vpop.f32.mrf.mxu0
        %3356 = vmatprep.mubr.bf16.mxu0 %v3123
        %3357 = vmatmul.mubr.bf16.gmra.mxu0 %v3121
        %v3358 = vpop.f32.mrf.mxu0
        %v3359 = vadd.f32 0.0, %v3358
        %v3360 = vpop.f32.mrf.mxu0
        %v3361 = vpop.f32.mrf.mxu0
        %v3362 = vadd.f32 0.0, %v3361
        %v3363 = vpop.f32.mrf.mxu0
        %3364 = vmatprep.mubr.bf16.mxu0 %v3122
        %3365 = vmatmul.mubr.bf16.gmra.mxu0 %v3120
        %v3366 = vpop.f32.mrf.mxu0
        %v3367 = vadd.f32 0.0, %v3366
        %v3368 = vpop.f32.mrf.mxu0
        %v3369 = vpop.f32.mrf.mxu0
        %v3370 = vpop.f32.mrf.mxu0
        %3371 = vdwg.mxu0
        %v3372 = vadd.f32 %v2906, %v3279
        %v3373 = vadd.f32 %v2907, %v3282
        %v3374 = vadd.f32 %v2908, %v3287
        %v3375 = vadd.f32 %v2909, %v3290
        %v3376 = vadd.f32 %v2910, %v3295
        %v3377 = vadd.f32 %v2911, %v3298
        %v3378 = vadd.f32 %v2912, %v3303
        %v3379 = vadd.f32 %v2913, %v3306
        %v3380 = vadd.f32 %v2914, %v3311
        %v3381 = vadd.f32 %v2915, %v3314
        %v3382 = vadd.f32 %v2916, %v3319
        %v3383 = vadd.f32 %v2917, %v3322
        %v3384 = vadd.f32 %v2918, %v3327
        %v3385 = vadd.f32 %v2919, %v3330
        %v3386 = vadd.f32 %v2920, %v3335
        %v3387 = vadd.f32 %v2921, %v3338
        %v3388 = vadd.f32 %v2922, %v3343
        %v3389 = vadd.f32 %v2923, %v3346
        %v3390 = vadd.f32 %v2924, %v3351
        %v3391 = vadd.f32 %v2925, %v3354
        %v3392 = vadd.f32 %v2926, %v3359
        %v3393 = vadd.f32 %v2927, %v3362
        %v3394 = vadd.f32 %v2928, %v3367
        %v3395 = vld [vmem:[%s0 + $0xb8] sm:$0x77]
        %s3396 = scalar_lea.vmem %s1630, 512 [#allocation2]
        %v3397 = vld [vmem:[%s3396] sm:$0xf]
        %v3398 = vld [vmem:[%s3396 + $0x4] sm:$0xf]
        %v3399 = vld [vmem:[%s3396 + $0x8] sm:$0xf]
        %v3400 = vld [vmem:[%s3396 + $0xc] sm:$0xf]
        %v3401 = vld [vmem:[%s3396 + $0x10] sm:$0xf]
        %v3402 = vld [vmem:[%s3396 + $0x14] sm:$0xf]
        %v3403 = vld [vmem:[%s3396 + $0x18] sm:$0xf]
        %v3404 = vld [vmem:[%s3396 + $0x1c] sm:$0xf]
        %v3405 = vld [vmem:[%s3396 + $0x20] sm:$0xf]
        %v3406 = vld [vmem:[%s3396 + $0x24] sm:$0xf]
        %v3407 = vld [vmem:[%s3396 + $0x28] sm:$0xf]
        %v3408 = vld [vmem:[%s3396 + $0x2c] sm:$0xf]
        %v3409 = vld [vmem:[%s3396 + $0x30] sm:$0xf]
        %v3410 = vld [vmem:[%s3396 + $0x34] sm:$0xf]
        %v3411 = vld [vmem:[%s3396 + $0x38] sm:$0xf]
        %v3412 = vld [vmem:[%s3396 + $0x3c] sm:$0xf]
        %v3413 = vld [vmem:[%s3396 + $0x40] sm:$0xf]
        %v3414 = vld [vmem:[%s3396 + $0x44] sm:$0xf]
        %v3415 = vld [vmem:[%s3396 + $0x48] sm:$0xf]
        %v3416 = vld [vmem:[%s3396 + $0x4c] sm:$0xf]
        %v3417 = vld [vmem:[%s3396 + $0x50] sm:$0xf]
        %v3418 = vld [vmem:[%s3396 + $0x54] sm:$0xf]
        %v3419 = vld [vmem:[%s3396 + $0x58] sm:$0xf]
        %v3420 = vld [vmem:[%s3396 + $0x5c] sm:$0xf]
        %v3421 = vld [vmem:[%s3396 + $0x60] sm:$0xf]
        %v3422 = vld [vmem:[%s3396 + $0x64] sm:$0xf]
        %v3423 = vld [vmem:[%s3396 + $0x68] sm:$0xf]
        %v3424 = vld [vmem:[%s3396 + $0x6c] sm:$0xf]
        %v3425 = vld [vmem:[%s3396 + $0x70] sm:$0xf]
        %v3426 = vld [vmem:[%s3396 + $0x74] sm:$0xf]
        %v3427 = vld [vmem:[%s3396 + $0x78] sm:$0xf]
        %v3428 = vld [vmem:[%s3396 + $0x7c] sm:$0xf]
        %v3430 = vunpack.c.l.b16 %v3395
        %v3431 = vunpack.c.h.b16 %v3395
        %v3432 = vpack.c.b16 %v3430, %v3430
        %v3433 = vpack.c.b16 %v3431, %v3431
        %vm3434 = vsmask.f32 6400
        %v3436 = vshrl.u32 %v3054, 16
        %v3438 = vrot.slane %v3436, 1
        %v3439 = vshll.u32 %v3054, 16
        %v3441 = vrot.slane %v3439, 2
        %v3442 = vor.u32 %v3438, %v3441
        %v3444 = vshrl.u32 %v3056, 16
        %v3446 = vrot.slane %v3444, 1
        %v3447 = vshll.u32 %v3056, 16
        %v3449 = vrot.slane %v3447, 2
        %v3450 = vor.u32 %v3446, %v3449
        %v3451 = vsel %vm3434, %v3442, %v3450
        %v3453 = vshrl.u32 %v3055, 16
        %v3455 = vrot.slane %v3453, 1
        %v3456 = vshll.u32 %v3055, 16
        %v3458 = vrot.slane %v3456, 2
        %v3459 = vor.u32 %v3455, %v3458
        %v3461 = vshrl.u32 %v3057, 16
        %v3463 = vrot.slane %v3461, 1
        %v3464 = vshll.u32 %v3057, 16
        %v3466 = vrot.slane %v3464, 2
        %v3467 = vor.u32 %v3463, %v3466
        %v3468 = vsel %vm3434, %v3459, %v3467
        %v3470 = vshrl.u32 %v3058, 16
        %v3472 = vrot.slane %v3470, 1
        %v3473 = vshll.u32 %v3058, 16
        %v3475 = vrot.slane %v3473, 2
        %v3476 = vor.u32 %v3472, %v3475
        %v3477 = vsel %vm3434, %v3450, %v3476
        %v3479 = vshrl.u32 %v3059, 16
        %v3481 = vrot.slane %v3479, 1
        %v3482 = vshll.u32 %v3059, 16
        %v3484 = vrot.slane %v3482, 2
        %v3485 = vor.u32 %v3481, %v3484
        %v3486 = vsel %vm3434, %v3467, %v3485
        %v3488 = vshrl.u32 %v3060, 16
        %v3490 = vrot.slane %v3488, 1
        %v3491 = vshll.u32 %v3060, 16
        %v3493 = vrot.slane %v3491, 2
        %v3494 = vor.u32 %v3490, %v3493
        %v3495 = vsel %vm3434, %v3476, %v3494
        %v3497 = vshrl.u32 %v3061, 16
        %v3499 = vrot.slane %v3497, 1
        %v3500 = vshll.u32 %v3061, 16
        %v3502 = vrot.slane %v3500, 2
        %v3503 = vor.u32 %v3499, %v3502
        %v3504 = vsel %vm3434, %v3485, %v3503
        %v3506 = vshrl.u32 %v3062, 16
        %v3508 = vrot.slane %v3506, 1
        %v3509 = vshll.u32 %v3062, 16
        %v3511 = vrot.slane %v3509, 2
        %v3512 = vor.u32 %v3508, %v3511
        %v3513 = vsel %vm3434, %v3494, %v3512
        %v3515 = vshrl.u32 %v3063, 16
        %v3517 = vrot.slane %v3515, 1
        %v3518 = vshll.u32 %v3063, 16
        %v3520 = vrot.slane %v3518, 2
        %v3521 = vor.u32 %v3517, %v3520
        %v3522 = vsel %vm3434, %v3503, %v3521
        %v3524 = vshrl.u32 %v3064, 16
        %v3526 = vrot.slane %v3524, 1
        %v3527 = vshll.u32 %v3064, 16
        %v3529 = vrot.slane %v3527, 2
        %v3530 = vor.u32 %v3526, %v3529
        %v3531 = vsel %vm3434, %v3512, %v3530
        %v3533 = vshrl.u32 %v3065, 16
        %v3535 = vrot.slane %v3533, 1
        %v3536 = vshll.u32 %v3065, 16
        %v3538 = vrot.slane %v3536, 2
        %v3539 = vor.u32 %v3535, %v3538
        %v3540 = vsel %vm3434, %v3521, %v3539
        %v3542 = vshrl.u32 %v3066, 16
        %v3544 = vrot.slane %v3542, 1
        %v3545 = vshll.u32 %v3066, 16
        %v3547 = vrot.slane %v3545, 2
        %v3548 = vor.u32 %v3544, %v3547
        %v3549 = vsel %vm3434, %v3530, %v3548
        %v3551 = vshrl.u32 %v3067, 16
        %v3553 = vrot.slane %v3551, 1
        %v3554 = vshll.u32 %v3067, 16
        %v3556 = vrot.slane %v3554, 2
        %v3557 = vor.u32 %v3553, %v3556
        %v3558 = vsel %vm3434, %v3539, %v3557
        %v3560 = vshrl.u32 %v3068, 16
        %v3562 = vrot.slane %v3560, 1
        %v3563 = vshll.u32 %v3068, 16
        %v3565 = vrot.slane %v3563, 2
        %v3566 = vor.u32 %v3562, %v3565
        %v3567 = vsel %vm3434, %v3548, %v3566
        %v3569 = vshrl.u32 %v3069, 16
        %v3571 = vrot.slane %v3569, 1
        %v3572 = vshll.u32 %v3069, 16
        %v3574 = vrot.slane %v3572, 2
        %v3575 = vor.u32 %v3571, %v3574
        %v3576 = vsel %vm3434, %v3557, %v3575
        %v3578 = vshrl.u32 %v3070, 16
        %v3580 = vrot.slane %v3578, 1
        %v3581 = vshll.u32 %v3070, 16
        %v3583 = vrot.slane %v3581, 2
        %v3584 = vor.u32 %v3580, %v3583
        %v3585 = vsel %vm3434, %v3566, %v3584
        %v3587 = vshrl.u32 %v3071, 16
        %v3589 = vrot.slane %v3587, 1
        %v3590 = vshll.u32 %v3071, 16
        %v3592 = vrot.slane %v3590, 2
        %v3593 = vor.u32 %v3589, %v3592
        %v3594 = vsel %vm3434, %v3575, %v3593
        %v3596 = vshrl.u32 %v3072, 16
        %v3598 = vrot.slane %v3596, 1
        %v3599 = vshll.u32 %v3072, 16
        %v3601 = vrot.slane %v3599, 2
        %v3602 = vor.u32 %v3598, %v3601
        %v3603 = vsel %vm3434, %v3584, %v3602
        %v3605 = vshrl.u32 %v3073, 16
        %v3607 = vrot.slane %v3605, 1
        %v3608 = vshll.u32 %v3073, 16
        %v3610 = vrot.slane %v3608, 2
        %v3611 = vor.u32 %v3607, %v3610
        %v3612 = vsel %vm3434, %v3593, %v3611
        %v3614 = vshrl.u32 %v3074, 16
        %v3616 = vrot.slane %v3614, 1
        %v3617 = vshll.u32 %v3074, 16
        %v3619 = vrot.slane %v3617, 2
        %v3620 = vor.u32 %v3616, %v3619
        %v3621 = vsel %vm3434, %v3602, %v3620
        %v3623 = vshrl.u32 %v3075, 16
        %v3625 = vrot.slane %v3623, 1
        %v3626 = vshll.u32 %v3075, 16
        %v3628 = vrot.slane %v3626, 2
        %v3629 = vor.u32 %v3625, %v3628
        %v3630 = vsel %vm3434, %v3611, %v3629
        %v3632 = vshrl.u32 %v3432, 16
        %v3634 = vrot.slane %v3632, 1
        %v3635 = vshll.u32 %v3432, 16
        %v3637 = vrot.slane %v3635, 2
        %v3638 = vor.u32 %v3634, %v3637
        %v3639 = vsel %vm3434, %v3620, %v3638
        %v3641 = vshrl.u32 %v3433, 16
        %v3643 = vrot.slane %v3641, 1
        %v3644 = vshll.u32 %v3433, 16
        %v3646 = vrot.slane %v3644, 2
        %v3647 = vor.u32 %v3643, %v3646
        %v3648 = vsel %vm3434, %v3629, %v3647
        %v3705 = vunpack.c.l.b16 %v3397
        %v3706 = vunpack.c.l.b16 %v3398
        %v3707 = vunpack.c.l.b16 %v3399
        %v3708 = vunpack.c.l.b16 %v3400
        %v3709 = vunpack.c.l.b16 %v3401
        %v3710 = vunpack.c.l.b16 %v3402
        %v3711 = vunpack.c.l.b16 %v3403
        %v3712 = vunpack.c.l.b16 %v3404
        %v3713 = vunpack.c.l.b16 %v3405
        %v3714 = vunpack.c.l.b16 %v3406
        %v3715 = vunpack.c.l.b16 %v3407
        %v3716 = vunpack.c.l.b16 %v3408
        %v3717 = vunpack.c.l.b16 %v3409
        %v3718 = vunpack.c.l.b16 %v3410
        %v3719 = vunpack.c.l.b16 %v3411
        %v3720 = vunpack.c.l.b16 %v3412
        %v3721 = vunpack.c.l.b16 %v3413
        %v3722 = vunpack.c.l.b16 %v3414
        %v3723 = vunpack.c.l.b16 %v3415
        %v3724 = vunpack.c.l.b16 %v3416
        %v3725 = vunpack.c.l.b16 %v3417
        %v3726 = vunpack.c.l.b16 %v3418
        %v3727 = vunpack.c.l.b16 %v3419
        %v3728 = vunpack.c.l.b16 %v3420
        %v3729 = vunpack.c.l.b16 %v3421
        %v3730 = vunpack.c.l.b16 %v3422
        %v3731 = vunpack.c.l.b16 %v3423
        %v3732 = vunpack.c.l.b16 %v3424
        %v3733 = vunpack.c.l.b16 %v3425
        %v3734 = vunpack.c.l.b16 %v3426
        %v3735 = vunpack.c.l.b16 %v3427
        %v3736 = vunpack.c.l.b16 %v3428
        %v3737 = vpack.c.b16 %v3706, %v3705
        %v3738 = vpack.c.b16 %v3708, %v3707
        %v3739 = vpack.c.b16 %v3710, %v3709
        %v3740 = vpack.c.b16 %v3712, %v3711
        %v3741 = vpack.c.b16 %v3714, %v3713
        %v3742 = vpack.c.b16 %v3716, %v3715
        %v3743 = vpack.c.b16 %v3718, %v3717
        %v3744 = vpack.c.b16 %v3720, %v3719
        %v3745 = vpack.c.b16 %v3722, %v3721
        %v3746 = vpack.c.b16 %v3724, %v3723
        %v3747 = vpack.c.b16 %v3726, %v3725
        %v3748 = vpack.c.b16 %v3728, %v3727
        %v3749 = vpack.c.b16 %v3730, %v3729
        %v3750 = vpack.c.b16 %v3732, %v3731
        %v3751 = vpack.c.b16 %v3734, %v3733
        %v3752 = vpack.c.b16 %v3736, %v3735
        %3769 = vmatprep.subr.bf16.mxu0 0
        %3770 = vmatpush1.bf16.msra.mxu0 %v3744
        %3771 = vmatprep.subr.bf16.mxu0 0
        %3772 = vmatpush1.bf16.msra.mxu0 %v3743
        %3773 = vmatprep.subr.bf16.mxu0 0
        %3774 = vmatpush1.bf16.msra.mxu0 %v3742
        %3775 = vmatprep.subr.bf16.mxu0 0
        %3776 = vmatpush1.bf16.msra.mxu0 %v3741
        %3777 = vmatprep.subr.bf16.mxu0 0
        %3778 = vmatpush1.bf16.msra.mxu0 %v3740
        %3779 = vmatprep.subr.bf16.mxu0 0
        %3780 = vmatpush1.bf16.msra.mxu0 %v3739
        %3781 = vmatprep.subr.bf16.mxu0 0
        %3782 = vmatpush1.bf16.msra.mxu0 %v3738
        %3783 = vmatprep.subr.bf16.mxu0 0
        %3784 = vmatpush1.bf16.msra.mxu0 %v3737
        %3785 = vmatprep.subr.bf16.mxu0 0
        %3786 = vmatpush2.bf16.msra.mxu0 %v3752
        %3787 = vmatprep.subr.bf16.mxu0 0
        %3788 = vmatpush2.bf16.msra.mxu0 %v3751
        %3789 = vmatprep.subr.bf16.mxu0 0
        %3790 = vmatpush2.bf16.msra.mxu0 %v3750
        %3791 = vmatprep.subr.bf16.mxu0 0
        %3792 = vmatpush2.bf16.msra.mxu0 %v3749
        %3793 = vmatprep.subr.bf16.mxu0 0
        %3794 = vmatpush2.bf16.msra.mxu0 %v3748
        %3795 = vmatprep.subr.bf16.mxu0 0
        %3796 = vmatpush2.bf16.msra.mxu0 %v3747
        %3797 = vmatprep.subr.bf16.mxu0 0
        %3798 = vmatpush2.bf16.msra.mxu0 %v3746
        %3799 = vmatprep.subr.bf16.mxu0 0
        %3800 = vmatpush2.bf16.msra.mxu0 %v3745
        %3801 = vmatprep.mubr.bf16.mxu0 %v3468
        %3802 = vmatmul.mubr.bf16.gmra.mxu0 %v3451
        %v3803 = vpop.f32.mrf.mxu0
        %v3804 = vadd.f32 0.0, %v3803
        %v3805 = vpop.f32.mrf.mxu0
        %v3806 = vpop.f32.mrf.mxu0
        %v3807 = vadd.f32 0.0, %v3806
        %v3808 = vpop.f32.mrf.mxu0
        %3809 = vmatprep.mubr.bf16.mxu0 %v3486
        %3810 = vmatmul.mubr.bf16.gmra.mxu0 %v3477
        %v3811 = vpop.f32.mrf.mxu0
        %v3812 = vadd.f32 0.0, %v3811
        %v3813 = vpop.f32.mrf.mxu0
        %v3814 = vpop.f32.mrf.mxu0
        %v3815 = vadd.f32 0.0, %v3814
        %v3816 = vpop.f32.mrf.mxu0
        %3817 = vmatprep.mubr.bf16.mxu0 %v3504
        %3818 = vmatmul.mubr.bf16.gmra.mxu0 %v3495
        %v3819 = vpop.f32.mrf.mxu0
        %v3820 = vadd.f32 0.0, %v3819
        %v3821 = vpop.f32.mrf.mxu0
        %v3822 = vpop.f32.mrf.mxu0
        %v3823 = vadd.f32 0.0, %v3822
        %v3824 = vpop.f32.mrf.mxu0
        %3825 = vmatprep.mubr.bf16.mxu0 %v3522
        %3826 = vmatmul.mubr.bf16.gmra.mxu0 %v3513
        %v3827 = vpop.f32.mrf.mxu0
        %v3828 = vadd.f32 0.0, %v3827
        %v3829 = vpop.f32.mrf.mxu0
        %v3830 = vpop.f32.mrf.mxu0
        %v3831 = vadd.f32 0.0, %v3830
        %v3832 = vpop.f32.mrf.mxu0
        %3833 = vmatprep.mubr.bf16.mxu0 %v3540
        %3834 = vmatmul.mubr.bf16.gmra.mxu0 %v3531
        %v3835 = vpop.f32.mrf.mxu0
        %v3836 = vadd.f32 0.0, %v3835
        %v3837 = vpop.f32.mrf.mxu0
        %v3838 = vpop.f32.mrf.mxu0
        %v3839 = vadd.f32 0.0, %v3838
        %v3840 = vpop.f32.mrf.mxu0
        %3841 = vmatprep.mubr.bf16.mxu0 %v3558
        %3842 = vmatmul.mubr.bf16.gmra.mxu0 %v3549
        %v3843 = vpop.f32.mrf.mxu0
        %v3844 = vadd.f32 0.0, %v3843
        %v3845 = vpop.f32.mrf.mxu0
        %v3846 = vpop.f32.mrf.mxu0
        %v3847 = vadd.f32 0.0, %v3846
        %v3848 = vpop.f32.mrf.mxu0
        %3849 = vmatprep.mubr.bf16.mxu0 %v3576
        %3850 = vmatmul.mubr.bf16.gmra.mxu0 %v3567
        %v3851 = vpop.f32.mrf.mxu0
        %v3852 = vadd.f32 0.0, %v3851
        %v3853 = vpop.f32.mrf.mxu0
        %v3854 = vpop.f32.mrf.mxu0
        %v3855 = vadd.f32 0.0, %v3854
        %v3856 = vpop.f32.mrf.mxu0
        %3857 = vmatprep.mubr.bf16.mxu0 %v3594
        %3858 = vmatmul.mubr.bf16.gmra.mxu0 %v3585
        %v3859 = vpop.f32.mrf.mxu0
        %v3860 = vadd.f32 0.0, %v3859
        %v3861 = vpop.f32.mrf.mxu0
        %v3862 = vpop.f32.mrf.mxu0
        %v3863 = vadd.f32 0.0, %v3862
        %v3864 = vpop.f32.mrf.mxu0
        %3865 = vmatprep.mubr.bf16.mxu0 %v3612
        %3866 = vmatmul.mubr.bf16.gmra.mxu0 %v3603
        %v3867 = vpop.f32.mrf.mxu0
        %v3868 = vadd.f32 0.0, %v3867
        %v3869 = vpop.f32.mrf.mxu0
        %v3870 = vpop.f32.mrf.mxu0
        %v3871 = vadd.f32 0.0, %v3870
        %v3872 = vpop.f32.mrf.mxu0
        %3873 = vmatprep.mubr.bf16.mxu0 %v3630
        %3874 = vmatmul.mubr.bf16.gmra.mxu0 %v3621
        %v3875 = vpop.f32.mrf.mxu0
        %v3876 = vadd.f32 0.0, %v3875
        %v3877 = vpop.f32.mrf.mxu0
        %v3878 = vpop.f32.mrf.mxu0
        %v3879 = vadd.f32 0.0, %v3878
        %v3880 = vpop.f32.mrf.mxu0
        %3881 = vmatprep.mubr.bf16.mxu0 %v3648
        %3882 = vmatmul.mubr.bf16.gmra.mxu0 %v3639
        %v3883 = vpop.f32.mrf.mxu0
        %v3884 = vadd.f32 0.0, %v3883
        %v3885 = vpop.f32.mrf.mxu0
        %v3886 = vpop.f32.mrf.mxu0
        %v3887 = vadd.f32 0.0, %v3886
        %v3888 = vpop.f32.mrf.mxu0
        %3889 = vmatprep.mubr.bf16.mxu0 %v3647
        %3890 = vmatmul.mubr.bf16.gmra.mxu0 %v3638
        %v3891 = vpop.f32.mrf.mxu0
        %v3892 = vadd.f32 0.0, %v3891
        %v3893 = vpop.f32.mrf.mxu0
        %v3894 = vpop.f32.mrf.mxu0
        %v3895 = vpop.f32.mrf.mxu0
        %3896 = vdwg.mxu0
        %v3897 = vadd.f32 %v3372, %v3804
        %v3898 = vadd.f32 %v3373, %v3807
        %v3899 = vadd.f32 %v3374, %v3812
        %v3900 = vadd.f32 %v3375, %v3815
        %v3901 = vadd.f32 %v3376, %v3820
        %v3902 = vadd.f32 %v3377, %v3823
        %v3903 = vadd.f32 %v3378, %v3828
        %v3904 = vadd.f32 %v3379, %v3831
        %v3905 = vadd.f32 %v3380, %v3836
        %v3906 = vadd.f32 %v3381, %v3839
        %v3907 = vadd.f32 %v3382, %v3844
        %v3908 = vadd.f32 %v3383, %v3847
        %v3909 = vadd.f32 %v3384, %v3852
        %v3910 = vadd.f32 %v3385, %v3855
        %v3911 = vadd.f32 %v3386, %v3860
        %v3912 = vadd.f32 %v3387, %v3863
        %v3913 = vadd.f32 %v3388, %v3868
        %v3914 = vadd.f32 %v3389, %v3871
        %v3915 = vadd.f32 %v3390, %v3876
        %v3916 = vadd.f32 %v3391, %v3879
        %v3917 = vadd.f32 %v3392, %v3884
        %v3918 = vadd.f32 %v3393, %v3887
        %v3919 = vadd.f32 %v3394, %v3892
        %v3920 = vld [vmem:[%s0 + $0x8] sm:$0xcc]
        %s3921 = scalar_lea.vmem %s1630, 640 [#allocation2]
        %v3922 = vld [vmem:[%s3921] sm:$0xf]
        %v3923 = vld [vmem:[%s3921 + $0x4] sm:$0xf]
        %v3924 = vld [vmem:[%s3921 + $0x8] sm:$0xf]
        %v3925 = vld [vmem:[%s3921 + $0xc] sm:$0xf]
        %v3926 = vld [vmem:[%s3921 + $0x10] sm:$0xf]
        %v3927 = vld [vmem:[%s3921 + $0x14] sm:$0xf]
        %v3928 = vld [vmem:[%s3921 + $0x18] sm:$0xf]
        %v3929 = vld [vmem:[%s3921 + $0x1c] sm:$0xf]
        %v3930 = vld [vmem:[%s3921 + $0x20] sm:$0xf]
        %v3931 = vld [vmem:[%s3921 + $0x24] sm:$0xf]
        %v3932 = vld [vmem:[%s3921 + $0x28] sm:$0xf]
        %v3933 = vld [vmem:[%s3921 + $0x2c] sm:$0xf]
        %v3934 = vld [vmem:[%s3921 + $0x30] sm:$0xf]
        %v3935 = vld [vmem:[%s3921 + $0x34] sm:$0xf]
        %v3936 = vld [vmem:[%s3921 + $0x38] sm:$0xf]
        %v3937 = vld [vmem:[%s3921 + $0x3c] sm:$0xf]
        %v3938 = vld [vmem:[%s3921 + $0x40] sm:$0xf]
        %v3939 = vld [vmem:[%s3921 + $0x44] sm:$0xf]
        %v3940 = vld [vmem:[%s3921 + $0x48] sm:$0xf]
        %v3941 = vld [vmem:[%s3921 + $0x4c] sm:$0xf]
        %v3942 = vld [vmem:[%s3921 + $0x50] sm:$0xf]
        %v3943 = vld [vmem:[%s3921 + $0x54] sm:$0xf]
        %v3944 = vld [vmem:[%s3921 + $0x58] sm:$0xf]
        %v3945 = vld [vmem:[%s3921 + $0x5c] sm:$0xf]
        %v3946 = vld [vmem:[%s3921 + $0x60] sm:$0xf]
        %v3947 = vld [vmem:[%s3921 + $0x64] sm:$0xf]
        %v3948 = vld [vmem:[%s3921 + $0x68] sm:$0xf]
        %v3949 = vld [vmem:[%s3921 + $0x6c] sm:$0xf]
        %v3950 = vld [vmem:[%s3921 + $0x70] sm:$0xf]
        %v3951 = vld [vmem:[%s3921 + $0x74] sm:$0xf]
        %v3952 = vld [vmem:[%s3921 + $0x78] sm:$0xf]
        %v3953 = vld [vmem:[%s3921 + $0x7c] sm:$0xf]
        %v3955 = vunpack.c.l.b16 %v3920
        %v3956 = vunpack.c.h.b16 %v3920
        %v3957 = vpack.c.b16 %v3010, %v3955
        %v3958 = vpack.c.b16 %v3011, %v3956
        %vm3959 = vcmask 1045504
        %v3960 = vrot.slane %v3957, 2
        %v3961 = vrot.slane %v3056, 2
        %v3962 = vsel %vm3959, %v3960, %v3961
        %v3963 = vrot.slane %v3958, 2
        %v3964 = vrot.slane %v3057, 2
        %v3965 = vsel %vm3959, %v3963, %v3964
        %v3966 = vrot.slane %v3058, 2
        %v3967 = vsel %vm3959, %v3961, %v3966
        %v3968 = vrot.slane %v3059, 2
        %v3969 = vsel %vm3959, %v3964, %v3968
        %v3970 = vrot.slane %v3060, 2
        %v3971 = vsel %vm3959, %v3966, %v3970
        %v3972 = vrot.slane %v3061, 2
        %v3973 = vsel %vm3959, %v3968, %v3972
        %v3974 = vrot.slane %v3062, 2
        %v3975 = vsel %vm3959, %v3970, %v3974
        %v3976 = vrot.slane %v3063, 2
        %v3977 = vsel %vm3959, %v3972, %v3976
        %v3978 = vrot.slane %v3064, 2
        %v3979 = vsel %vm3959, %v3974, %v3978
        %v3980 = vrot.slane %v3065, 2
        %v3981 = vsel %vm3959, %v3976, %v3980
        %v3982 = vrot.slane %v3066, 2
        %v3983 = vsel %vm3959, %v3978, %v3982
        %v3984 = vrot.slane %v3067, 2
        %v3985 = vsel %vm3959, %v3980, %v3984
        %v3986 = vrot.slane %v3068, 2
        %v3987 = vsel %vm3959, %v3982, %v3986
        %v3988 = vrot.slane %v3069, 2
        %v3989 = vsel %vm3959, %v3984, %v3988
        %v3990 = vrot.slane %v3070, 2
        %v3991 = vsel %vm3959, %v3986, %v3990
        %v3992 = vrot.slane %v3071, 2
        %v3993 = vsel %vm3959, %v3988, %v3992
        %v3994 = vrot.slane %v3072, 2
        %v3995 = vsel %vm3959, %v3990, %v3994
        %v3996 = vrot.slane %v3073, 2
        %v3997 = vsel %vm3959, %v3992, %v3996
        %v3998 = vrot.slane %v3074, 2
        %v3999 = vsel %vm3959, %v3994, %v3998
        %v4000 = vrot.slane %v3075, 2
        %v4001 = vsel %vm3959, %v3996, %v4000
        %v4002 = vrot.slane %v3432, 2
        %v4003 = vsel %vm3959, %v3998, %v4002
        %v4004 = vrot.slane %v3433, 2
        %v4005 = vsel %vm3959, %v4000, %v4004
        %v4062 = vunpack.c.l.b16 %v3922
        %v4063 = vunpack.c.l.b16 %v3923
        %v4064 = vunpack.c.l.b16 %v3924
        %v4065 = vunpack.c.l.b16 %v3925
        %v4066 = vunpack.c.l.b16 %v3926
        %v4067 = vunpack.c.l.b16 %v3927
        %v4068 = vunpack.c.l.b16 %v3928
        %v4069 = vunpack.c.l.b16 %v3929
        %v4070 = vunpack.c.l.b16 %v3930
        %v4071 = vunpack.c.l.b16 %v3931
        %v4072 = vunpack.c.l.b16 %v3932
        %v4073 = vunpack.c.l.b16 %v3933
        %v4074 = vunpack.c.l.b16 %v3934
        %v4075 = vunpack.c.l.b16 %v3935
        %v4076 = vunpack.c.l.b16 %v3936
        %v4077 = vunpack.c.l.b16 %v3937
        %v4078 = vunpack.c.l.b16 %v3938
        %v4079 = vunpack.c.l.b16 %v3939
        %v4080 = vunpack.c.l.b16 %v3940
        %v4081 = vunpack.c.l.b16 %v3941
        %v4082 = vunpack.c.l.b16 %v3942
        %v4083 = vunpack.c.l.b16 %v3943
        %v4084 = vunpack.c.l.b16 %v3944
        %v4085 = vunpack.c.l.b16 %v3945
        %v4086 = vunpack.c.l.b16 %v3946
        %v4087 = vunpack.c.l.b16 %v3947
        %v4088 = vunpack.c.l.b16 %v3948
        %v4089 = vunpack.c.l.b16 %v3949
        %v4090 = vunpack.c.l.b16 %v3950
        %v4091 = vunpack.c.l.b16 %v3951
        %v4092 = vunpack.c.l.b16 %v3952
        %v4093 = vunpack.c.l.b16 %v3953
        %v4094 = vpack.c.b16 %v4063, %v4062
        %v4095 = vpack.c.b16 %v4065, %v4064
        %v4096 = vpack.c.b16 %v4067, %v4066
        %v4097 = vpack.c.b16 %v4069, %v4068
        %v4098 = vpack.c.b16 %v4071, %v4070
        %v4099 = vpack.c.b16 %v4073, %v4072
        %v4100 = vpack.c.b16 %v4075, %v4074
        %v4101 = vpack.c.b16 %v4077, %v4076
        %v4102 = vpack.c.b16 %v4079, %v4078
        %v4103 = vpack.c.b16 %v4081, %v4080
        %v4104 = vpack.c.b16 %v4083, %v4082
        %v4105 = vpack.c.b16 %v4085, %v4084
        %v4106 = vpack.c.b16 %v4087, %v4086
        %v4107 = vpack.c.b16 %v4089, %v4088
        %v4108 = vpack.c.b16 %v4091, %v4090
        %v4109 = vpack.c.b16 %v4093, %v4092
        %4126 = vmatprep.subr.bf16.mxu0 0
        %4127 = vmatpush1.bf16.msra.mxu0 %v4101
        %4128 = vmatprep.subr.bf16.mxu0 0
        %4129 = vmatpush1.bf16.msra.mxu0 %v4100
        %4130 = vmatprep.subr.bf16.mxu0 0
        %4131 = vmatpush1.bf16.msra.mxu0 %v4099
        %4132 = vmatprep.subr.bf16.mxu0 0
        %4133 = vmatpush1.bf16.msra.mxu0 %v4098
        %4134 = vmatprep.subr.bf16.mxu0 0
        %4135 = vmatpush1.bf16.msra.mxu0 %v4097
        %4136 = vmatprep.subr.bf16.mxu0 0
        %4137 = vmatpush1.bf16.msra.mxu0 %v4096
        %4138 = vmatprep.subr.bf16.mxu0 0
        %4139 = vmatpush1.bf16.msra.mxu0 %v4095
        %4140 = vmatprep.subr.bf16.mxu0 0
        %4141 = vmatpush1.bf16.msra.mxu0 %v4094
        %4142 = vmatprep.subr.bf16.mxu0 0
        %4143 = vmatpush2.bf16.msra.mxu0 %v4109
        %4144 = vmatprep.subr.bf16.mxu0 0
        %4145 = vmatpush2.bf16.msra.mxu0 %v4108
        %4146 = vmatprep.subr.bf16.mxu0 0
        %4147 = vmatpush2.bf16.msra.mxu0 %v4107
        %4148 = vmatprep.subr.bf16.mxu0 0
        %4149 = vmatpush2.bf16.msra.mxu0 %v4106
        %4150 = vmatprep.subr.bf16.mxu0 0
        %4151 = vmatpush2.bf16.msra.mxu0 %v4105
        %4152 = vmatprep.subr.bf16.mxu0 0
        %4153 = vmatpush2.bf16.msra.mxu0 %v4104
        %4154 = vmatprep.subr.bf16.mxu0 0
        %4155 = vmatpush2.bf16.msra.mxu0 %v4103
        %4156 = vmatprep.subr.bf16.mxu0 0
        %4157 = vmatpush2.bf16.msra.mxu0 %v4102
        %4158 = vmatprep.mubr.bf16.mxu0 %v3965
        %4159 = vmatmul.mubr.bf16.gmra.mxu0 %v3962
        %v4160 = vpop.f32.mrf.mxu0
        %v4161 = vadd.f32 0.0, %v4160
        %v4162 = vpop.f32.mrf.mxu0
        %v4163 = vpop.f32.mrf.mxu0
        %v4164 = vadd.f32 0.0, %v4163
        %v4165 = vpop.f32.mrf.mxu0
        %4166 = vmatprep.mubr.bf16.mxu0 %v3969
        %4167 = vmatmul.mubr.bf16.gmra.mxu0 %v3967
        %v4168 = vpop.f32.mrf.mxu0
        %v4169 = vadd.f32 0.0, %v4168
        %v4170 = vpop.f32.mrf.mxu0
        %v4171 = vpop.f32.mrf.mxu0
        %v4172 = vadd.f32 0.0, %v4171
        %v4173 = vpop.f32.mrf.mxu0
        %4174 = vmatprep.mubr.bf16.mxu0 %v3973
        %4175 = vmatmul.mubr.bf16.gmra.mxu0 %v3971
        %v4176 = vpop.f32.mrf.mxu0
        %v4177 = vadd.f32 0.0, %v4176
        %v4178 = vpop.f32.mrf.mxu0
        %v4179 = vpop.f32.mrf.mxu0
        %v4180 = vadd.f32 0.0, %v4179
        %v4181 = vpop.f32.mrf.mxu0
        %4182 = vmatprep.mubr.bf16.mxu0 %v3977
        %4183 = vmatmul.mubr.bf16.gmra.mxu0 %v3975
        %v4184 = vpop.f32.mrf.mxu0
        %v4185 = vadd.f32 0.0, %v4184
        %v4186 = vpop.f32.mrf.mxu0
        %v4187 = vpop.f32.mrf.mxu0
        %v4188 = vadd.f32 0.0, %v4187
        %v4189 = vpop.f32.mrf.mxu0
        %4190 = vmatprep.mubr.bf16.mxu0 %v3981
        %4191 = vmatmul.mubr.bf16.gmra.mxu0 %v3979
        %v4192 = vpop.f32.mrf.mxu0
        %v4193 = vadd.f32 0.0, %v4192
        %v4194 = vpop.f32.mrf.mxu0
        %v4195 = vpop.f32.mrf.mxu0
        %v4196 = vadd.f32 0.0, %v4195
        %v4197 = vpop.f32.mrf.mxu0
        %4198 = vmatprep.mubr.bf16.mxu0 %v3985
        %4199 = vmatmul.mubr.bf16.gmra.mxu0 %v3983
        %v4200 = vpop.f32.mrf.mxu0
        %v4201 = vadd.f32 0.0, %v4200
        %v4202 = vpop.f32.mrf.mxu0
        %v4203 = vpop.f32.mrf.mxu0
        %v4204 = vadd.f32 0.0, %v4203
        %v4205 = vpop.f32.mrf.mxu0
        %4206 = vmatprep.mubr.bf16.mxu0 %v3989
        %4207 = vmatmul.mubr.bf16.gmra.mxu0 %v3987
        %v4208 = vpop.f32.mrf.mxu0
        %v4209 = vadd.f32 0.0, %v4208
        %v4210 = vpop.f32.mrf.mxu0
        %v4211 = vpop.f32.mrf.mxu0
        %v4212 = vadd.f32 0.0, %v4211
        %v4213 = vpop.f32.mrf.mxu0
        %4214 = vmatprep.mubr.bf16.mxu0 %v3993
        %4215 = vmatmul.mubr.bf16.gmra.mxu0 %v3991
        %v4216 = vpop.f32.mrf.mxu0
        %v4217 = vadd.f32 0.0, %v4216
        %v4218 = vpop.f32.mrf.mxu0
        %v4219 = vpop.f32.mrf.mxu0
        %v4220 = vadd.f32 0.0, %v4219
        %v4221 = vpop.f32.mrf.mxu0
        %4222 = vmatprep.mubr.bf16.mxu0 %v3997
        %4223 = vmatmul.mubr.bf16.gmra.mxu0 %v3995
        %v4224 = vpop.f32.mrf.mxu0
        %v4225 = vadd.f32 0.0, %v4224
        %v4226 = vpop.f32.mrf.mxu0
        %v4227 = vpop.f32.mrf.mxu0
        %v4228 = vadd.f32 0.0, %v4227
        %v4229 = vpop.f32.mrf.mxu0
        %4230 = vmatprep.mubr.bf16.mxu0 %v4001
        %4231 = vmatmul.mubr.bf16.gmra.mxu0 %v3999
        %v4232 = vpop.f32.mrf.mxu0
        %v4233 = vadd.f32 0.0, %v4232
        %v4234 = vpop.f32.mrf.mxu0
        %v4235 = vpop.f32.mrf.mxu0
        %v4236 = vadd.f32 0.0, %v4235
        %v4237 = vpop.f32.mrf.mxu0
        %4238 = vmatprep.mubr.bf16.mxu0 %v4005
        %4239 = vmatmul.mubr.bf16.gmra.mxu0 %v4003
        %v4240 = vpop.f32.mrf.mxu0
        %v4241 = vadd.f32 0.0, %v4240
        %v4242 = vpop.f32.mrf.mxu0
        %v4243 = vpop.f32.mrf.mxu0
        %v4244 = vadd.f32 0.0, %v4243
        %v4245 = vpop.f32.mrf.mxu0
        %4246 = vmatprep.mubr.bf16.mxu0 %v4004
        %4247 = vmatmul.mubr.bf16.gmra.mxu0 %v4002
        %v4248 = vpop.f32.mrf.mxu0
        %v4249 = vadd.f32 0.0, %v4248
        %v4250 = vpop.f32.mrf.mxu0
        %v4251 = vpop.f32.mrf.mxu0
        %v4252 = vpop.f32.mrf.mxu0
        %4253 = vdwg.mxu0
        %v4254 = vadd.f32 %v3897, %v4161
        %v4255 = vadd.f32 %v3898, %v4164
        %v4256 = vadd.f32 %v3899, %v4169
        %v4257 = vadd.f32 %v3900, %v4172
        %v4258 = vadd.f32 %v3901, %v4177
        %v4259 = vadd.f32 %v3902, %v4180
        %v4260 = vadd.f32 %v3903, %v4185
        %v4261 = vadd.f32 %v3904, %v4188
        %v4262 = vadd.f32 %v3905, %v4193
        %v4263 = vadd.f32 %v3906, %v4196
        %v4264 = vadd.f32 %v3907, %v4201
        %v4265 = vadd.f32 %v3908, %v4204
        %v4266 = vadd.f32 %v3909, %v4209
        %v4267 = vadd.f32 %v3910, %v4212
        %v4268 = vadd.f32 %v3911, %v4217
        %v4269 = vadd.f32 %v3912, %v4220
        %v4270 = vadd.f32 %v3913, %v4225
        %v4271 = vadd.f32 %v3914, %v4228
        %v4272 = vadd.f32 %v3915, %v4233
        %v4273 = vadd.f32 %v3916, %v4236
        %v4274 = vadd.f32 %v3917, %v4241
        %v4275 = vadd.f32 %v3918, %v4244
        %v4276 = vadd.f32 %v3919, %v4249
        %v4277 = vld [vmem:[%s0 + $0x10] sm:$0xcc]
        %v4278 = vld [vmem:[%s0 + $0x18] sm:$0xff]
        %v4279 = vld [vmem:[%s0 + $0x20] sm:$0xff]
        %v4280 = vld [vmem:[%s0 + $0x28] sm:$0xff]
        %v4281 = vld [vmem:[%s0 + $0x30] sm:$0xff]
        %v4282 = vld [vmem:[%s0 + $0x38] sm:$0xff]
        %v4283 = vld [vmem:[%s0 + $0x40] sm:$0xff]
        %v4284 = vld [vmem:[%s0 + $0x48] sm:$0xff]
        %v4285 = vld [vmem:[%s0 + $0x50] sm:$0xff]
        %v4286 = vld [vmem:[%s0 + $0x58] sm:$0xff]
        %v4287 = vld [vmem:[%s0 + $0x60] sm:$0xff]
        %v4288 = vld [vmem:[%s0 + $0x68] sm:$0xff]
        %v4289 = vld [vmem:[%s0 + $0x70] sm:$0xff]
        %v4290 = vld [vmem:[%s0 + $0x78] sm:$0xff]
        %v4291 = vld [vmem:[%s0 + $0x80] sm:$0xff]
        %v4292 = vld [vmem:[%s0 + $0x88] sm:$0xff]
        %v4293 = vld [vmem:[%s0 + $0x90] sm:$0xff]
        %v4294 = vld [vmem:[%s0 + $0x98] sm:$0xff]
        %v4295 = vld [vmem:[%s0 + $0xa0] sm:$0xff]
        %v4296 = vld [vmem:[%s0 + $0xa8] sm:$0xff]
        %v4297 = vld [vmem:[%s0 + $0xb0] sm:$0xff]
        %v4298 = vld [vmem:[%s0 + $0xb8] sm:$0xff]
        %v4299 = vld [vmem:[%s0 + $0xc0] sm:$0x77]
        %s4300 = scalar_lea.vmem %s1630, 768 [#allocation2]
        %v4301 = vld [vmem:[%s4300] sm:$0xf]
        %v4302 = vld [vmem:[%s4300 + $0x4] sm:$0xf]
        %v4303 = vld [vmem:[%s4300 + $0x8] sm:$0xf]
        %v4304 = vld [vmem:[%s4300 + $0xc] sm:$0xf]
        %v4305 = vld [vmem:[%s4300 + $0x10] sm:$0xf]
        %v4306 = vld [vmem:[%s4300 + $0x14] sm:$0xf]
        %v4307 = vld [vmem:[%s4300 + $0x18] sm:$0xf]
        %v4308 = vld [vmem:[%s4300 + $0x1c] sm:$0xf]
        %v4309 = vld [vmem:[%s4300 + $0x20] sm:$0xf]
        %v4310 = vld [vmem:[%s4300 + $0x24] sm:$0xf]
        %v4311 = vld [vmem:[%s4300 + $0x28] sm:$0xf]
        %v4312 = vld [vmem:[%s4300 + $0x2c] sm:$0xf]
        %v4313 = vld [vmem:[%s4300 + $0x30] sm:$0xf]
        %v4314 = vld [vmem:[%s4300 + $0x34] sm:$0xf]
        %v4315 = vld [vmem:[%s4300 + $0x38] sm:$0xf]
        %v4316 = vld [vmem:[%s4300 + $0x3c] sm:$0xf]
        %v4317 = vld [vmem:[%s4300 + $0x40] sm:$0xf]
        %v4318 = vld [vmem:[%s4300 + $0x44] sm:$0xf]
        %v4319 = vld [vmem:[%s4300 + $0x48] sm:$0xf]
        %v4320 = vld [vmem:[%s4300 + $0x4c] sm:$0xf]
        %v4321 = vld [vmem:[%s4300 + $0x50] sm:$0xf]
        %v4322 = vld [vmem:[%s4300 + $0x54] sm:$0xf]
        %v4323 = vld [vmem:[%s4300 + $0x58] sm:$0xf]
        %v4324 = vld [vmem:[%s4300 + $0x5c] sm:$0xf]
        %v4325 = vld [vmem:[%s4300 + $0x60] sm:$0xf]
        %v4326 = vld [vmem:[%s4300 + $0x64] sm:$0xf]
        %v4327 = vld [vmem:[%s4300 + $0x68] sm:$0xf]
        %v4328 = vld [vmem:[%s4300 + $0x6c] sm:$0xf]
        %v4329 = vld [vmem:[%s4300 + $0x70] sm:$0xf]
        %v4330 = vld [vmem:[%s4300 + $0x74] sm:$0xf]
        %v4331 = vld [vmem:[%s4300 + $0x78] sm:$0xf]
        %v4332 = vld [vmem:[%s4300 + $0x7c] sm:$0xf]
        %v4356 = vunpack.c.l.b16 %v4277
        %v4357 = vunpack.c.h.b16 %v4277
        %v4358 = vunpack.c.l.b16 %v4278
        %v4359 = vunpack.c.h.b16 %v4278
        %v4360 = vunpack.c.l.b16 %v4279
        %v4361 = vunpack.c.h.b16 %v4279
        %v4362 = vunpack.c.l.b16 %v4280
        %v4363 = vunpack.c.h.b16 %v4280
        %v4364 = vunpack.c.l.b16 %v4281
        %v4365 = vunpack.c.h.b16 %v4281
        %v4366 = vunpack.c.l.b16 %v4282
        %v4367 = vunpack.c.h.b16 %v4282
        %v4368 = vunpack.c.l.b16 %v4283
        %v4369 = vunpack.c.h.b16 %v4283
        %v4370 = vunpack.c.l.b16 %v4284
        %v4371 = vunpack.c.h.b16 %v4284
        %v4372 = vunpack.c.l.b16 %v4285
        %v4373 = vunpack.c.h.b16 %v4285
        %v4374 = vunpack.c.l.b16 %v4286
        %v4375 = vunpack.c.h.b16 %v4286
        %v4376 = vunpack.c.l.b16 %v4287
        %v4377 = vunpack.c.h.b16 %v4287
        %v4378 = vunpack.c.l.b16 %v4288
        %v4379 = vunpack.c.h.b16 %v4288
        %v4380 = vunpack.c.l.b16 %v4289
        %v4381 = vunpack.c.h.b16 %v4289
        %v4382 = vunpack.c.l.b16 %v4290
        %v4383 = vunpack.c.h.b16 %v4290
        %v4384 = vunpack.c.l.b16 %v4291
        %v4385 = vunpack.c.h.b16 %v4291
        %v4386 = vunpack.c.l.b16 %v4292
        %v4387 = vunpack.c.h.b16 %v4292
        %v4388 = vunpack.c.l.b16 %v4293
        %v4389 = vunpack.c.h.b16 %v4293
        %v4390 = vunpack.c.l.b16 %v4294
        %v4391 = vunpack.c.h.b16 %v4294
        %v4392 = vunpack.c.l.b16 %v4295
        %v4393 = vunpack.c.h.b16 %v4295
        %v4394 = vunpack.c.l.b16 %v4296
        %v4395 = vunpack.c.h.b16 %v4296
        %v4396 = vunpack.c.l.b16 %v4297
        %v4397 = vunpack.c.h.b16 %v4297
        %v4398 = vunpack.c.l.b16 %v4298
        %v4399 = vunpack.c.h.b16 %v4298
        %v4400 = vunpack.c.l.b16 %v4299
        %v4401 = vunpack.c.h.b16 %v4299
        %v4402 = vpack.c.b16 %v4358, %v4356
        %v4403 = vpack.c.b16 %v4359, %v4357
        %v4404 = vpack.c.b16 %v4362, %v4360
        %v4405 = vpack.c.b16 %v4363, %v4361
        %v4406 = vpack.c.b16 %v4366, %v4364
        %v4407 = vpack.c.b16 %v4367, %v4365
        %v4408 = vpack.c.b16 %v4370, %v4368
        %v4409 = vpack.c.b16 %v4371, %v4369
        %v4410 = vpack.c.b16 %v4374, %v4372
        %v4411 = vpack.c.b16 %v4375, %v4373
        %v4412 = vpack.c.b16 %v4378, %v4376
        %v4413 = vpack.c.b16 %v4379, %v4377
        %v4414 = vpack.c.b16 %v4382, %v4380
        %v4415 = vpack.c.b16 %v4383, %v4381
        %v4416 = vpack.c.b16 %v4386, %v4384
        %v4417 = vpack.c.b16 %v4387, %v4385
        %v4418 = vpack.c.b16 %v4390, %v4388
        %v4419 = vpack.c.b16 %v4391, %v4389
        %v4420 = vpack.c.b16 %v4394, %v4392
        %v4421 = vpack.c.b16 %v4395, %v4393
        %v4422 = vpack.c.b16 %v4398, %v4396
        %v4423 = vpack.c.b16 %v4399, %v4397
        %v4424 = vpack.c.b16 %v4400, %v4400
        %v4425 = vpack.c.b16 %v4401, %v4401
        %v4426 = vrot.slane %v4402, 2
        %v4427 = vrot.slane %v4404, 2
        %v4428 = vsel %vm3959, %v4426, %v4427
        %v4429 = vrot.slane %v4403, 2
        %v4430 = vrot.slane %v4405, 2
        %v4431 = vsel %vm3959, %v4429, %v4430
        %v4432 = vrot.slane %v4406, 2
        %v4433 = vsel %vm3959, %v4427, %v4432
        %v4434 = vrot.slane %v4407, 2
        %v4435 = vsel %vm3959, %v4430, %v4434
        %v4436 = vrot.slane %v4408, 2
        %v4437 = vsel %vm3959, %v4432, %v4436
        %v4438 = vrot.slane %v4409, 2
        %v4439 = vsel %vm3959, %v4434, %v4438
        %v4440 = vrot.slane %v4410, 2
        %v4441 = vsel %vm3959, %v4436, %v4440
        %v4442 = vrot.slane %v4411, 2
        %v4443 = vsel %vm3959, %v4438, %v4442
        %v4444 = vrot.slane %v4412, 2
        %v4445 = vsel %vm3959, %v4440, %v4444
        %v4446 = vrot.slane %v4413, 2
        %v4447 = vsel %vm3959, %v4442, %v4446
        %v4448 = vrot.slane %v4414, 2
        %v4449 = vsel %vm3959, %v4444, %v4448
        %v4450 = vrot.slane %v4415, 2
        %v4451 = vsel %vm3959, %v4446, %v4450
        %v4452 = vrot.slane %v4416, 2
        %v4453 = vsel %vm3959, %v4448, %v4452
        %v4454 = vrot.slane %v4417, 2
        %v4455 = vsel %vm3959, %v4450, %v4454
        %v4456 = vrot.slane %v4418, 2
        %v4457 = vsel %vm3959, %v4452, %v4456
        %v4458 = vrot.slane %v4419, 2
        %v4459 = vsel %vm3959, %v4454, %v4458
        %v4460 = vrot.slane %v4420, 2
        %v4461 = vsel %vm3959, %v4456, %v4460
        %v4462 = vrot.slane %v4421, 2
        %v4463 = vsel %vm3959, %v4458, %v4462
        %v4464 = vrot.slane %v4422, 2
        %v4465 = vsel %vm3959, %v4460, %v4464
        %v4466 = vrot.slane %v4423, 2
        %v4467 = vsel %vm3959, %v4462, %v4466
        %v4468 = vrot.slane %v4424, 2
        %v4469 = vsel %vm3959, %v4464, %v4468
        %v4470 = vrot.slane %v4425, 2
        %v4471 = vsel %vm3959, %v4466, %v4470
        %v4528 = vunpack.c.l.b16 %v4301
        %v4529 = vunpack.c.l.b16 %v4302
        %v4530 = vunpack.c.l.b16 %v4303
        %v4531 = vunpack.c.l.b16 %v4304
        %v4532 = vunpack.c.l.b16 %v4305
        %v4533 = vunpack.c.l.b16 %v4306
        %v4534 = vunpack.c.l.b16 %v4307
        %v4535 = vunpack.c.l.b16 %v4308
        %v4536 = vunpack.c.l.b16 %v4309
        %v4537 = vunpack.c.l.b16 %v4310
        %v4538 = vunpack.c.l.b16 %v4311
        %v4539 = vunpack.c.l.b16 %v4312
        %v4540 = vunpack.c.l.b16 %v4313
        %v4541 = vunpack.c.l.b16 %v4314
        %v4542 = vunpack.c.l.b16 %v4315
        %v4543 = vunpack.c.l.b16 %v4316
        %v4544 = vunpack.c.l.b16 %v4317
        %v4545 = vunpack.c.l.b16 %v4318
        %v4546 = vunpack.c.l.b16 %v4319
        %v4547 = vunpack.c.l.b16 %v4320
        %v4548 = vunpack.c.l.b16 %v4321
        %v4549 = vunpack.c.l.b16 %v4322
        %v4550 = vunpack.c.l.b16 %v4323
        %v4551 = vunpack.c.l.b16 %v4324
        %v4552 = vunpack.c.l.b16 %v4325
        %v4553 = vunpack.c.l.b16 %v4326
        %v4554 = vunpack.c.l.b16 %v4327
        %v4555 = vunpack.c.l.b16 %v4328
        %v4556 = vunpack.c.l.b16 %v4329
        %v4557 = vunpack.c.l.b16 %v4330
        %v4558 = vunpack.c.l.b16 %v4331
        %v4559 = vunpack.c.l.b16 %v4332
        %v4560 = vpack.c.b16 %v4529, %v4528
        %v4561 = vpack.c.b16 %v4531, %v4530
        %v4562 = vpack.c.b16 %v4533, %v4532
        %v4563 = vpack.c.b16 %v4535, %v4534
        %v4564 = vpack.c.b16 %v4537, %v4536
        %v4565 = vpack.c.b16 %v4539, %v4538
        %v4566 = vpack.c.b16 %v4541, %v4540
        %v4567 = vpack.c.b16 %v4543, %v4542
        %v4568 = vpack.c.b16 %v4545, %v4544
        %v4569 = vpack.c.b16 %v4547, %v4546
        %v4570 = vpack.c.b16 %v4549, %v4548
        %v4571 = vpack.c.b16 %v4551, %v4550
        %v4572 = vpack.c.b16 %v4553, %v4552
        %v4573 = vpack.c.b16 %v4555, %v4554
        %v4574 = vpack.c.b16 %v4557, %v4556
        %v4575 = vpack.c.b16 %v4559, %v4558
        %4592 = vmatprep.subr.bf16.mxu0 0
        %4593 = vmatpush1.bf16.msra.mxu0 %v4567
        %4594 = vmatprep.subr.bf16.mxu0 0
        %4595 = vmatpush1.bf16.msra.mxu0 %v4566
        %4596 = vmatprep.subr.bf16.mxu0 0
        %4597 = vmatpush1.bf16.msra.mxu0 %v4565
        %4598 = vmatprep.subr.bf16.mxu0 0
        %4599 = vmatpush1.bf16.msra.mxu0 %v4564
        %4600 = vmatprep.subr.bf16.mxu0 0
        %4601 = vmatpush1.bf16.msra.mxu0 %v4563
        %4602 = vmatprep.subr.bf16.mxu0 0
        %4603 = vmatpush1.bf16.msra.mxu0 %v4562
        %4604 = vmatprep.subr.bf16.mxu0 0
        %4605 = vmatpush1.bf16.msra.mxu0 %v4561
        %4606 = vmatprep.subr.bf16.mxu0 0
        %4607 = vmatpush1.bf16.msra.mxu0 %v4560
        %4608 = vmatprep.subr.bf16.mxu0 0
        %4609 = vmatpush2.bf16.msra.mxu0 %v4575
        %4610 = vmatprep.subr.bf16.mxu0 0
        %4611 = vmatpush2.bf16.msra.mxu0 %v4574
        %4612 = vmatprep.subr.bf16.mxu0 0
        %4613 = vmatpush2.bf16.msra.mxu0 %v4573
        %4614 = vmatprep.subr.bf16.mxu0 0
        %4615 = vmatpush2.bf16.msra.mxu0 %v4572
        %4616 = vmatprep.subr.bf16.mxu0 0
        %4617 = vmatpush2.bf16.msra.mxu0 %v4571
        %4618 = vmatprep.subr.bf16.mxu0 0
        %4619 = vmatpush2.bf16.msra.mxu0 %v4570
        %4620 = vmatprep.subr.bf16.mxu0 0
        %4621 = vmatpush2.bf16.msra.mxu0 %v4569
        %4622 = vmatprep.subr.bf16.mxu0 0
        %4623 = vmatpush2.bf16.msra.mxu0 %v4568
        %4624 = vmatprep.mubr.bf16.mxu0 %v4431
        %4625 = vmatmul.mubr.bf16.gmra.mxu0 %v4428
        %v4626 = vpop.f32.mrf.mxu0
        %v4627 = vadd.f32 0.0, %v4626
        %v4628 = vpop.f32.mrf.mxu0
        %v4629 = vpop.f32.mrf.mxu0
        %v4630 = vadd.f32 0.0, %v4629
        %v4631 = vpop.f32.mrf.mxu0
        %4632 = vmatprep.mubr.bf16.mxu0 %v4435
        %4633 = vmatmul.mubr.bf16.gmra.mxu0 %v4433
        %v4634 = vpop.f32.mrf.mxu0
        %v4635 = vadd.f32 0.0, %v4634
        %v4636 = vpop.f32.mrf.mxu0
        %v4637 = vpop.f32.mrf.mxu0
        %v4638 = vadd.f32 0.0, %v4637
        %v4639 = vpop.f32.mrf.mxu0
        %4640 = vmatprep.mubr.bf16.mxu0 %v4439
        %4641 = vmatmul.mubr.bf16.gmra.mxu0 %v4437
        %v4642 = vpop.f32.mrf.mxu0
        %v4643 = vadd.f32 0.0, %v4642
        %v4644 = vpop.f32.mrf.mxu0
        %v4645 = vpop.f32.mrf.mxu0
        %v4646 = vadd.f32 0.0, %v4645
        %v4647 = vpop.f32.mrf.mxu0
        %4648 = vmatprep.mubr.bf16.mxu0 %v4443
        %4649 = vmatmul.mubr.bf16.gmra.mxu0 %v4441
        %v4650 = vpop.f32.mrf.mxu0
        %v4651 = vadd.f32 0.0, %v4650
        %v4652 = vpop.f32.mrf.mxu0
        %v4653 = vpop.f32.mrf.mxu0
        %v4654 = vadd.f32 0.0, %v4653
        %v4655 = vpop.f32.mrf.mxu0
        %4656 = vmatprep.mubr.bf16.mxu0 %v4447
        %4657 = vmatmul.mubr.bf16.gmra.mxu0 %v4445
        %v4658 = vpop.f32.mrf.mxu0
        %v4659 = vadd.f32 0.0, %v4658
        %v4660 = vpop.f32.mrf.mxu0
        %v4661 = vpop.f32.mrf.mxu0
        %v4662 = vadd.f32 0.0, %v4661
        %v4663 = vpop.f32.mrf.mxu0
        %4664 = vmatprep.mubr.bf16.mxu0 %v4451
        %4665 = vmatmul.mubr.bf16.gmra.mxu0 %v4449
        %v4666 = vpop.f32.mrf.mxu0
        %v4667 = vadd.f32 0.0, %v4666
        %v4668 = vpop.f32.mrf.mxu0
        %v4669 = vpop.f32.mrf.mxu0
        %v4670 = vadd.f32 0.0, %v4669
        %v4671 = vpop.f32.mrf.mxu0
        %4672 = vmatprep.mubr.bf16.mxu0 %v4455
        %4673 = vmatmul.mubr.bf16.gmra.mxu0 %v4453
        %v4674 = vpop.f32.mrf.mxu0
        %v4675 = vadd.f32 0.0, %v4674
        %v4676 = vpop.f32.mrf.mxu0
        %v4677 = vpop.f32.mrf.mxu0
        %v4678 = vadd.f32 0.0, %v4677
        %v4679 = vpop.f32.mrf.mxu0
        %4680 = vmatprep.mubr.bf16.mxu0 %v4459
        %4681 = vmatmul.mubr.bf16.gmra.mxu0 %v4457
        %v4682 = vpop.f32.mrf.mxu0
        %v4683 = vadd.f32 0.0, %v4682
        %v4684 = vpop.f32.mrf.mxu0
        %v4685 = vpop.f32.mrf.mxu0
        %v4686 = vadd.f32 0.0, %v4685
        %v4687 = vpop.f32.mrf.mxu0
        %4688 = vmatprep.mubr.bf16.mxu0 %v4463
        %4689 = vmatmul.mubr.bf16.gmra.mxu0 %v4461
        %v4690 = vpop.f32.mrf.mxu0
        %v4691 = vadd.f32 0.0, %v4690
        %v4692 = vpop.f32.mrf.mxu0
        %v4693 = vpop.f32.mrf.mxu0
        %v4694 = vadd.f32 0.0, %v4693
        %v4695 = vpop.f32.mrf.mxu0
        %4696 = vmatprep.mubr.bf16.mxu0 %v4467
        %4697 = vmatmul.mubr.bf16.gmra.mxu0 %v4465
        %v4698 = vpop.f32.mrf.mxu0
        %v4699 = vadd.f32 0.0, %v4698
        %v4700 = vpop.f32.mrf.mxu0
        %v4701 = vpop.f32.mrf.mxu0
        %v4702 = vadd.f32 0.0, %v4701
        %v4703 = vpop.f32.mrf.mxu0
        %4704 = vmatprep.mubr.bf16.mxu0 %v4471
        %4705 = vmatmul.mubr.bf16.gmra.mxu0 %v4469
        %v4706 = vpop.f32.mrf.mxu0
        %v4707 = vadd.f32 0.0, %v4706
        %v4708 = vpop.f32.mrf.mxu0
        %v4709 = vpop.f32.mrf.mxu0
        %v4710 = vadd.f32 0.0, %v4709
        %v4711 = vpop.f32.mrf.mxu0
        %4712 = vmatprep.mubr.bf16.mxu0 %v4470
        %4713 = vmatmul.mubr.bf16.gmra.mxu0 %v4468
        %v4714 = vpop.f32.mrf.mxu0
        %v4715 = vadd.f32 0.0, %v4714
        %v4716 = vpop.f32.mrf.mxu0
        %v4717 = vpop.f32.mrf.mxu0
        %v4718 = vpop.f32.mrf.mxu0
        %4719 = vdwg.mxu0
        %v4720 = vadd.f32 %v4254, %v4627
        %v4721 = vadd.f32 %v4255, %v4630
        %v4722 = vadd.f32 %v4256, %v4635
        %v4723 = vadd.f32 %v4257, %v4638
        %v4724 = vadd.f32 %v4258, %v4643
        %v4725 = vadd.f32 %v4259, %v4646
        %v4726 = vadd.f32 %v4260, %v4651
        %v4727 = vadd.f32 %v4261, %v4654
        %v4728 = vadd.f32 %v4262, %v4659
        %v4729 = vadd.f32 %v4263, %v4662
        %v4730 = vadd.f32 %v4264, %v4667
        %v4731 = vadd.f32 %v4265, %v4670
        %v4732 = vadd.f32 %v4266, %v4675
        %v4733 = vadd.f32 %v4267, %v4678
        %v4734 = vadd.f32 %v4268, %v4683
        %v4735 = vadd.f32 %v4269, %v4686
        %v4736 = vadd.f32 %v4270, %v4691
        %v4737 = vadd.f32 %v4271, %v4694
        %v4738 = vadd.f32 %v4272, %v4699
        %v4739 = vadd.f32 %v4273, %v4702
        %v4740 = vadd.f32 %v4274, %v4707
        %v4741 = vadd.f32 %v4275, %v4710
        %v4742 = vadd.f32 %v4276, %v4715
        %v4743 = vld [vmem:[%s0 + $0xc0] sm:$0xff]
        %s4744 = scalar_lea.vmem %s1630, 896 [#allocation2]
        %v4745 = vld [vmem:[%s4744] sm:$0xf]
        %v4746 = vld [vmem:[%s4744 + $0x4] sm:$0xf]
        %v4747 = vld [vmem:[%s4744 + $0x8] sm:$0xf]
        %v4748 = vld [vmem:[%s4744 + $0xc] sm:$0xf]
        %v4749 = vld [vmem:[%s4744 + $0x10] sm:$0xf]
        %v4750 = vld [vmem:[%s4744 + $0x14] sm:$0xf]
        %v4751 = vld [vmem:[%s4744 + $0x18] sm:$0xf]
        %v4752 = vld [vmem:[%s4744 + $0x1c] sm:$0xf]
        %v4753 = vld [vmem:[%s4744 + $0x20] sm:$0xf]
        %v4754 = vld [vmem:[%s4744 + $0x24] sm:$0xf]
        %v4755 = vld [vmem:[%s4744 + $0x28] sm:$0xf]
        %v4756 = vld [vmem:[%s4744 + $0x2c] sm:$0xf]
        %v4757 = vld [vmem:[%s4744 + $0x30] sm:$0xf]
        %v4758 = vld [vmem:[%s4744 + $0x34] sm:$0xf]
        %v4759 = vld [vmem:[%s4744 + $0x38] sm:$0xf]
        %v4760 = vld [vmem:[%s4744 + $0x3c] sm:$0xf]
        %v4761 = vld [vmem:[%s4744 + $0x40] sm:$0xf]
        %v4762 = vld [vmem:[%s4744 + $0x44] sm:$0xf]
        %v4763 = vld [vmem:[%s4744 + $0x48] sm:$0xf]
        %v4764 = vld [vmem:[%s4744 + $0x4c] sm:$0xf]
        %v4765 = vld [vmem:[%s4744 + $0x50] sm:$0xf]
        %v4766 = vld [vmem:[%s4744 + $0x54] sm:$0xf]
        %v4767 = vld [vmem:[%s4744 + $0x58] sm:$0xf]
        %v4768 = vld [vmem:[%s4744 + $0x5c] sm:$0xf]
        %v4769 = vld [vmem:[%s4744 + $0x60] sm:$0xf]
        %v4770 = vld [vmem:[%s4744 + $0x64] sm:$0xf]
        %v4771 = vld [vmem:[%s4744 + $0x68] sm:$0xf]
        %v4772 = vld [vmem:[%s4744 + $0x6c] sm:$0xf]
        %v4773 = vld [vmem:[%s4744 + $0x70] sm:$0xf]
        %v4774 = vld [vmem:[%s4744 + $0x74] sm:$0xf]
        %v4775 = vld [vmem:[%s4744 + $0x78] sm:$0xf]
        %v4776 = vld [vmem:[%s4744 + $0x7c] sm:$0xf]
        %v4778 = vunpack.c.l.b16 %v4743
        %v4779 = vunpack.c.h.b16 %v4743
        %v4780 = vpack.c.b16 %v4778, %v4778
        %v4781 = vpack.c.b16 %v4779, %v4779
        %vm4782 = vsmask.f32 5376
        %v4784 = vshrl.u32 %v4402, 16
        %v4786 = vrot.slane %v4784, 2
        %v4787 = vshll.u32 %v4402, 16
        %v4789 = vrot.slane %v4787, 3
        %v4790 = vor.u32 %v4786, %v4789
        %v4792 = vshrl.u32 %v4404, 16
        %v4794 = vrot.slane %v4792, 2
        %v4795 = vshll.u32 %v4404, 16
        %v4797 = vrot.slane %v4795, 3
        %v4798 = vor.u32 %v4794, %v4797
        %v4799 = vsel %vm4782, %v4790, %v4798
        %v4801 = vshrl.u32 %v4403, 16
        %v4803 = vrot.slane %v4801, 2
        %v4804 = vshll.u32 %v4403, 16
        %v4806 = vrot.slane %v4804, 3
        %v4807 = vor.u32 %v4803, %v4806
        %v4809 = vshrl.u32 %v4405, 16
        %v4811 = vrot.slane %v4809, 2
        %v4812 = vshll.u32 %v4405, 16
        %v4814 = vrot.slane %v4812, 3
        %v4815 = vor.u32 %v4811, %v4814
        %v4816 = vsel %vm4782, %v4807, %v4815
        %v4818 = vshrl.u32 %v4406, 16
        %v4820 = vrot.slane %v4818, 2
        %v4821 = vshll.u32 %v4406, 16
        %v4823 = vrot.slane %v4821, 3
        %v4824 = vor.u32 %v4820, %v4823
        %v4825 = vsel %vm4782, %v4798, %v4824
        %v4827 = vshrl.u32 %v4407, 16
        %v4829 = vrot.slane %v4827, 2
        %v4830 = vshll.u32 %v4407, 16
        %v4832 = vrot.slane %v4830, 3
        %v4833 = vor.u32 %v4829, %v4832
        %v4834 = vsel %vm4782, %v4815, %v4833
        %v4836 = vshrl.u32 %v4408, 16
        %v4838 = vrot.slane %v4836, 2
        %v4839 = vshll.u32 %v4408, 16
        %v4841 = vrot.slane %v4839, 3
        %v4842 = vor.u32 %v4838, %v4841
        %v4843 = vsel %vm4782, %v4824, %v4842
        %v4845 = vshrl.u32 %v4409, 16
        %v4847 = vrot.slane %v4845, 2
        %v4848 = vshll.u32 %v4409, 16
        %v4850 = vrot.slane %v4848, 3
        %v4851 = vor.u32 %v4847, %v4850
        %v4852 = vsel %vm4782, %v4833, %v4851
        %v4854 = vshrl.u32 %v4410, 16
        %v4856 = vrot.slane %v4854, 2
        %v4857 = vshll.u32 %v4410, 16
        %v4859 = vrot.slane %v4857, 3
        %v4860 = vor.u32 %v4856, %v4859
        %v4861 = vsel %vm4782, %v4842, %v4860
        %v4863 = vshrl.u32 %v4411, 16
        %v4865 = vrot.slane %v4863, 2
        %v4866 = vshll.u32 %v4411, 16
        %v4868 = vrot.slane %v4866, 3
        %v4869 = vor.u32 %v4865, %v4868
        %v4870 = vsel %vm4782, %v4851, %v4869
        %v4872 = vshrl.u32 %v4412, 16
        %v4874 = vrot.slane %v4872, 2
        %v4875 = vshll.u32 %v4412, 16
        %v4877 = vrot.slane %v4875, 3
        %v4878 = vor.u32 %v4874, %v4877
        %v4879 = vsel %vm4782, %v4860, %v4878
        %v4881 = vshrl.u32 %v4413, 16
        %v4883 = vrot.slane %v4881, 2
        %v4884 = vshll.u32 %v4413, 16
        %v4886 = vrot.slane %v4884, 3
        %v4887 = vor.u32 %v4883, %v4886
        %v4888 = vsel %vm4782, %v4869, %v4887
        %v4890 = vshrl.u32 %v4414, 16
        %v4892 = vrot.slane %v4890, 2
        %v4893 = vshll.u32 %v4414, 16
        %v4895 = vrot.slane %v4893, 3
        %v4896 = vor.u32 %v4892, %v4895
        %v4897 = vsel %vm4782, %v4878, %v4896
        %v4899 = vshrl.u32 %v4415, 16
        %v4901 = vrot.slane %v4899, 2
        %v4902 = vshll.u32 %v4415, 16
        %v4904 = vrot.slane %v4902, 3
        %v4905 = vor.u32 %v4901, %v4904
        %v4906 = vsel %vm4782, %v4887, %v4905
        %v4908 = vshrl.u32 %v4416, 16
        %v4910 = vrot.slane %v4908, 2
        %v4911 = vshll.u32 %v4416, 16
        %v4913 = vrot.slane %v4911, 3
        %v4914 = vor.u32 %v4910, %v4913
        %v4915 = vsel %vm4782, %v4896, %v4914
        %v4917 = vshrl.u32 %v4417, 16
        %v4919 = vrot.slane %v4917, 2
        %v4920 = vshll.u32 %v4417, 16
        %v4922 = vrot.slane %v4920, 3
        %v4923 = vor.u32 %v4919, %v4922
        %v4924 = vsel %vm4782, %v4905, %v4923
        %v4926 = vshrl.u32 %v4418, 16
        %v4928 = vrot.slane %v4926, 2
        %v4929 = vshll.u32 %v4418, 16
        %v4931 = vrot.slane %v4929, 3
        %v4932 = vor.u32 %v4928, %v4931
        %v4933 = vsel %vm4782, %v4914, %v4932
        %v4935 = vshrl.u32 %v4419, 16
        %v4937 = vrot.slane %v4935, 2
        %v4938 = vshll.u32 %v4419, 16
        %v4940 = vrot.slane %v4938, 3
        %v4941 = vor.u32 %v4937, %v4940
        %v4942 = vsel %vm4782, %v4923, %v4941
        %v4944 = vshrl.u32 %v4420, 16
        %v4946 = vrot.slane %v4944, 2
        %v4947 = vshll.u32 %v4420, 16
        %v4949 = vrot.slane %v4947, 3
        %v4950 = vor.u32 %v4946, %v4949
        %v4951 = vsel %vm4782, %v4932, %v4950
        %v4953 = vshrl.u32 %v4421, 16
        %v4955 = vrot.slane %v4953, 2
        %v4956 = vshll.u32 %v4421, 16
        %v4958 = vrot.slane %v4956, 3
        %v4959 = vor.u32 %v4955, %v4958
        %v4960 = vsel %vm4782, %v4941, %v4959
        %v4962 = vshrl.u32 %v4422, 16
        %v4964 = vrot.slane %v4962, 2
        %v4965 = vshll.u32 %v4422, 16
        %v4967 = vrot.slane %v4965, 3
        %v4968 = vor.u32 %v4964, %v4967
        %v4969 = vsel %vm4782, %v4950, %v4968
        %v4971 = vshrl.u32 %v4423, 16
        %v4973 = vrot.slane %v4971, 2
        %v4974 = vshll.u32 %v4423, 16
        %v4976 = vrot.slane %v4974, 3
        %v4977 = vor.u32 %v4973, %v4976
        %v4978 = vsel %vm4782, %v4959, %v4977
        %v4980 = vshrl.u32 %v4780, 16
        %v4982 = vrot.slane %v4980, 2
        %v4983 = vshll.u32 %v4780, 16
        %v4985 = vrot.slane %v4983, 3
        %v4986 = vor.u32 %v4982, %v4985
        %v4987 = vsel %vm4782, %v4968, %v4986
        %v4989 = vshrl.u32 %v4781, 16
        %v4991 = vrot.slane %v4989, 2
        %v4992 = vshll.u32 %v4781, 16
        %v4994 = vrot.slane %v4992, 3
        %v4995 = vor.u32 %v4991, %v4994
        %v4996 = vsel %vm4782, %v4977, %v4995
        %v5053 = vunpack.c.l.b16 %v4745
        %v5054 = vunpack.c.l.b16 %v4746
        %v5055 = vunpack.c.l.b16 %v4747
        %v5056 = vunpack.c.l.b16 %v4748
        %v5057 = vunpack.c.l.b16 %v4749
        %v5058 = vunpack.c.l.b16 %v4750
        %v5059 = vunpack.c.l.b16 %v4751
        %v5060 = vunpack.c.l.b16 %v4752
        %v5061 = vunpack.c.l.b16 %v4753
        %v5062 = vunpack.c.l.b16 %v4754
        %v5063 = vunpack.c.l.b16 %v4755
        %v5064 = vunpack.c.l.b16 %v4756
        %v5065 = vunpack.c.l.b16 %v4757
        %v5066 = vunpack.c.l.b16 %v4758
        %v5067 = vunpack.c.l.b16 %v4759
        %v5068 = vunpack.c.l.b16 %v4760
        %v5069 = vunpack.c.l.b16 %v4761
        %v5070 = vunpack.c.l.b16 %v4762
        %v5071 = vunpack.c.l.b16 %v4763
        %v5072 = vunpack.c.l.b16 %v4764
        %v5073 = vunpack.c.l.b16 %v4765
        %v5074 = vunpack.c.l.b16 %v4766
        %v5075 = vunpack.c.l.b16 %v4767
        %v5076 = vunpack.c.l.b16 %v4768
        %v5077 = vunpack.c.l.b16 %v4769
        %v5078 = vunpack.c.l.b16 %v4770
        %v5079 = vunpack.c.l.b16 %v4771
        %v5080 = vunpack.c.l.b16 %v4772
        %v5081 = vunpack.c.l.b16 %v4773
        %v5082 = vunpack.c.l.b16 %v4774
        %v5083 = vunpack.c.l.b16 %v4775
        %v5084 = vunpack.c.l.b16 %v4776
        %v5085 = vpack.c.b16 %v5054, %v5053
        %v5086 = vpack.c.b16 %v5056, %v5055
        %v5087 = vpack.c.b16 %v5058, %v5057
        %v5088 = vpack.c.b16 %v5060, %v5059
        %v5089 = vpack.c.b16 %v5062, %v5061
        %v5090 = vpack.c.b16 %v5064, %v5063
        %v5091 = vpack.c.b16 %v5066, %v5065
        %v5092 = vpack.c.b16 %v5068, %v5067
        %v5093 = vpack.c.b16 %v5070, %v5069
        %v5094 = vpack.c.b16 %v5072, %v5071
        %v5095 = vpack.c.b16 %v5074, %v5073
        %v5096 = vpack.c.b16 %v5076, %v5075
        %v5097 = vpack.c.b16 %v5078, %v5077
        %v5098 = vpack.c.b16 %v5080, %v5079
        %v5099 = vpack.c.b16 %v5082, %v5081
        %v5100 = vpack.c.b16 %v5084, %v5083
        %5117 = vmatprep.subr.bf16.mxu0 0
        %5118 = vmatpush1.bf16.msra.mxu0 %v5092
        %5119 = vmatprep.subr.bf16.mxu0 0
        %5120 = vmatpush1.bf16.msra.mxu0 %v5091
        %5121 = vmatprep.subr.bf16.mxu0 0
        %5122 = vmatpush1.bf16.msra.mxu0 %v5090
        %5123 = vmatprep.subr.bf16.mxu0 0
        %5124 = vmatpush1.bf16.msra.mxu0 %v5089
        %5125 = vmatprep.subr.bf16.mxu0 0
        %5126 = vmatpush1.bf16.msra.mxu0 %v5088
        %5127 = vmatprep.subr.bf16.mxu0 0
        %5128 = vmatpush1.bf16.msra.mxu0 %v5087
        %5129 = vmatprep.subr.bf16.mxu0 0
        %5130 = vmatpush1.bf16.msra.mxu0 %v5086
        %5131 = vmatprep.subr.bf16.mxu0 0
        %5132 = vmatpush1.bf16.msra.mxu0 %v5085
        %5133 = vmatprep.subr.bf16.mxu0 0
        %5134 = vmatpush2.bf16.msra.mxu0 %v5100
        %5135 = vmatprep.subr.bf16.mxu0 0
        %5136 = vmatpush2.bf16.msra.mxu0 %v5099
        %5137 = vmatprep.subr.bf16.mxu0 0
        %5138 = vmatpush2.bf16.msra.mxu0 %v5098
        %5139 = vmatprep.subr.bf16.mxu0 0
        %5140 = vmatpush2.bf16.msra.mxu0 %v5097
        %5141 = vmatprep.subr.bf16.mxu0 0
        %5142 = vmatpush2.bf16.msra.mxu0 %v5096
        %5143 = vmatprep.subr.bf16.mxu0 0
        %5144 = vmatpush2.bf16.msra.mxu0 %v5095
        %5145 = vmatprep.subr.bf16.mxu0 0
        %5146 = vmatpush2.bf16.msra.mxu0 %v5094
        %5147 = vmatprep.subr.bf16.mxu0 0
        %5148 = vmatpush2.bf16.msra.mxu0 %v5093
        %5149 = vmatprep.mubr.bf16.mxu0 %v4816
        %5150 = vmatmul.mubr.bf16.gmra.mxu0 %v4799
        %v5151 = vpop.f32.mrf.mxu0
        %v5152 = vadd.f32 0.0, %v5151
        %v5153 = vpop.f32.mrf.mxu0
        %v5154 = vpop.f32.mrf.mxu0
        %v5155 = vadd.f32 0.0, %v5154
        %v5156 = vpop.f32.mrf.mxu0
        %5157 = vmatprep.mubr.bf16.mxu0 %v4834
        %5158 = vmatmul.mubr.bf16.gmra.mxu0 %v4825
        %v5159 = vpop.f32.mrf.mxu0
        %v5160 = vadd.f32 0.0, %v5159
        %v5161 = vpop.f32.mrf.mxu0
        %v5162 = vpop.f32.mrf.mxu0
        %v5163 = vadd.f32 0.0, %v5162
        %v5164 = vpop.f32.mrf.mxu0
        %5165 = vmatprep.mubr.bf16.mxu0 %v4852
        %5166 = vmatmul.mubr.bf16.gmra.mxu0 %v4843
        %v5167 = vpop.f32.mrf.mxu0
        %v5168 = vadd.f32 0.0, %v5167
        %v5169 = vpop.f32.mrf.mxu0
        %v5170 = vpop.f32.mrf.mxu0
        %v5171 = vadd.f32 0.0, %v5170
        %v5172 = vpop.f32.mrf.mxu0
        %5173 = vmatprep.mubr.bf16.mxu0 %v4870
        %5174 = vmatmul.mubr.bf16.gmra.mxu0 %v4861
        %v5175 = vpop.f32.mrf.mxu0
        %v5176 = vadd.f32 0.0, %v5175
        %v5177 = vpop.f32.mrf.mxu0
        %v5178 = vpop.f32.mrf.mxu0
        %v5179 = vadd.f32 0.0, %v5178
        %v5180 = vpop.f32.mrf.mxu0
        %5181 = vmatprep.mubr.bf16.mxu0 %v4888
        %5182 = vmatmul.mubr.bf16.gmra.mxu0 %v4879
        %v5183 = vpop.f32.mrf.mxu0
        %v5184 = vadd.f32 0.0, %v5183
        %v5185 = vpop.f32.mrf.mxu0
        %v5186 = vpop.f32.mrf.mxu0
        %v5187 = vadd.f32 0.0, %v5186
        %v5188 = vpop.f32.mrf.mxu0
        %5189 = vmatprep.mubr.bf16.mxu0 %v4906
        %5190 = vmatmul.mubr.bf16.gmra.mxu0 %v4897
        %v5191 = vpop.f32.mrf.mxu0
        %v5192 = vadd.f32 0.0, %v5191
        %v5193 = vpop.f32.mrf.mxu0
        %v5194 = vpop.f32.mrf.mxu0
        %v5195 = vadd.f32 0.0, %v5194
        %v5196 = vpop.f32.mrf.mxu0
        %5197 = vmatprep.mubr.bf16.mxu0 %v4924
        %5198 = vmatmul.mubr.bf16.gmra.mxu0 %v4915
        %v5199 = vpop.f32.mrf.mxu0
        %v5200 = vadd.f32 0.0, %v5199
        %v5201 = vpop.f32.mrf.mxu0
        %v5202 = vpop.f32.mrf.mxu0
        %v5203 = vadd.f32 0.0, %v5202
        %v5204 = vpop.f32.mrf.mxu0
        %5205 = vmatprep.mubr.bf16.mxu0 %v4942
        %5206 = vmatmul.mubr.bf16.gmra.mxu0 %v4933
        %v5207 = vpop.f32.mrf.mxu0
        %v5208 = vadd.f32 0.0, %v5207
        %v5209 = vpop.f32.mrf.mxu0
        %v5210 = vpop.f32.mrf.mxu0
        %v5211 = vadd.f32 0.0, %v5210
        %v5212 = vpop.f32.mrf.mxu0
        %5213 = vmatprep.mubr.bf16.mxu0 %v4960
        %5214 = vmatmul.mubr.bf16.gmra.mxu0 %v4951
        %v5215 = vpop.f32.mrf.mxu0
        %v5216 = vadd.f32 0.0, %v5215
        %v5217 = vpop.f32.mrf.mxu0
        %v5218 = vpop.f32.mrf.mxu0
        %v5219 = vadd.f32 0.0, %v5218
        %v5220 = vpop.f32.mrf.mxu0
        %5221 = vmatprep.mubr.bf16.mxu0 %v4978
        %5222 = vmatmul.mubr.bf16.gmra.mxu0 %v4969
        %v5223 = vpop.f32.mrf.mxu0
        %v5224 = vadd.f32 0.0, %v5223
        %v5225 = vpop.f32.mrf.mxu0
        %v5226 = vpop.f32.mrf.mxu0
        %v5227 = vadd.f32 0.0, %v5226
        %v5228 = vpop.f32.mrf.mxu0
        %5229 = vmatprep.mubr.bf16.mxu0 %v4996
        %5230 = vmatmul.mubr.bf16.gmra.mxu0 %v4987
        %v5231 = vpop.f32.mrf.mxu0
        %v5232 = vadd.f32 0.0, %v5231
        %v5233 = vpop.f32.mrf.mxu0
        %v5234 = vpop.f32.mrf.mxu0
        %v5235 = vadd.f32 0.0, %v5234
        %v5236 = vpop.f32.mrf.mxu0
        %5237 = vmatprep.mubr.bf16.mxu0 %v4995
        %5238 = vmatmul.mubr.bf16.gmra.mxu0 %v4986
        %v5239 = vpop.f32.mrf.mxu0
        %v5240 = vadd.f32 0.0, %v5239
        %v5241 = vpop.f32.mrf.mxu0
        %v5242 = vpop.f32.mrf.mxu0
        %v5243 = vpop.f32.mrf.mxu0
        %5244 = vdwg.mxu0
        %v5245 = vadd.f32 %v4720, %v5152
        %v5246 = vadd.f32 %v4721, %v5155
        %v5247 = vadd.f32 %v4722, %v5160
        %v5248 = vadd.f32 %v4723, %v5163
        %v5249 = vadd.f32 %v4724, %v5168
        %v5250 = vadd.f32 %v4725, %v5171
        %v5251 = vadd.f32 %v4726, %v5176
        %v5252 = vadd.f32 %v4727, %v5179
        %v5253 = vadd.f32 %v4728, %v5184
        %v5254 = vadd.f32 %v4729, %v5187
        %v5255 = vadd.f32 %v4730, %v5192
        %v5256 = vadd.f32 %v4731, %v5195
        %v5257 = vadd.f32 %v4732, %v5200
        %v5258 = vadd.f32 %v4733, %v5203
        %v5259 = vadd.f32 %v4734, %v5208
        %v5260 = vadd.f32 %v4735, %v5211
        %v5261 = vadd.f32 %v4736, %v5216
        %v5262 = vadd.f32 %v4737, %v5219
        %v5263 = vadd.f32 %v4738, %v5224
        %v5264 = vadd.f32 %v4739, %v5227
        %v5265 = vadd.f32 %v4740, %v5232
        %v5266 = vadd.f32 %v4741, %v5235
        %v5267 = vadd.f32 %v4742, %v5240
        %v5268 = vld [vmem:[%s0 + $0x10] sm:$0x88]
        %s5269 = scalar_lea.vmem %s1630, 1024 [#allocation2]
        %v5270 = vld [vmem:[%s5269] sm:$0xf]
        %v5271 = vld [vmem:[%s5269 + $0x4] sm:$0xf]
        %v5272 = vld [vmem:[%s5269 + $0x8] sm:$0xf]
        %v5273 = vld [vmem:[%s5269 + $0xc] sm:$0xf]
        %v5274 = vld [vmem:[%s5269 + $0x10] sm:$0xf]
        %v5275 = vld [vmem:[%s5269 + $0x14] sm:$0xf]
        %v5276 = vld [vmem:[%s5269 + $0x18] sm:$0xf]
        %v5277 = vld [vmem:[%s5269 + $0x1c] sm:$0xf]
        %v5278 = vld [vmem:[%s5269 + $0x20] sm:$0xf]
        %v5279 = vld [vmem:[%s5269 + $0x24] sm:$0xf]
        %v5280 = vld [vmem:[%s5269 + $0x28] sm:$0xf]
        %v5281 = vld [vmem:[%s5269 + $0x2c] sm:$0xf]
        %v5282 = vld [vmem:[%s5269 + $0x30] sm:$0xf]
        %v5283 = vld [vmem:[%s5269 + $0x34] sm:$0xf]
        %v5284 = vld [vmem:[%s5269 + $0x38] sm:$0xf]
        %v5285 = vld [vmem:[%s5269 + $0x3c] sm:$0xf]
        %v5286 = vld [vmem:[%s5269 + $0x40] sm:$0xf]
        %v5287 = vld [vmem:[%s5269 + $0x44] sm:$0xf]
        %v5288 = vld [vmem:[%s5269 + $0x48] sm:$0xf]
        %v5289 = vld [vmem:[%s5269 + $0x4c] sm:$0xf]
        %v5290 = vld [vmem:[%s5269 + $0x50] sm:$0xf]
        %v5291 = vld [vmem:[%s5269 + $0x54] sm:$0xf]
        %v5292 = vld [vmem:[%s5269 + $0x58] sm:$0xf]
        %v5293 = vld [vmem:[%s5269 + $0x5c] sm:$0xf]
        %v5294 = vld [vmem:[%s5269 + $0x60] sm:$0xf]
        %v5295 = vld [vmem:[%s5269 + $0x64] sm:$0xf]
        %v5296 = vld [vmem:[%s5269 + $0x68] sm:$0xf]
        %v5297 = vld [vmem:[%s5269 + $0x6c] sm:$0xf]
        %v5298 = vld [vmem:[%s5269 + $0x70] sm:$0xf]
        %v5299 = vld [vmem:[%s5269 + $0x74] sm:$0xf]
        %v5300 = vld [vmem:[%s5269 + $0x78] sm:$0xf]
        %v5301 = vld [vmem:[%s5269 + $0x7c] sm:$0xf]
        %v5303 = vunpack.c.l.b16 %v5268
        %v5304 = vunpack.c.h.b16 %v5268
        %v5305 = vpack.c.b16 %v4358, %v5303
        %v5306 = vpack.c.b16 %v4359, %v5304
        %vm5307 = vcmask 1044480
        %v5308 = vrot.slane %v5305, 3
        %v5309 = vrot.slane %v4404, 3
        %v5310 = vsel %vm5307, %v5308, %v5309
        %v5311 = vrot.slane %v5306, 3
        %v5312 = vrot.slane %v4405, 3
        %v5313 = vsel %vm5307, %v5311, %v5312
        %v5314 = vrot.slane %v4406, 3
        %v5315 = vsel %vm5307, %v5309, %v5314
        %v5316 = vrot.slane %v4407, 3
        %v5317 = vsel %vm5307, %v5312, %v5316
        %v5318 = vrot.slane %v4408, 3
        %v5319 = vsel %vm5307, %v5314, %v5318
        %v5320 = vrot.slane %v4409, 3
        %v5321 = vsel %vm5307, %v5316, %v5320
        %v5322 = vrot.slane %v4410, 3
        %v5323 = vsel %vm5307, %v5318, %v5322
        %v5324 = vrot.slane %v4411, 3
        %v5325 = vsel %vm5307, %v5320, %v5324
        %v5326 = vrot.slane %v4412, 3
        %v5327 = vsel %vm5307, %v5322, %v5326
        %v5328 = vrot.slane %v4413, 3
        %v5329 = vsel %vm5307, %v5324, %v5328
        %v5330 = vrot.slane %v4414, 3
        %v5331 = vsel %vm5307, %v5326, %v5330
        %v5332 = vrot.slane %v4415, 3
        %v5333 = vsel %vm5307, %v5328, %v5332
        %v5334 = vrot.slane %v4416, 3
        %v5335 = vsel %vm5307, %v5330, %v5334
        %v5336 = vrot.slane %v4417, 3
        %v5337 = vsel %vm5307, %v5332, %v5336
        %v5338 = vrot.slane %v4418, 3
        %v5339 = vsel %vm5307, %v5334, %v5338
        %v5340 = vrot.slane %v4419, 3
        %v5341 = vsel %vm5307, %v5336, %v5340
        %v5342 = vrot.slane %v4420, 3
        %v5343 = vsel %vm5307, %v5338, %v5342
        %v5344 = vrot.slane %v4421, 3
        %v5345 = vsel %vm5307, %v5340, %v5344
        %v5346 = vrot.slane %v4422, 3
        %v5347 = vsel %vm5307, %v5342, %v5346
        %v5348 = vrot.slane %v4423, 3
        %v5349 = vsel %vm5307, %v5344, %v5348
        %v5350 = vrot.slane %v4780, 3
        %v5351 = vsel %vm5307, %v5346, %v5350
        %v5352 = vrot.slane %v4781, 3
        %v5353 = vsel %vm5307, %v5348, %v5352
        %v5410 = vunpack.c.l.b16 %v5270
        %v5411 = vunpack.c.l.b16 %v5271
        %v5412 = vunpack.c.l.b16 %v5272
        %v5413 = vunpack.c.l.b16 %v5273
        %v5414 = vunpack.c.l.b16 %v5274
        %v5415 = vunpack.c.l.b16 %v5275
        %v5416 = vunpack.c.l.b16 %v5276
        %v5417 = vunpack.c.l.b16 %v5277
        %v5418 = vunpack.c.l.b16 %v5278
        %v5419 = vunpack.c.l.b16 %v5279
        %v5420 = vunpack.c.l.b16 %v5280
        %v5421 = vunpack.c.l.b16 %v5281
        %v5422 = vunpack.c.l.b16 %v5282
        %v5423 = vunpack.c.l.b16 %v5283
        %v5424 = vunpack.c.l.b16 %v5284
        %v5425 = vunpack.c.l.b16 %v5285
        %v5426 = vunpack.c.l.b16 %v5286
        %v5427 = vunpack.c.l.b16 %v5287
        %v5428 = vunpack.c.l.b16 %v5288
        %v5429 = vunpack.c.l.b16 %v5289
        %v5430 = vunpack.c.l.b16 %v5290
        %v5431 = vunpack.c.l.b16 %v5291
        %v5432 = vunpack.c.l.b16 %v5292
        %v5433 = vunpack.c.l.b16 %v5293
        %v5434 = vunpack.c.l.b16 %v5294
        %v5435 = vunpack.c.l.b16 %v5295
        %v5436 = vunpack.c.l.b16 %v5296
        %v5437 = vunpack.c.l.b16 %v5297
        %v5438 = vunpack.c.l.b16 %v5298
        %v5439 = vunpack.c.l.b16 %v5299
        %v5440 = vunpack.c.l.b16 %v5300
        %v5441 = vunpack.c.l.b16 %v5301
        %v5442 = vpack.c.b16 %v5411, %v5410
        %v5443 = vpack.c.b16 %v5413, %v5412
        %v5444 = vpack.c.b16 %v5415, %v5414
        %v5445 = vpack.c.b16 %v5417, %v5416
        %v5446 = vpack.c.b16 %v5419, %v5418
        %v5447 = vpack.c.b16 %v5421, %v5420
        %v5448 = vpack.c.b16 %v5423, %v5422
        %v5449 = vpack.c.b16 %v5425, %v5424
        %v5450 = vpack.c.b16 %v5427, %v5426
        %v5451 = vpack.c.b16 %v5429, %v5428
        %v5452 = vpack.c.b16 %v5431, %v5430
        %v5453 = vpack.c.b16 %v5433, %v5432
        %v5454 = vpack.c.b16 %v5435, %v5434
        %v5455 = vpack.c.b16 %v5437, %v5436
        %v5456 = vpack.c.b16 %v5439, %v5438
        %v5457 = vpack.c.b16 %v5441, %v5440
        %5474 = vmatprep.subr.bf16.mxu0 0
        %5475 = vmatpush1.bf16.msra.mxu0 %v5449
        %5476 = vmatprep.subr.bf16.mxu0 0
        %5477 = vmatpush1.bf16.msra.mxu0 %v5448
        %5478 = vmatprep.subr.bf16.mxu0 0
        %5479 = vmatpush1.bf16.msra.mxu0 %v5447
        %5480 = vmatprep.subr.bf16.mxu0 0
        %5481 = vmatpush1.bf16.msra.mxu0 %v5446
        %5482 = vmatprep.subr.bf16.mxu0 0
        %5483 = vmatpush1.bf16.msra.mxu0 %v5445
        %5484 = vmatprep.subr.bf16.mxu0 0
        %5485 = vmatpush1.bf16.msra.mxu0 %v5444
        %5486 = vmatprep.subr.bf16.mxu0 0
        %5487 = vmatpush1.bf16.msra.mxu0 %v5443
        %5488 = vmatprep.subr.bf16.mxu0 0
        %5489 = vmatpush1.bf16.msra.mxu0 %v5442
        %5490 = vmatprep.subr.bf16.mxu0 0
        %5491 = vmatpush2.bf16.msra.mxu0 %v5457
        %5492 = vmatprep.subr.bf16.mxu0 0
        %5493 = vmatpush2.bf16.msra.mxu0 %v5456
        %5494 = vmatprep.subr.bf16.mxu0 0
        %5495 = vmatpush2.bf16.msra.mxu0 %v5455
        %5496 = vmatprep.subr.bf16.mxu0 0
        %5497 = vmatpush2.bf16.msra.mxu0 %v5454
        %5498 = vmatprep.subr.bf16.mxu0 0
        %5499 = vmatpush2.bf16.msra.mxu0 %v5453
        %5500 = vmatprep.subr.bf16.mxu0 0
        %5501 = vmatpush2.bf16.msra.mxu0 %v5452
        %5502 = vmatprep.subr.bf16.mxu0 0
        %5503 = vmatpush2.bf16.msra.mxu0 %v5451
        %5504 = vmatprep.subr.bf16.mxu0 0
        %5505 = vmatpush2.bf16.msra.mxu0 %v5450
        %5506 = vmatprep.mubr.bf16.mxu0 %v5313
        %5507 = vmatmul.mubr.bf16.gmra.mxu0 %v5310
        %v5508 = vpop.f32.mrf.mxu0
        %v5509 = vadd.f32 0.0, %v5508
        %v5510 = vpop.f32.mrf.mxu0
        %v5511 = vpop.f32.mrf.mxu0
        %v5512 = vadd.f32 0.0, %v5511
        %v5513 = vpop.f32.mrf.mxu0
        %5514 = vmatprep.mubr.bf16.mxu0 %v5317
        %5515 = vmatmul.mubr.bf16.gmra.mxu0 %v5315
        %v5516 = vpop.f32.mrf.mxu0
        %v5517 = vadd.f32 0.0, %v5516
        %v5518 = vpop.f32.mrf.mxu0
        %v5519 = vpop.f32.mrf.mxu0
        %v5520 = vadd.f32 0.0, %v5519
        %v5521 = vpop.f32.mrf.mxu0
        %5522 = vmatprep.mubr.bf16.mxu0 %v5321
        %5523 = vmatmul.mubr.bf16.gmra.mxu0 %v5319
        %v5524 = vpop.f32.mrf.mxu0
        %v5525 = vadd.f32 0.0, %v5524
        %v5526 = vpop.f32.mrf.mxu0
        %v5527 = vpop.f32.mrf.mxu0
        %v5528 = vadd.f32 0.0, %v5527
        %v5529 = vpop.f32.mrf.mxu0
        %5530 = vmatprep.mubr.bf16.mxu0 %v5325
        %5531 = vmatmul.mubr.bf16.gmra.mxu0 %v5323
        %v5532 = vpop.f32.mrf.mxu0
        %v5533 = vadd.f32 0.0, %v5532
        %v5534 = vpop.f32.mrf.mxu0
        %v5535 = vpop.f32.mrf.mxu0
        %v5536 = vadd.f32 0.0, %v5535
        %v5537 = vpop.f32.mrf.mxu0
        %5538 = vmatprep.mubr.bf16.mxu0 %v5329
        %5539 = vmatmul.mubr.bf16.gmra.mxu0 %v5327
        %v5540 = vpop.f32.mrf.mxu0
        %v5541 = vadd.f32 0.0, %v5540
        %v5542 = vpop.f32.mrf.mxu0
        %v5543 = vpop.f32.mrf.mxu0
        %v5544 = vadd.f32 0.0, %v5543
        %v5545 = vpop.f32.mrf.mxu0
        %5546 = vmatprep.mubr.bf16.mxu0 %v5333
        %5547 = vmatmul.mubr.bf16.gmra.mxu0 %v5331
        %v5548 = vpop.f32.mrf.mxu0
        %v5549 = vadd.f32 0.0, %v5548
        %v5550 = vpop.f32.mrf.mxu0
        %v5551 = vpop.f32.mrf.mxu0
        %v5552 = vadd.f32 0.0, %v5551
        %v5553 = vpop.f32.mrf.mxu0
        %5554 = vmatprep.mubr.bf16.mxu0 %v5337
        %5555 = vmatmul.mubr.bf16.gmra.mxu0 %v5335
        %v5556 = vpop.f32.mrf.mxu0
        %v5557 = vadd.f32 0.0, %v5556
        %v5558 = vpop.f32.mrf.mxu0
        %v5559 = vpop.f32.mrf.mxu0
        %v5560 = vadd.f32 0.0, %v5559
        %v5561 = vpop.f32.mrf.mxu0
        %5562 = vmatprep.mubr.bf16.mxu0 %v5341
        %5563 = vmatmul.mubr.bf16.gmra.mxu0 %v5339
        %v5564 = vpop.f32.mrf.mxu0
        %v5565 = vadd.f32 0.0, %v5564
        %v5566 = vpop.f32.mrf.mxu0
        %v5567 = vpop.f32.mrf.mxu0
        %v5568 = vadd.f32 0.0, %v5567
        %v5569 = vpop.f32.mrf.mxu0
        %5570 = vmatprep.mubr.bf16.mxu0 %v5345
        %5571 = vmatmul.mubr.bf16.gmra.mxu0 %v5343
        %v5572 = vpop.f32.mrf.mxu0
        %v5573 = vadd.f32 0.0, %v5572
        %v5574 = vpop.f32.mrf.mxu0
        %v5575 = vpop.f32.mrf.mxu0
        %v5576 = vadd.f32 0.0, %v5575
        %v5577 = vpop.f32.mrf.mxu0
        %5578 = vmatprep.mubr.bf16.mxu0 %v5349
        %5579 = vmatmul.mubr.bf16.gmra.mxu0 %v5347
        %v5580 = vpop.f32.mrf.mxu0
        %v5581 = vadd.f32 0.0, %v5580
        %v5582 = vpop.f32.mrf.mxu0
        %v5583 = vpop.f32.mrf.mxu0
        %v5584 = vadd.f32 0.0, %v5583
        %v5585 = vpop.f32.mrf.mxu0
        %5586 = vmatprep.mubr.bf16.mxu0 %v5353
        %5587 = vmatmul.mubr.bf16.gmra.mxu0 %v5351
        %v5588 = vpop.f32.mrf.mxu0
        %v5589 = vadd.f32 0.0, %v5588
        %v5590 = vpop.f32.mrf.mxu0
        %v5591 = vpop.f32.mrf.mxu0
        %v5592 = vadd.f32 0.0, %v5591
        %v5593 = vpop.f32.mrf.mxu0
        %5594 = vmatprep.mubr.bf16.mxu0 %v5352
        %5595 = vmatmul.mubr.bf16.gmra.mxu0 %v5350
        %v5596 = vpop.f32.mrf.mxu0
        %v5597 = vadd.f32 0.0, %v5596
        %v5598 = vpop.f32.mrf.mxu0
        %v5599 = vpop.f32.mrf.mxu0
        %v5600 = vpop.f32.mrf.mxu0
        %5601 = vdwg.mxu0
        %v5602 = vadd.f32 %v5245, %v5509
        %v5603 = vadd.f32 %v5246, %v5512
        %v5604 = vadd.f32 %v5247, %v5517
        %v5605 = vadd.f32 %v5248, %v5520
        %v5606 = vadd.f32 %v5249, %v5525
        %v5607 = vadd.f32 %v5250, %v5528
        %v5608 = vadd.f32 %v5251, %v5533
        %v5609 = vadd.f32 %v5252, %v5536
        %v5610 = vadd.f32 %v5253, %v5541
        %v5611 = vadd.f32 %v5254, %v5544
        %v5612 = vadd.f32 %v5255, %v5549
        %v5613 = vadd.f32 %v5256, %v5552
        %v5614 = vadd.f32 %v5257, %v5557
        %v5615 = vadd.f32 %v5258, %v5560
        %v5616 = vadd.f32 %v5259, %v5565
        %v5617 = vadd.f32 %v5260, %v5568
        %v5618 = vadd.f32 %v5261, %v5573
        %v5619 = vadd.f32 %v5262, %v5576
        %v5620 = vadd.f32 %v5263, %v5581
        %v5621 = vadd.f32 %v5264, %v5584
        %v5622 = vadd.f32 %v5265, %v5589
        %v5623 = vadd.f32 %v5266, %v5592
        %v5624 = vadd.f32 %v5267, %v5597
        %v5625 = vld [vmem:[%s2] sm:$0xff]
        %v5626 = vld [vmem:[%s2 + $0x8] sm:$0xff]
        %v5627 = vld [vmem:[%s2 + $0x10] sm:$0xff]
        %v5628 = vld [vmem:[%s2 + $0x18] sm:$0xff]
        %v5629 = vld [vmem:[%s2 + $0x20] sm:$0xff]
        %v5630 = vld [vmem:[%s2 + $0x28] sm:$0xff]
        %v5631 = vld [vmem:[%s2 + $0x30] sm:$0xff]
        %v5632 = vld [vmem:[%s2 + $0x38] sm:$0xff]
        %v5633 = vld [vmem:[%s2 + $0x40] sm:$0xff]
        %v5634 = vld [vmem:[%s2 + $0x48] sm:$0xff]
        %v5635 = vld [vmem:[%s2 + $0x50] sm:$0xff]
        %v5636 = vld [vmem:[%s2 + $0x58] sm:$0xff]
        %v5637 = vld [vmem:[%s2 + $0x60] sm:$0xff]
        %v5638 = vld [vmem:[%s2 + $0x68] sm:$0xff]
        %v5639 = vld [vmem:[%s2 + $0x70] sm:$0xff]
        %v5640 = vld [vmem:[%s2 + $0x78] sm:$0xff]
        %v5641 = vld [vmem:[%s2 + $0x80] sm:$0xff]
        %v5642 = vld [vmem:[%s2 + $0x88] sm:$0xff]
        %v5643 = vld [vmem:[%s2 + $0x90] sm:$0xff]
        %v5644 = vld [vmem:[%s2 + $0x98] sm:$0xff]
        %v5645 = vld [vmem:[%s2 + $0xa0] sm:$0xff]
        %v5646 = vld [vmem:[%s2 + $0xa8] sm:$0xff]
        %v5647 = vld [vmem:[%s2 + $0xb0] sm:$0x3]
        %v5648 = vld [vmem:[%s1687] sm:$0x1]
        %v5649 = vld [vmem:[%s1690] sm:$0x1]
        %5651 = vset.pattern.permute.xlu0 0
        %5652 = vperm.xlu0 %5651, %v5625
        %v5653 = vpop.permute.xlu0 %5652
        %5656 = vset.pattern.permute.xlu0 0
        %5657 = vperm.xlu0 %5656, %v5626
        %v5658 = vpop.permute.xlu0 %5657
        %5661 = vset.pattern.permute.xlu0 0
        %5662 = vperm.xlu0 %5661, %v5627
        %v5663 = vpop.permute.xlu0 %5662
        %5666 = vset.pattern.permute.xlu0 0
        %5667 = vperm.xlu0 %5666, %v5628
        %v5668 = vpop.permute.xlu0 %5667
        %5671 = vset.pattern.permute.xlu0 0
        %5672 = vperm.xlu0 %5671, %v5629
        %v5673 = vpop.permute.xlu0 %5672
        %5676 = vset.pattern.permute.xlu0 0
        %5677 = vperm.xlu0 %5676, %v5630
        %v5678 = vpop.permute.xlu0 %5677
        %5681 = vset.pattern.permute.xlu0 0
        %5682 = vperm.xlu0 %5681, %v5631
        %v5683 = vpop.permute.xlu0 %5682
        %5686 = vset.pattern.permute.xlu0 0
        %5687 = vperm.xlu0 %5686, %v5632
        %v5688 = vpop.permute.xlu0 %5687
        %5691 = vset.pattern.permute.xlu0 0
        %5692 = vperm.xlu0 %5691, %v5633
        %v5693 = vpop.permute.xlu0 %5692
        %5696 = vset.pattern.permute.xlu0 0
        %5697 = vperm.xlu0 %5696, %v5634
        %v5698 = vpop.permute.xlu0 %5697
        %5701 = vset.pattern.permute.xlu0 0
        %5702 = vperm.xlu0 %5701, %v5635
        %v5703 = vpop.permute.xlu0 %5702
        %5706 = vset.pattern.permute.xlu0 0
        %5707 = vperm.xlu0 %5706, %v5636
        %v5708 = vpop.permute.xlu0 %5707
        %5711 = vset.pattern.permute.xlu0 0
        %5712 = vperm.xlu0 %5711, %v5637
        %v5713 = vpop.permute.xlu0 %5712
        %5716 = vset.pattern.permute.xlu0 0
        %5717 = vperm.xlu0 %5716, %v5638
        %v5718 = vpop.permute.xlu0 %5717
        %5721 = vset.pattern.permute.xlu0 0
        %5722 = vperm.xlu0 %5721, %v5639
        %v5723 = vpop.permute.xlu0 %5722
        %5726 = vset.pattern.permute.xlu0 0
        %5727 = vperm.xlu0 %5726, %v5640
        %v5728 = vpop.permute.xlu0 %5727
        %5731 = vset.pattern.permute.xlu0 0
        %5732 = vperm.xlu0 %5731, %v5641
        %v5733 = vpop.permute.xlu0 %5732
        %5736 = vset.pattern.permute.xlu0 0
        %5737 = vperm.xlu0 %5736, %v5642
        %v5738 = vpop.permute.xlu0 %5737
        %5741 = vset.pattern.permute.xlu0 0
        %5742 = vperm.xlu0 %5741, %v5643
        %v5743 = vpop.permute.xlu0 %5742
        %5746 = vset.pattern.permute.xlu0 0
        %5747 = vperm.xlu0 %5746, %v5644
        %v5748 = vpop.permute.xlu0 %5747
        %5751 = vset.pattern.permute.xlu0 0
        %5752 = vperm.xlu0 %5751, %v5645
        %v5753 = vpop.permute.xlu0 %5752
        %5756 = vset.pattern.permute.xlu0 0
        %5757 = vperm.xlu0 %5756, %v5646
        %v5758 = vpop.permute.xlu0 %5757
        %5761 = vset.pattern.permute.xlu0 0
        %5762 = vperm.xlu0 %5761, %v5647
        %v5763 = vpop.permute.xlu0 %5762
        %v5765 = vmul.f32 %v5602, %v5653
        %v5766 = vmul.f32 %v5603, %v5658
        %v5767 = vmul.f32 %v5604, %v5663
        %v5768 = vmul.f32 %v5605, %v5668
        %v5769 = vmul.f32 %v5606, %v5673
        %v5770 = vmul.f32 %v5607, %v5678
        %v5771 = vmul.f32 %v5608, %v5683
        %v5772 = vmul.f32 %v5609, %v5688
        %v5773 = vmul.f32 %v5610, %v5693
        %v5774 = vmul.f32 %v5611, %v5698
        %v5775 = vmul.f32 %v5612, %v5703
        %v5776 = vmul.f32 %v5613, %v5708
        %v5777 = vmul.f32 %v5614, %v5713
        %v5778 = vmul.f32 %v5615, %v5718
        %v5779 = vmul.f32 %v5616, %v5723
        %v5780 = vmul.f32 %v5617, %v5728
        %v5781 = vmul.f32 %v5618, %v5733
        %v5782 = vmul.f32 %v5619, %v5738
        %v5783 = vmul.f32 %v5620, %v5743
        %v5784 = vmul.f32 %v5621, %v5748
        %v5785 = vmul.f32 %v5622, %v5753
        %v5786 = vmul.f32 %v5623, %v5758
        %v5787 = vmul.f32 %v5624, %v5763
        %v5788 = vadd.f32 %v5765, %v5766
        %v5789 = vadd.f32 %v5788, %v5767
        %v5790 = vadd.f32 %v5789, %v5768
        %v5791 = vadd.f32 %v5790, %v5769
        %v5792 = vadd.f32 %v5791, %v5770
        %v5793 = vadd.f32 %v5792, %v5771
        %v5794 = vadd.f32 %v5793, %v5772
        %v5795 = vadd.f32 %v5794, %v5773
        %v5796 = vadd.f32 %v5795, %v5774
        %v5797 = vadd.f32 %v5796, %v5775
        %v5798 = vadd.f32 %v5797, %v5776
        %v5799 = vadd.f32 %v5798, %v5777
        %v5800 = vadd.f32 %v5799, %v5778
        %v5801 = vadd.f32 %v5800, %v5779
        %v5802 = vadd.f32 %v5801, %v5780
        %v5803 = vadd.f32 %v5802, %v5781
        %v5804 = vadd.f32 %v5803, %v5782
        %v5805 = vadd.f32 %v5804, %v5783
        %v5806 = vadd.f32 %v5805, %v5784
        %v5807 = vadd.f32 %v5806, %v5785
        %v5808 = vadd.f32 %v5807, %v5786
        %vm5809 = vcmask 1041408
        %v5810 = vsel %vm5809, %v5787, 0.0
        %v5811 = vadd.f32 %v5808, %v5810
        %v5812 = vrot.slane %v5811, 4
        %v5813 = vadd.f32 %v5811, %v5812
        %v5814 = vrot.slane %v5813, 2
        %v5815 = vadd.f32 %v5813, %v5814
        %v5816 = vrot.slane %v5815, 1
        %v5817 = vadd.f32 %v5815, %v5816
        %v5818 = vmul.f32 %v5765, %v5602
        %v5819 = vmul.f32 %v5766, %v5603
        %v5820 = vmul.f32 %v5767, %v5604
        %v5821 = vmul.f32 %v5768, %v5605
        %v5822 = vmul.f32 %v5769, %v5606
        %v5823 = vmul.f32 %v5770, %v5607
        %v5824 = vmul.f32 %v5771, %v5608
        %v5825 = vmul.f32 %v5772, %v5609
        %v5826 = vmul.f32 %v5773, %v5610
        %v5827 = vmul.f32 %v5774, %v5611
        %v5828 = vmul.f32 %v5775, %v5612
        %v5829 = vmul.f32 %v5776, %v5613
        %v5830 = vmul.f32 %v5777, %v5614
        %v5831 = vmul.f32 %v5778, %v5615
        %v5832 = vmul.f32 %v5779, %v5616
        %v5833 = vmul.f32 %v5780, %v5617
        %v5834 = vmul.f32 %v5781, %v5618
        %v5835 = vmul.f32 %v5782, %v5619
        %v5836 = vmul.f32 %v5783, %v5620
        %v5837 = vmul.f32 %v5784, %v5621
        %v5838 = vmul.f32 %v5785, %v5622
        %v5839 = vmul.f32 %v5786, %v5623
        %v5840 = vmul.f32 %v5787, %v5624
        %v5841 = vadd.f32 %v5818, %v5819
        %v5842 = vadd.f32 %v5841, %v5820
        %v5843 = vadd.f32 %v5842, %v5821
        %v5844 = vadd.f32 %v5843, %v5822
        %v5845 = vadd.f32 %v5844, %v5823
        %v5846 = vadd.f32 %v5845, %v5824
        %v5847 = vadd.f32 %v5846, %v5825
        %v5848 = vadd.f32 %v5847, %v5826
        %v5849 = vadd.f32 %v5848, %v5827
        %v5850 = vadd.f32 %v5849, %v5828
        %v5851 = vadd.f32 %v5850, %v5829
        %v5852 = vadd.f32 %v5851, %v5830
        %v5853 = vadd.f32 %v5852, %v5831
        %v5854 = vadd.f32 %v5853, %v5832
        %v5855 = vadd.f32 %v5854, %v5833
        %v5856 = vadd.f32 %v5855, %v5834
        %v5857 = vadd.f32 %v5856, %v5835
        %v5858 = vadd.f32 %v5857, %v5836
        %v5859 = vadd.f32 %v5858, %v5837
        %v5860 = vadd.f32 %v5859, %v5838
        %v5861 = vadd.f32 %v5860, %v5839
        %v5862 = vsel %vm5809, %v5840, 0.0
        %v5863 = vadd.f32 %v5861, %v5862
        %v5864 = vrot.slane %v5863, 4
        %v5865 = vadd.f32 %v5863, %v5864
        %v5866 = vrot.slane %v5865, 2
        %v5867 = vadd.f32 %v5865, %v5866
        %v5868 = vrot.slane %v5867, 1
        %v5869 = vadd.f32 %v5867, %v5868
        %v5870 = vmul.f32 %v5817, 0.0078125
        %v5871 = vmul.f32 %v5869, 0.0078125
        %v5872 = vmul.f32 %v5870, %v5870
        %v5873 = vsub.f32 %v5871, %v5872
        %v5874 = vmax.f32 %v5873, 0.0
        %v5875 = vadd.f32 %v5874, 1e-05
        %v5876 = vrsqrt.pop %v5875
        %v5877 = vmul.f32 %v5648, %v5876
        %v5878 = vmul.f32 %v5870, %v5877
        %v5879 = vsub.f32 %v5649, %v5878
        %v5881 = vlaneseq
        %v5882 = vshrl.u32 %v5881, 7
        %v5883 = vsub.s32 0, %v5882
        %v5884 = vrot.slane %v5877, %v5883
        %v5886 = vmul.f32 %v5602, %v5884
        %v5887 = vmul.f32 %v5603, %v5884
        %v5888 = vmul.f32 %v5604, %v5884
        %v5889 = vmul.f32 %v5605, %v5884
        %v5890 = vmul.f32 %v5606, %v5884
        %v5891 = vmul.f32 %v5607, %v5884
        %v5892 = vmul.f32 %v5608, %v5884
        %v5893 = vmul.f32 %v5609, %v5884
        %v5894 = vmul.f32 %v5610, %v5884
        %v5895 = vmul.f32 %v5611, %v5884
        %v5896 = vmul.f32 %v5612, %v5884
        %v5897 = vmul.f32 %v5613, %v5884
        %v5898 = vmul.f32 %v5614, %v5884
        %v5899 = vmul.f32 %v5615, %v5884
        %v5900 = vmul.f32 %v5616, %v5884
        %v5901 = vmul.f32 %v5617, %v5884
        %v5902 = vmul.f32 %v5618, %v5884
        %v5903 = vmul.f32 %v5619, %v5884
        %v5904 = vmul.f32 %v5620, %v5884
        %v5905 = vmul.f32 %v5621, %v5884
        %v5906 = vmul.f32 %v5622, %v5884
        %v5907 = vmul.f32 %v5623, %v5884
        %v5908 = vmul.f32 %v5624, %v5884
        %v5910 = vlaneseq
        %v5911 = vshrl.u32 %v5910, 7
        %v5912 = vsub.s32 0, %v5911
        %v5913 = vrot.slane %v5879, %v5912
        %v5915 = vadd.f32 %v5886, %v5913
        %v5916 = vadd.f32 %v5887, %v5913
        %v5917 = vadd.f32 %v5888, %v5913
        %v5918 = vadd.f32 %v5889, %v5913
        %v5919 = vadd.f32 %v5890, %v5913
        %v5920 = vadd.f32 %v5891, %v5913
        %v5921 = vadd.f32 %v5892, %v5913
        %v5922 = vadd.f32 %v5893, %v5913
        %v5923 = vadd.f32 %v5894, %v5913
        %v5924 = vadd.f32 %v5895, %v5913
        %v5925 = vadd.f32 %v5896, %v5913
        %v5926 = vadd.f32 %v5897, %v5913
        %v5927 = vadd.f32 %v5898, %v5913
        %v5928 = vadd.f32 %v5899, %v5913
        %v5929 = vadd.f32 %v5900, %v5913
        %v5930 = vadd.f32 %v5901, %v5913
        %v5931 = vadd.f32 %v5902, %v5913
        %v5932 = vadd.f32 %v5903, %v5913
        %v5933 = vadd.f32 %v5904, %v5913
        %v5934 = vadd.f32 %v5905, %v5913
        %v5935 = vadd.f32 %v5906, %v5913
        %v5936 = vadd.f32 %v5907, %v5913
        %v5937 = vadd.f32 %v5908, %v5913
        %v5938 = vld [vmem:[%s5] sm:$0xf]
        %v5939 = vld [vmem:[%s5 + $0x4] sm:$0xf]
        %v5940 = vld [vmem:[%s5 + $0x8] sm:$0xf]
        %v5941 = vld [vmem:[%s5 + $0xc] sm:$0xf]
        %v5942 = vld [vmem:[%s5 + $0x10] sm:$0xf]
        %v5943 = vld [vmem:[%s5 + $0x14] sm:$0xf]
        %v5944 = vld [vmem:[%s5 + $0x18] sm:$0xf]
        %v5945 = vld [vmem:[%s5 + $0x1c] sm:$0xf]
        %v5946 = vld [vmem:[%s5 + $0x20] sm:$0xf]
        %v5947 = vld [vmem:[%s5 + $0x24] sm:$0xf]
        %v5948 = vld [vmem:[%s5 + $0x28] sm:$0xf]
        %v5949 = vld [vmem:[%s5 + $0x2c] sm:$0xf]
        %v5950 = vld [vmem:[%s5 + $0x30] sm:$0xf]
        %v5951 = vld [vmem:[%s5 + $0x34] sm:$0xf]
        %v5952 = vld [vmem:[%s5 + $0x38] sm:$0xf]
        %v5953 = vld [vmem:[%s5 + $0x3c] sm:$0xf]
        %v5954 = vld [vmem:[%s5 + $0x40] sm:$0xf]
        %v5955 = vld [vmem:[%s5 + $0x44] sm:$0xf]
        %v5956 = vld [vmem:[%s5 + $0x48] sm:$0xf]
        %v5957 = vld [vmem:[%s5 + $0x4c] sm:$0xf]
        %v5958 = vld [vmem:[%s5 + $0x50] sm:$0xf]
        %v5959 = vld [vmem:[%s5 + $0x54] sm:$0xf]
        %v5960 = vld [vmem:[%s5 + $0x58] sm:$0x1]
        %v5961 = vld [vmem:[%s1637] sm:$0xf]
        %v5962 = vld [vmem:[%s1637 + $0x4] sm:$0xf]
        %v5963 = vld [vmem:[%s1637 + $0x8] sm:$0xf]
        %v5964 = vld [vmem:[%s1637 + $0xc] sm:$0xf]
        %v5965 = vld [vmem:[%s1637 + $0x10] sm:$0xf]
        %v5966 = vld [vmem:[%s1637 + $0x14] sm:$0xf]
        %v5967 = vld [vmem:[%s1637 + $0x18] sm:$0xf]
        %v5968 = vld [vmem:[%s1637 + $0x1c] sm:$0xf]
        %v5969 = vld [vmem:[%s1637 + $0x20] sm:$0xf]
        %v5970 = vld [vmem:[%s1637 + $0x24] sm:$0xf]
        %v5971 = vld [vmem:[%s1637 + $0x28] sm:$0xf]
        %v5972 = vld [vmem:[%s1637 + $0x2c] sm:$0xf]
        %v5973 = vld [vmem:[%s1637 + $0x30] sm:$0xf]
        %v5974 = vld [vmem:[%s1637 + $0x34] sm:$0xf]
        %v5975 = vld [vmem:[%s1637 + $0x38] sm:$0xf]
        %v5976 = vld [vmem:[%s1637 + $0x3c] sm:$0xf]
        %v6000 = vunpack.c.l.b16 %v5938
        %v6001 = vunpack.c.l.b16 %v5939
        %v6002 = vunpack.c.l.b16 %v5940
        %v6003 = vunpack.c.l.b16 %v5941
        %v6004 = vunpack.c.l.b16 %v5942
        %v6005 = vunpack.c.l.b16 %v5943
        %v6006 = vunpack.c.l.b16 %v5944
        %v6007 = vunpack.c.l.b16 %v5945
        %v6008 = vunpack.c.l.b16 %v5946
        %v6009 = vunpack.c.l.b16 %v5947
        %v6010 = vunpack.c.l.b16 %v5948
        %v6011 = vunpack.c.l.b16 %v5949
        %v6012 = vunpack.c.l.b16 %v5950
        %v6013 = vunpack.c.l.b16 %v5951
        %v6014 = vunpack.c.l.b16 %v5952
        %v6015 = vunpack.c.l.b16 %v5953
        %v6016 = vunpack.c.l.b16 %v5954
        %v6017 = vunpack.c.l.b16 %v5955
        %v6018 = vunpack.c.l.b16 %v5956
        %v6019 = vunpack.c.l.b16 %v5957
        %v6020 = vunpack.c.l.b16 %v5958
        %v6021 = vunpack.c.l.b16 %v5959
        %v6022 = vunpack.c.l.b16 %v5960
        %v6023 = vpack.c.b16 %v6001, %v6000
        %v6024 = vpack.c.b16 %v6003, %v6002
        %v6025 = vpack.c.b16 %v6005, %v6004
        %v6026 = vpack.c.b16 %v6007, %v6006
        %v6027 = vpack.c.b16 %v6009, %v6008
        %v6028 = vpack.c.b16 %v6011, %v6010
        %v6029 = vpack.c.b16 %v6013, %v6012
        %v6030 = vpack.c.b16 %v6015, %v6014
        %v6031 = vpack.c.b16 %v6017, %v6016
        %v6032 = vpack.c.b16 %v6019, %v6018
        %v6033 = vpack.c.b16 %v6021, %v6020
        %v6034 = vpack.c.b16 %v6022, %v6022
        %v6063 = vunpack.c.l.b16 %v5961
        %v6064 = vunpack.c.l.b16 %v5962
        %v6065 = vunpack.c.l.b16 %v5963
        %v6066 = vunpack.c.l.b16 %v5964
        %v6067 = vunpack.c.l.b16 %v5965
        %v6068 = vunpack.c.l.b16 %v5966
        %v6069 = vunpack.c.l.b16 %v5967
        %v6070 = vunpack.c.l.b16 %v5968
        %v6071 = vunpack.c.l.b16 %v5969
        %v6072 = vunpack.c.l.b16 %v5970
        %v6073 = vunpack.c.l.b16 %v5971
        %v6074 = vunpack.c.l.b16 %v5972
        %v6075 = vunpack.c.l.b16 %v5973
        %v6076 = vunpack.c.l.b16 %v5974
        %v6077 = vunpack.c.l.b16 %v5975
        %v6078 = vunpack.c.l.b16 %v5976
        %v6079 = vpack.c.b16 %v6064, %v6063
        %v6080 = vpack.c.b16 %v6066, %v6065
        %v6081 = vpack.c.b16 %v6068, %v6067
        %v6082 = vpack.c.b16 %v6070, %v6069
        %v6083 = vpack.c.b16 %v6072, %v6071
        %v6084 = vpack.c.b16 %v6074, %v6073
        %v6085 = vpack.c.b16 %v6076, %v6075
        %v6086 = vpack.c.b16 %v6078, %v6077
        %6095 = vmatprep.subr.bf16.mxu0 0
        %6096 = vmatpush1.bf16.msra.mxu0 %v6086
        %6097 = vmatprep.subr.bf16.mxu0 0
        %6098 = vmatpush1.bf16.msra.mxu0 %v6085
        %6099 = vmatprep.subr.bf16.mxu0 0
        %6100 = vmatpush1.bf16.msra.mxu0 %v6084
        %6101 = vmatprep.subr.bf16.mxu0 0
        %6102 = vmatpush1.bf16.msra.mxu0 %v6083
        %6103 = vmatprep.subr.bf16.mxu0 0
        %6104 = vmatpush1.bf16.msra.mxu0 %v6082
        %6105 = vmatprep.subr.bf16.mxu0 0
        %6106 = vmatpush1.bf16.msra.mxu0 %v6081
        %6107 = vmatprep.subr.bf16.mxu0 0
        %6108 = vmatpush1.bf16.msra.mxu0 %v6080
        %6109 = vmatprep.subr.bf16.mxu0 0
        %6110 = vmatpush1.bf16.msra.mxu0 %v6079
        %6111 = vmatprep.subr.bf16.mxu0 0
        %6112 = vmatpush2.bf16.msra.mxu0 0
        %6113 = vmatprep.subr.bf16.mxu0 0
        %6114 = vmatpush2.bf16.msra.mxu0 0
        %6115 = vmatprep.subr.bf16.mxu0 0
        %6116 = vmatpush2.bf16.msra.mxu0 0
        %6117 = vmatprep.subr.bf16.mxu0 0
        %6118 = vmatpush2.bf16.msra.mxu0 0
        %6119 = vmatprep.subr.bf16.mxu0 0
        %6120 = vmatpush2.bf16.msra.mxu0 0
        %6121 = vmatprep.subr.bf16.mxu0 0
        %6122 = vmatpush2.bf16.msra.mxu0 0
        %6123 = vmatprep.subr.bf16.mxu0 0
        %6124 = vmatpush2.bf16.msra.mxu0 0
        %6125 = vmatprep.subr.bf16.mxu0 0
        %6126 = vmatpush2.bf16.msra.mxu0 0
        %6127 = vmatprep.mubr.bf16.mxu0 0
        %6128 = vmatmul.mubr.bf16.gmra.mxu0 %v6023
        %v6129 = vpop.f32.mrf.mxu0
        %v6130 = vadd.f32 0.0, %v6129
        %v6131 = vpop.f32.mrf.mxu0
        %v6132 = vpop.f32.mrf.mxu0
        %v6133 = vadd.f32 0.0, %v6132
        %v6134 = vpop.f32.mrf.mxu0
        %6135 = vmatprep.mubr.bf16.mxu0 0
        %6136 = vmatmul.mubr.bf16.gmra.mxu0 %v6024
        %v6137 = vpop.f32.mrf.mxu0
        %v6138 = vadd.f32 0.0, %v6137
        %v6139 = vpop.f32.mrf.mxu0
        %v6140 = vpop.f32.mrf.mxu0
        %v6141 = vadd.f32 0.0, %v6140
        %v6142 = vpop.f32.mrf.mxu0
        %6143 = vmatprep.mubr.bf16.mxu0 0
        %6144 = vmatmul.mubr.bf16.gmra.mxu0 %v6025
        %v6145 = vpop.f32.mrf.mxu0
        %v6146 = vadd.f32 0.0, %v6145
        %v6147 = vpop.f32.mrf.mxu0
        %v6148 = vpop.f32.mrf.mxu0
        %v6149 = vadd.f32 0.0, %v6148
        %v6150 = vpop.f32.mrf.mxu0
        %6151 = vmatprep.mubr.bf16.mxu0 0
        %6152 = vmatmul.mubr.bf16.gmra.mxu0 %v6026
        %v6153 = vpop.f32.mrf.mxu0
        %v6154 = vadd.f32 0.0, %v6153
        %v6155 = vpop.f32.mrf.mxu0
        %v6156 = vpop.f32.mrf.mxu0
        %v6157 = vadd.f32 0.0, %v6156
        %v6158 = vpop.f32.mrf.mxu0
        %6159 = vmatprep.mubr.bf16.mxu0 0
        %6160 = vmatmul.mubr.bf16.gmra.mxu0 %v6027
        %v6161 = vpop.f32.mrf.mxu0
        %v6162 = vadd.f32 0.0, %v6161
        %v6163 = vpop.f32.mrf.mxu0
        %v6164 = vpop.f32.mrf.mxu0
        %v6165 = vadd.f32 0.0, %v6164
        %v6166 = vpop.f32.mrf.mxu0
        %6167 = vmatprep.mubr.bf16.mxu0 0
        %6168 = vmatmul.mubr.bf16.gmra.mxu0 %v6028
        %v6169 = vpop.f32.mrf.mxu0
        %v6170 = vadd.f32 0.0, %v6169
        %v6171 = vpop.f32.mrf.mxu0
        %v6172 = vpop.f32.mrf.mxu0
        %v6173 = vadd.f32 0.0, %v6172
        %v6174 = vpop.f32.mrf.mxu0
        %6175 = vmatprep.mubr.bf16.mxu0 0
        %6176 = vmatmul.mubr.bf16.gmra.mxu0 %v6029
        %v6177 = vpop.f32.mrf.mxu0
        %v6178 = vadd.f32 0.0, %v6177
        %v6179 = vpop.f32.mrf.mxu0
        %v6180 = vpop.f32.mrf.mxu0
        %v6181 = vadd.f32 0.0, %v6180
        %v6182 = vpop.f32.mrf.mxu0
        %6183 = vmatprep.mubr.bf16.mxu0 0
        %6184 = vmatmul.mubr.bf16.gmra.mxu0 %v6030
        %v6185 = vpop.f32.mrf.mxu0
        %v6186 = vadd.f32 0.0, %v6185
        %v6187 = vpop.f32.mrf.mxu0
        %v6188 = vpop.f32.mrf.mxu0
        %v6189 = vadd.f32 0.0, %v6188
        %v6190 = vpop.f32.mrf.mxu0
        %6191 = vmatprep.mubr.bf16.mxu0 0
        %6192 = vmatmul.mubr.bf16.gmra.mxu0 %v6031
        %v6193 = vpop.f32.mrf.mxu0
        %v6194 = vadd.f32 0.0, %v6193
        %v6195 = vpop.f32.mrf.mxu0
        %v6196 = vpop.f32.mrf.mxu0
        %v6197 = vadd.f32 0.0, %v6196
        %v6198 = vpop.f32.mrf.mxu0
        %6199 = vmatprep.mubr.bf16.mxu0 0
        %6200 = vmatmul.mubr.bf16.gmra.mxu0 %v6032
        %v6201 = vpop.f32.mrf.mxu0
        %v6202 = vadd.f32 0.0, %v6201
        %v6203 = vpop.f32.mrf.mxu0
        %v6204 = vpop.f32.mrf.mxu0
        %v6205 = vadd.f32 0.0, %v6204
        %v6206 = vpop.f32.mrf.mxu0
        %6207 = vmatprep.mubr.bf16.mxu0 0
        %6208 = vmatmul.mubr.bf16.gmra.mxu0 %v6033
        %v6209 = vpop.f32.mrf.mxu0
        %v6210 = vadd.f32 0.0, %v6209
        %v6211 = vpop.f32.mrf.mxu0
        %v6212 = vpop.f32.mrf.mxu0
        %v6213 = vadd.f32 0.0, %v6212
        %v6214 = vpop.f32.mrf.mxu0
        %6215 = vmatprep.mubr.bf16.mxu0 0
        %6216 = vmatmul.mubr.bf16.gmra.mxu0 %v6034
        %v6217 = vpop.f32.mrf.mxu0
        %v6218 = vadd.f32 0.0, %v6217
        %v6219 = vpop.f32.mrf.mxu0
        %v6220 = vpop.f32.mrf.mxu0
        %v6221 = vpop.f32.mrf.mxu0
        %6222 = vdwg.mxu0
        %v6223 = vld [vmem:[%s1693] sm:$0x1]
        %v6224 = vld [vmem:[%s1696] sm:$0x1]
        %v6225 = vmul.f32 %v6130, %v5653
        %v6226 = vmul.f32 %v6133, %v5658
        %v6227 = vmul.f32 %v6138, %v5663
        %v6228 = vmul.f32 %v6141, %v5668
        %v6229 = vmul.f32 %v6146, %v5673
        %v6230 = vmul.f32 %v6149, %v5678
        %v6231 = vmul.f32 %v6154, %v5683
        %v6232 = vmul.f32 %v6157, %v5688
        %v6233 = vmul.f32 %v6162, %v5693
        %v6234 = vmul.f32 %v6165, %v5698
        %v6235 = vmul.f32 %v6170, %v5703
        %v6236 = vmul.f32 %v6173, %v5708
        %v6237 = vmul.f32 %v6178, %v5713
        %v6238 = vmul.f32 %v6181, %v5718
        %v6239 = vmul.f32 %v6186, %v5723
        %v6240 = vmul.f32 %v6189, %v5728
        %v6241 = vmul.f32 %v6194, %v5733
        %v6242 = vmul.f32 %v6197, %v5738
        %v6243 = vmul.f32 %v6202, %v5743
        %v6244 = vmul.f32 %v6205, %v5748
        %v6245 = vmul.f32 %v6210, %v5753
        %v6246 = vmul.f32 %v6213, %v5758
        %v6247 = vmul.f32 %v6218, %v5763
        %v6248 = vadd.f32 %v6225, %v6226
        %v6249 = vadd.f32 %v6248, %v6227
        %v6250 = vadd.f32 %v6249, %v6228
        %v6251 = vadd.f32 %v6250, %v6229
        %v6252 = vadd.f32 %v6251, %v6230
        %v6253 = vadd.f32 %v6252, %v6231
        %v6254 = vadd.f32 %v6253, %v6232
        %v6255 = vadd.f32 %v6254, %v6233
        %v6256 = vadd.f32 %v6255, %v6234
        %v6257 = vadd.f32 %v6256, %v6235
        %v6258 = vadd.f32 %v6257, %v6236
        %v6259 = vadd.f32 %v6258, %v6237
        %v6260 = vadd.f32 %v6259, %v6238
        %v6261 = vadd.f32 %v6260, %v6239
        %v6262 = vadd.f32 %v6261, %v6240
        %v6263 = vadd.f32 %v6262, %v6241
        %v6264 = vadd.f32 %v6263, %v6242
        %v6265 = vadd.f32 %v6264, %v6243
        %v6266 = vadd.f32 %v6265, %v6244
        %v6267 = vadd.f32 %v6266, %v6245
        %v6268 = vadd.f32 %v6267, %v6246
        %v6269 = vsel %vm5809, %v6247, 0.0
        %v6270 = vadd.f32 %v6268, %v6269
        %v6271 = vrot.slane %v6270, 4
        %v6272 = vadd.f32 %v6270, %v6271
        %v6273 = vrot.slane %v6272, 2
        %v6274 = vadd.f32 %v6272, %v6273
        %v6275 = vrot.slane %v6274, 1
        %v6276 = vadd.f32 %v6274, %v6275
        %v6277 = vmul.f32 %v6225, %v6130
        %v6278 = vmul.f32 %v6226, %v6133
        %v6279 = vmul.f32 %v6227, %v6138
        %v6280 = vmul.f32 %v6228, %v6141
        %v6281 = vmul.f32 %v6229, %v6146
        %v6282 = vmul.f32 %v6230, %v6149
        %v6283 = vmul.f32 %v6231, %v6154
        %v6284 = vmul.f32 %v6232, %v6157
        %v6285 = vmul.f32 %v6233, %v6162
        %v6286 = vmul.f32 %v6234, %v6165
        %v6287 = vmul.f32 %v6235, %v6170
        %v6288 = vmul.f32 %v6236, %v6173
        %v6289 = vmul.f32 %v6237, %v6178
        %v6290 = vmul.f32 %v6238, %v6181
        %v6291 = vmul.f32 %v6239, %v6186
        %v6292 = vmul.f32 %v6240, %v6189
        %v6293 = vmul.f32 %v6241, %v6194
        %v6294 = vmul.f32 %v6242, %v6197
        %v6295 = vmul.f32 %v6243, %v6202
        %v6296 = vmul.f32 %v6244, %v6205
        %v6297 = vmul.f32 %v6245, %v6210
        %v6298 = vmul.f32 %v6246, %v6213
        %v6299 = vmul.f32 %v6247, %v6218
        %v6300 = vadd.f32 %v6277, %v6278
        %v6301 = vadd.f32 %v6300, %v6279
        %v6302 = vadd.f32 %v6301, %v6280
        %v6303 = vadd.f32 %v6302, %v6281
        %v6304 = vadd.f32 %v6303, %v6282
        %v6305 = vadd.f32 %v6304, %v6283
        %v6306 = vadd.f32 %v6305, %v6284
        %v6307 = vadd.f32 %v6306, %v6285
        %v6308 = vadd.f32 %v6307, %v6286
        %v6309 = vadd.f32 %v6308, %v6287
        %v6310 = vadd.f32 %v6309, %v6288
        %v6311 = vadd.f32 %v6310, %v6289
        %v6312 = vadd.f32 %v6311, %v6290
        %v6313 = vadd.f32 %v6312, %v6291
        %v6314 = vadd.f32 %v6313, %v6292
        %v6315 = vadd.f32 %v6314, %v6293
        %v6316 = vadd.f32 %v6315, %v6294
        %v6317 = vadd.f32 %v6316, %v6295
        %v6318 = vadd.f32 %v6317, %v6296
        %v6319 = vadd.f32 %v6318, %v6297
        %v6320 = vadd.f32 %v6319, %v6298
        %v6321 = vsel %vm5809, %v6299, 0.0
        %v6322 = vadd.f32 %v6320, %v6321
        %v6323 = vrot.slane %v6322, 4
        %v6324 = vadd.f32 %v6322, %v6323
        %v6325 = vrot.slane %v6324, 2
        %v6326 = vadd.f32 %v6324, %v6325
        %v6327 = vrot.slane %v6326, 1
        %v6328 = vadd.f32 %v6326, %v6327
        %v6329 = vmul.f32 %v6276, 0.0078125
        %v6330 = vmul.f32 %v6328, 0.0078125
        %v6331 = vmul.f32 %v6329, %v6329
        %v6332 = vsub.f32 %v6330, %v6331
        %v6333 = vmax.f32 %v6332, 0.0
        %v6334 = vadd.f32 %v6333, 1e-05
        %v6335 = vrsqrt.pop %v6334
        %v6336 = vmul.f32 %v6223, %v6335
        %v6337 = vmul.f32 %v6329, %v6336
        %v6338 = vsub.f32 %v6224, %v6337
        %v6340 = vlaneseq
        %v6341 = vshrl.u32 %v6340, 7
        %v6342 = vsub.s32 0, %v6341
        %v6343 = vrot.slane %v6336, %v6342
        %v6345 = vmul.f32 %v6130, %v6343
        %v6346 = vmul.f32 %v6133, %v6343
        %v6347 = vmul.f32 %v6138, %v6343
        %v6348 = vmul.f32 %v6141, %v6343
        %v6349 = vmul.f32 %v6146, %v6343
        %v6350 = vmul.f32 %v6149, %v6343
        %v6351 = vmul.f32 %v6154, %v6343
        %v6352 = vmul.f32 %v6157, %v6343
        %v6353 = vmul.f32 %v6162, %v6343
        %v6354 = vmul.f32 %v6165, %v6343
        %v6355 = vmul.f32 %v6170, %v6343
        %v6356 = vmul.f32 %v6173, %v6343
        %v6357 = vmul.f32 %v6178, %v6343
        %v6358 = vmul.f32 %v6181, %v6343
        %v6359 = vmul.f32 %v6186, %v6343
        %v6360 = vmul.f32 %v6189, %v6343
        %v6361 = vmul.f32 %v6194, %v6343
        %v6362 = vmul.f32 %v6197, %v6343
        %v6363 = vmul.f32 %v6202, %v6343
        %v6364 = vmul.f32 %v6205, %v6343
        %v6365 = vmul.f32 %v6210, %v6343
        %v6366 = vmul.f32 %v6213, %v6343
        %v6367 = vmul.f32 %v6218, %v6343
        %v6369 = vlaneseq
        %v6370 = vshrl.u32 %v6369, 7
        %v6371 = vsub.s32 0, %v6370
        %v6372 = vrot.slane %v6338, %v6371
        %v6374 = vadd.f32 %v6345, %v6372
        %v6375 = vadd.f32 %v6346, %v6372
        %v6376 = vadd.f32 %v6347, %v6372
        %v6377 = vadd.f32 %v6348, %v6372
        %v6378 = vadd.f32 %v6349, %v6372
        %v6379 = vadd.f32 %v6350, %v6372
        %v6380 = vadd.f32 %v6351, %v6372
        %v6381 = vadd.f32 %v6352, %v6372
        %v6382 = vadd.f32 %v6353, %v6372
        %v6383 = vadd.f32 %v6354, %v6372
        %v6384 = vadd.f32 %v6355, %v6372
        %v6385 = vadd.f32 %v6356, %v6372
        %v6386 = vadd.f32 %v6357, %v6372
        %v6387 = vadd.f32 %v6358, %v6372
        %v6388 = vadd.f32 %v6359, %v6372
        %v6389 = vadd.f32 %v6360, %v6372
        %v6390 = vadd.f32 %v6361, %v6372
        %v6391 = vadd.f32 %v6362, %v6372
        %v6392 = vadd.f32 %v6363, %v6372
        %v6393 = vadd.f32 %v6364, %v6372
        %v6394 = vadd.f32 %v6365, %v6372
        %v6395 = vadd.f32 %v6366, %v6372
        %v6396 = vadd.f32 %v6367, %v6372
        %v6397 = vadd.f32 %v5915, %v6374
        %v6398 = vadd.f32 %v5916, %v6375
        %v6399 = vadd.f32 %v5917, %v6376
        %v6400 = vadd.f32 %v5918, %v6377
        %v6401 = vadd.f32 %v5919, %v6378
        %v6402 = vadd.f32 %v5920, %v6379
        %v6403 = vadd.f32 %v5921, %v6380
        %v6404 = vadd.f32 %v5922, %v6381
        %v6405 = vadd.f32 %v5923, %v6382
        %v6406 = vadd.f32 %v5924, %v6383
        %v6407 = vadd.f32 %v5925, %v6384
        %v6408 = vadd.f32 %v5926, %v6385
        %v6409 = vadd.f32 %v5927, %v6386
        %v6410 = vadd.f32 %v5928, %v6387
        %v6411 = vadd.f32 %v5929, %v6388
        %v6412 = vadd.f32 %v5930, %v6389
        %v6413 = vadd.f32 %v5931, %v6390
        %v6414 = vadd.f32 %v5932, %v6391
        %v6415 = vadd.f32 %v5933, %v6392
        %v6416 = vadd.f32 %v5934, %v6393
        %v6417 = vadd.f32 %v5935, %v6394
        %v6418 = vadd.f32 %v5936, %v6395
        %v6419 = vadd.f32 %v5937, %v6396
        %v6420 = vmax.f32 %v6397, 0.0
        %v6421 = vmax.f32 %v6398, 0.0
        %v6422 = vmax.f32 %v6399, 0.0
        %v6423 = vmax.f32 %v6400, 0.0
        %v6424 = vmax.f32 %v6401, 0.0
        %v6425 = vmax.f32 %v6402, 0.0
        %v6426 = vmax.f32 %v6403, 0.0
        %v6427 = vmax.f32 %v6404, 0.0
        %v6428 = vmax.f32 %v6405, 0.0
        %v6429 = vmax.f32 %v6406, 0.0
        %v6430 = vmax.f32 %v6407, 0.0
        %v6431 = vmax.f32 %v6408, 0.0
        %v6432 = vmax.f32 %v6409, 0.0
        %v6433 = vmax.f32 %v6410, 0.0
        %v6434 = vmax.f32 %v6411, 0.0
        %v6435 = vmax.f32 %v6412, 0.0
        %v6436 = vmax.f32 %v6413, 0.0
        %v6437 = vmax.f32 %v6414, 0.0
        %v6438 = vmax.f32 %v6415, 0.0
        %v6439 = vmax.f32 %v6416, 0.0
        %v6440 = vmax.f32 %v6417, 0.0
        %v6441 = vmax.f32 %v6418, 0.0
        %v6442 = vmax.f32 %v6419, 0.0
        %6443 = vst [vmem:[%s1684] sm:$0xff] %v6420
        %6444 = vst [vmem:[%s1684 + $0x8] sm:$0xff] %v6421
        %6445 = vst [vmem:[%s1684 + $0x10] sm:$0xff] %v6422
        %6446 = vst [vmem:[%s1684 + $0x18] sm:$0xff] %v6423
        %6447 = vst [vmem:[%s1684 + $0x20] sm:$0xff] %v6424
        %6448 = vst [vmem:[%s1684 + $0x28] sm:$0xff] %v6425
        %6449 = vst [vmem:[%s1684 + $0x30] sm:$0xff] %v6426
        %6450 = vst [vmem:[%s1684 + $0x38] sm:$0xff] %v6427
        %6451 = vst [vmem:[%s1684 + $0x40] sm:$0xff] %v6428
        %6452 = vst [vmem:[%s1684 + $0x48] sm:$0xff] %v6429
        %6453 = vst [vmem:[%s1684 + $0x50] sm:$0xff] %v6430
        %6454 = vst [vmem:[%s1684 + $0x58] sm:$0xff] %v6431
        %6455 = vst [vmem:[%s1684 + $0x60] sm:$0xff] %v6432
        %6456 = vst [vmem:[%s1684 + $0x68] sm:$0xff] %v6433
        %6457 = vst [vmem:[%s1684 + $0x70] sm:$0xff] %v6434
        %6458 = vst [vmem:[%s1684 + $0x78] sm:$0xff] %v6435
        %6459 = vst [vmem:[%s1684 + $0x80] sm:$0xff] %v6436
        %6460 = vst [vmem:[%s1684 + $0x88] sm:$0xff] %v6437
        %6461 = vst [vmem:[%s1684 + $0x90] sm:$0xff] %v6438
        %6462 = vst [vmem:[%s1684 + $0x98] sm:$0xff] %v6439
        %6463 = vst [vmem:[%s1684 + $0xa0] sm:$0xff] %v6440
        %6464 = vst [vmem:[%s1684 + $0xa8] sm:$0xff] %v6441
        %6465 = vst [vmem:[%s1684 + $0xb0] sm:$0x3] %v6442
        %s6466 = sand.u32 %s247, 1
        %s6467 = sand.u32 %s247, 1
        %s6468 = smul.addr %s6467, 184
        %s6469 = scalar_lea.vmem [#allocation4], %s6468
        // Predicated region
        $region139: #{basic_block_forward.3} parent=129 // pred_check
          %p6470 = pneg %p257
        $region140: #{basic_block_forward.3} parent=129 // pred_check_branch
          %6472 = sbr.rel (%p6470) target = $region142
        $region141: #{basic_block_forward.3} parent=129 // pred_region
          %s6473 = smul.addr %s20, 8
          %s6474 = scalar_lea.vmem %s9, %s6473
          // Predicated region
          $region143: #{basic_block_forward.3} parent=141 // pred_check
            _
          $region144: #{basic_block_forward.3} parent=141 // pred_check_branch
            %6476 = sbr.rel (0) target = $region146
          $region145: #{basic_block_forward.3} parent=141 // pred_region
            // Predicated region
            $region147: #{basic_block_forward.3} parent=145 // pred_check
              _
            $region148: #{basic_block_forward.3} parent=145 // pred_check_branch
              %6478 = sbr.rel (0) target = $region150
            $region149: #{basic_block_forward.3} parent=145 // pred_region
              // Predicated region
              $region162: #{basic_block_forward.3} parent=149 // pred_check
                _
              $region163: #{basic_block_forward.3} parent=149 // pred_check_branch
                %6538 = sbr.rel (0) target = $region165
              $region164: #{basic_block_forward.3} parent=149 // pred_region
                loop: start=0, step=1, limit=1
                $region166: #{basic_block_forward.3} parent=164 // loop_pre_header
                  _
                $region167: #{basic_block_forward.3} parent=164 // loop_header
                  %s6540 = sphi 0, %s6544
                  %p6541 = scmp.ge.s32.totalorder %s6540, 1
                  %s6545 = sphi %s6469, %s6469
                  %s6546 = sphi %s6474, %s6474
                $region168: #{basic_block_forward.3} parent=164 // loop_header_branch
                  %6543 = sbr.rel (%p6541) target = $region172
                $region169: #{basic_block_forward.3} parent=164 // loop_body
                  %v6547 = vld [vmem:[%s6545] sm:$0xff]
                  %6548 = vst [vmem:[%s6546] sm:$0xff] %v6547
                  %v6549 = vld [vmem:[%s6545 + $0x8] sm:$0xff]
                  %6550 = vst [vmem:[%s6546 + $0x10] sm:$0xff] %v6549
                  %v6551 = vld [vmem:[%s6545 + $0x10] sm:$0xff]
                  %6552 = vst [vmem:[%s6546 + $0x20] sm:$0xff] %v6551
                  %v6553 = vld [vmem:[%s6545 + $0x18] sm:$0xff]
                  %6554 = vst [vmem:[%s6546 + $0x30] sm:$0xff] %v6553
                  %v6555 = vld [vmem:[%s6545 + $0x20] sm:$0xff]
                  %6556 = vst [vmem:[%s6546 + $0x40] sm:$0xff] %v6555
                  %v6557 = vld [vmem:[%s6545 + $0x28] sm:$0xff]
                  %6558 = vst [vmem:[%s6546 + $0x50] sm:$0xff] %v6557
                  %v6559 = vld [vmem:[%s6545 + $0x30] sm:$0xff]
                  %6560 = vst [vmem:[%s6546 + $0x60] sm:$0xff] %v6559
                  %v6561 = vld [vmem:[%s6545 + $0x38] sm:$0xff]
                  %6562 = vst [vmem:[%s6546 + $0x70] sm:$0xff] %v6561
                  %v6563 = vld [vmem:[%s6545 + $0x40] sm:$0xff]
                  %6564 = vst [vmem:[%s6546 + $0x80] sm:$0xff] %v6563
                  %v6565 = vld [vmem:[%s6545 + $0x48] sm:$0xff]
                  %6566 = vst [vmem:[%s6546 + $0x90] sm:$0xff] %v6565
                  %v6567 = vld [vmem:[%s6545 + $0x50] sm:$0xff]
                  %6568 = vst [vmem:[%s6546 + $0xa0] sm:$0xff] %v6567
                  %v6569 = vld [vmem:[%s6545 + $0x58] sm:$0xff]
                  %6570 = vst [vmem:[%s6546 + $0xb0] sm:$0xff] %v6569
                  %v6571 = vld [vmem:[%s6545 + $0x60] sm:$0xff]
                  %6572 = vst [vmem:[%s6546 + $0xc0] sm:$0xff] %v6571
                  %v6573 = vld [vmem:[%s6545 + $0x68] sm:$0xff]
                  %6574 = vst [vmem:[%s6546 + $0xd0] sm:$0xff] %v6573
                  %v6575 = vld [vmem:[%s6545 + $0x70] sm:$0xff]
                  %6576 = vst [vmem:[%s6546 + $0xe0] sm:$0xff] %v6575
                  %v6577 = vld [vmem:[%s6545 + $0x78] sm:$0xff]
                  %6578 = vst [vmem:[%s6546 + $0xf0] sm:$0xff] %v6577
                  %v6579 = vld [vmem:[%s6545 + $0x80] sm:$0xff]
                  %6580 = vst [vmem:[%s6546 + $0x100] sm:$0xff] %v6579
                  %v6581 = vld [vmem:[%s6545 + $0x88] sm:$0xff]
                  %6582 = vst [vmem:[%s6546 + $0x110] sm:$0xff] %v6581
                  %v6583 = vld [vmem:[%s6545 + $0x90] sm:$0xff]
                  %6584 = vst [vmem:[%s6546 + $0x120] sm:$0xff] %v6583
                  %v6585 = vld [vmem:[%s6545 + $0x98] sm:$0xff]
                  %6586 = vst [vmem:[%s6546 + $0x130] sm:$0xff] %v6585
                  %v6587 = vld [vmem:[%s6545 + $0xa0] sm:$0xff]
                  %6588 = vst [vmem:[%s6546 + $0x140] sm:$0xff] %v6587
                  %v6589 = vld [vmem:[%s6545 + $0xa8] sm:$0xff]
                  %6590 = vst [vmem:[%s6546 + $0x150] sm:$0xff] %v6589
                  %v6591 = vld [vmem:[%s6545 + $0xb0] sm:$0xff]
                  %6592 = vst [vmem:[%s6546 + $0x160] sm:$0xff] %v6591
                $region170: #{basic_block_forward.3} parent=164 // loop_footer
                  %s6544 = sadd.s32 1, %s6540
                $region171: #{basic_block_forward.3} parent=164 // loop_footer_branch
                  %6539 = sbr.rel target = $region167
                $region172: #{basic_block_forward.3} parent=164 // loop_exit
                  _
              $region165: #{basic_block_forward.3} parent=149 // pred_fallthru
                _
              // Predicated region
              $region173: #{basic_block_forward.3} parent=149 // pred_check
                _
              $region174: #{basic_block_forward.3} parent=149 // pred_check_branch
                %6594 = sbr.rel target = $region176
              $region175: #{basic_block_forward.3} parent=149 // pred_region
                _
              $region176: #{basic_block_forward.3} parent=149 // pred_fallthru
                _
            $region150: #{basic_block_forward.3} parent=145 // pred_fallthru
              _
            // Predicated region
            $region151: #{basic_block_forward.3} parent=145 // pred_check
              _
            $region152: #{basic_block_forward.3} parent=145 // pred_check_branch
              %6480 = sbr.rel target = $region154
            $region153: #{basic_block_forward.3} parent=145 // pred_region
              %s6482 = ssub.s32 256, 1
              loop: start=0, step=1, limit=1
              $region155: #{basic_block_forward.3} parent=153 // loop_pre_header
                _
              $region156: #{basic_block_forward.3} parent=153 // loop_header
                %s6484 = sphi 0, %s6488
                %p6485 = scmp.ge.s32.totalorder %s6484, 1
                %s6489 = sphi %s6469, %s6469
                %s6490 = sphi %s6474, %s6474
              $region157: #{basic_block_forward.3} parent=153 // loop_header_branch
                %6487 = sbr.rel (%p6485) target = $region161
              $region158: #{basic_block_forward.3} parent=153 // loop_body
                %v6491 = vld [vmem:[%s6489] sm:%s6482]
                %6492 = vst [vmem:[%s6490] sm:%s6482] %v6491
                %v6493 = vld [vmem:[%s6489 + $0x8] sm:%s6482]
                %6494 = vst [vmem:[%s6490 + $0x10] sm:%s6482] %v6493
                %v6495 = vld [vmem:[%s6489 + $0x10] sm:%s6482]
                %6496 = vst [vmem:[%s6490 + $0x20] sm:%s6482] %v6495
                %v6497 = vld [vmem:[%s6489 + $0x18] sm:%s6482]
                %6498 = vst [vmem:[%s6490 + $0x30] sm:%s6482] %v6497
                %v6499 = vld [vmem:[%s6489 + $0x20] sm:%s6482]
                %6500 = vst [vmem:[%s6490 + $0x40] sm:%s6482] %v6499
                %v6501 = vld [vmem:[%s6489 + $0x28] sm:%s6482]
                %6502 = vst [vmem:[%s6490 + $0x50] sm:%s6482] %v6501
                %v6503 = vld [vmem:[%s6489 + $0x30] sm:%s6482]
                %6504 = vst [vmem:[%s6490 + $0x60] sm:%s6482] %v6503
                %v6505 = vld [vmem:[%s6489 + $0x38] sm:%s6482]
                %6506 = vst [vmem:[%s6490 + $0x70] sm:%s6482] %v6505
                %v6507 = vld [vmem:[%s6489 + $0x40] sm:%s6482]
                %6508 = vst [vmem:[%s6490 + $0x80] sm:%s6482] %v6507
                %v6509 = vld [vmem:[%s6489 + $0x48] sm:%s6482]
                %6510 = vst [vmem:[%s6490 + $0x90] sm:%s6482] %v6509
                %v6511 = vld [vmem:[%s6489 + $0x50] sm:%s6482]
                %6512 = vst [vmem:[%s6490 + $0xa0] sm:%s6482] %v6511
                %v6513 = vld [vmem:[%s6489 + $0x58] sm:%s6482]
                %6514 = vst [vmem:[%s6490 + $0xb0] sm:%s6482] %v6513
                %v6515 = vld [vmem:[%s6489 + $0x60] sm:%s6482]
                %6516 = vst [vmem:[%s6490 + $0xc0] sm:%s6482] %v6515
                %v6517 = vld [vmem:[%s6489 + $0x68] sm:%s6482]
                %6518 = vst [vmem:[%s6490 + $0xd0] sm:%s6482] %v6517
                %v6519 = vld [vmem:[%s6489 + $0x70] sm:%s6482]
                %6520 = vst [vmem:[%s6490 + $0xe0] sm:%s6482] %v6519
                %v6521 = vld [vmem:[%s6489 + $0x78] sm:%s6482]
                %6522 = vst [vmem:[%s6490 + $0xf0] sm:%s6482] %v6521
                %v6523 = vld [vmem:[%s6489 + $0x80] sm:%s6482]
                %6524 = vst [vmem:[%s6490 + $0x100] sm:%s6482] %v6523
                %v6525 = vld [vmem:[%s6489 + $0x88] sm:%s6482]
                %6526 = vst [vmem:[%s6490 + $0x110] sm:%s6482] %v6525
                %v6527 = vld [vmem:[%s6489 + $0x90] sm:%s6482]
                %6528 = vst [vmem:[%s6490 + $0x120] sm:%s6482] %v6527
                %v6529 = vld [vmem:[%s6489 + $0x98] sm:%s6482]
                %6530 = vst [vmem:[%s6490 + $0x130] sm:%s6482] %v6529
                %v6531 = vld [vmem:[%s6489 + $0xa0] sm:%s6482]
                %6532 = vst [vmem:[%s6490 + $0x140] sm:%s6482] %v6531
                %v6533 = vld [vmem:[%s6489 + $0xa8] sm:%s6482]
                %6534 = vst [vmem:[%s6490 + $0x150] sm:%s6482] %v6533
                %v6535 = vld [vmem:[%s6489 + $0xb0] sm:%s6482]
                %6536 = vst [vmem:[%s6490 + $0x160] sm:%s6482] %v6535
              $region159: #{basic_block_forward.3} parent=153 // loop_footer
                %s6488 = sadd.s32 1, %s6484
              $region160: #{basic_block_forward.3} parent=153 // loop_footer_branch
                %6483 = sbr.rel target = $region156
              $region161: #{basic_block_forward.3} parent=153 // loop_exit
                _
            $region154: #{basic_block_forward.3} parent=145 // pred_fallthru
              _
          $region146: #{basic_block_forward.3} parent=141 // pred_fallthru
            _
          %6595 = vnop
        $region142: #{basic_block_forward.3} parent=129 // pred_fallthru
          _
      $region130: #{basic_block_forward.3} parent=5 // pred_fallthru
        _
      %p6596 = scmp.le.s32.totalorder 2, %s15
      // Predicated region
      $region177: #{basic_block_forward.3} parent=5 // pred_check
        %p6597 = pneg %p6596
      $region178: #{basic_block_forward.3} parent=5 // pred_check_branch
        %6599 = sbr.rel (%p6597) target = $region180
      $region179: #{basic_block_forward.3} parent=5 // pred_region
        %s6600 = ssub.s32 %s15, 2
        // Predicated region
        $region181: #{basic_block_forward.3} parent=179 // pred_check
          %p6601 = pneg %p263
        $region182: #{basic_block_forward.3} parent=179 // pred_check_branch
          %6603 = sbr.rel (%p6601) target = $region184
        $region183: #{basic_block_forward.3} parent=179 // pred_region
          %s6604 = sand.u32 %s248, 1
          %s6605 = sand.u32 %s248, 1
          %s6606 = smul.addr %s6605, 184
          %s6607 = scalar_lea.vmem [#allocation4], %s6606
        $region184: #{basic_block_forward.3} parent=179 // pred_fallthru
          _
      $region180: #{basic_block_forward.3} parent=5 // pred_fallthru
        _
    $region6: #{basic_block_forward.3} parent=1 // loop_footer
      %s19 = sadd.s32 1, %s15
    $region7: #{basic_block_forward.3} parent=1 // loop_footer_branch
      %14 = sbr.rel target = $region3
    $region8: #{basic_block_forward.3} parent=1 // loop_exit
      _

</llo_original>
